<compile_context>
chip_gen: v7x
topology: tpu7x:2x2x1
jax: 0.10.0
libtpu: 0.0.40
codegen_flags: <defaults>
</compile_context>

<pallas_src>
import jax
import jax.numpy as jnp
from jax.experimental import pallas as pl
from jax.experimental.pallas import tpu as pltpu

CPAD = 128                          # lane-dense output-channel padding
VMEM_LIMIT = 32 * 1024 * 1024       # scoped VMEM (safe on v5e/v6e/v7x)
BLOCK_BYTE_BUDGET = 8 * 1024 * 1024 # per-grid-step VMEM budget for tiling


def _round_up(x, m):
    return ((x + m - 1) // m) * m


def _cdiv(a, b):
    return -(-a // b)


# ---------------------------------------------------------------------------
# Pallas kernels
# ---------------------------------------------------------------------------
def _conv_relu_pool_kernel(x_ref, w_ref, b_ref, o_ref):
    """Fused conv-as-GEMM + 2x2 max-pool + bias + ReLU.

    x_ref: (4*tile, K) bf16 — im2col rows ordered (tap, row)
    w_ref: (K, C) bf16, b_ref: (1, C) f32, o_ref: (tile, C) bf16
    """
    tile = o_ref.shape[0]
    # ONE MXU GEMM covering all 4 pooling taps.
    z = jnp.dot(x_ref[...], w_ref[...], preferred_element_type=jnp.float32)
    # 2x2 max-pool = max over the 4 tap row-blocks (tile-aligned slices).
    m = jnp.maximum(jnp.maximum(z[:tile], z[tile:2 * tile]),
                    jnp.maximum(z[2 * tile:3 * tile], z[3 * tile:4 * tile]))
    # relu(max(taps) + b) == max(relu(taps + b)); bias/ReLU applied once.
    o_ref[...] = jnp.maximum(m + b_ref[...], 0.0).astype(o_ref.dtype)


# ---------------------------------------------------------------------------
# XLA glue: tap-ordered im2col (pure data movement, no FLOPs)
# ---------------------------------------------------------------------------
def _pooled_im2col(x_nhwc, kh, kw, hp, wp, *, batch_major):
    """Valid-conv patches at pooled output positions only.

    Returns (4, rows, kh*kw*Cin) bf16; tap t = di*2+dj is the 2x2-pool offset.
    Rows ordered (n, ph, pw) if batch_major else (ph, pw, n); K ordering is
    (ki, kj, cin) with cin fastest (matches HWIO weight reshape).
    """
    N, H, W, C = x_nhwc.shape
    slabs = []
    for di in (0, 1):
        for dj in (0, 1):
            cols = jnp.stack(
                [x_nhwc[:, di + ki: di + ki + 2 * hp: 2,
                         dj + kj: dj + kj + 2 * wp: 2, :]
                 for ki in range(kh) for kj in range(kw)],
                axis=3)                                   # (N, hp, wp, kh*kw, C)
            if not batch_major:
                cols = jnp.transpose(cols, (1, 2, 0, 3, 4))
            slabs.append(cols.reshape(N * hp * wp, kh * kw * C))
    return jnp.stack(slabs, axis=0).astype(jnp.bfloat16)  # (4, rows, K)


# ---------------------------------------------------------------------------
# pallas_call wrappers
# ---------------------------------------------------------------------------
def _conv_relu_pool(x_nhwc, w_hwio, b):
    """max_pool2d(relu(conv2d(x, w) + b), 2) in NHWC, one fused Pallas kernel."""
    N, H, W, Cin = x_nhwc.shape
    KH, KW, wcin, Cout = w_hwio.shape
    assert wcin == Cin, (wcin, Cin)
    Ho, Wo = H - KH + 1, W - KW + 1
    Hp, Wp = Ho // 2, Wo // 2

    x4 = _pooled_im2col(x_nhwc, KH, KW, Hp, Wp, batch_major=True)   # (4, M, K)
    M, K = x4.shape[1], x4.shape[2]
    Kp = _round_up(K, 128) if K > 128 else K        # clean lane tiling of K

    # VMEM-budget-driven M tiling: 1 block at small sizes, grows with batch.
    m_blocks = 1
    while True:
        tile = _round_up(_cdiv(M, m_blocks), 16)
        blk_bytes = (2 * (4 * tile * Kp * 2)        # double-buffered slab block
                     + 2 * (tile * Cout * 2)        # output block
                     + 2 * (Kp * Cout * 2))         # weight
        if blk_bytes <= BLOCK_BYTE_BUDGET or tile <= 16:
            break
        m_blocks += 1
    m_pad = m_blocks * tile

    x4p = jnp.pad(x4, ((0, 0), (0, m_pad - M), (0, Kp - K)))
    # Row order (block, tap, row) so every grid step reads a plain 2-D slab.
    slab = (x4p.reshape(4, m_blocks, tile, Kp)
               .transpose(1, 0, 2, 3)
               .reshape(m_blocks * 4 * tile, Kp))
    w_mat = jnp.pad(w_hwio.reshape(KH * KW * Cin, Cout).astype(jnp.bfloat16),
                    ((0, Kp - K), (0, 0)))
    b_row = b.reshape(1, Cout).astype(jnp.float32)

    out = pl.pallas_call(
        _conv_relu_pool_kernel,
        out_shape=jax.ShapeDtypeStruct((m_pad, Cout), jnp.bfloat16),
        grid=(m_blocks,),
        in_specs=[
            pl.BlockSpec((4 * tile, Kp), lambda i: (i, 0)),
            pl.BlockSpec((Kp, Cout), lambda i: (0, 0)),
            pl.BlockSpec((1, Cout), lambda i: (0, 0)),
        ],
        out_specs=pl.BlockSpec((tile, Cout), lambda i: (i, 0)),
        compiler_params=pltpu.CompilerParams(
            dimension_semantics=("parallel",),
            vmem_limit_bytes=VMEM_LIMIT),
    )(slab, w_mat, b_row)
    return out[:M].reshape(N, Hp, Wp, Cout)


def _conv3_fc_head(x_nhwc, w_hwio, b3, fw1, fb1, fw2, fb2):
    """conv3 + relu + pool + NCHW-flatten + fc1 + relu + fc2 + softmax, fused."""
    N, H, W, Cin = x_nhwc.shape
    KH, KW, wcin, Cout = w_hwio.shape
    assert wcin == Cin, (wcin, Cin)
    Ho, Wo = H - KH + 1, W - KW + 1
    Hp, Wp = Ho // 2, Wo // 2
    S = Hp * Wp                                           # spatial positions (4)
    Dh = fw1.shape[1]
    O = fw2.shape[1]
    assert fw1.shape[0] == Cout * S

    x4 = _pooled_im2col(x_nhwc, KH, KW, Hp, Wp, batch_major=False)  # (4, S*N, K)
    K = x4.shape[2]
    Kp = _round_up(K, 128) if K > 128 else K

    # VMEM-budget-driven batch tiling (1 block at small N; parallel grid later).
    per_sample = 2 * (4 * S * Kp * 2 + S * Cout * 4)
    n_blocks = 1
    while True:
        ntile = _cdiv(N, n_blocks)
        if n_blocks > 1:
            ntile = _round_up(ntile, 16)
        if ntile * per_sample <= BLOCK_BYTE_BUDGET or ntile <= 16:
            break
        n_blocks += 1
    n_pad = n_blocks * ntile

    x4 = x4.reshape(4, S, N, K)
    x4 = jnp.pad(x4, ((0, 0), (0, 0), (0, n_pad - N), (0, Kp - K)))
    # Row order (batch-block, tap, s, n) -> each grid step is a plain 2-D slab.
    slab = (x4.reshape(4, S, n_blocks, ntile, Kp)
              .transpose(2, 0, 1, 3, 4)
              .reshape(n_blocks * 4 * S * ntile, Kp))

    w3_mat = jnp.pad(w_hwio.reshape(KH * KW * Cin, Cout).astype(jnp.bfloat16),
                     ((0, Kp - K), (0, 0)))
    b3_row = b3.reshape(1, Cout).astype(jnp.float32)
    # fc1 expects the NCHW flatten (row index c*S + s); the in-kernel fc1 input
    # has columns ordered (s, c), so pre-permute fw1 rows to (s*C + c).
    w1_mat = (fw1.reshape(Cout, S, Dh).transpose(1, 0, 2)
                 .reshape(S * Cout, Dh).astype(jnp.bfloat16))
    b1_row = fb1.reshape(1, Dh).astype(jnp.float32)
    w2_mat = fw2.astype(jnp.bfloat16)
    b2_row = fb2.reshape(1, O).astype(jnp.float32)

    def kernel(x_ref, w3_ref, b3_ref, w1_ref, b1_ref, w2_ref, b2_ref, o_ref):
        sn = S * ntile
        # conv3: ONE GEMM over all (tap, s, n) rows.
        z = jnp.dot(x_ref[...], w3_ref[...], preferred_element_type=jnp.float32)
        m = jnp.maximum(jnp.maximum(z[:sn], z[sn:2 * sn]),
                        jnp.maximum(z[2 * sn:3 * sn], z[3 * sn:4 * sn]))
        p = jnp.maximum(m + b3_ref[...], 0.0).astype(jnp.bfloat16)   # (S*ntile, C), rows (s, n)
        # NCHW flatten realized as a lane-dim concat -> (ntile, S*C); one fc1 GEMM.
        q = jnp.concatenate(
            [p[s * ntile:(s + 1) * ntile] for s in range(S)], axis=1)
        h = jnp.dot(q, w1_ref[...], preferred_element_type=jnp.float32) + b1_ref[...]
        h = jnp.maximum(h, 0.0).astype(jnp.bfloat16)
        logits = jnp.dot(h, w2_ref[...], preferred_element_type=jnp.float32) + b2_ref[...]
        logits = logits - jnp.max(logits, axis=-1, keepdims=True)
        e = jnp.exp(logits)
        o_ref[...] = e / jnp.sum(e, axis=-1, keepdims=True)

    out = pl.pallas_call(
        kernel,
        out_shape=jax.ShapeDtypeStruct((n_pad, O), jnp.float32),
        grid=(n_blocks,),
        in_specs=[
            pl.BlockSpec((4 * S * ntile, Kp), lambda i: (i, 0)),
            pl.BlockSpec((Kp, Cout), lambda i: (0, 0)),
            pl.BlockSpec((1, Cout), lambda i: (0, 0)),
            pl.BlockSpec((S * Cout, Dh), lambda i: (0, 0)),
            pl.BlockSpec((1, Dh), lambda i: (0, 0)),
            pl.BlockSpec((Dh, O), lambda i: (0, 0)),
            pl.BlockSpec((1, O), lambda i: (0, 0)),
        ],
        out_specs=pl.BlockSpec((ntile, O), lambda i: (i, 0)),
        compiler_params=pltpu.CompilerParams(
            dimension_semantics=("parallel",),
            vmem_limit_bytes=VMEM_LIMIT),
    )(slab, w3_mat, b3_row, w1_mat, b1_row, w2_mat, b2_row)
    return out[:N]


# ---------------------------------------------------------------------------
# Parameter padding helpers: output channels are zero-padded to 128 lanes
# (zero bias pad + ReLU keeps padded lanes exactly 0; they are sliced away
# before feeding the next layer, so K is never inflated).
# ---------------------------------------------------------------------------
def _pad_conv_w_out(w, cout_pad):
    return jnp.pad(w, ((0, 0), (0, 0), (0, 0), (0, cout_pad - w.shape[3])))


def _pad_vec(b, cpad):
    return jnp.pad(b, (0, cpad - b.shape[0]))


# ---------------------------------------------------------------------------
# Parameters (deterministic, matching nn.Module shapes) and forward pass
# ---------------------------------------------------------------------------
def init_params(key):
    ks = jax.random.split(key, 10)

    def u(k, shape, fan_in):
        bound = 1.0 / (fan_in ** 0.5)
        return jax.random.uniform(k, shape, jnp.float32, -bound, bound)

    return {
        # conv weights stored as (KH, KW, Cin, Cout)
        "w1": u(ks[0], (5, 5, 1, 46), 1 * 25),    "b1": u(ks[1], (46,), 1 * 25),
        "w2": u(ks[2], (5, 5, 46, 82), 46 * 25),  "b2": u(ks[3], (82,), 46 * 25),
        "w3": u(ks[4], (5, 5, 82, 128), 82 * 25), "b3": u(ks[5], (128,), 82 * 25),
        # fc weights stored as (in, out); _to_linear = 128*2*2 = 512
        "fw1": u(ks[6], (512, 512), 512), "fb1": u(ks[7], (512,), 512),
        "fw2": u(ks[8], (512, 2), 512),   "fb2": u(ks[9], (2,), 512),
    }


@jax.jit
def net_forward(params, x_nchw):
    x = jnp.transpose(x_nchw, (0, 2, 3, 1)).astype(jnp.bfloat16)    # NCHW -> NHWC

    # conv1: 1 -> 46 (out channels zero-padded to 128 for lane-dense stores)
    w1 = _pad_conv_w_out(params["w1"], CPAD)
    b1 = _pad_vec(params["b1"], CPAD)
    x = _conv_relu_pool(x, w1, b1)                                   # (N, 23, 23, 128)

    # conv2: 46 -> 82; contract only over the 46 real input channels
    w2 = _pad_conv_w_out(params["w2"], CPAD)
    b2 = _pad_vec(params["b2"], CPAD)
    x = _conv_relu_pool(x[..., :params["w2"].shape[2]], w2, b2)      # (N, 9, 9, 128)

    # conv3 (82 real in, 128 real out) + pool + NCHW flatten + fc1 + relu +
    # fc2 + softmax, single fused kernel
    x = x[..., :params["w3"].shape[2]]
    return _conv3_fc_head(x, params["w3"], params["b3"],
                          params["fw1"], params["fb1"],
                          params["fw2"], params["fb2"])              # (N, 2)


if __name__ == "__main__":
    key = jax.random.PRNGKey(0)
    pkey, xkey = jax.random.split(key)
    params = init_params(pkey)
    x = jax.random.normal(xkey, (2, 1, 50, 50), jnp.float32)         # NCHW like PyTorch

    out = net_forward(params, x)
    out = jax.block_until_ready(out)

    assert out.shape == (2, 2), out.shape
    assert bool(jnp.all(jnp.isfinite(out)))
    row_sums = jnp.sum(out, axis=1)
    assert bool(jnp.all(jnp.abs(row_sums - 1.0) < 1e-3)), row_sums
    print("KERNEL_OK")
</pallas_src>

<mosaic_0001>
module attributes {stable_mosaic.version = 11 : i64} {
  func.func @_conv_relu_pool_kernel(%arg0: i32, %arg1: memref<4288x25xbf16, #tpu.memory_space<vmem>>, %arg2: memref<25x128xbf16, #tpu.memory_space<vmem>>, %arg3: memref<1x128xf32, #tpu.memory_space<vmem>>, %arg4: memref<1072x128xbf16, #tpu.memory_space<vmem>>) attributes {dimension_semantics = [#tpu.dimension_semantics<parallel>], iteration_bounds = array<i64: 1>, scalar_prefetch = 0 : i64, scratch_operands = 0 : i64, tpu.core_type = #tpu.core_type<tc>, window_params = [{transform_indices = @transform_0, window_bounds = array<i64: 4288, 25>}, {pipeline_mode = #tpu.pipeline_mode<synchronous>, transform_indices = @transform_1, window_bounds = array<i64: 25, 128>}, {pipeline_mode = #tpu.pipeline_mode<synchronous>, transform_indices = @transform_2, window_bounds = array<i64: 1, 128>}, {transform_indices = @transform_3, window_bounds = array<i64: 1072, 128>}]} {
    %c0 = arith.constant 0 : index
    %c0_0 = arith.constant 0 : index
    %0 = vector.load %arg1[%c0, %c0_0] : memref<4288x25xbf16, #tpu.memory_space<vmem>>, vector<4288x25xbf16>
    %c0_1 = arith.constant 0 : index
    %c0_2 = arith.constant 0 : index
    %1 = vector.load %arg2[%c0_1, %c0_2] : memref<25x128xbf16, #tpu.memory_space<vmem>>, vector<25x128xbf16>
    %cst = arith.constant dense<0.000000e+00> : vector<4288x128xf32>
    %2 = tpu.matmul %0, %1, %cst {dimension_numbers = #tpu.dot_dimension_numbers<[1], [0], [0], [1], [0, 0, 1, 1], [], []>} : vector<4288x25xbf16>, vector<25x128xbf16>, vector<4288x128xf32> -> vector<4288x128xf32>
    %3 = vector.extract_strided_slice %2 {offsets = [0, 0], sizes = [1072, 128], strides = [1, 1]} : vector<4288x128xf32> to vector<1072x128xf32>
    %4 = vector.extract_strided_slice %2 {offsets = [1072, 0], sizes = [1072, 128], strides = [1, 1]} : vector<4288x128xf32> to vector<1072x128xf32>
    %5 = arith.maximumf %3, %4 : vector<1072x128xf32>
    %6 = vector.extract_strided_slice %2 {offsets = [2144, 0], sizes = [1072, 128], strides = [1, 1]} : vector<4288x128xf32> to vector<1072x128xf32>
    %7 = vector.extract_strided_slice %2 {offsets = [3216, 0], sizes = [1072, 128], strides = [1, 1]} : vector<4288x128xf32> to vector<1072x128xf32>
    %8 = arith.maximumf %6, %7 : vector<1072x128xf32>
    %9 = arith.maximumf %5, %8 : vector<1072x128xf32>
    %c0_3 = arith.constant 0 : index
    %c0_4 = arith.constant 0 : index
    %10 = vector.load %arg3[%c0_3, %c0_4] : memref<1x128xf32, #tpu.memory_space<vmem>>, vector<1x128xf32>
    %11 = vector.broadcast %10 : vector<1x128xf32> to vector<1072x128xf32>
    %12 = arith.addf %9, %11 : vector<1072x128xf32>
    %cst_5 = arith.constant 0.000000e+00 : f32
    %13 = vector.broadcast %cst_5 : f32 to vector<1072x128xf32>
    %14 = arith.maximumf %12, %13 : vector<1072x128xf32>
    %15 = arith.truncf %14 : vector<1072x128xf32> to vector<1072x128xbf16>
    %c0_6 = arith.constant 0 : index
    %c0_7 = arith.constant 0 : index
    %16 = vector.load %arg4[%c0_6, %c0_7] : memref<1072x128xbf16, #tpu.memory_space<vmem>>, vector<1072x128xbf16>
    tpu.vector_store %arg4[%c0_6, %c0_7], %15 {strides = array<i32>} : memref<1072x128xbf16, #tpu.memory_space<vmem>>, vector<1072x128xbf16>,
    return
  }
  func.func @transform_0(%arg0: i32) -> (i32, i32) {
    %c0_i32 = arith.constant 0 : i32
    %c0_i32_0 = arith.constant 0 : i32
    return %arg0, %c0_i32 : i32, i32
  }
  func.func @transform_1(%arg0: i32) -> (i32, i32) {
    %c0_i32 = arith.constant 0 : i32
    %c0_i32_0 = arith.constant 0 : i32
    %c0_i32_1 = arith.constant 0 : i32
    return %c0_i32, %c0_i32_0 : i32, i32
  }
  func.func @transform_2(%arg0: i32) -> (i32, i32) {
    %c0_i32 = arith.constant 0 : i32
    %c0_i32_0 = arith.constant 0 : i32
    %c0_i32_1 = arith.constant 0 : i32
    return %c0_i32, %c0_i32_0 : i32, i32
  }
  func.func @transform_3(%arg0: i32) -> (i32, i32) {
    %c0_i32 = arith.constant 0 : i32
    %c0_i32_0 = arith.constant 0 : i32
    return %arg0, %c0_i32 : i32, i32
  }
}

module attributes {stable_mosaic.version = 11 : i64} {
  func.func @_conv_relu_pool_kernel(%arg0: i32, %arg1: memref<704x1152xbf16, #tpu.memory_space<vmem>>, %arg2: memref<1152x128xbf16, #tpu.memory_space<vmem>>, %arg3: memref<1x128xf32, #tpu.memory_space<vmem>>, %arg4: memref<176x128xbf16, #tpu.memory_space<vmem>>) attributes {dimension_semantics = [#tpu.dimension_semantics<parallel>], iteration_bounds = array<i64: 1>, scalar_prefetch = 0 : i64, scratch_operands = 0 : i64, tpu.core_type = #tpu.core_type<tc>, window_params = [{transform_indices = @transform_0, window_bounds = array<i64: 704, 1152>}, {pipeline_mode = #tpu.pipeline_mode<synchronous>, transform_indices = @transform_1, window_bounds = array<i64: 1152, 128>}, {pipeline_mode = #tpu.pipeline_mode<synchronous>, transform_indices = @transform_2, window_bounds = array<i64: 1, 128>}, {transform_indices = @transform_3, window_bounds = array<i64: 176, 128>}]} {
    %c0 = arith.constant 0 : index
    %c0_0 = arith.constant 0 : index
    %0 = vector.load %arg1[%c0, %c0_0] : memref<704x1152xbf16, #tpu.memory_space<vmem>>, vector<704x1152xbf16>
    %c0_1 = arith.constant 0 : index
    %c0_2 = arith.constant 0 : index
    %1 = vector.load %arg2[%c0_1, %c0_2] : memref<1152x128xbf16, #tpu.memory_space<vmem>>, vector<1152x128xbf16>
    %cst = arith.constant dense<0.000000e+00> : vector<704x128xf32>
    %2 = tpu.matmul %0, %1, %cst {dimension_numbers = #tpu.dot_dimension_numbers<[1], [0], [0], [1], [0, 0, 1, 1], [], []>} : vector<704x1152xbf16>, vector<1152x128xbf16>, vector<704x128xf32> -> vector<704x128xf32>
    %3 = vector.extract_strided_slice %2 {offsets = [0, 0], sizes = [176, 128], strides = [1, 1]} : vector<704x128xf32> to vector<176x128xf32>
    %4 = vector.extract_strided_slice %2 {offsets = [176, 0], sizes = [176, 128], strides = [1, 1]} : vector<704x128xf32> to vector<176x128xf32>
    %5 = arith.maximumf %3, %4 : vector<176x128xf32>
    %6 = vector.extract_strided_slice %2 {offsets = [352, 0], sizes = [176, 128], strides = [1, 1]} : vector<704x128xf32> to vector<176x128xf32>
    %7 = vector.extract_strided_slice %2 {offsets = [528, 0], sizes = [176, 128], strides = [1, 1]} : vector<704x128xf32> to vector<176x128xf32>
    %8 = arith.maximumf %6, %7 : vector<176x128xf32>
    %9 = arith.maximumf %5, %8 : vector<176x128xf32>
    %c0_3 = arith.constant 0 : index
    %c0_4 = arith.constant 0 : index
    %10 = vector.load %arg3[%c0_3, %c0_4] : memref<1x128xf32, #tpu.memory_space<vmem>>, vector<1x128xf32>
    %11 = vector.broadcast %10 : vector<1x128xf32> to vector<176x128xf32>
    %12 = arith.addf %9, %11 : vector<176x128xf32>
    %cst_5 = arith.constant 0.000000e+00 : f32
    %13 = vector.broadcast %cst_5 : f32 to vector<176x128xf32>
    %14 = arith.maximumf %12, %13 : vector<176x128xf32>
    %15 = arith.truncf %14 : vector<176x128xf32> to vector<176x128xbf16>
    %c0_6 = arith.constant 0 : index
    %c0_7 = arith.constant 0 : index
    %16 = vector.load %arg4[%c0_6, %c0_7] : memref<176x128xbf16, #tpu.memory_space<vmem>>, vector<176x128xbf16>
    tpu.vector_store %arg4[%c0_6, %c0_7], %15 {strides = array<i32>} : memref<176x128xbf16, #tpu.memory_space<vmem>>, vector<176x128xbf16>,
    return
  }
  func.func @transform_0(%arg0: i32) -> (i32, i32) {
    %c0_i32 = arith.constant 0 : i32
    %c0_i32_0 = arith.constant 0 : i32
    return %arg0, %c0_i32 : i32, i32
  }
  func.func @transform_1(%arg0: i32) -> (i32, i32) {
    %c0_i32 = arith.constant 0 : i32
    %c0_i32_0 = arith.constant 0 : i32
    %c0_i32_1 = arith.constant 0 : i32
    return %c0_i32, %c0_i32_0 : i32, i32
  }
  func.func @transform_2(%arg0: i32) -> (i32, i32) {
    %c0_i32 = arith.constant 0 : i32
    %c0_i32_0 = arith.constant 0 : i32
    %c0_i32_1 = arith.constant 0 : i32
    return %c0_i32, %c0_i32_0 : i32, i32
  }
  func.func @transform_3(%arg0: i32) -> (i32, i32) {
    %c0_i32 = arith.constant 0 : i32
    %c0_i32_0 = arith.constant 0 : i32
    return %arg0, %c0_i32 : i32, i32
  }
}

module attributes {stable_mosaic.version = 11 : i64} {
  func.func @kernel(%arg0: i32, %arg1: memref<32x2176xbf16, #tpu.memory_space<vmem>>, %arg2: memref<2176x128xbf16, #tpu.memory_space<vmem>>, %arg3: memref<1x128xf32, #tpu.memory_space<vmem>>, %arg4: memref<512x512xbf16, #tpu.memory_space<vmem>>, %arg5: memref<1x512xf32, #tpu.memory_space<vmem>>, %arg6: memref<512x2xbf16, #tpu.memory_space<vmem>>, %arg7: memref<1x2xf32, #tpu.memory_space<vmem>>, %arg8: memref<2x2xf32, #tpu.memory_space<vmem>>) attributes {dimension_semantics = [#tpu.dimension_semantics<parallel>], iteration_bounds = array<i64: 1>, scalar_prefetch = 0 : i64, scratch_operands = 0 : i64, tpu.core_type = #tpu.core_type<tc>, window_params = [{transform_indices = @transform_0, window_bounds = array<i64: 32, 2176>}, {pipeline_mode = #tpu.pipeline_mode<synchronous>, transform_indices = @transform_1, window_bounds = array<i64: 2176, 128>}, {pipeline_mode = #tpu.pipeline_mode<synchronous>, transform_indices = @transform_2, window_bounds = array<i64: 1, 128>}, {pipeline_mode = #tpu.pipeline_mode<synchronous>, transform_indices = @transform_3, window_bounds = array<i64: 512, 512>}, {pipeline_mode = #tpu.pipeline_mode<synchronous>, transform_indices = @transform_4, window_bounds = array<i64: 1, 512>}, {pipeline_mode = #tpu.pipeline_mode<synchronous>, transform_indices = @transform_5, window_bounds = array<i64: 512, 2>}, {pipeline_mode = #tpu.pipeline_mode<synchronous>, transform_indices = @transform_6, window_bounds = array<i64: 1, 2>}, {transform_indices = @transform_7, window_bounds = array<i64: 2, 2>}]} {
    %c0 = arith.constant 0 : index
    %c0_0 = arith.constant 0 : index
    %0 = vector.load %arg1[%c0, %c0_0] : memref<32x2176xbf16, #tpu.memory_space<vmem>>, vector<32x2176xbf16>
    %c0_1 = arith.constant 0 : index
    %c0_2 = arith.constant 0 : index
    %1 = vector.load %arg2[%c0_1, %c0_2] : memref<2176x128xbf16, #tpu.memory_space<vmem>>, vector<2176x128xbf16>
    %cst = arith.constant dense<0.000000e+00> : vector<32x128xf32>
    %2 = tpu.matmul %0, %1, %cst {dimension_numbers = #tpu.dot_dimension_numbers<[1], [0], [0], [1], [0, 0, 1, 1], [], []>} : vector<32x2176xbf16>, vector<2176x128xbf16>, vector<32x128xf32> -> vector<32x128xf32>
    %3 = vector.extract_strided_slice %2 {offsets = [0, 0], sizes = [8, 128], strides = [1, 1]} : vector<32x128xf32> to vector<8x128xf32>
    %4 = vector.extract_strided_slice %2 {offsets = [8, 0], sizes = [8, 128], strides = [1, 1]} : vector<32x128xf32> to vector<8x128xf32>
    %5 = arith.maximumf %3, %4 : vector<8x128xf32>
    %6 = vector.extract_strided_slice %2 {offsets = [16, 0], sizes = [8, 128], strides = [1, 1]} : vector<32x128xf32> to vector<8x128xf32>
    %7 = vector.extract_strided_slice %2 {offsets = [24, 0], sizes = [8, 128], strides = [1, 1]} : vector<32x128xf32> to vector<8x128xf32>
    %8 = arith.maximumf %6, %7 : vector<8x128xf32>
    %9 = arith.maximumf %5, %8 : vector<8x128xf32>
    %c0_3 = arith.constant 0 : index
    %c0_4 = arith.constant 0 : index
    %10 = vector.load %arg3[%c0_3, %c0_4] : memref<1x128xf32, #tpu.memory_space<vmem>>, vector<1x128xf32>
    %11 = vector.broadcast %10 : vector<1x128xf32> to vector<8x128xf32>
    %12 = arith.addf %9, %11 : vector<8x128xf32>
    %cst_5 = arith.constant 0.000000e+00 : f32
    %13 = vector.broadcast %cst_5 : f32 to vector<8x128xf32>
    %14 = arith.maximumf %12, %13 : vector<8x128xf32>
    %15 = arith.truncf %14 : vector<8x128xf32> to vector<8x128xbf16>
    %16 = vector.extract_strided_slice %15 {offsets = [0, 0], sizes = [2, 128], strides = [1, 1]} : vector<8x128xbf16> to vector<2x128xbf16>
    %17 = vector.extract_strided_slice %15 {offsets = [2, 0], sizes = [2, 128], strides = [1, 1]} : vector<8x128xbf16> to vector<2x128xbf16>
    %18 = vector.extract_strided_slice %15 {offsets = [4, 0], sizes = [2, 128], strides = [1, 1]} : vector<8x128xbf16> to vector<2x128xbf16>
    %19 = vector.extract_strided_slice %15 {offsets = [6, 0], sizes = [2, 128], strides = [1, 1]} : vector<8x128xbf16> to vector<2x128xbf16>
    %20 = tpu.concatenate %16, %17, %18, %19 in 1 : vector<2x128xbf16>, vector<2x128xbf16>, vector<2x128xbf16>, vector<2x128xbf16> -> vector<2x512xbf16>
    %c0_6 = arith.constant 0 : index
    %c0_7 = arith.constant 0 : index
    %21 = vector.load %arg4[%c0_6, %c0_7] : memref<512x512xbf16, #tpu.memory_space<vmem>>, vector<512x512xbf16>
    %cst_8 = arith.constant dense<0.000000e+00> : vector<2x512xf32>
    %22 = tpu.matmul %20, %21, %cst_8 {dimension_numbers = #tpu.dot_dimension_numbers<[1], [0], [0], [1], [0, 0, 1, 1], [], []>} : vector<2x512xbf16>, vector<512x512xbf16>, vector<2x512xf32> -> vector<2x512xf32>
    %c0_9 = arith.constant 0 : index
    %c0_10 = arith.constant 0 : index
    %23 = vector.load %arg5[%c0_9, %c0_10] : memref<1x512xf32, #tpu.memory_space<vmem>>, vector<1x512xf32>
    %24 = vector.broadcast %23 : vector<1x512xf32> to vector<2x512xf32>
    %25 = arith.addf %22, %24 : vector<2x512xf32>
    %cst_11 = arith.constant 0.000000e+00 : f32
    %26 = vector.broadcast %cst_11 : f32 to vector<2x512xf32>
    %27 = arith.maximumf %25, %26 : vector<2x512xf32>
    %28 = arith.truncf %27 : vector<2x512xf32> to vector<2x512xbf16>
    %c0_12 = arith.constant 0 : index
    %c0_13 = arith.constant 0 : index
    %29 = vector.load %arg6[%c0_12, %c0_13] : memref<512x2xbf16, #tpu.memory_space<vmem>>, vector<512x2xbf16>
    %cst_14 = arith.constant dense<0.000000e+00> : vector<2x2xf32>
    %30 = tpu.matmul %28, %29, %cst_14 {dimension_numbers = #tpu.dot_dimension_numbers<[1], [0], [0], [1], [0, 0, 1, 1], [], []>} : vector<2x512xbf16>, vector<512x2xbf16>, vector<2x2xf32> -> vector<2x2xf32>
    %c0_15 = arith.constant 0 : index
    %c0_16 = arith.constant 0 : index
    %31 = vector.load %arg7[%c0_15, %c0_16] : memref<1x2xf32, #tpu.memory_space<vmem>>, vector<1x2xf32>
    %32 = vector.broadcast %31 : vector<1x2xf32> to vector<2x2xf32>
    %33 = arith.addf %30, %32 : vector<2x2xf32>
    %cst_17 = arith.constant dense<0xFF800000> : vector<2xf32>
    %34 = vector.multi_reduction <maximumf>, %33, %cst_17 [1] : vector<2x2xf32> to vector<2xf32>
    %35 = vector.shape_cast %34 : vector<2xf32> to vector<2x1xf32>
    %36 = vector.broadcast %35 : vector<2x1xf32> to vector<2x2xf32>
    %37 = arith.subf %33, %36 : vector<2x2xf32>
    %38 = math.exp %37 : vector<2x2xf32>
    %cst_18 = arith.constant dense<0.000000e+00> : vector<2xf32>
    %39 = vector.multi_reduction <add>, %38, %cst_18 [1] : vector<2x2xf32> to vector<2xf32>
    %40 = vector.shape_cast %39 : vector<2xf32> to vector<2x1xf32>
    %41 = vector.broadcast %40 : vector<2x1xf32> to vector<2x2xf32>
    %42 = arith.divf %38, %41 : vector<2x2xf32>
    %c0_19 = arith.constant 0 : index
    %c0_20 = arith.constant 0 : index
    %43 = vector.load %arg8[%c0_19, %c0_20] : memref<2x2xf32, #tpu.memory_space<vmem>>, vector<2x2xf32>
    tpu.vector_store %arg8[%c0_19, %c0_20], %42 {strides = array<i32>} : memref<2x2xf32, #tpu.memory_space<vmem>>, vector<2x2xf32>,
    return
  }
  func.func @transform_0(%arg0: i32) -> (i32, i32) {
    %c0_i32 = arith.constant 0 : i32
    %c0_i32_0 = arith.constant 0 : i32
    return %arg0, %c0_i32 : i32, i32
  }
  func.func @transform_1(%arg0: i32) -> (i32, i32) {
    %c0_i32 = arith.constant 0 : i32
    %c0_i32_0 = arith.constant 0 : i32
    %c0_i32_1 = arith.constant 0 : i32
    return %c0_i32, %c0_i32_0 : i32, i32
  }
  func.func @transform_2(%arg0: i32) -> (i32, i32) {
    %c0_i32 = arith.constant 0 : i32
    %c0_i32_0 = arith.constant 0 : i32
    %c0_i32_1 = arith.constant 0 : i32
    return %c0_i32, %c0_i32_0 : i32, i32
  }
  func.func @transform_3(%arg0: i32) -> (i32, i32) {
    %c0_i32 = arith.constant 0 : i32
    %c0_i32_0 = arith.constant 0 : i32
    %c0_i32_1 = arith.constant 0 : i32
    return %c0_i32, %c0_i32_0 : i32, i32
  }
  func.func @transform_4(%arg0: i32) -> (i32, i32) {
    %c0_i32 = arith.constant 0 : i32
    %c0_i32_0 = arith.constant 0 : i32
    %c0_i32_1 = arith.constant 0 : i32
    return %c0_i32, %c0_i32_0 : i32, i32
  }
  func.func @transform_5(%arg0: i32) -> (i32, i32) {
    %c0_i32 = arith.constant 0 : i32
    %c0_i32_0 = arith.constant 0 : i32
    %c0_i32_1 = arith.constant 0 : i32
    return %c0_i32, %c0_i32_0 : i32, i32
  }
  func.func @transform_6(%arg0: i32) -> (i32, i32) {
    %c0_i32 = arith.constant 0 : i32
    %c0_i32_0 = arith.constant 0 : i32
    %c0_i32_1 = arith.constant 0 : i32
    return %c0_i32, %c0_i32_0 : i32, i32
  }
  func.func @transform_7(%arg0: i32) -> (i32, i32) {
    %c0_i32 = arith.constant 0 : i32
    %c0_i32_0 = arith.constant 0 : i32
    return %arg0, %c0_i32 : i32, i32
  }
}

</mosaic_0001>

<llo_original>
// kernel: net_forward.3
$region0: #{net_forward.3}
  #allocation0 [shape = 'u32[]', space=smem, size = 0x4, offset = 0x4, fixed_abs, tag = 'smem constant byte address 0x4 - core index']
  #allocation1 [shape = 'u32[144,128]{1,0:T(1,128)}', space=vmem, size = 0x12000, scoped, tag = 'internal scratch']
  %s0 = inlined_call_operand.vmem [shape: bf16[4288,25], index: 0, kind: input, shape index: {}]
  %s1 = inlined_call_operand.vmem [shape: bf16[25,128], index: 1, kind: input, shape index: {}]
  %s2 = inlined_call_operand.vmem [shape: f32[1,128], index: 2, kind: input, shape index: {}]
  %s3 = inlined_call_operand.vmem [shape: bf16[1072,128], index: 3, kind: output, shape index: {}]
  %s4 = sld [smem:[#allocation0]]
  $region22: #{net_forward.3} parent=0
    _
  %s6 = ssub.s32 1, %s4
  %s7 = scalar_select 0, %s6, %s4
  // Predicated region
  $region2: #{net_forward.3} parent=0 // pred_check
    _
  $region3: #{net_forward.3} parent=0 // pred_check_branch
    %9 = sbr.rel (0) target = $region5
  $region4: #{net_forward.3} parent=0 // pred_region
    _
  $region5: #{net_forward.3} parent=0 // pred_fallthru
    _
  // Predicated region
  $region6: #{net_forward.3} parent=0 // pred_check
    _
  $region7: #{net_forward.3} parent=0 // pred_check_branch
    %11 = sbr.rel (0) target = $region9
  $region8: #{net_forward.3} parent=0 // pred_region
    _
  $region9: #{net_forward.3} parent=0 // pred_fallthru
    _
  // Predicated region
  $region10: #{net_forward.3} parent=0 // pred_check
    _
  $region11: #{net_forward.3} parent=0 // pred_check_branch
    %13 = sbr.rel (0) target = $region13
  $region12: #{net_forward.3} parent=0 // pred_region
    _
  $region13: #{net_forward.3} parent=0 // pred_fallthru
    _
  %v15 = vld [vmem:[%s0] sm:$0xf]
  %v16 = vld [vmem:[%s0 + $0x4] sm:$0xf]
  %v17 = vld [vmem:[%s0 + $0x8] sm:$0xf]
  %v18 = vld [vmem:[%s0 + $0xc] sm:$0xf]
  %v19 = vld [vmem:[%s0 + $0x10] sm:$0xf]
  %v20 = vld [vmem:[%s0 + $0x14] sm:$0xf]
  %v21 = vld [vmem:[%s0 + $0x18] sm:$0xf]
  %v22 = vld [vmem:[%s0 + $0x1c] sm:$0xf]
  %v23 = vld [vmem:[%s0 + $0x20] sm:$0xf]
  %v24 = vld [vmem:[%s0 + $0x24] sm:$0xf]
  %v25 = vld [vmem:[%s0 + $0x28] sm:$0xf]
  %v26 = vld [vmem:[%s0 + $0x2c] sm:$0xf]
  %v27 = vld [vmem:[%s0 + $0x30] sm:$0xf]
  %v28 = vld [vmem:[%s0 + $0x34] sm:$0xf]
  %v29 = vld [vmem:[%s0 + $0x38] sm:$0xf]
  %v30 = vld [vmem:[%s0 + $0x3c] sm:$0xf]
  %v31 = vld [vmem:[%s0 + $0x40] sm:$0xf]
  %v32 = vld [vmem:[%s0 + $0x44] sm:$0xf]
  %v33 = vld [vmem:[%s0 + $0x48] sm:$0xf]
  %v34 = vld [vmem:[%s0 + $0x4c] sm:$0xf]
  %v35 = vld [vmem:[%s0 + $0x50] sm:$0xf]
  %v36 = vld [vmem:[%s0 + $0x54] sm:$0xf]
  %v37 = vld [vmem:[%s0 + $0x58] sm:$0xf]
  %v38 = vld [vmem:[%s0 + $0x5c] sm:$0xf]
  %v39 = vld [vmem:[%s0 + $0x60] sm:$0xf]
  %v40 = vld [vmem:[%s0 + $0x64] sm:$0xf]
  %v41 = vld [vmem:[%s0 + $0x68] sm:$0xf]
  %v42 = vld [vmem:[%s0 + $0x6c] sm:$0xf]
  %v43 = vld [vmem:[%s0 + $0x70] sm:$0xf]
  %v44 = vld [vmem:[%s0 + $0x74] sm:$0xf]
  %v45 = vld [vmem:[%s0 + $0x78] sm:$0xf]
  %v46 = vld [vmem:[%s0 + $0x7c] sm:$0xf]
  %v47 = vld [vmem:[%s0 + $0x80] sm:$0xf]
  %v48 = vld [vmem:[%s0 + $0x84] sm:$0xf]
  %v49 = vld [vmem:[%s0 + $0x88] sm:$0xf]
  %v50 = vld [vmem:[%s0 + $0x8c] sm:$0xf]
  %v51 = vld [vmem:[%s0 + $0x90] sm:$0xf]
  %v52 = vld [vmem:[%s0 + $0x94] sm:$0xf]
  %v53 = vld [vmem:[%s0 + $0x98] sm:$0xf]
  %v54 = vld [vmem:[%s0 + $0x9c] sm:$0xf]
  %v55 = vld [vmem:[%s0 + $0xa0] sm:$0xf]
  %v56 = vld [vmem:[%s0 + $0xa4] sm:$0xf]
  %v57 = vld [vmem:[%s0 + $0xa8] sm:$0xf]
  %v58 = vld [vmem:[%s0 + $0xac] sm:$0xf]
  %v59 = vld [vmem:[%s0 + $0xb0] sm:$0xf]
  %v60 = vld [vmem:[%s0 + $0xb4] sm:$0xf]
  %v61 = vld [vmem:[%s0 + $0xb8] sm:$0xf]
  %v62 = vld [vmem:[%s0 + $0xbc] sm:$0xf]
  %v63 = vld [vmem:[%s0 + $0xc0] sm:$0xf]
  %v64 = vld [vmem:[%s0 + $0xc4] sm:$0xf]
  %v65 = vld [vmem:[%s0 + $0xc8] sm:$0xf]
  %v66 = vld [vmem:[%s0 + $0xcc] sm:$0xf]
  %v67 = vld [vmem:[%s0 + $0xd0] sm:$0xf]
  %v68 = vld [vmem:[%s0 + $0xd4] sm:$0xf]
  %v69 = vld [vmem:[%s0 + $0xd8] sm:$0xf]
  %v70 = vld [vmem:[%s0 + $0xdc] sm:$0xf]
  %v71 = vld [vmem:[%s0 + $0xe0] sm:$0xf]
  %v72 = vld [vmem:[%s0 + $0xe4] sm:$0xf]
  %v73 = vld [vmem:[%s0 + $0xe8] sm:$0xf]
  %v74 = vld [vmem:[%s0 + $0xec] sm:$0xf]
  %v75 = vld [vmem:[%s0 + $0xf0] sm:$0xf]
  %v76 = vld [vmem:[%s0 + $0xf4] sm:$0xf]
  %v77 = vld [vmem:[%s0 + $0xf8] sm:$0xf]
  %v78 = vld [vmem:[%s0 + $0xfc] sm:$0xf]
  %v79 = vld [vmem:[%s0 + $0x100] sm:$0xf]
  %v80 = vld [vmem:[%s0 + $0x104] sm:$0xf]
  %v81 = vld [vmem:[%s0 + $0x108] sm:$0xf]
  %v82 = vld [vmem:[%s0 + $0x10c] sm:$0xf]
  %v83 = vld [vmem:[%s0 + $0x110] sm:$0xf]
  %v84 = vld [vmem:[%s0 + $0x114] sm:$0xf]
  %v85 = vld [vmem:[%s0 + $0x118] sm:$0xf]
  %v86 = vld [vmem:[%s0 + $0x11c] sm:$0xf]
  %v87 = vld [vmem:[%s0 + $0x120] sm:$0xf]
  %v88 = vld [vmem:[%s0 + $0x124] sm:$0xf]
  %v89 = vld [vmem:[%s0 + $0x128] sm:$0xf]
  %v90 = vld [vmem:[%s0 + $0x12c] sm:$0xf]
  %v91 = vld [vmem:[%s0 + $0x130] sm:$0xf]
  %v92 = vld [vmem:[%s0 + $0x134] sm:$0xf]
  %v93 = vld [vmem:[%s0 + $0x138] sm:$0xf]
  %v94 = vld [vmem:[%s0 + $0x13c] sm:$0xf]
  %v95 = vld [vmem:[%s0 + $0x140] sm:$0xf]
  %v96 = vld [vmem:[%s0 + $0x144] sm:$0xf]
  %v97 = vld [vmem:[%s0 + $0x148] sm:$0xf]
  %v98 = vld [vmem:[%s0 + $0x14c] sm:$0xf]
  %v99 = vld [vmem:[%s0 + $0x150] sm:$0xf]
  %v100 = vld [vmem:[%s0 + $0x154] sm:$0xf]
  %v101 = vld [vmem:[%s0 + $0x158] sm:$0xf]
  %v102 = vld [vmem:[%s0 + $0x15c] sm:$0xf]
  %v103 = vld [vmem:[%s0 + $0x160] sm:$0xf]
  %v104 = vld [vmem:[%s0 + $0x164] sm:$0xf]
  %v105 = vld [vmem:[%s0 + $0x168] sm:$0xf]
  %v106 = vld [vmem:[%s0 + $0x16c] sm:$0xf]
  %v107 = vld [vmem:[%s0 + $0x170] sm:$0xf]
  %v108 = vld [vmem:[%s0 + $0x174] sm:$0xf]
  %v109 = vld [vmem:[%s0 + $0x178] sm:$0xf]
  %v110 = vld [vmem:[%s0 + $0x17c] sm:$0xf]
  %v111 = vld [vmem:[%s0 + $0x180] sm:$0xf]
  %v112 = vld [vmem:[%s0 + $0x184] sm:$0xf]
  %v113 = vld [vmem:[%s0 + $0x188] sm:$0xf]
  %v114 = vld [vmem:[%s0 + $0x18c] sm:$0xf]
  %v115 = vld [vmem:[%s0 + $0x190] sm:$0xf]
  %v116 = vld [vmem:[%s0 + $0x194] sm:$0xf]
  %v117 = vld [vmem:[%s0 + $0x198] sm:$0xf]
  %v118 = vld [vmem:[%s0 + $0x19c] sm:$0xf]
  %v119 = vld [vmem:[%s0 + $0x1a0] sm:$0xf]
  %v120 = vld [vmem:[%s0 + $0x1a4] sm:$0xf]
  %v121 = vld [vmem:[%s0 + $0x1a8] sm:$0xf]
  %v122 = vld [vmem:[%s0 + $0x1ac] sm:$0xf]
  %v123 = vld [vmem:[%s0 + $0x1b0] sm:$0xf]
  %v124 = vld [vmem:[%s0 + $0x1b4] sm:$0xf]
  %v125 = vld [vmem:[%s0 + $0x1b8] sm:$0xf]
  %v126 = vld [vmem:[%s0 + $0x1bc] sm:$0xf]
  %v127 = vld [vmem:[%s0 + $0x1c0] sm:$0xf]
  %v128 = vld [vmem:[%s0 + $0x1c4] sm:$0xf]
  %v129 = vld [vmem:[%s0 + $0x1c8] sm:$0xf]
  %v130 = vld [vmem:[%s0 + $0x1cc] sm:$0xf]
  %v131 = vld [vmem:[%s0 + $0x1d0] sm:$0xf]
  %v132 = vld [vmem:[%s0 + $0x1d4] sm:$0xf]
  %v133 = vld [vmem:[%s0 + $0x1d8] sm:$0xf]
  %v134 = vld [vmem:[%s0 + $0x1dc] sm:$0xf]
  %v135 = vld [vmem:[%s0 + $0x1e0] sm:$0xf]
  %v136 = vld [vmem:[%s0 + $0x1e4] sm:$0xf]
  %v137 = vld [vmem:[%s0 + $0x1e8] sm:$0xf]
  %v138 = vld [vmem:[%s0 + $0x1ec] sm:$0xf]
  %v139 = vld [vmem:[%s0 + $0x1f0] sm:$0xf]
  %v140 = vld [vmem:[%s0 + $0x1f4] sm:$0xf]
  %v141 = vld [vmem:[%s0 + $0x1f8] sm:$0xf]
  %v142 = vld [vmem:[%s0 + $0x1fc] sm:$0xf]
  %v143 = vld [vmem:[%s0 + $0x200] sm:$0xf]
  %v144 = vld [vmem:[%s0 + $0x204] sm:$0xf]
  %v145 = vld [vmem:[%s0 + $0x208] sm:$0xf]
  %v146 = vld [vmem:[%s0 + $0x20c] sm:$0xf]
  %v147 = vld [vmem:[%s0 + $0x210] sm:$0xf]
  %v148 = vld [vmem:[%s0 + $0x214] sm:$0xf]
  %v149 = vld [vmem:[%s0 + $0x218] sm:$0xf]
  %v150 = vld [vmem:[%s0 + $0x21c] sm:$0xf]
  %v151 = vld [vmem:[%s0 + $0x220] sm:$0xf]
  %v152 = vld [vmem:[%s0 + $0x224] sm:$0xf]
  %v153 = vld [vmem:[%s0 + $0x228] sm:$0xf]
  %v154 = vld [vmem:[%s0 + $0x22c] sm:$0xf]
  %v155 = vld [vmem:[%s0 + $0x230] sm:$0xf]
  %v156 = vld [vmem:[%s0 + $0x234] sm:$0xf]
  %v157 = vld [vmem:[%s0 + $0x238] sm:$0xf]
  %v158 = vld [vmem:[%s0 + $0x23c] sm:$0xf]
  %v159 = vld [vmem:[%s0 + $0x240] sm:$0xf]
  %v160 = vld [vmem:[%s0 + $0x244] sm:$0xf]
  %v161 = vld [vmem:[%s0 + $0x248] sm:$0xf]
  %v162 = vld [vmem:[%s0 + $0x24c] sm:$0xf]
  %v163 = vld [vmem:[%s0 + $0x250] sm:$0xf]
  %v164 = vld [vmem:[%s0 + $0x254] sm:$0xf]
  %v165 = vld [vmem:[%s0 + $0x258] sm:$0xf]
  %v166 = vld [vmem:[%s0 + $0x25c] sm:$0xf]
  %v167 = vld [vmem:[%s0 + $0x260] sm:$0xf]
  %v168 = vld [vmem:[%s0 + $0x264] sm:$0xf]
  %v169 = vld [vmem:[%s0 + $0x268] sm:$0xf]
  %v170 = vld [vmem:[%s0 + $0x26c] sm:$0xf]
  %v171 = vld [vmem:[%s0 + $0x270] sm:$0xf]
  %v172 = vld [vmem:[%s0 + $0x274] sm:$0xf]
  %v173 = vld [vmem:[%s0 + $0x278] sm:$0xf]
  %v174 = vld [vmem:[%s0 + $0x27c] sm:$0xf]
  %v175 = vld [vmem:[%s0 + $0x280] sm:$0xf]
  %v176 = vld [vmem:[%s0 + $0x284] sm:$0xf]
  %v177 = vld [vmem:[%s0 + $0x288] sm:$0xf]
  %v178 = vld [vmem:[%s0 + $0x28c] sm:$0xf]
  %v179 = vld [vmem:[%s0 + $0x290] sm:$0xf]
  %v180 = vld [vmem:[%s0 + $0x294] sm:$0xf]
  %v181 = vld [vmem:[%s0 + $0x298] sm:$0xf]
  %v182 = vld [vmem:[%s0 + $0x29c] sm:$0xf]
  %v183 = vld [vmem:[%s0 + $0x2a0] sm:$0xf]
  %v184 = vld [vmem:[%s0 + $0x2a4] sm:$0xf]
  %v185 = vld [vmem:[%s0 + $0x2a8] sm:$0xf]
  %v186 = vld [vmem:[%s0 + $0x2ac] sm:$0xf]
  %v187 = vld [vmem:[%s0 + $0x2b0] sm:$0xf]
  %v188 = vld [vmem:[%s0 + $0x2b4] sm:$0xf]
  %v189 = vld [vmem:[%s0 + $0x2b8] sm:$0xf]
  %v190 = vld [vmem:[%s0 + $0x2bc] sm:$0xf]
  %v191 = vld [vmem:[%s0 + $0x2c0] sm:$0xf]
  %v192 = vld [vmem:[%s0 + $0x2c4] sm:$0xf]
  %v193 = vld [vmem:[%s0 + $0x2c8] sm:$0xf]
  %v194 = vld [vmem:[%s0 + $0x2cc] sm:$0xf]
  %v195 = vld [vmem:[%s0 + $0x2d0] sm:$0xf]
  %v196 = vld [vmem:[%s0 + $0x2d4] sm:$0xf]
  %v197 = vld [vmem:[%s0 + $0x2d8] sm:$0xf]
  %v198 = vld [vmem:[%s0 + $0x2dc] sm:$0xf]
  %v199 = vld [vmem:[%s0 + $0x2e0] sm:$0xf]
  %v200 = vld [vmem:[%s0 + $0x2e4] sm:$0xf]
  %v201 = vld [vmem:[%s0 + $0x2e8] sm:$0xf]
  %v202 = vld [vmem:[%s0 + $0x2ec] sm:$0xf]
  %v203 = vld [vmem:[%s0 + $0x2f0] sm:$0xf]
  %v204 = vld [vmem:[%s0 + $0x2f4] sm:$0xf]
  %v205 = vld [vmem:[%s0 + $0x2f8] sm:$0xf]
  %v206 = vld [vmem:[%s0 + $0x2fc] sm:$0xf]
  %v207 = vld [vmem:[%s0 + $0x300] sm:$0xf]
  %v208 = vld [vmem:[%s0 + $0x304] sm:$0xf]
  %v209 = vld [vmem:[%s0 + $0x308] sm:$0xf]
  %v210 = vld [vmem:[%s0 + $0x30c] sm:$0xf]
  %v211 = vld [vmem:[%s0 + $0x310] sm:$0xf]
  %v212 = vld [vmem:[%s0 + $0x314] sm:$0xf]
  %v213 = vld [vmem:[%s0 + $0x318] sm:$0xf]
  %v214 = vld [vmem:[%s0 + $0x31c] sm:$0xf]
  %v215 = vld [vmem:[%s0 + $0x320] sm:$0xf]
  %v216 = vld [vmem:[%s0 + $0x324] sm:$0xf]
  %v217 = vld [vmem:[%s0 + $0x328] sm:$0xf]
  %v218 = vld [vmem:[%s0 + $0x32c] sm:$0xf]
  %v219 = vld [vmem:[%s0 + $0x330] sm:$0xf]
  %v220 = vld [vmem:[%s0 + $0x334] sm:$0xf]
  %v221 = vld [vmem:[%s0 + $0x338] sm:$0xf]
  %v222 = vld [vmem:[%s0 + $0x33c] sm:$0xf]
  %v223 = vld [vmem:[%s0 + $0x340] sm:$0xf]
  %v224 = vld [vmem:[%s0 + $0x344] sm:$0xf]
  %v225 = vld [vmem:[%s0 + $0x348] sm:$0xf]
  %v226 = vld [vmem:[%s0 + $0x34c] sm:$0xf]
  %v227 = vld [vmem:[%s0 + $0x350] sm:$0xf]
  %v228 = vld [vmem:[%s0 + $0x354] sm:$0xf]
  %v229 = vld [vmem:[%s0 + $0x358] sm:$0xf]
  %v230 = vld [vmem:[%s0 + $0x35c] sm:$0xf]
  %v231 = vld [vmem:[%s0 + $0x360] sm:$0xf]
  %v232 = vld [vmem:[%s0 + $0x364] sm:$0xf]
  %v233 = vld [vmem:[%s0 + $0x368] sm:$0xf]
  %v234 = vld [vmem:[%s0 + $0x36c] sm:$0xf]
  %v235 = vld [vmem:[%s0 + $0x370] sm:$0xf]
  %v236 = vld [vmem:[%s0 + $0x374] sm:$0xf]
  %v237 = vld [vmem:[%s0 + $0x378] sm:$0xf]
  %v238 = vld [vmem:[%s0 + $0x37c] sm:$0xf]
  %v239 = vld [vmem:[%s0 + $0x380] sm:$0xf]
  %v240 = vld [vmem:[%s0 + $0x384] sm:$0xf]
  %v241 = vld [vmem:[%s0 + $0x388] sm:$0xf]
  %v242 = vld [vmem:[%s0 + $0x38c] sm:$0xf]
  %v243 = vld [vmem:[%s0 + $0x390] sm:$0xf]
  %v244 = vld [vmem:[%s0 + $0x394] sm:$0xf]
  %v245 = vld [vmem:[%s0 + $0x398] sm:$0xf]
  %v246 = vld [vmem:[%s0 + $0x39c] sm:$0xf]
  %v247 = vld [vmem:[%s0 + $0x3a0] sm:$0xf]
  %v248 = vld [vmem:[%s0 + $0x3a4] sm:$0xf]
  %v249 = vld [vmem:[%s0 + $0x3a8] sm:$0xf]
  %v250 = vld [vmem:[%s0 + $0x3ac] sm:$0xf]
  %v251 = vld [vmem:[%s0 + $0x3b0] sm:$0xf]
  %v252 = vld [vmem:[%s0 + $0x3b4] sm:$0xf]
  %v253 = vld [vmem:[%s0 + $0x3b8] sm:$0xf]
  %v254 = vld [vmem:[%s0 + $0x3bc] sm:$0xf]
  %v255 = vld [vmem:[%s0 + $0x3c0] sm:$0xf]
  %v256 = vld [vmem:[%s0 + $0x3c4] sm:$0xf]
  %v257 = vld [vmem:[%s0 + $0x3c8] sm:$0xf]
  %v258 = vld [vmem:[%s0 + $0x3cc] sm:$0xf]
  %v259 = vld [vmem:[%s0 + $0x3d0] sm:$0xf]
  %v260 = vld [vmem:[%s0 + $0x3d4] sm:$0xf]
  %v261 = vld [vmem:[%s0 + $0x3d8] sm:$0xf]
  %v262 = vld [vmem:[%s0 + $0x3dc] sm:$0xf]
  %v263 = vld [vmem:[%s0 + $0x3e0] sm:$0xf]
  %v264 = vld [vmem:[%s0 + $0x3e4] sm:$0xf]
  %v265 = vld [vmem:[%s0 + $0x3e8] sm:$0xf]
  %v266 = vld [vmem:[%s0 + $0x3ec] sm:$0xf]
  %v267 = vld [vmem:[%s0 + $0x3f0] sm:$0xf]
  %v268 = vld [vmem:[%s0 + $0x3f4] sm:$0xf]
  %v269 = vld [vmem:[%s0 + $0x3f8] sm:$0xf]
  %v270 = vld [vmem:[%s0 + $0x3fc] sm:$0xf]
  %v271 = vld [vmem:[%s0 + $0x400] sm:$0xf]
  %v272 = vld [vmem:[%s0 + $0x404] sm:$0xf]
  %v273 = vld [vmem:[%s0 + $0x408] sm:$0xf]
  %v274 = vld [vmem:[%s0 + $0x40c] sm:$0xf]
  %v275 = vld [vmem:[%s0 + $0x410] sm:$0xf]
  %v276 = vld [vmem:[%s0 + $0x414] sm:$0xf]
  %v277 = vld [vmem:[%s0 + $0x418] sm:$0xf]
  %v278 = vld [vmem:[%s0 + $0x41c] sm:$0xf]
  %v279 = vld [vmem:[%s0 + $0x420] sm:$0xf]
  %v280 = vld [vmem:[%s0 + $0x424] sm:$0xf]
  %v281 = vld [vmem:[%s0 + $0x428] sm:$0xf]
  %v282 = vld [vmem:[%s0 + $0x42c] sm:$0xf]
  %v283 = vld [vmem:[%s0 + $0x430] sm:$0xf]
  %v284 = vld [vmem:[%s0 + $0x434] sm:$0xf]
  %v285 = vld [vmem:[%s0 + $0x438] sm:$0xf]
  %v286 = vld [vmem:[%s0 + $0x43c] sm:$0xf]
  %v287 = vld [vmem:[%s0 + $0x440] sm:$0xf]
  %v288 = vld [vmem:[%s0 + $0x444] sm:$0xf]
  %v289 = vld [vmem:[%s0 + $0x448] sm:$0xf]
  %v290 = vld [vmem:[%s0 + $0x44c] sm:$0xf]
  %v291 = vld [vmem:[%s0 + $0x450] sm:$0xf]
  %v292 = vld [vmem:[%s0 + $0x454] sm:$0xf]
  %v293 = vld [vmem:[%s0 + $0x458] sm:$0xf]
  %v294 = vld [vmem:[%s0 + $0x45c] sm:$0xf]
  %v295 = vld [vmem:[%s0 + $0x460] sm:$0xf]
  %v296 = vld [vmem:[%s0 + $0x464] sm:$0xf]
  %v297 = vld [vmem:[%s0 + $0x468] sm:$0xf]
  %v298 = vld [vmem:[%s0 + $0x46c] sm:$0xf]
  %v299 = vld [vmem:[%s0 + $0x470] sm:$0xf]
  %v300 = vld [vmem:[%s0 + $0x474] sm:$0xf]
  %v301 = vld [vmem:[%s0 + $0x478] sm:$0xf]
  %v302 = vld [vmem:[%s0 + $0x47c] sm:$0xf]
  %v303 = vld [vmem:[%s0 + $0x480] sm:$0xf]
  %v304 = vld [vmem:[%s0 + $0x484] sm:$0xf]
  %v305 = vld [vmem:[%s0 + $0x488] sm:$0xf]
  %v306 = vld [vmem:[%s0 + $0x48c] sm:$0xf]
  %v307 = vld [vmem:[%s0 + $0x490] sm:$0xf]
  %v308 = vld [vmem:[%s0 + $0x494] sm:$0xf]
  %v309 = vld [vmem:[%s0 + $0x498] sm:$0xf]
  %v310 = vld [vmem:[%s0 + $0x49c] sm:$0xf]
  %v311 = vld [vmem:[%s0 + $0x4a0] sm:$0xf]
  %v312 = vld [vmem:[%s0 + $0x4a4] sm:$0xf]
  %v313 = vld [vmem:[%s0 + $0x4a8] sm:$0xf]
  %v314 = vld [vmem:[%s0 + $0x4ac] sm:$0xf]
  %v315 = vld [vmem:[%s0 + $0x4b0] sm:$0xf]
  %v316 = vld [vmem:[%s0 + $0x4b4] sm:$0xf]
  %v317 = vld [vmem:[%s0 + $0x4b8] sm:$0xf]
  %v318 = vld [vmem:[%s0 + $0x4bc] sm:$0xf]
  %v319 = vld [vmem:[%s0 + $0x4c0] sm:$0xf]
  %v320 = vld [vmem:[%s0 + $0x4c4] sm:$0xf]
  %v321 = vld [vmem:[%s0 + $0x4c8] sm:$0xf]
  %v322 = vld [vmem:[%s0 + $0x4cc] sm:$0xf]
  %v323 = vld [vmem:[%s0 + $0x4d0] sm:$0xf]
  %v324 = vld [vmem:[%s0 + $0x4d4] sm:$0xf]
  %v325 = vld [vmem:[%s0 + $0x4d8] sm:$0xf]
  %v326 = vld [vmem:[%s0 + $0x4dc] sm:$0xf]
  %v327 = vld [vmem:[%s0 + $0x4e0] sm:$0xf]
  %v328 = vld [vmem:[%s0 + $0x4e4] sm:$0xf]
  %v329 = vld [vmem:[%s0 + $0x4e8] sm:$0xf]
  %v330 = vld [vmem:[%s0 + $0x4ec] sm:$0xf]
  %v331 = vld [vmem:[%s0 + $0x4f0] sm:$0xf]
  %v332 = vld [vmem:[%s0 + $0x4f4] sm:$0xf]
  %v333 = vld [vmem:[%s0 + $0x4f8] sm:$0xf]
  %v334 = vld [vmem:[%s0 + $0x4fc] sm:$0xf]
  %v335 = vld [vmem:[%s0 + $0x500] sm:$0xf]
  %v336 = vld [vmem:[%s0 + $0x504] sm:$0xf]
  %v337 = vld [vmem:[%s0 + $0x508] sm:$0xf]
  %v338 = vld [vmem:[%s0 + $0x50c] sm:$0xf]
  %v339 = vld [vmem:[%s0 + $0x510] sm:$0xf]
  %v340 = vld [vmem:[%s0 + $0x514] sm:$0xf]
  %v341 = vld [vmem:[%s0 + $0x518] sm:$0xf]
  %v342 = vld [vmem:[%s0 + $0x51c] sm:$0xf]
  %v343 = vld [vmem:[%s0 + $0x520] sm:$0xf]
  %v344 = vld [vmem:[%s0 + $0x524] sm:$0xf]
  %v345 = vld [vmem:[%s0 + $0x528] sm:$0xf]
  %v346 = vld [vmem:[%s0 + $0x52c] sm:$0xf]
  %v347 = vld [vmem:[%s0 + $0x530] sm:$0xf]
  %v348 = vld [vmem:[%s0 + $0x534] sm:$0xf]
  %v349 = vld [vmem:[%s0 + $0x538] sm:$0xf]
  %v350 = vld [vmem:[%s0 + $0x53c] sm:$0xf]
  %v351 = vld [vmem:[%s0 + $0x540] sm:$0xf]
  %v352 = vld [vmem:[%s0 + $0x544] sm:$0xf]
  %v353 = vld [vmem:[%s0 + $0x548] sm:$0xf]
  %v354 = vld [vmem:[%s0 + $0x54c] sm:$0xf]
  %v355 = vld [vmem:[%s0 + $0x550] sm:$0xf]
  %v356 = vld [vmem:[%s0 + $0x554] sm:$0xf]
  %v357 = vld [vmem:[%s0 + $0x558] sm:$0xf]
  %v358 = vld [vmem:[%s0 + $0x55c] sm:$0xf]
  %v359 = vld [vmem:[%s0 + $0x560] sm:$0xf]
  %v360 = vld [vmem:[%s0 + $0x564] sm:$0xf]
  %v361 = vld [vmem:[%s0 + $0x568] sm:$0xf]
  %v362 = vld [vmem:[%s0 + $0x56c] sm:$0xf]
  %v363 = vld [vmem:[%s0 + $0x570] sm:$0xf]
  %v364 = vld [vmem:[%s0 + $0x574] sm:$0xf]
  %v365 = vld [vmem:[%s0 + $0x578] sm:$0xf]
  %v366 = vld [vmem:[%s0 + $0x57c] sm:$0xf]
  %v367 = vld [vmem:[%s0 + $0x580] sm:$0xf]
  %v368 = vld [vmem:[%s0 + $0x584] sm:$0xf]
  %v369 = vld [vmem:[%s0 + $0x588] sm:$0xf]
  %v370 = vld [vmem:[%s0 + $0x58c] sm:$0xf]
  %v371 = vld [vmem:[%s0 + $0x590] sm:$0xf]
  %v372 = vld [vmem:[%s0 + $0x594] sm:$0xf]
  %v373 = vld [vmem:[%s0 + $0x598] sm:$0xf]
  %v374 = vld [vmem:[%s0 + $0x59c] sm:$0xf]
  %v375 = vld [vmem:[%s0 + $0x5a0] sm:$0xf]
  %v376 = vld [vmem:[%s0 + $0x5a4] sm:$0xf]
  %v377 = vld [vmem:[%s0 + $0x5a8] sm:$0xf]
  %v378 = vld [vmem:[%s0 + $0x5ac] sm:$0xf]
  %v379 = vld [vmem:[%s0 + $0x5b0] sm:$0xf]
  %v380 = vld [vmem:[%s0 + $0x5b4] sm:$0xf]
  %v381 = vld [vmem:[%s0 + $0x5b8] sm:$0xf]
  %v382 = vld [vmem:[%s0 + $0x5bc] sm:$0xf]
  %v383 = vld [vmem:[%s0 + $0x5c0] sm:$0xf]
  %v384 = vld [vmem:[%s0 + $0x5c4] sm:$0xf]
  %v385 = vld [vmem:[%s0 + $0x5c8] sm:$0xf]
  %v386 = vld [vmem:[%s0 + $0x5cc] sm:$0xf]
  %v387 = vld [vmem:[%s0 + $0x5d0] sm:$0xf]
  %v388 = vld [vmem:[%s0 + $0x5d4] sm:$0xf]
  %v389 = vld [vmem:[%s0 + $0x5d8] sm:$0xf]
  %v390 = vld [vmem:[%s0 + $0x5dc] sm:$0xf]
  %v391 = vld [vmem:[%s0 + $0x5e0] sm:$0xf]
  %v392 = vld [vmem:[%s0 + $0x5e4] sm:$0xf]
  %v393 = vld [vmem:[%s0 + $0x5e8] sm:$0xf]
  %v394 = vld [vmem:[%s0 + $0x5ec] sm:$0xf]
  %v395 = vld [vmem:[%s0 + $0x5f0] sm:$0xf]
  %v396 = vld [vmem:[%s0 + $0x5f4] sm:$0xf]
  %v397 = vld [vmem:[%s0 + $0x5f8] sm:$0xf]
  %v398 = vld [vmem:[%s0 + $0x5fc] sm:$0xf]
  %v399 = vld [vmem:[%s0 + $0x600] sm:$0xf]
  %v400 = vld [vmem:[%s0 + $0x604] sm:$0xf]
  %v401 = vld [vmem:[%s0 + $0x608] sm:$0xf]
  %v402 = vld [vmem:[%s0 + $0x60c] sm:$0xf]
  %v403 = vld [vmem:[%s0 + $0x610] sm:$0xf]
  %v404 = vld [vmem:[%s0 + $0x614] sm:$0xf]
  %v405 = vld [vmem:[%s0 + $0x618] sm:$0xf]
  %v406 = vld [vmem:[%s0 + $0x61c] sm:$0xf]
  %v407 = vld [vmem:[%s0 + $0x620] sm:$0xf]
  %v408 = vld [vmem:[%s0 + $0x624] sm:$0xf]
  %v409 = vld [vmem:[%s0 + $0x628] sm:$0xf]
  %v410 = vld [vmem:[%s0 + $0x62c] sm:$0xf]
  %v411 = vld [vmem:[%s0 + $0x630] sm:$0xf]
  %v412 = vld [vmem:[%s0 + $0x634] sm:$0xf]
  %v413 = vld [vmem:[%s0 + $0x638] sm:$0xf]
  %v414 = vld [vmem:[%s0 + $0x63c] sm:$0xf]
  %v415 = vld [vmem:[%s0 + $0x640] sm:$0xf]
  %v416 = vld [vmem:[%s0 + $0x644] sm:$0xf]
  %v417 = vld [vmem:[%s0 + $0x648] sm:$0xf]
  %v418 = vld [vmem:[%s0 + $0x64c] sm:$0xf]
  %v419 = vld [vmem:[%s0 + $0x650] sm:$0xf]
  %v420 = vld [vmem:[%s0 + $0x654] sm:$0xf]
  %v421 = vld [vmem:[%s0 + $0x658] sm:$0xf]
  %v422 = vld [vmem:[%s0 + $0x65c] sm:$0xf]
  %v423 = vld [vmem:[%s0 + $0x660] sm:$0xf]
  %v424 = vld [vmem:[%s0 + $0x664] sm:$0xf]
  %v425 = vld [vmem:[%s0 + $0x668] sm:$0xf]
  %v426 = vld [vmem:[%s0 + $0x66c] sm:$0xf]
  %v427 = vld [vmem:[%s0 + $0x670] sm:$0xf]
  %v428 = vld [vmem:[%s0 + $0x674] sm:$0xf]
  %v429 = vld [vmem:[%s0 + $0x678] sm:$0xf]
  %v430 = vld [vmem:[%s0 + $0x67c] sm:$0xf]
  %v431 = vld [vmem:[%s0 + $0x680] sm:$0xf]
  %v432 = vld [vmem:[%s0 + $0x684] sm:$0xf]
  %v433 = vld [vmem:[%s0 + $0x688] sm:$0xf]
  %v434 = vld [vmem:[%s0 + $0x68c] sm:$0xf]
  %v435 = vld [vmem:[%s0 + $0x690] sm:$0xf]
  %v436 = vld [vmem:[%s0 + $0x694] sm:$0xf]
  %v437 = vld [vmem:[%s0 + $0x698] sm:$0xf]
  %v438 = vld [vmem:[%s0 + $0x69c] sm:$0xf]
  %v439 = vld [vmem:[%s0 + $0x6a0] sm:$0xf]
  %v440 = vld [vmem:[%s0 + $0x6a4] sm:$0xf]
  %v441 = vld [vmem:[%s0 + $0x6a8] sm:$0xf]
  %v442 = vld [vmem:[%s0 + $0x6ac] sm:$0xf]
  %v443 = vld [vmem:[%s0 + $0x6b0] sm:$0xf]
  %v444 = vld [vmem:[%s0 + $0x6b4] sm:$0xf]
  %v445 = vld [vmem:[%s0 + $0x6b8] sm:$0xf]
  %v446 = vld [vmem:[%s0 + $0x6bc] sm:$0xf]
  %v447 = vld [vmem:[%s0 + $0x6c0] sm:$0xf]
  %v448 = vld [vmem:[%s0 + $0x6c4] sm:$0xf]
  %v449 = vld [vmem:[%s0 + $0x6c8] sm:$0xf]
  %v450 = vld [vmem:[%s0 + $0x6cc] sm:$0xf]
  %v451 = vld [vmem:[%s0 + $0x6d0] sm:$0xf]
  %v452 = vld [vmem:[%s0 + $0x6d4] sm:$0xf]
  %v453 = vld [vmem:[%s0 + $0x6d8] sm:$0xf]
  %v454 = vld [vmem:[%s0 + $0x6dc] sm:$0xf]
  %v455 = vld [vmem:[%s0 + $0x6e0] sm:$0xf]
  %v456 = vld [vmem:[%s0 + $0x6e4] sm:$0xf]
  %v457 = vld [vmem:[%s0 + $0x6e8] sm:$0xf]
  %v458 = vld [vmem:[%s0 + $0x6ec] sm:$0xf]
  %v459 = vld [vmem:[%s0 + $0x6f0] sm:$0xf]
  %v460 = vld [vmem:[%s0 + $0x6f4] sm:$0xf]
  %v461 = vld [vmem:[%s0 + $0x6f8] sm:$0xf]
  %v462 = vld [vmem:[%s0 + $0x6fc] sm:$0xf]
  %v463 = vld [vmem:[%s0 + $0x700] sm:$0xf]
  %v464 = vld [vmem:[%s0 + $0x704] sm:$0xf]
  %v465 = vld [vmem:[%s0 + $0x708] sm:$0xf]
  %v466 = vld [vmem:[%s0 + $0x70c] sm:$0xf]
  %v467 = vld [vmem:[%s0 + $0x710] sm:$0xf]
  %v468 = vld [vmem:[%s0 + $0x714] sm:$0xf]
  %v469 = vld [vmem:[%s0 + $0x718] sm:$0xf]
  %v470 = vld [vmem:[%s0 + $0x71c] sm:$0xf]
  %v471 = vld [vmem:[%s0 + $0x720] sm:$0xf]
  %v472 = vld [vmem:[%s0 + $0x724] sm:$0xf]
  %v473 = vld [vmem:[%s0 + $0x728] sm:$0xf]
  %v474 = vld [vmem:[%s0 + $0x72c] sm:$0xf]
  %v475 = vld [vmem:[%s0 + $0x730] sm:$0xf]
  %v476 = vld [vmem:[%s0 + $0x734] sm:$0xf]
  %v477 = vld [vmem:[%s0 + $0x738] sm:$0xf]
  %v478 = vld [vmem:[%s0 + $0x73c] sm:$0xf]
  %v479 = vld [vmem:[%s0 + $0x740] sm:$0xf]
  %v480 = vld [vmem:[%s0 + $0x744] sm:$0xf]
  %v481 = vld [vmem:[%s0 + $0x748] sm:$0xf]
  %v482 = vld [vmem:[%s0 + $0x74c] sm:$0xf]
  %v483 = vld [vmem:[%s0 + $0x750] sm:$0xf]
  %v484 = vld [vmem:[%s0 + $0x754] sm:$0xf]
  %v485 = vld [vmem:[%s0 + $0x758] sm:$0xf]
  %v486 = vld [vmem:[%s0 + $0x75c] sm:$0xf]
  %v487 = vld [vmem:[%s0 + $0x760] sm:$0xf]
  %v488 = vld [vmem:[%s0 + $0x764] sm:$0xf]
  %v489 = vld [vmem:[%s0 + $0x768] sm:$0xf]
  %v490 = vld [vmem:[%s0 + $0x76c] sm:$0xf]
  %v491 = vld [vmem:[%s0 + $0x770] sm:$0xf]
  %v492 = vld [vmem:[%s0 + $0x774] sm:$0xf]
  %v493 = vld [vmem:[%s0 + $0x778] sm:$0xf]
  %v494 = vld [vmem:[%s0 + $0x77c] sm:$0xf]
  %v495 = vld [vmem:[%s0 + $0x780] sm:$0xf]
  %v496 = vld [vmem:[%s0 + $0x784] sm:$0xf]
  %v497 = vld [vmem:[%s0 + $0x788] sm:$0xf]
  %v498 = vld [vmem:[%s0 + $0x78c] sm:$0xf]
  %v499 = vld [vmem:[%s0 + $0x790] sm:$0xf]
  %v500 = vld [vmem:[%s0 + $0x794] sm:$0xf]
  %v501 = vld [vmem:[%s0 + $0x798] sm:$0xf]
  %v502 = vld [vmem:[%s0 + $0x79c] sm:$0xf]
  %v503 = vld [vmem:[%s0 + $0x7a0] sm:$0xf]
  %v504 = vld [vmem:[%s0 + $0x7a4] sm:$0xf]
  %v505 = vld [vmem:[%s0 + $0x7a8] sm:$0xf]
  %v506 = vld [vmem:[%s0 + $0x7ac] sm:$0xf]
  %v507 = vld [vmem:[%s0 + $0x7b0] sm:$0xf]
  %v508 = vld [vmem:[%s0 + $0x7b4] sm:$0xf]
  %v509 = vld [vmem:[%s0 + $0x7b8] sm:$0xf]
  %v510 = vld [vmem:[%s0 + $0x7bc] sm:$0xf]
  %v511 = vld [vmem:[%s0 + $0x7c0] sm:$0xf]
  %v512 = vld [vmem:[%s0 + $0x7c4] sm:$0xf]
  %v513 = vld [vmem:[%s0 + $0x7c8] sm:$0xf]
  %v514 = vld [vmem:[%s0 + $0x7cc] sm:$0xf]
  %v515 = vld [vmem:[%s0 + $0x7d0] sm:$0xf]
  %v516 = vld [vmem:[%s0 + $0x7d4] sm:$0xf]
  %v517 = vld [vmem:[%s0 + $0x7d8] sm:$0xf]
  %v518 = vld [vmem:[%s0 + $0x7dc] sm:$0xf]
  %v519 = vld [vmem:[%s0 + $0x7e0] sm:$0xf]
  %v520 = vld [vmem:[%s0 + $0x7e4] sm:$0xf]
  %v521 = vld [vmem:[%s0 + $0x7e8] sm:$0xf]
  %v522 = vld [vmem:[%s0 + $0x7ec] sm:$0xf]
  %v523 = vld [vmem:[%s0 + $0x7f0] sm:$0xf]
  %v524 = vld [vmem:[%s0 + $0x7f4] sm:$0xf]
  %v525 = vld [vmem:[%s0 + $0x7f8] sm:$0xf]
  %v526 = vld [vmem:[%s0 + $0x7fc] sm:$0xf]
  %v527 = vld [vmem:[%s0 + $0x800] sm:$0xf]
  %v528 = vld [vmem:[%s0 + $0x804] sm:$0xf]
  %v529 = vld [vmem:[%s0 + $0x808] sm:$0xf]
  %v530 = vld [vmem:[%s0 + $0x80c] sm:$0xf]
  %v531 = vld [vmem:[%s0 + $0x810] sm:$0xf]
  %v532 = vld [vmem:[%s0 + $0x814] sm:$0xf]
  %v533 = vld [vmem:[%s0 + $0x818] sm:$0xf]
  %v534 = vld [vmem:[%s0 + $0x81c] sm:$0xf]
  %v535 = vld [vmem:[%s0 + $0x820] sm:$0xf]
  %v536 = vld [vmem:[%s0 + $0x824] sm:$0xf]
  %v537 = vld [vmem:[%s0 + $0x828] sm:$0xf]
  %v538 = vld [vmem:[%s0 + $0x82c] sm:$0xf]
  %v539 = vld [vmem:[%s0 + $0x830] sm:$0xf]
  %v540 = vld [vmem:[%s0 + $0x834] sm:$0xf]
  %v541 = vld [vmem:[%s0 + $0x838] sm:$0xf]
  %v542 = vld [vmem:[%s0 + $0x83c] sm:$0xf]
  %v543 = vld [vmem:[%s0 + $0x840] sm:$0xf]
  %v544 = vld [vmem:[%s0 + $0x844] sm:$0xf]
  %v545 = vld [vmem:[%s0 + $0x848] sm:$0xf]
  %v546 = vld [vmem:[%s0 + $0x84c] sm:$0xf]
  %v547 = vld [vmem:[%s0 + $0x850] sm:$0xf]
  %v548 = vld [vmem:[%s0 + $0x854] sm:$0xf]
  %v549 = vld [vmem:[%s0 + $0x858] sm:$0xf]
  %v550 = vld [vmem:[%s0 + $0x85c] sm:$0xf]
  %v551 = vld [vmem:[%s1] sm:$0xf]
  %v552 = vld [vmem:[%s1 + $0x4] sm:$0xf]
  %v553 = vld [vmem:[%s1 + $0x8] sm:$0xf]
  %v554 = vld [vmem:[%s1 + $0xc] sm:$0x1]
  %v1091 = vunpack.c.l.b16 %v15
  %v1092 = vunpack.c.l.b16 %v16
  %v1093 = vunpack.c.l.b16 %v17
  %v1094 = vunpack.c.l.b16 %v18
  %v1095 = vunpack.c.l.b16 %v19
  %v1096 = vunpack.c.l.b16 %v20
  %v1097 = vunpack.c.l.b16 %v21
  %v1098 = vunpack.c.l.b16 %v22
  %v1099 = vunpack.c.l.b16 %v23
  %v1100 = vunpack.c.l.b16 %v24
  %v1101 = vunpack.c.l.b16 %v25
  %v1102 = vunpack.c.l.b16 %v26
  %v1103 = vunpack.c.l.b16 %v27
  %v1104 = vunpack.c.l.b16 %v28
  %v1105 = vunpack.c.l.b16 %v29
  %v1106 = vunpack.c.l.b16 %v30
  %v1107 = vunpack.c.l.b16 %v31
  %v1108 = vunpack.c.l.b16 %v32
  %v1109 = vunpack.c.l.b16 %v33
  %v1110 = vunpack.c.l.b16 %v34
  %v1111 = vunpack.c.l.b16 %v35
  %v1112 = vunpack.c.l.b16 %v36
  %v1113 = vunpack.c.l.b16 %v37
  %v1114 = vunpack.c.l.b16 %v38
  %v1115 = vunpack.c.l.b16 %v39
  %v1116 = vunpack.c.l.b16 %v40
  %v1117 = vunpack.c.l.b16 %v41
  %v1118 = vunpack.c.l.b16 %v42
  %v1119 = vunpack.c.l.b16 %v43
  %v1120 = vunpack.c.l.b16 %v44
  %v1121 = vunpack.c.l.b16 %v45
  %v1122 = vunpack.c.l.b16 %v46
  %v1123 = vunpack.c.l.b16 %v47
  %v1124 = vunpack.c.l.b16 %v48
  %v1125 = vunpack.c.l.b16 %v49
  %v1126 = vunpack.c.l.b16 %v50
  %v1127 = vunpack.c.l.b16 %v51
  %v1128 = vunpack.c.l.b16 %v52
  %v1129 = vunpack.c.l.b16 %v53
  %v1130 = vunpack.c.l.b16 %v54
  %v1131 = vunpack.c.l.b16 %v55
  %v1132 = vunpack.c.l.b16 %v56
  %v1133 = vunpack.c.l.b16 %v57
  %v1134 = vunpack.c.l.b16 %v58
  %v1135 = vunpack.c.l.b16 %v59
  %v1136 = vunpack.c.l.b16 %v60
  %v1137 = vunpack.c.l.b16 %v61
  %v1138 = vunpack.c.l.b16 %v62
  %v1139 = vunpack.c.l.b16 %v63
  %v1140 = vunpack.c.l.b16 %v64
  %v1141 = vunpack.c.l.b16 %v65
  %v1142 = vunpack.c.l.b16 %v66
  %v1143 = vunpack.c.l.b16 %v67
  %v1144 = vunpack.c.l.b16 %v68
  %v1145 = vunpack.c.l.b16 %v69
  %v1146 = vunpack.c.l.b16 %v70
  %v1147 = vunpack.c.l.b16 %v71
  %v1148 = vunpack.c.l.b16 %v72
  %v1149 = vunpack.c.l.b16 %v73
  %v1150 = vunpack.c.l.b16 %v74
  %v1151 = vunpack.c.l.b16 %v75
  %v1152 = vunpack.c.l.b16 %v76
  %v1153 = vunpack.c.l.b16 %v77
  %v1154 = vunpack.c.l.b16 %v78
  %v1155 = vunpack.c.l.b16 %v79
  %v1156 = vunpack.c.l.b16 %v80
  %v1157 = vunpack.c.l.b16 %v81
  %v1158 = vunpack.c.l.b16 %v82
  %v1159 = vunpack.c.l.b16 %v83
  %v1160 = vunpack.c.l.b16 %v84
  %v1161 = vunpack.c.l.b16 %v85
  %v1162 = vunpack.c.l.b16 %v86
  %v1163 = vunpack.c.l.b16 %v87
  %v1164 = vunpack.c.l.b16 %v88
  %v1165 = vunpack.c.l.b16 %v89
  %v1166 = vunpack.c.l.b16 %v90
  %v1167 = vunpack.c.l.b16 %v91
  %v1168 = vunpack.c.l.b16 %v92
  %v1169 = vunpack.c.l.b16 %v93
  %v1170 = vunpack.c.l.b16 %v94
  %v1171 = vunpack.c.l.b16 %v95
  %v1172 = vunpack.c.l.b16 %v96
  %v1173 = vunpack.c.l.b16 %v97
  %v1174 = vunpack.c.l.b16 %v98
  %v1175 = vunpack.c.l.b16 %v99
  %v1176 = vunpack.c.l.b16 %v100
  %v1177 = vunpack.c.l.b16 %v101
  %v1178 = vunpack.c.l.b16 %v102
  %v1179 = vunpack.c.l.b16 %v103
  %v1180 = vunpack.c.l.b16 %v104
  %v1181 = vunpack.c.l.b16 %v105
  %v1182 = vunpack.c.l.b16 %v106
  %v1183 = vunpack.c.l.b16 %v107
  %v1184 = vunpack.c.l.b16 %v108
  %v1185 = vunpack.c.l.b16 %v109
  %v1186 = vunpack.c.l.b16 %v110
  %v1187 = vunpack.c.l.b16 %v111
  %v1188 = vunpack.c.l.b16 %v112
  %v1189 = vunpack.c.l.b16 %v113
  %v1190 = vunpack.c.l.b16 %v114
  %v1191 = vunpack.c.l.b16 %v115
  %v1192 = vunpack.c.l.b16 %v116
  %v1193 = vunpack.c.l.b16 %v117
  %v1194 = vunpack.c.l.b16 %v118
  %v1195 = vunpack.c.l.b16 %v119
  %v1196 = vunpack.c.l.b16 %v120
  %v1197 = vunpack.c.l.b16 %v121
  %v1198 = vunpack.c.l.b16 %v122
  %v1199 = vunpack.c.l.b16 %v123
  %v1200 = vunpack.c.l.b16 %v124
  %v1201 = vunpack.c.l.b16 %v125
  %v1202 = vunpack.c.l.b16 %v126
  %v1203 = vunpack.c.l.b16 %v127
  %v1204 = vunpack.c.l.b16 %v128
  %v1205 = vunpack.c.l.b16 %v129
  %v1206 = vunpack.c.l.b16 %v130
  %v1207 = vunpack.c.l.b16 %v131
  %v1208 = vunpack.c.l.b16 %v132
  %v1209 = vunpack.c.l.b16 %v133
  %v1210 = vunpack.c.l.b16 %v134
  %v1211 = vunpack.c.l.b16 %v135
  %v1212 = vunpack.c.l.b16 %v136
  %v1213 = vunpack.c.l.b16 %v137
  %v1214 = vunpack.c.l.b16 %v138
  %v1215 = vunpack.c.l.b16 %v139
  %v1216 = vunpack.c.l.b16 %v140
  %v1217 = vunpack.c.l.b16 %v141
  %v1218 = vunpack.c.l.b16 %v142
  %v1219 = vunpack.c.l.b16 %v143
  %v1220 = vunpack.c.l.b16 %v144
  %v1221 = vunpack.c.l.b16 %v145
  %v1222 = vunpack.c.l.b16 %v146
  %v1223 = vunpack.c.l.b16 %v147
  %v1224 = vunpack.c.l.b16 %v148
  %v1225 = vunpack.c.l.b16 %v149
  %v1226 = vunpack.c.l.b16 %v150
  %v1227 = vunpack.c.l.b16 %v151
  %v1228 = vunpack.c.l.b16 %v152
  %v1229 = vunpack.c.l.b16 %v153
  %v1230 = vunpack.c.l.b16 %v154
  %v1231 = vunpack.c.l.b16 %v155
  %v1232 = vunpack.c.l.b16 %v156
  %v1233 = vunpack.c.l.b16 %v157
  %v1234 = vunpack.c.l.b16 %v158
  %v1235 = vunpack.c.l.b16 %v159
  %v1236 = vunpack.c.l.b16 %v160
  %v1237 = vunpack.c.l.b16 %v161
  %v1238 = vunpack.c.l.b16 %v162
  %v1239 = vunpack.c.l.b16 %v163
  %v1240 = vunpack.c.l.b16 %v164
  %v1241 = vunpack.c.l.b16 %v165
  %v1242 = vunpack.c.l.b16 %v166
  %v1243 = vunpack.c.l.b16 %v167
  %v1244 = vunpack.c.l.b16 %v168
  %v1245 = vunpack.c.l.b16 %v169
  %v1246 = vunpack.c.l.b16 %v170
  %v1247 = vunpack.c.l.b16 %v171
  %v1248 = vunpack.c.l.b16 %v172
  %v1249 = vunpack.c.l.b16 %v173
  %v1250 = vunpack.c.l.b16 %v174
  %v1251 = vunpack.c.l.b16 %v175
  %v1252 = vunpack.c.l.b16 %v176
  %v1253 = vunpack.c.l.b16 %v177
  %v1254 = vunpack.c.l.b16 %v178
  %v1255 = vunpack.c.l.b16 %v179
  %v1256 = vunpack.c.l.b16 %v180
  %v1257 = vunpack.c.l.b16 %v181
  %v1258 = vunpack.c.l.b16 %v182
  %v1259 = vunpack.c.l.b16 %v183
  %v1260 = vunpack.c.l.b16 %v184
  %v1261 = vunpack.c.l.b16 %v185
  %v1262 = vunpack.c.l.b16 %v186
  %v1263 = vunpack.c.l.b16 %v187
  %v1264 = vunpack.c.l.b16 %v188
  %v1265 = vunpack.c.l.b16 %v189
  %v1266 = vunpack.c.l.b16 %v190
  %v1267 = vunpack.c.l.b16 %v191
  %v1268 = vunpack.c.l.b16 %v192
  %v1269 = vunpack.c.l.b16 %v193
  %v1270 = vunpack.c.l.b16 %v194
  %v1271 = vunpack.c.l.b16 %v195
  %v1272 = vunpack.c.l.b16 %v196
  %v1273 = vunpack.c.l.b16 %v197
  %v1274 = vunpack.c.l.b16 %v198
  %v1275 = vunpack.c.l.b16 %v199
  %v1276 = vunpack.c.l.b16 %v200
  %v1277 = vunpack.c.l.b16 %v201
  %v1278 = vunpack.c.l.b16 %v202
  %v1279 = vunpack.c.l.b16 %v203
  %v1280 = vunpack.c.l.b16 %v204
  %v1281 = vunpack.c.l.b16 %v205
  %v1282 = vunpack.c.l.b16 %v206
  %v1283 = vunpack.c.l.b16 %v207
  %v1284 = vunpack.c.l.b16 %v208
  %v1285 = vunpack.c.l.b16 %v209
  %v1286 = vunpack.c.l.b16 %v210
  %v1287 = vunpack.c.l.b16 %v211
  %v1288 = vunpack.c.l.b16 %v212
  %v1289 = vunpack.c.l.b16 %v213
  %v1290 = vunpack.c.l.b16 %v214
  %v1291 = vunpack.c.l.b16 %v215
  %v1292 = vunpack.c.l.b16 %v216
  %v1293 = vunpack.c.l.b16 %v217
  %v1294 = vunpack.c.l.b16 %v218
  %v1295 = vunpack.c.l.b16 %v219
  %v1296 = vunpack.c.l.b16 %v220
  %v1297 = vunpack.c.l.b16 %v221
  %v1298 = vunpack.c.l.b16 %v222
  %v1299 = vunpack.c.l.b16 %v223
  %v1300 = vunpack.c.l.b16 %v224
  %v1301 = vunpack.c.l.b16 %v225
  %v1302 = vunpack.c.l.b16 %v226
  %v1303 = vunpack.c.l.b16 %v227
  %v1304 = vunpack.c.l.b16 %v228
  %v1305 = vunpack.c.l.b16 %v229
  %v1306 = vunpack.c.l.b16 %v230
  %v1307 = vunpack.c.l.b16 %v231
  %v1308 = vunpack.c.l.b16 %v232
  %v1309 = vunpack.c.l.b16 %v233
  %v1310 = vunpack.c.l.b16 %v234
  %v1311 = vunpack.c.l.b16 %v235
  %v1312 = vunpack.c.l.b16 %v236
  %v1313 = vunpack.c.l.b16 %v237
  %v1314 = vunpack.c.l.b16 %v238
  %v1315 = vunpack.c.l.b16 %v239
  %v1316 = vunpack.c.l.b16 %v240
  %v1317 = vunpack.c.l.b16 %v241
  %v1318 = vunpack.c.l.b16 %v242
  %v1319 = vunpack.c.l.b16 %v243
  %v1320 = vunpack.c.l.b16 %v244
  %v1321 = vunpack.c.l.b16 %v245
  %v1322 = vunpack.c.l.b16 %v246
  %v1323 = vunpack.c.l.b16 %v247
  %v1324 = vunpack.c.l.b16 %v248
  %v1325 = vunpack.c.l.b16 %v249
  %v1326 = vunpack.c.l.b16 %v250
  %v1327 = vunpack.c.l.b16 %v251
  %v1328 = vunpack.c.l.b16 %v252
  %v1329 = vunpack.c.l.b16 %v253
  %v1330 = vunpack.c.l.b16 %v254
  %v1331 = vunpack.c.l.b16 %v255
  %v1332 = vunpack.c.l.b16 %v256
  %v1333 = vunpack.c.l.b16 %v257
  %v1334 = vunpack.c.l.b16 %v258
  %v1335 = vunpack.c.l.b16 %v259
  %v1336 = vunpack.c.l.b16 %v260
  %v1337 = vunpack.c.l.b16 %v261
  %v1338 = vunpack.c.l.b16 %v262
  %v1339 = vunpack.c.l.b16 %v263
  %v1340 = vunpack.c.l.b16 %v264
  %v1341 = vunpack.c.l.b16 %v265
  %v1342 = vunpack.c.l.b16 %v266
  %v1343 = vunpack.c.l.b16 %v267
  %v1344 = vunpack.c.l.b16 %v268
  %v1345 = vunpack.c.l.b16 %v269
  %v1346 = vunpack.c.l.b16 %v270
  %v1347 = vunpack.c.l.b16 %v271
  %v1348 = vunpack.c.l.b16 %v272
  %v1349 = vunpack.c.l.b16 %v273
  %v1350 = vunpack.c.l.b16 %v274
  %v1351 = vunpack.c.l.b16 %v275
  %v1352 = vunpack.c.l.b16 %v276
  %v1353 = vunpack.c.l.b16 %v277
  %v1354 = vunpack.c.l.b16 %v278
  %v1355 = vunpack.c.l.b16 %v279
  %v1356 = vunpack.c.l.b16 %v280
  %v1357 = vunpack.c.l.b16 %v281
  %v1358 = vunpack.c.l.b16 %v282
  %v1359 = vunpack.c.l.b16 %v283
  %v1360 = vunpack.c.l.b16 %v284
  %v1361 = vunpack.c.l.b16 %v285
  %v1362 = vunpack.c.l.b16 %v286
  %v1363 = vunpack.c.l.b16 %v287
  %v1364 = vunpack.c.l.b16 %v288
  %v1365 = vunpack.c.l.b16 %v289
  %v1366 = vunpack.c.l.b16 %v290
  %v1367 = vunpack.c.l.b16 %v291
  %v1368 = vunpack.c.l.b16 %v292
  %v1369 = vunpack.c.l.b16 %v293
  %v1370 = vunpack.c.l.b16 %v294
  %v1371 = vunpack.c.l.b16 %v295
  %v1372 = vunpack.c.l.b16 %v296
  %v1373 = vunpack.c.l.b16 %v297
  %v1374 = vunpack.c.l.b16 %v298
  %v1375 = vunpack.c.l.b16 %v299
  %v1376 = vunpack.c.l.b16 %v300
  %v1377 = vunpack.c.l.b16 %v301
  %v1378 = vunpack.c.l.b16 %v302
  %v1379 = vunpack.c.l.b16 %v303
  %v1380 = vunpack.c.l.b16 %v304
  %v1381 = vunpack.c.l.b16 %v305
  %v1382 = vunpack.c.l.b16 %v306
  %v1383 = vunpack.c.l.b16 %v307
  %v1384 = vunpack.c.l.b16 %v308
  %v1385 = vunpack.c.l.b16 %v309
  %v1386 = vunpack.c.l.b16 %v310
  %v1387 = vunpack.c.l.b16 %v311
  %v1388 = vunpack.c.l.b16 %v312
  %v1389 = vunpack.c.l.b16 %v313
  %v1390 = vunpack.c.l.b16 %v314
  %v1391 = vunpack.c.l.b16 %v315
  %v1392 = vunpack.c.l.b16 %v316
  %v1393 = vunpack.c.l.b16 %v317
  %v1394 = vunpack.c.l.b16 %v318
  %v1395 = vunpack.c.l.b16 %v319
  %v1396 = vunpack.c.l.b16 %v320
  %v1397 = vunpack.c.l.b16 %v321
  %v1398 = vunpack.c.l.b16 %v322
  %v1399 = vunpack.c.l.b16 %v323
  %v1400 = vunpack.c.l.b16 %v324
  %v1401 = vunpack.c.l.b16 %v325
  %v1402 = vunpack.c.l.b16 %v326
  %v1403 = vunpack.c.l.b16 %v327
  %v1404 = vunpack.c.l.b16 %v328
  %v1405 = vunpack.c.l.b16 %v329
  %v1406 = vunpack.c.l.b16 %v330
  %v1407 = vunpack.c.l.b16 %v331
  %v1408 = vunpack.c.l.b16 %v332
  %v1409 = vunpack.c.l.b16 %v333
  %v1410 = vunpack.c.l.b16 %v334
  %v1411 = vunpack.c.l.b16 %v335
  %v1412 = vunpack.c.l.b16 %v336
  %v1413 = vunpack.c.l.b16 %v337
  %v1414 = vunpack.c.l.b16 %v338
  %v1415 = vunpack.c.l.b16 %v339
  %v1416 = vunpack.c.l.b16 %v340
  %v1417 = vunpack.c.l.b16 %v341
  %v1418 = vunpack.c.l.b16 %v342
  %v1419 = vunpack.c.l.b16 %v343
  %v1420 = vunpack.c.l.b16 %v344
  %v1421 = vunpack.c.l.b16 %v345
  %v1422 = vunpack.c.l.b16 %v346
  %v1423 = vunpack.c.l.b16 %v347
  %v1424 = vunpack.c.l.b16 %v348
  %v1425 = vunpack.c.l.b16 %v349
  %v1426 = vunpack.c.l.b16 %v350
  %v1427 = vunpack.c.l.b16 %v351
  %v1428 = vunpack.c.l.b16 %v352
  %v1429 = vunpack.c.l.b16 %v353
  %v1430 = vunpack.c.l.b16 %v354
  %v1431 = vunpack.c.l.b16 %v355
  %v1432 = vunpack.c.l.b16 %v356
  %v1433 = vunpack.c.l.b16 %v357
  %v1434 = vunpack.c.l.b16 %v358
  %v1435 = vunpack.c.l.b16 %v359
  %v1436 = vunpack.c.l.b16 %v360
  %v1437 = vunpack.c.l.b16 %v361
  %v1438 = vunpack.c.l.b16 %v362
  %v1439 = vunpack.c.l.b16 %v363
  %v1440 = vunpack.c.l.b16 %v364
  %v1441 = vunpack.c.l.b16 %v365
  %v1442 = vunpack.c.l.b16 %v366
  %v1443 = vunpack.c.l.b16 %v367
  %v1444 = vunpack.c.l.b16 %v368
  %v1445 = vunpack.c.l.b16 %v369
  %v1446 = vunpack.c.l.b16 %v370
  %v1447 = vunpack.c.l.b16 %v371
  %v1448 = vunpack.c.l.b16 %v372
  %v1449 = vunpack.c.l.b16 %v373
  %v1450 = vunpack.c.l.b16 %v374
  %v1451 = vunpack.c.l.b16 %v375
  %v1452 = vunpack.c.l.b16 %v376
  %v1453 = vunpack.c.l.b16 %v377
  %v1454 = vunpack.c.l.b16 %v378
  %v1455 = vunpack.c.l.b16 %v379
  %v1456 = vunpack.c.l.b16 %v380
  %v1457 = vunpack.c.l.b16 %v381
  %v1458 = vunpack.c.l.b16 %v382
  %v1459 = vunpack.c.l.b16 %v383
  %v1460 = vunpack.c.l.b16 %v384
  %v1461 = vunpack.c.l.b16 %v385
  %v1462 = vunpack.c.l.b16 %v386
  %v1463 = vunpack.c.l.b16 %v387
  %v1464 = vunpack.c.l.b16 %v388
  %v1465 = vunpack.c.l.b16 %v389
  %v1466 = vunpack.c.l.b16 %v390
  %v1467 = vunpack.c.l.b16 %v391
  %v1468 = vunpack.c.l.b16 %v392
  %v1469 = vunpack.c.l.b16 %v393
  %v1470 = vunpack.c.l.b16 %v394
  %v1471 = vunpack.c.l.b16 %v395
  %v1472 = vunpack.c.l.b16 %v396
  %v1473 = vunpack.c.l.b16 %v397
  %v1474 = vunpack.c.l.b16 %v398
  %v1475 = vunpack.c.l.b16 %v399
  %v1476 = vunpack.c.l.b16 %v400
  %v1477 = vunpack.c.l.b16 %v401
  %v1478 = vunpack.c.l.b16 %v402
  %v1479 = vunpack.c.l.b16 %v403
  %v1480 = vunpack.c.l.b16 %v404
  %v1481 = vunpack.c.l.b16 %v405
  %v1482 = vunpack.c.l.b16 %v406
  %v1483 = vunpack.c.l.b16 %v407
  %v1484 = vunpack.c.l.b16 %v408
  %v1485 = vunpack.c.l.b16 %v409
  %v1486 = vunpack.c.l.b16 %v410
  %v1487 = vunpack.c.l.b16 %v411
  %v1488 = vunpack.c.l.b16 %v412
  %v1489 = vunpack.c.l.b16 %v413
  %v1490 = vunpack.c.l.b16 %v414
  %v1491 = vunpack.c.l.b16 %v415
  %v1492 = vunpack.c.l.b16 %v416
  %v1493 = vunpack.c.l.b16 %v417
  %v1494 = vunpack.c.l.b16 %v418
  %v1495 = vunpack.c.l.b16 %v419
  %v1496 = vunpack.c.l.b16 %v420
  %v1497 = vunpack.c.l.b16 %v421
  %v1498 = vunpack.c.l.b16 %v422
  %v1499 = vunpack.c.l.b16 %v423
  %v1500 = vunpack.c.l.b16 %v424
  %v1501 = vunpack.c.l.b16 %v425
  %v1502 = vunpack.c.l.b16 %v426
  %v1503 = vunpack.c.l.b16 %v427
  %v1504 = vunpack.c.l.b16 %v428
  %v1505 = vunpack.c.l.b16 %v429
  %v1506 = vunpack.c.l.b16 %v430
  %v1507 = vunpack.c.l.b16 %v431
  %v1508 = vunpack.c.l.b16 %v432
  %v1509 = vunpack.c.l.b16 %v433
  %v1510 = vunpack.c.l.b16 %v434
  %v1511 = vunpack.c.l.b16 %v435
  %v1512 = vunpack.c.l.b16 %v436
  %v1513 = vunpack.c.l.b16 %v437
  %v1514 = vunpack.c.l.b16 %v438
  %v1515 = vunpack.c.l.b16 %v439
  %v1516 = vunpack.c.l.b16 %v440
  %v1517 = vunpack.c.l.b16 %v441
  %v1518 = vunpack.c.l.b16 %v442
  %v1519 = vunpack.c.l.b16 %v443
  %v1520 = vunpack.c.l.b16 %v444
  %v1521 = vunpack.c.l.b16 %v445
  %v1522 = vunpack.c.l.b16 %v446
  %v1523 = vunpack.c.l.b16 %v447
  %v1524 = vunpack.c.l.b16 %v448
  %v1525 = vunpack.c.l.b16 %v449
  %v1526 = vunpack.c.l.b16 %v450
  %v1527 = vunpack.c.l.b16 %v451
  %v1528 = vunpack.c.l.b16 %v452
  %v1529 = vunpack.c.l.b16 %v453
  %v1530 = vunpack.c.l.b16 %v454
  %v1531 = vunpack.c.l.b16 %v455
  %v1532 = vunpack.c.l.b16 %v456
  %v1533 = vunpack.c.l.b16 %v457
  %v1534 = vunpack.c.l.b16 %v458
  %v1535 = vunpack.c.l.b16 %v459
  %v1536 = vunpack.c.l.b16 %v460
  %v1537 = vunpack.c.l.b16 %v461
  %v1538 = vunpack.c.l.b16 %v462
  %v1539 = vunpack.c.l.b16 %v463
  %v1540 = vunpack.c.l.b16 %v464
  %v1541 = vunpack.c.l.b16 %v465
  %v1542 = vunpack.c.l.b16 %v466
  %v1543 = vunpack.c.l.b16 %v467
  %v1544 = vunpack.c.l.b16 %v468
  %v1545 = vunpack.c.l.b16 %v469
  %v1546 = vunpack.c.l.b16 %v470
  %v1547 = vunpack.c.l.b16 %v471
  %v1548 = vunpack.c.l.b16 %v472
  %v1549 = vunpack.c.l.b16 %v473
  %v1550 = vunpack.c.l.b16 %v474
  %v1551 = vunpack.c.l.b16 %v475
  %v1552 = vunpack.c.l.b16 %v476
  %v1553 = vunpack.c.l.b16 %v477
  %v1554 = vunpack.c.l.b16 %v478
  %v1555 = vunpack.c.l.b16 %v479
  %v1556 = vunpack.c.l.b16 %v480
  %v1557 = vunpack.c.l.b16 %v481
  %v1558 = vunpack.c.l.b16 %v482
  %v1559 = vunpack.c.l.b16 %v483
  %v1560 = vunpack.c.l.b16 %v484
  %v1561 = vunpack.c.l.b16 %v485
  %v1562 = vunpack.c.l.b16 %v486
  %v1563 = vunpack.c.l.b16 %v487
  %v1564 = vunpack.c.l.b16 %v488
  %v1565 = vunpack.c.l.b16 %v489
  %v1566 = vunpack.c.l.b16 %v490
  %v1567 = vunpack.c.l.b16 %v491
  %v1568 = vunpack.c.l.b16 %v492
  %v1569 = vunpack.c.l.b16 %v493
  %v1570 = vunpack.c.l.b16 %v494
  %v1571 = vunpack.c.l.b16 %v495
  %v1572 = vunpack.c.l.b16 %v496
  %v1573 = vunpack.c.l.b16 %v497
  %v1574 = vunpack.c.l.b16 %v498
  %v1575 = vunpack.c.l.b16 %v499
  %v1576 = vunpack.c.l.b16 %v500
  %v1577 = vunpack.c.l.b16 %v501
  %v1578 = vunpack.c.l.b16 %v502
  %v1579 = vunpack.c.l.b16 %v503
  %v1580 = vunpack.c.l.b16 %v504
  %v1581 = vunpack.c.l.b16 %v505
  %v1582 = vunpack.c.l.b16 %v506
  %v1583 = vunpack.c.l.b16 %v507
  %v1584 = vunpack.c.l.b16 %v508
  %v1585 = vunpack.c.l.b16 %v509
  %v1586 = vunpack.c.l.b16 %v510
  %v1587 = vunpack.c.l.b16 %v511
  %v1588 = vunpack.c.l.b16 %v512
  %v1589 = vunpack.c.l.b16 %v513
  %v1590 = vunpack.c.l.b16 %v514
  %v1591 = vunpack.c.l.b16 %v515
  %v1592 = vunpack.c.l.b16 %v516
  %v1593 = vunpack.c.l.b16 %v517
  %v1594 = vunpack.c.l.b16 %v518
  %v1595 = vunpack.c.l.b16 %v519
  %v1596 = vunpack.c.l.b16 %v520
  %v1597 = vunpack.c.l.b16 %v521
  %v1598 = vunpack.c.l.b16 %v522
  %v1599 = vunpack.c.l.b16 %v523
  %v1600 = vunpack.c.l.b16 %v524
  %v1601 = vunpack.c.l.b16 %v525
  %v1602 = vunpack.c.l.b16 %v526
  %v1603 = vunpack.c.l.b16 %v527
  %v1604 = vunpack.c.l.b16 %v528
  %v1605 = vunpack.c.l.b16 %v529
  %v1606 = vunpack.c.l.b16 %v530
  %v1607 = vunpack.c.l.b16 %v531
  %v1608 = vunpack.c.l.b16 %v532
  %v1609 = vunpack.c.l.b16 %v533
  %v1610 = vunpack.c.l.b16 %v534
  %v1611 = vunpack.c.l.b16 %v535
  %v1612 = vunpack.c.l.b16 %v536
  %v1613 = vunpack.c.l.b16 %v537
  %v1614 = vunpack.c.l.b16 %v538
  %v1615 = vunpack.c.l.b16 %v539
  %v1616 = vunpack.c.l.b16 %v540
  %v1617 = vunpack.c.l.b16 %v541
  %v1618 = vunpack.c.l.b16 %v542
  %v1619 = vunpack.c.l.b16 %v543
  %v1620 = vunpack.c.l.b16 %v544
  %v1621 = vunpack.c.l.b16 %v545
  %v1622 = vunpack.c.l.b16 %v546
  %v1623 = vunpack.c.l.b16 %v547
  %v1624 = vunpack.c.l.b16 %v548
  %v1625 = vunpack.c.l.b16 %v549
  %v1626 = vunpack.c.l.b16 %v550
  %v1627 = vpack.c.b16 %v1092, %v1091
  %v1628 = vpack.c.b16 %v1094, %v1093
  %v1629 = vpack.c.b16 %v1096, %v1095
  %v1630 = vpack.c.b16 %v1098, %v1097
  %v1631 = vpack.c.b16 %v1100, %v1099
  %v1632 = vpack.c.b16 %v1102, %v1101
  %v1633 = vpack.c.b16 %v1104, %v1103
  %v1634 = vpack.c.b16 %v1106, %v1105
  %v1635 = vpack.c.b16 %v1108, %v1107
  %v1636 = vpack.c.b16 %v1110, %v1109
  %v1637 = vpack.c.b16 %v1112, %v1111
  %v1638 = vpack.c.b16 %v1114, %v1113
  %v1639 = vpack.c.b16 %v1116, %v1115
  %v1640 = vpack.c.b16 %v1118, %v1117
  %v1641 = vpack.c.b16 %v1120, %v1119
  %v1642 = vpack.c.b16 %v1122, %v1121
  %v1643 = vpack.c.b16 %v1124, %v1123
  %v1644 = vpack.c.b16 %v1126, %v1125
  %v1645 = vpack.c.b16 %v1128, %v1127
  %v1646 = vpack.c.b16 %v1130, %v1129
  %v1647 = vpack.c.b16 %v1132, %v1131
  %v1648 = vpack.c.b16 %v1134, %v1133
  %v1649 = vpack.c.b16 %v1136, %v1135
  %v1650 = vpack.c.b16 %v1138, %v1137
  %v1651 = vpack.c.b16 %v1140, %v1139
  %v1652 = vpack.c.b16 %v1142, %v1141
  %v1653 = vpack.c.b16 %v1144, %v1143
  %v1654 = vpack.c.b16 %v1146, %v1145
  %v1655 = vpack.c.b16 %v1148, %v1147
  %v1656 = vpack.c.b16 %v1150, %v1149
  %v1657 = vpack.c.b16 %v1152, %v1151
  %v1658 = vpack.c.b16 %v1154, %v1153
  %v1659 = vpack.c.b16 %v1156, %v1155
  %v1660 = vpack.c.b16 %v1158, %v1157
  %v1661 = vpack.c.b16 %v1160, %v1159
  %v1662 = vpack.c.b16 %v1162, %v1161
  %v1663 = vpack.c.b16 %v1164, %v1163
  %v1664 = vpack.c.b16 %v1166, %v1165
  %v1665 = vpack.c.b16 %v1168, %v1167
  %v1666 = vpack.c.b16 %v1170, %v1169
  %v1667 = vpack.c.b16 %v1172, %v1171
  %v1668 = vpack.c.b16 %v1174, %v1173
  %v1669 = vpack.c.b16 %v1176, %v1175
  %v1670 = vpack.c.b16 %v1178, %v1177
  %v1671 = vpack.c.b16 %v1180, %v1179
  %v1672 = vpack.c.b16 %v1182, %v1181
  %v1673 = vpack.c.b16 %v1184, %v1183
  %v1674 = vpack.c.b16 %v1186, %v1185
  %v1675 = vpack.c.b16 %v1188, %v1187
  %v1676 = vpack.c.b16 %v1190, %v1189
  %v1677 = vpack.c.b16 %v1192, %v1191
  %v1678 = vpack.c.b16 %v1194, %v1193
  %v1679 = vpack.c.b16 %v1196, %v1195
  %v1680 = vpack.c.b16 %v1198, %v1197
  %v1681 = vpack.c.b16 %v1200, %v1199
  %v1682 = vpack.c.b16 %v1202, %v1201
  %v1683 = vpack.c.b16 %v1204, %v1203
  %v1684 = vpack.c.b16 %v1206, %v1205
  %v1685 = vpack.c.b16 %v1208, %v1207
  %v1686 = vpack.c.b16 %v1210, %v1209
  %v1687 = vpack.c.b16 %v1212, %v1211
  %v1688 = vpack.c.b16 %v1214, %v1213
  %v1689 = vpack.c.b16 %v1216, %v1215
  %v1690 = vpack.c.b16 %v1218, %v1217
  %v1691 = vpack.c.b16 %v1220, %v1219
  %v1692 = vpack.c.b16 %v1222, %v1221
  %v1693 = vpack.c.b16 %v1224, %v1223
  %v1694 = vpack.c.b16 %v1226, %v1225
  %v1695 = vpack.c.b16 %v1228, %v1227
  %v1696 = vpack.c.b16 %v1230, %v1229
  %v1697 = vpack.c.b16 %v1232, %v1231
  %v1698 = vpack.c.b16 %v1234, %v1233
  %v1699 = vpack.c.b16 %v1236, %v1235
  %v1700 = vpack.c.b16 %v1238, %v1237
  %v1701 = vpack.c.b16 %v1240, %v1239
  %v1702 = vpack.c.b16 %v1242, %v1241
  %v1703 = vpack.c.b16 %v1244, %v1243
  %v1704 = vpack.c.b16 %v1246, %v1245
  %v1705 = vpack.c.b16 %v1248, %v1247
  %v1706 = vpack.c.b16 %v1250, %v1249
  %v1707 = vpack.c.b16 %v1252, %v1251
  %v1708 = vpack.c.b16 %v1254, %v1253
  %v1709 = vpack.c.b16 %v1256, %v1255
  %v1710 = vpack.c.b16 %v1258, %v1257
  %v1711 = vpack.c.b16 %v1260, %v1259
  %v1712 = vpack.c.b16 %v1262, %v1261
  %v1713 = vpack.c.b16 %v1264, %v1263
  %v1714 = vpack.c.b16 %v1266, %v1265
  %v1715 = vpack.c.b16 %v1268, %v1267
  %v1716 = vpack.c.b16 %v1270, %v1269
  %v1717 = vpack.c.b16 %v1272, %v1271
  %v1718 = vpack.c.b16 %v1274, %v1273
  %v1719 = vpack.c.b16 %v1276, %v1275
  %v1720 = vpack.c.b16 %v1278, %v1277
  %v1721 = vpack.c.b16 %v1280, %v1279
  %v1722 = vpack.c.b16 %v1282, %v1281
  %v1723 = vpack.c.b16 %v1284, %v1283
  %v1724 = vpack.c.b16 %v1286, %v1285
  %v1725 = vpack.c.b16 %v1288, %v1287
  %v1726 = vpack.c.b16 %v1290, %v1289
  %v1727 = vpack.c.b16 %v1292, %v1291
  %v1728 = vpack.c.b16 %v1294, %v1293
  %v1729 = vpack.c.b16 %v1296, %v1295
  %v1730 = vpack.c.b16 %v1298, %v1297
  %v1731 = vpack.c.b16 %v1300, %v1299
  %v1732 = vpack.c.b16 %v1302, %v1301
  %v1733 = vpack.c.b16 %v1304, %v1303
  %v1734 = vpack.c.b16 %v1306, %v1305
  %v1735 = vpack.c.b16 %v1308, %v1307
  %v1736 = vpack.c.b16 %v1310, %v1309
  %v1737 = vpack.c.b16 %v1312, %v1311
  %v1738 = vpack.c.b16 %v1314, %v1313
  %v1739 = vpack.c.b16 %v1316, %v1315
  %v1740 = vpack.c.b16 %v1318, %v1317
  %v1741 = vpack.c.b16 %v1320, %v1319
  %v1742 = vpack.c.b16 %v1322, %v1321
  %v1743 = vpack.c.b16 %v1324, %v1323
  %v1744 = vpack.c.b16 %v1326, %v1325
  %v1745 = vpack.c.b16 %v1328, %v1327
  %v1746 = vpack.c.b16 %v1330, %v1329
  %v1747 = vpack.c.b16 %v1332, %v1331
  %v1748 = vpack.c.b16 %v1334, %v1333
  %v1749 = vpack.c.b16 %v1336, %v1335
  %v1750 = vpack.c.b16 %v1338, %v1337
  %v1751 = vpack.c.b16 %v1340, %v1339
  %v1752 = vpack.c.b16 %v1342, %v1341
  %v1753 = vpack.c.b16 %v1344, %v1343
  %v1754 = vpack.c.b16 %v1346, %v1345
  %v1755 = vpack.c.b16 %v1348, %v1347
  %v1756 = vpack.c.b16 %v1350, %v1349
  %v1757 = vpack.c.b16 %v1352, %v1351
  %v1758 = vpack.c.b16 %v1354, %v1353
  %v1759 = vpack.c.b16 %v1356, %v1355
  %v1760 = vpack.c.b16 %v1358, %v1357
  %v1761 = vpack.c.b16 %v1360, %v1359
  %v1762 = vpack.c.b16 %v1362, %v1361
  %v1763 = vpack.c.b16 %v1364, %v1363
  %v1764 = vpack.c.b16 %v1366, %v1365
  %v1765 = vpack.c.b16 %v1368, %v1367
  %v1766 = vpack.c.b16 %v1370, %v1369
  %v1767 = vpack.c.b16 %v1372, %v1371
  %v1768 = vpack.c.b16 %v1374, %v1373
  %v1769 = vpack.c.b16 %v1376, %v1375
  %v1770 = vpack.c.b16 %v1378, %v1377
  %v1771 = vpack.c.b16 %v1380, %v1379
  %v1772 = vpack.c.b16 %v1382, %v1381
  %v1773 = vpack.c.b16 %v1384, %v1383
  %v1774 = vpack.c.b16 %v1386, %v1385
  %v1775 = vpack.c.b16 %v1388, %v1387
  %v1776 = vpack.c.b16 %v1390, %v1389
  %v1777 = vpack.c.b16 %v1392, %v1391
  %v1778 = vpack.c.b16 %v1394, %v1393
  %v1779 = vpack.c.b16 %v1396, %v1395
  %v1780 = vpack.c.b16 %v1398, %v1397
  %v1781 = vpack.c.b16 %v1400, %v1399
  %v1782 = vpack.c.b16 %v1402, %v1401
  %v1783 = vpack.c.b16 %v1404, %v1403
  %v1784 = vpack.c.b16 %v1406, %v1405
  %v1785 = vpack.c.b16 %v1408, %v1407
  %v1786 = vpack.c.b16 %v1410, %v1409
  %v1787 = vpack.c.b16 %v1412, %v1411
  %v1788 = vpack.c.b16 %v1414, %v1413
  %v1789 = vpack.c.b16 %v1416, %v1415
  %v1790 = vpack.c.b16 %v1418, %v1417
  %v1791 = vpack.c.b16 %v1420, %v1419
  %v1792 = vpack.c.b16 %v1422, %v1421
  %v1793 = vpack.c.b16 %v1424, %v1423
  %v1794 = vpack.c.b16 %v1426, %v1425
  %v1795 = vpack.c.b16 %v1428, %v1427
  %v1796 = vpack.c.b16 %v1430, %v1429
  %v1797 = vpack.c.b16 %v1432, %v1431
  %v1798 = vpack.c.b16 %v1434, %v1433
  %v1799 = vpack.c.b16 %v1436, %v1435
  %v1800 = vpack.c.b16 %v1438, %v1437
  %v1801 = vpack.c.b16 %v1440, %v1439
  %v1802 = vpack.c.b16 %v1442, %v1441
  %v1803 = vpack.c.b16 %v1444, %v1443
  %v1804 = vpack.c.b16 %v1446, %v1445
  %v1805 = vpack.c.b16 %v1448, %v1447
  %v1806 = vpack.c.b16 %v1450, %v1449
  %v1807 = vpack.c.b16 %v1452, %v1451
  %v1808 = vpack.c.b16 %v1454, %v1453
  %v1809 = vpack.c.b16 %v1456, %v1455
  %v1810 = vpack.c.b16 %v1458, %v1457
  %v1811 = vpack.c.b16 %v1460, %v1459
  %v1812 = vpack.c.b16 %v1462, %v1461
  %v1813 = vpack.c.b16 %v1464, %v1463
  %v1814 = vpack.c.b16 %v1466, %v1465
  %v1815 = vpack.c.b16 %v1468, %v1467
  %v1816 = vpack.c.b16 %v1470, %v1469
  %v1817 = vpack.c.b16 %v1472, %v1471
  %v1818 = vpack.c.b16 %v1474, %v1473
  %v1819 = vpack.c.b16 %v1476, %v1475
  %v1820 = vpack.c.b16 %v1478, %v1477
  %v1821 = vpack.c.b16 %v1480, %v1479
  %v1822 = vpack.c.b16 %v1482, %v1481
  %v1823 = vpack.c.b16 %v1484, %v1483
  %v1824 = vpack.c.b16 %v1486, %v1485
  %v1825 = vpack.c.b16 %v1488, %v1487
  %v1826 = vpack.c.b16 %v1490, %v1489
  %v1827 = vpack.c.b16 %v1492, %v1491
  %v1828 = vpack.c.b16 %v1494, %v1493
  %v1829 = vpack.c.b16 %v1496, %v1495
  %v1830 = vpack.c.b16 %v1498, %v1497
  %v1831 = vpack.c.b16 %v1500, %v1499
  %v1832 = vpack.c.b16 %v1502, %v1501
  %v1833 = vpack.c.b16 %v1504, %v1503
  %v1834 = vpack.c.b16 %v1506, %v1505
  %v1835 = vpack.c.b16 %v1508, %v1507
  %v1836 = vpack.c.b16 %v1510, %v1509
  %v1837 = vpack.c.b16 %v1512, %v1511
  %v1838 = vpack.c.b16 %v1514, %v1513
  %v1839 = vpack.c.b16 %v1516, %v1515
  %v1840 = vpack.c.b16 %v1518, %v1517
  %v1841 = vpack.c.b16 %v1520, %v1519
  %v1842 = vpack.c.b16 %v1522, %v1521
  %v1843 = vpack.c.b16 %v1524, %v1523
  %v1844 = vpack.c.b16 %v1526, %v1525
  %v1845 = vpack.c.b16 %v1528, %v1527
  %v1846 = vpack.c.b16 %v1530, %v1529
  %v1847 = vpack.c.b16 %v1532, %v1531
  %v1848 = vpack.c.b16 %v1534, %v1533
  %v1849 = vpack.c.b16 %v1536, %v1535
  %v1850 = vpack.c.b16 %v1538, %v1537
  %v1851 = vpack.c.b16 %v1540, %v1539
  %v1852 = vpack.c.b16 %v1542, %v1541
  %v1853 = vpack.c.b16 %v1544, %v1543
  %v1854 = vpack.c.b16 %v1546, %v1545
  %v1855 = vpack.c.b16 %v1548, %v1547
  %v1856 = vpack.c.b16 %v1550, %v1549
  %v1857 = vpack.c.b16 %v1552, %v1551
  %v1858 = vpack.c.b16 %v1554, %v1553
  %v1859 = vpack.c.b16 %v1556, %v1555
  %v1860 = vpack.c.b16 %v1558, %v1557
  %v1861 = vpack.c.b16 %v1560, %v1559
  %v1862 = vpack.c.b16 %v1562, %v1561
  %v1863 = vpack.c.b16 %v1564, %v1563
  %v1864 = vpack.c.b16 %v1566, %v1565
  %v1865 = vpack.c.b16 %v1568, %v1567
  %v1866 = vpack.c.b16 %v1570, %v1569
  %v1867 = vpack.c.b16 %v1572, %v1571
  %v1868 = vpack.c.b16 %v1574, %v1573
  %v1869 = vpack.c.b16 %v1576, %v1575
  %v1870 = vpack.c.b16 %v1578, %v1577
  %v1871 = vpack.c.b16 %v1580, %v1579
  %v1872 = vpack.c.b16 %v1582, %v1581
  %v1873 = vpack.c.b16 %v1584, %v1583
  %v1874 = vpack.c.b16 %v1586, %v1585
  %v1875 = vpack.c.b16 %v1588, %v1587
  %v1876 = vpack.c.b16 %v1590, %v1589
  %v1877 = vpack.c.b16 %v1592, %v1591
  %v1878 = vpack.c.b16 %v1594, %v1593
  %v1879 = vpack.c.b16 %v1596, %v1595
  %v1880 = vpack.c.b16 %v1598, %v1597
  %v1881 = vpack.c.b16 %v1600, %v1599
  %v1882 = vpack.c.b16 %v1602, %v1601
  %v1883 = vpack.c.b16 %v1604, %v1603
  %v1884 = vpack.c.b16 %v1606, %v1605
  %v1885 = vpack.c.b16 %v1608, %v1607
  %v1886 = vpack.c.b16 %v1610, %v1609
  %v1887 = vpack.c.b16 %v1612, %v1611
  %v1888 = vpack.c.b16 %v1614, %v1613
  %v1889 = vpack.c.b16 %v1616, %v1615
  %v1890 = vpack.c.b16 %v1618, %v1617
  %v1891 = vpack.c.b16 %v1620, %v1619
  %v1892 = vpack.c.b16 %v1622, %v1621
  %v1893 = vpack.c.b16 %v1624, %v1623
  %v1894 = vpack.c.b16 %v1626, %v1625
  %v1899 = vunpack.c.l.b16 %v551
  %v1900 = vunpack.c.l.b16 %v552
  %v1901 = vunpack.c.l.b16 %v553
  %v1902 = vunpack.c.l.b16 %v554
  %v1903 = vpack.c.b16 %v1900, %v1899
  %v1904 = vpack.c.b16 %v1902, %v1901
  %vm1906 = vcmask 203776
  %v1908 = vsel %vm1906, %v1627, 0
  %v1911 = vsel %vm1906, %v1628, 0
  %v1914 = vsel %vm1906, %v1629, 0
  %v1917 = vsel %vm1906, %v1630, 0
  %v1920 = vsel %vm1906, %v1631, 0
  %v1923 = vsel %vm1906, %v1632, 0
  %v1926 = vsel %vm1906, %v1633, 0
  %v1929 = vsel %vm1906, %v1634, 0
  %v1932 = vsel %vm1906, %v1635, 0
  %v1935 = vsel %vm1906, %v1636, 0
  %v1938 = vsel %vm1906, %v1637, 0
  %v1941 = vsel %vm1906, %v1638, 0
  %v1944 = vsel %vm1906, %v1639, 0
  %v1947 = vsel %vm1906, %v1640, 0
  %v1950 = vsel %vm1906, %v1641, 0
  %v1953 = vsel %vm1906, %v1642, 0
  %v1956 = vsel %vm1906, %v1643, 0
  %v1959 = vsel %vm1906, %v1644, 0
  %v1962 = vsel %vm1906, %v1645, 0
  %v1965 = vsel %vm1906, %v1646, 0
  %v1968 = vsel %vm1906, %v1647, 0
  %v1971 = vsel %vm1906, %v1648, 0
  %v1974 = vsel %vm1906, %v1649, 0
  %v1977 = vsel %vm1906, %v1650, 0
  %v1980 = vsel %vm1906, %v1651, 0
  %v1983 = vsel %vm1906, %v1652, 0
  %v1986 = vsel %vm1906, %v1653, 0
  %v1989 = vsel %vm1906, %v1654, 0
  %v1992 = vsel %vm1906, %v1655, 0
  %v1995 = vsel %vm1906, %v1656, 0
  %v1998 = vsel %vm1906, %v1657, 0
  %v2001 = vsel %vm1906, %v1658, 0
  %v2004 = vsel %vm1906, %v1659, 0
  %v2007 = vsel %vm1906, %v1660, 0
  %v2010 = vsel %vm1906, %v1661, 0
  %v2013 = vsel %vm1906, %v1662, 0
  %v2016 = vsel %vm1906, %v1663, 0
  %v2019 = vsel %vm1906, %v1664, 0
  %v2022 = vsel %vm1906, %v1665, 0
  %v2025 = vsel %vm1906, %v1666, 0
  %v2028 = vsel %vm1906, %v1667, 0
  %v2031 = vsel %vm1906, %v1668, 0
  %v2034 = vsel %vm1906, %v1669, 0
  %v2037 = vsel %vm1906, %v1670, 0
  %v2040 = vsel %vm1906, %v1671, 0
  %v2043 = vsel %vm1906, %v1672, 0
  %v2046 = vsel %vm1906, %v1673, 0
  %v2049 = vsel %vm1906, %v1674, 0
  %v2052 = vsel %vm1906, %v1675, 0
  %v2055 = vsel %vm1906, %v1676, 0
  %v2058 = vsel %vm1906, %v1677, 0
  %v2061 = vsel %vm1906, %v1678, 0
  %v2064 = vsel %vm1906, %v1679, 0
  %v2067 = vsel %vm1906, %v1680, 0
  %v2070 = vsel %vm1906, %v1681, 0
  %v2073 = vsel %vm1906, %v1682, 0
  %v2076 = vsel %vm1906, %v1683, 0
  %v2079 = vsel %vm1906, %v1684, 0
  %v2082 = vsel %vm1906, %v1685, 0
  %v2085 = vsel %vm1906, %v1686, 0
  %v2088 = vsel %vm1906, %v1687, 0
  %v2091 = vsel %vm1906, %v1688, 0
  %v2094 = vsel %vm1906, %v1689, 0
  %v2097 = vsel %vm1906, %v1690, 0
  %v2100 = vsel %vm1906, %v1691, 0
  %v2103 = vsel %vm1906, %v1692, 0
  %v2106 = vsel %vm1906, %v1693, 0
  %v2109 = vsel %vm1906, %v1694, 0
  %v2112 = vsel %vm1906, %v1695, 0
  %v2115 = vsel %vm1906, %v1696, 0
  %v2118 = vsel %vm1906, %v1697, 0
  %v2121 = vsel %vm1906, %v1698, 0
  %v2124 = vsel %vm1906, %v1699, 0
  %v2127 = vsel %vm1906, %v1700, 0
  %v2130 = vsel %vm1906, %v1701, 0
  %v2133 = vsel %vm1906, %v1702, 0
  %v2136 = vsel %vm1906, %v1703, 0
  %v2139 = vsel %vm1906, %v1704, 0
  %v2142 = vsel %vm1906, %v1705, 0
  %v2145 = vsel %vm1906, %v1706, 0
  %v2148 = vsel %vm1906, %v1707, 0
  %v2151 = vsel %vm1906, %v1708, 0
  %v2154 = vsel %vm1906, %v1709, 0
  %v2157 = vsel %vm1906, %v1710, 0
  %v2160 = vsel %vm1906, %v1711, 0
  %v2163 = vsel %vm1906, %v1712, 0
  %v2166 = vsel %vm1906, %v1713, 0
  %v2169 = vsel %vm1906, %v1714, 0
  %v2172 = vsel %vm1906, %v1715, 0
  %v2175 = vsel %vm1906, %v1716, 0
  %v2178 = vsel %vm1906, %v1717, 0
  %v2181 = vsel %vm1906, %v1718, 0
  %v2184 = vsel %vm1906, %v1719, 0
  %v2187 = vsel %vm1906, %v1720, 0
  %v2190 = vsel %vm1906, %v1721, 0
  %v2193 = vsel %vm1906, %v1722, 0
  %v2196 = vsel %vm1906, %v1723, 0
  %v2199 = vsel %vm1906, %v1724, 0
  %v2202 = vsel %vm1906, %v1725, 0
  %v2205 = vsel %vm1906, %v1726, 0
  %v2208 = vsel %vm1906, %v1727, 0
  %v2211 = vsel %vm1906, %v1728, 0
  %v2214 = vsel %vm1906, %v1729, 0
  %v2217 = vsel %vm1906, %v1730, 0
  %v2220 = vsel %vm1906, %v1731, 0
  %v2223 = vsel %vm1906, %v1732, 0
  %v2226 = vsel %vm1906, %v1733, 0
  %v2229 = vsel %vm1906, %v1734, 0
  %v2232 = vsel %vm1906, %v1735, 0
  %v2235 = vsel %vm1906, %v1736, 0
  %v2238 = vsel %vm1906, %v1737, 0
  %v2241 = vsel %vm1906, %v1738, 0
  %v2244 = vsel %vm1906, %v1739, 0
  %v2247 = vsel %vm1906, %v1740, 0
  %v2250 = vsel %vm1906, %v1741, 0
  %v2253 = vsel %vm1906, %v1742, 0
  %v2256 = vsel %vm1906, %v1743, 0
  %v2259 = vsel %vm1906, %v1744, 0
  %v2262 = vsel %vm1906, %v1745, 0
  %v2265 = vsel %vm1906, %v1746, 0
  %v2268 = vsel %vm1906, %v1747, 0
  %v2271 = vsel %vm1906, %v1748, 0
  %v2274 = vsel %vm1906, %v1749, 0
  %v2277 = vsel %vm1906, %v1750, 0
  %v2280 = vsel %vm1906, %v1751, 0
  %v2283 = vsel %vm1906, %v1752, 0
  %v2286 = vsel %vm1906, %v1753, 0
  %v2289 = vsel %vm1906, %v1754, 0
  %v2292 = vsel %vm1906, %v1755, 0
  %v2295 = vsel %vm1906, %v1756, 0
  %v2298 = vsel %vm1906, %v1757, 0
  %v2301 = vsel %vm1906, %v1758, 0
  %v2304 = vsel %vm1906, %v1759, 0
  %v2307 = vsel %vm1906, %v1760, 0
  %v2310 = vsel %vm1906, %v1761, 0
  %v2313 = vsel %vm1906, %v1762, 0
  %v2316 = vsel %vm1906, %v1763, 0
  %v2319 = vsel %vm1906, %v1764, 0
  %v2322 = vsel %vm1906, %v1765, 0
  %v2325 = vsel %vm1906, %v1766, 0
  %v2328 = vsel %vm1906, %v1767, 0
  %v2331 = vsel %vm1906, %v1768, 0
  %v2334 = vsel %vm1906, %v1769, 0
  %v2337 = vsel %vm1906, %v1770, 0
  %v2340 = vsel %vm1906, %v1771, 0
  %v2343 = vsel %vm1906, %v1772, 0
  %v2346 = vsel %vm1906, %v1773, 0
  %v2349 = vsel %vm1906, %v1774, 0
  %v2352 = vsel %vm1906, %v1775, 0
  %v2355 = vsel %vm1906, %v1776, 0
  %v2358 = vsel %vm1906, %v1777, 0
  %v2361 = vsel %vm1906, %v1778, 0
  %v2364 = vsel %vm1906, %v1779, 0
  %v2367 = vsel %vm1906, %v1780, 0
  %v2370 = vsel %vm1906, %v1781, 0
  %v2373 = vsel %vm1906, %v1782, 0
  %v2376 = vsel %vm1906, %v1783, 0
  %v2379 = vsel %vm1906, %v1784, 0
  %v2382 = vsel %vm1906, %v1785, 0
  %v2385 = vsel %vm1906, %v1786, 0
  %v2388 = vsel %vm1906, %v1787, 0
  %v2391 = vsel %vm1906, %v1788, 0
  %v2394 = vsel %vm1906, %v1789, 0
  %v2397 = vsel %vm1906, %v1790, 0
  %v2400 = vsel %vm1906, %v1791, 0
  %v2403 = vsel %vm1906, %v1792, 0
  %v2406 = vsel %vm1906, %v1793, 0
  %v2409 = vsel %vm1906, %v1794, 0
  %v2412 = vsel %vm1906, %v1795, 0
  %v2415 = vsel %vm1906, %v1796, 0
  %v2418 = vsel %vm1906, %v1797, 0
  %v2421 = vsel %vm1906, %v1798, 0
  %v2424 = vsel %vm1906, %v1799, 0
  %v2427 = vsel %vm1906, %v1800, 0
  %v2430 = vsel %vm1906, %v1801, 0
  %v2433 = vsel %vm1906, %v1802, 0
  %v2436 = vsel %vm1906, %v1803, 0
  %v2439 = vsel %vm1906, %v1804, 0
  %v2442 = vsel %vm1906, %v1805, 0
  %v2445 = vsel %vm1906, %v1806, 0
  %v2448 = vsel %vm1906, %v1807, 0
  %v2451 = vsel %vm1906, %v1808, 0
  %v2454 = vsel %vm1906, %v1809, 0
  %v2457 = vsel %vm1906, %v1810, 0
  %v2460 = vsel %vm1906, %v1811, 0
  %v2463 = vsel %vm1906, %v1812, 0
  %v2466 = vsel %vm1906, %v1813, 0
  %v2469 = vsel %vm1906, %v1814, 0
  %v2472 = vsel %vm1906, %v1815, 0
  %v2475 = vsel %vm1906, %v1816, 0
  %v2478 = vsel %vm1906, %v1817, 0
  %v2481 = vsel %vm1906, %v1818, 0
  %v2484 = vsel %vm1906, %v1819, 0
  %v2487 = vsel %vm1906, %v1820, 0
  %v2490 = vsel %vm1906, %v1821, 0
  %v2493 = vsel %vm1906, %v1822, 0
  %v2496 = vsel %vm1906, %v1823, 0
  %v2499 = vsel %vm1906, %v1824, 0
  %v2502 = vsel %vm1906, %v1825, 0
  %v2505 = vsel %vm1906, %v1826, 0
  %v2508 = vsel %vm1906, %v1827, 0
  %v2511 = vsel %vm1906, %v1828, 0
  %v2514 = vsel %vm1906, %v1829, 0
  %v2517 = vsel %vm1906, %v1830, 0
  %v2520 = vsel %vm1906, %v1831, 0
  %v2523 = vsel %vm1906, %v1832, 0
  %v2526 = vsel %vm1906, %v1833, 0
  %v2529 = vsel %vm1906, %v1834, 0
  %v2532 = vsel %vm1906, %v1835, 0
  %v2535 = vsel %vm1906, %v1836, 0
  %v2538 = vsel %vm1906, %v1837, 0
  %v2541 = vsel %vm1906, %v1838, 0
  %v2544 = vsel %vm1906, %v1839, 0
  %v2547 = vsel %vm1906, %v1840, 0
  %v2550 = vsel %vm1906, %v1841, 0
  %v2553 = vsel %vm1906, %v1842, 0
  %v2556 = vsel %vm1906, %v1843, 0
  %v2559 = vsel %vm1906, %v1844, 0
  %v2562 = vsel %vm1906, %v1845, 0
  %v2565 = vsel %vm1906, %v1846, 0
  %v2568 = vsel %vm1906, %v1847, 0
  %v2571 = vsel %vm1906, %v1848, 0
  %v2574 = vsel %vm1906, %v1849, 0
  %v2577 = vsel %vm1906, %v1850, 0
  %v2580 = vsel %vm1906, %v1851, 0
  %v2583 = vsel %vm1906, %v1852, 0
  %v2586 = vsel %vm1906, %v1853, 0
  %v2589 = vsel %vm1906, %v1854, 0
  %v2592 = vsel %vm1906, %v1855, 0
  %v2595 = vsel %vm1906, %v1856, 0
  %v2598 = vsel %vm1906, %v1857, 0
  %v2601 = vsel %vm1906, %v1858, 0
  %v2604 = vsel %vm1906, %v1859, 0
  %v2607 = vsel %vm1906, %v1860, 0
  %v2610 = vsel %vm1906, %v1861, 0
  %v2613 = vsel %vm1906, %v1862, 0
  %v2616 = vsel %vm1906, %v1863, 0
  %v2619 = vsel %vm1906, %v1864, 0
  %v2622 = vsel %vm1906, %v1865, 0
  %v2625 = vsel %vm1906, %v1866, 0
  %v2628 = vsel %vm1906, %v1867, 0
  %v2631 = vsel %vm1906, %v1868, 0
  %v2634 = vsel %vm1906, %v1869, 0
  %v2637 = vsel %vm1906, %v1870, 0
  %v2640 = vsel %vm1906, %v1871, 0
  %v2643 = vsel %vm1906, %v1872, 0
  %v2646 = vsel %vm1906, %v1873, 0
  %v2649 = vsel %vm1906, %v1874, 0
  %v2652 = vsel %vm1906, %v1875, 0
  %v2655 = vsel %vm1906, %v1876, 0
  %v2658 = vsel %vm1906, %v1877, 0
  %v2661 = vsel %vm1906, %v1878, 0
  %v2664 = vsel %vm1906, %v1879, 0
  %v2667 = vsel %vm1906, %v1880, 0
  %v2670 = vsel %vm1906, %v1881, 0
  %v2673 = vsel %vm1906, %v1882, 0
  %v2676 = vsel %vm1906, %v1883, 0
  %v2679 = vsel %vm1906, %v1884, 0
  %v2682 = vsel %vm1906, %v1885, 0
  %v2685 = vsel %vm1906, %v1886, 0
  %v2688 = vsel %vm1906, %v1887, 0
  %v2691 = vsel %vm1906, %v1888, 0
  %v2694 = vsel %vm1906, %v1889, 0
  %v2697 = vsel %vm1906, %v1890, 0
  %v2700 = vsel %vm1906, %v1891, 0
  %v2703 = vsel %vm1906, %v1892, 0
  %v2706 = vsel %vm1906, %v1893, 0
  %v2709 = vsel %vm1906, %v1894, 0
  %vm2711 = vcmask 1043456
  %vm2712 = vcmask 1044480
  %v2713 = vsel %vm2711, 4294967295, 65535
  %v2714 = vsel %vm2712, %v2713, 0
  %v2716 = vand.u32 %v1904, %v2714
  %2718 = vmatprep.subr.bf16.mxu0 0
  %2719 = vmatpush1.bf16.msra.mxu0 %v1903
  %2720 = vmatprep.subr.bf16.mxu0 0
  %2721 = vmatpush1.bf16.msra.mxu0 %v2716
  %2722 = vmatprep.subr.bf16.mxu0 0
  %2723 = vmatpush1.bf16.msra.mxu0 0
  %2724 = vmatprep.subr.bf16.mxu0 0
  %2725 = vmatpush1.bf16.msra.mxu0 0
  %2726 = vmatprep.subr.bf16.mxu0 0
  %2727 = vmatpush1.bf16.msra.mxu0 0
  %2728 = vmatprep.subr.bf16.mxu0 0
  %2729 = vmatpush1.bf16.msra.mxu0 0
  %2730 = vmatprep.subr.bf16.mxu0 0
  %2731 = vmatpush1.bf16.msra.mxu0 0
  %2732 = vmatprep.subr.bf16.mxu0 0
  %2733 = vmatpush1.bf16.msra.mxu0 0
  %2734 = vmatprep.subr.bf16.mxu0 0
  %2735 = vmatpush1.bf16.msra.mxu0 0
  %2736 = vmatprep.subr.bf16.mxu0 0
  %2737 = vmatpush1.bf16.msra.mxu0 0
  %2738 = vmatprep.subr.bf16.mxu0 0
  %2739 = vmatpush1.bf16.msra.mxu0 0
  %2740 = vmatprep.subr.bf16.mxu0 0
  %2741 = vmatpush1.bf16.msra.mxu0 0
  %2742 = vmatprep.subr.bf16.mxu0 0
  %2743 = vmatpush1.bf16.msra.mxu0 0
  %2744 = vmatprep.subr.bf16.mxu0 0
  %2745 = vmatpush1.bf16.msra.mxu0 0
  %2746 = vmatprep.subr.bf16.mxu0 0
  %2747 = vmatpush1.bf16.msra.mxu0 0
  %2748 = vmatprep.subr.bf16.mxu0 0
  %2749 = vmatpush1.bf16.msra.mxu0 0
  %2750 = vmatprep.mubr.bf16.mxu0 0
  %2751 = vmatmul.mubr.bf16.gmra.mrb[0].mxu0 %v1908
  %v2752 = vpop.f32.mrb[0].mxu0
  %v2753 = vadd.f32 0.0, %v2752
  %v2754 = vpop.f32.mrb[0].mxu0
  %v2755 = vpop.f32.mrb[0].mxu0
  %v2756 = vadd.f32 0.0, %v2755
  %v2757 = vpop.f32.mrb[0].mxu0
  %2758 = vmatprep.mubr.bf16.mxu0 0
  %2759 = vmatmul.mubr.bf16.gmra.mrb[0].mxu0 %v1911
  %v2760 = vpop.f32.mrb[0].mxu0
  %v2761 = vadd.f32 0.0, %v2760
  %v2762 = vpop.f32.mrb[0].mxu0
  %v2763 = vpop.f32.mrb[0].mxu0
  %v2764 = vadd.f32 0.0, %v2763
  %v2765 = vpop.f32.mrb[0].mxu0
  %2766 = vmatprep.mubr.bf16.mxu0 0
  %2767 = vmatmul.mubr.bf16.gmra.mrb[0].mxu0 %v1914
  %v2768 = vpop.f32.mrb[0].mxu0
  %v2769 = vadd.f32 0.0, %v2768
  %v2770 = vpop.f32.mrb[0].mxu0
  %v2771 = vpop.f32.mrb[0].mxu0
  %v2772 = vadd.f32 0.0, %v2771
  %v2773 = vpop.f32.mrb[0].mxu0
  %2774 = vmatprep.mubr.bf16.mxu0 0
  %2775 = vmatmul.mubr.bf16.gmra.mrb[0].mxu0 %v1917
  %v2776 = vpop.f32.mrb[0].mxu0
  %v2777 = vadd.f32 0.0, %v2776
  %v2778 = vpop.f32.mrb[0].mxu0
  %v2779 = vpop.f32.mrb[0].mxu0
  %v2780 = vadd.f32 0.0, %v2779
  %v2781 = vpop.f32.mrb[0].mxu0
  %2782 = vmatprep.mubr.bf16.mxu0 0
  %2783 = vmatmul.mubr.bf16.gmra.mrb[0].mxu0 %v1920
  %v2784 = vpop.f32.mrb[0].mxu0
  %v2785 = vadd.f32 0.0, %v2784
  %v2786 = vpop.f32.mrb[0].mxu0
  %v2787 = vpop.f32.mrb[0].mxu0
  %v2788 = vadd.f32 0.0, %v2787
  %v2789 = vpop.f32.mrb[0].mxu0
  %2790 = vmatprep.mubr.bf16.mxu0 0
  %2791 = vmatmul.mubr.bf16.gmra.mrb[0].mxu0 %v1923
  %v2792 = vpop.f32.mrb[0].mxu0
  %v2793 = vadd.f32 0.0, %v2792
  %v2794 = vpop.f32.mrb[0].mxu0
  %v2795 = vpop.f32.mrb[0].mxu0
  %v2796 = vadd.f32 0.0, %v2795
  %v2797 = vpop.f32.mrb[0].mxu0
  %2798 = vmatprep.mubr.bf16.mxu0 0
  %2799 = vmatmul.mubr.bf16.gmra.mrb[0].mxu0 %v1926
  %v2800 = vpop.f32.mrb[0].mxu0
  %v2801 = vadd.f32 0.0, %v2800
  %v2802 = vpop.f32.mrb[0].mxu0
  %v2803 = vpop.f32.mrb[0].mxu0
  %v2804 = vadd.f32 0.0, %v2803
  %v2805 = vpop.f32.mrb[0].mxu0
  %2806 = vmatprep.mubr.bf16.mxu0 0
  %2807 = vmatmul.mubr.bf16.gmra.mrb[0].mxu0 %v1929
  %v2808 = vpop.f32.mrb[0].mxu0
  %v2809 = vadd.f32 0.0, %v2808
  %v2810 = vpop.f32.mrb[0].mxu0
  %v2811 = vpop.f32.mrb[0].mxu0
  %v2812 = vadd.f32 0.0, %v2811
  %v2813 = vpop.f32.mrb[0].mxu0
  %2814 = vmatprep.mubr.bf16.mxu0 0
  %2815 = vmatmul.mubr.bf16.gmra.mrb[0].mxu0 %v1932
  %v2816 = vpop.f32.mrb[0].mxu0
  %v2817 = vadd.f32 0.0, %v2816
  %v2818 = vpop.f32.mrb[0].mxu0
  %v2819 = vpop.f32.mrb[0].mxu0
  %v2820 = vadd.f32 0.0, %v2819
  %v2821 = vpop.f32.mrb[0].mxu0
  %2822 = vmatprep.mubr.bf16.mxu0 0
  %2823 = vmatmul.mubr.bf16.gmra.mrb[0].mxu0 %v1935
  %v2824 = vpop.f32.mrb[0].mxu0
  %v2825 = vadd.f32 0.0, %v2824
  %v2826 = vpop.f32.mrb[0].mxu0
  %v2827 = vpop.f32.mrb[0].mxu0
  %v2828 = vadd.f32 0.0, %v2827
  %v2829 = vpop.f32.mrb[0].mxu0
  %2830 = vmatprep.mubr.bf16.mxu0 0
  %2831 = vmatmul.mubr.bf16.gmra.mrb[0].mxu0 %v1938
  %v2832 = vpop.f32.mrb[0].mxu0
  %v2833 = vadd.f32 0.0, %v2832
  %v2834 = vpop.f32.mrb[0].mxu0
  %v2835 = vpop.f32.mrb[0].mxu0
  %v2836 = vadd.f32 0.0, %v2835
  %v2837 = vpop.f32.mrb[0].mxu0
  %2838 = vmatprep.mubr.bf16.mxu0 0
  %2839 = vmatmul.mubr.bf16.gmra.mrb[0].mxu0 %v1941
  %v2840 = vpop.f32.mrb[0].mxu0
  %v2841 = vadd.f32 0.0, %v2840
  %v2842 = vpop.f32.mrb[0].mxu0
  %v2843 = vpop.f32.mrb[0].mxu0
  %v2844 = vadd.f32 0.0, %v2843
  %v2845 = vpop.f32.mrb[0].mxu0
  %2846 = vmatprep.mubr.bf16.mxu0 0
  %2847 = vmatmul.mubr.bf16.gmra.mrb[0].mxu0 %v1944
  %v2848 = vpop.f32.mrb[0].mxu0
  %v2849 = vadd.f32 0.0, %v2848
  %v2850 = vpop.f32.mrb[0].mxu0
  %v2851 = vpop.f32.mrb[0].mxu0
  %v2852 = vadd.f32 0.0, %v2851
  %v2853 = vpop.f32.mrb[0].mxu0
  %2854 = vmatprep.mubr.bf16.mxu0 0
  %2855 = vmatmul.mubr.bf16.gmra.mrb[0].mxu0 %v1947
  %v2856 = vpop.f32.mrb[0].mxu0
  %v2857 = vadd.f32 0.0, %v2856
  %v2858 = vpop.f32.mrb[0].mxu0
  %v2859 = vpop.f32.mrb[0].mxu0
  %v2860 = vadd.f32 0.0, %v2859
  %v2861 = vpop.f32.mrb[0].mxu0
  %2862 = vmatprep.mubr.bf16.mxu0 0
  %2863 = vmatmul.mubr.bf16.gmra.mrb[0].mxu0 %v1950
  %v2864 = vpop.f32.mrb[0].mxu0
  %v2865 = vadd.f32 0.0, %v2864
  %v2866 = vpop.f32.mrb[0].mxu0
  %v2867 = vpop.f32.mrb[0].mxu0
  %v2868 = vadd.f32 0.0, %v2867
  %v2869 = vpop.f32.mrb[0].mxu0
  %2870 = vmatprep.mubr.bf16.mxu0 0
  %2871 = vmatmul.mubr.bf16.gmra.mrb[0].mxu0 %v1953
  %v2872 = vpop.f32.mrb[0].mxu0
  %v2873 = vadd.f32 0.0, %v2872
  %v2874 = vpop.f32.mrb[0].mxu0
  %v2875 = vpop.f32.mrb[0].mxu0
  %v2876 = vadd.f32 0.0, %v2875
  %v2877 = vpop.f32.mrb[0].mxu0
  %2878 = vmatprep.mubr.bf16.mxu0 0
  %2879 = vmatmul.mubr.bf16.gmra.mrb[0].mxu0 %v1956
  %v2880 = vpop.f32.mrb[0].mxu0
  %v2881 = vadd.f32 0.0, %v2880
  %v2882 = vpop.f32.mrb[0].mxu0
  %v2883 = vpop.f32.mrb[0].mxu0
  %v2884 = vadd.f32 0.0, %v2883
  %v2885 = vpop.f32.mrb[0].mxu0
  %2886 = vmatprep.mubr.bf16.mxu0 0
  %2887 = vmatmul.mubr.bf16.gmra.mrb[0].mxu0 %v1959
  %v2888 = vpop.f32.mrb[0].mxu0
  %v2889 = vadd.f32 0.0, %v2888
  %v2890 = vpop.f32.mrb[0].mxu0
  %v2891 = vpop.f32.mrb[0].mxu0
  %v2892 = vadd.f32 0.0, %v2891
  %v2893 = vpop.f32.mrb[0].mxu0
  %2894 = vmatprep.mubr.bf16.mxu0 0
  %2895 = vmatmul.mubr.bf16.gmra.mrb[0].mxu0 %v1962
  %v2896 = vpop.f32.mrb[0].mxu0
  %v2897 = vadd.f32 0.0, %v2896
  %v2898 = vpop.f32.mrb[0].mxu0
  %v2899 = vpop.f32.mrb[0].mxu0
  %v2900 = vadd.f32 0.0, %v2899
  %v2901 = vpop.f32.mrb[0].mxu0
  %2902 = vmatprep.mubr.bf16.mxu0 0
  %2903 = vmatmul.mubr.bf16.gmra.mrb[0].mxu0 %v1965
  %v2904 = vpop.f32.mrb[0].mxu0
  %v2905 = vadd.f32 0.0, %v2904
  %v2906 = vpop.f32.mrb[0].mxu0
  %v2907 = vpop.f32.mrb[0].mxu0
  %v2908 = vadd.f32 0.0, %v2907
  %v2909 = vpop.f32.mrb[0].mxu0
  %2910 = vmatprep.mubr.bf16.mxu0 0
  %2911 = vmatmul.mubr.bf16.gmra.mrb[0].mxu0 %v1968
  %v2912 = vpop.f32.mrb[0].mxu0
  %v2913 = vadd.f32 0.0, %v2912
  %v2914 = vpop.f32.mrb[0].mxu0
  %v2915 = vpop.f32.mrb[0].mxu0
  %v2916 = vadd.f32 0.0, %v2915
  %v2917 = vpop.f32.mrb[0].mxu0
  %2918 = vmatprep.mubr.bf16.mxu0 0
  %2919 = vmatmul.mubr.bf16.gmra.mrb[0].mxu0 %v1971
  %v2920 = vpop.f32.mrb[0].mxu0
  %v2921 = vadd.f32 0.0, %v2920
  %v2922 = vpop.f32.mrb[0].mxu0
  %v2923 = vpop.f32.mrb[0].mxu0
  %v2924 = vadd.f32 0.0, %v2923
  %v2925 = vpop.f32.mrb[0].mxu0
  %2926 = vmatprep.mubr.bf16.mxu0 0
  %2927 = vmatmul.mubr.bf16.gmra.mrb[0].mxu0 %v1974
  %v2928 = vpop.f32.mrb[0].mxu0
  %v2929 = vadd.f32 0.0, %v2928
  %v2930 = vpop.f32.mrb[0].mxu0
  %v2931 = vpop.f32.mrb[0].mxu0
  %v2932 = vadd.f32 0.0, %v2931
  %v2933 = vpop.f32.mrb[0].mxu0
  %2934 = vmatprep.mubr.bf16.mxu0 0
  %2935 = vmatmul.mubr.bf16.gmra.mrb[0].mxu0 %v1977
  %v2936 = vpop.f32.mrb[0].mxu0
  %v2937 = vadd.f32 0.0, %v2936
  %v2938 = vpop.f32.mrb[0].mxu0
  %v2939 = vpop.f32.mrb[0].mxu0
  %v2940 = vadd.f32 0.0, %v2939
  %v2941 = vpop.f32.mrb[0].mxu0
  %2942 = vmatprep.mubr.bf16.mxu0 0
  %2943 = vmatmul.mubr.bf16.gmra.mrb[0].mxu0 %v1980
  %v2944 = vpop.f32.mrb[0].mxu0
  %v2945 = vadd.f32 0.0, %v2944
  %v2946 = vpop.f32.mrb[0].mxu0
  %v2947 = vpop.f32.mrb[0].mxu0
  %v2948 = vadd.f32 0.0, %v2947
  %v2949 = vpop.f32.mrb[0].mxu0
  %2950 = vmatprep.mubr.bf16.mxu0 0
  %2951 = vmatmul.mubr.bf16.gmra.mrb[0].mxu0 %v1983
  %v2952 = vpop.f32.mrb[0].mxu0
  %v2953 = vadd.f32 0.0, %v2952
  %v2954 = vpop.f32.mrb[0].mxu0
  %v2955 = vpop.f32.mrb[0].mxu0
  %v2956 = vadd.f32 0.0, %v2955
  %v2957 = vpop.f32.mrb[0].mxu0
  %2958 = vmatprep.mubr.bf16.mxu0 0
  %2959 = vmatmul.mubr.bf16.gmra.mrb[0].mxu0 %v1986
  %v2960 = vpop.f32.mrb[0].mxu0
  %v2961 = vadd.f32 0.0, %v2960
  %v2962 = vpop.f32.mrb[0].mxu0
  %v2963 = vpop.f32.mrb[0].mxu0
  %v2964 = vadd.f32 0.0, %v2963
  %v2965 = vpop.f32.mrb[0].mxu0
  %2966 = vmatprep.mubr.bf16.mxu0 0
  %2967 = vmatmul.mubr.bf16.gmra.mrb[0].mxu0 %v1989
  %v2968 = vpop.f32.mrb[0].mxu0
  %v2969 = vadd.f32 0.0, %v2968
  %v2970 = vpop.f32.mrb[0].mxu0
  %v2971 = vpop.f32.mrb[0].mxu0
  %v2972 = vadd.f32 0.0, %v2971
  %v2973 = vpop.f32.mrb[0].mxu0
  %2974 = vmatprep.mubr.bf16.mxu0 0
  %2975 = vmatmul.mubr.bf16.gmra.mrb[0].mxu0 %v1992
  %v2976 = vpop.f32.mrb[0].mxu0
  %v2977 = vadd.f32 0.0, %v2976
  %v2978 = vpop.f32.mrb[0].mxu0
  %v2979 = vpop.f32.mrb[0].mxu0
  %v2980 = vadd.f32 0.0, %v2979
  %v2981 = vpop.f32.mrb[0].mxu0
  %2982 = vmatprep.mubr.bf16.mxu0 0
  %2983 = vmatmul.mubr.bf16.gmra.mrb[0].mxu0 %v1995
  %v2984 = vpop.f32.mrb[0].mxu0
  %v2985 = vadd.f32 0.0, %v2984
  %v2986 = vpop.f32.mrb[0].mxu0
  %v2987 = vpop.f32.mrb[0].mxu0
  %v2988 = vadd.f32 0.0, %v2987
  %v2989 = vpop.f32.mrb[0].mxu0
  %2990 = vmatprep.mubr.bf16.mxu0 0
  %2991 = vmatmul.mubr.bf16.gmra.mrb[0].mxu0 %v1998
  %v2992 = vpop.f32.mrb[0].mxu0
  %v2993 = vadd.f32 0.0, %v2992
  %v2994 = vpop.f32.mrb[0].mxu0
  %v2995 = vpop.f32.mrb[0].mxu0
  %v2996 = vadd.f32 0.0, %v2995
  %v2997 = vpop.f32.mrb[0].mxu0
  %2998 = vmatprep.mubr.bf16.mxu0 0
  %2999 = vmatmul.mubr.bf16.gmra.mrb[0].mxu0 %v2001
  %v3000 = vpop.f32.mrb[0].mxu0
  %v3001 = vadd.f32 0.0, %v3000
  %v3002 = vpop.f32.mrb[0].mxu0
  %v3003 = vpop.f32.mrb[0].mxu0
  %v3004 = vadd.f32 0.0, %v3003
  %v3005 = vpop.f32.mrb[0].mxu0
  %3006 = vmatprep.mubr.bf16.mxu0 0
  %3007 = vmatmul.mubr.bf16.gmra.mrb[0].mxu0 %v2004
  %v3008 = vpop.f32.mrb[0].mxu0
  %v3009 = vadd.f32 0.0, %v3008
  %v3010 = vpop.f32.mrb[0].mxu0
  %v3011 = vpop.f32.mrb[0].mxu0
  %v3012 = vadd.f32 0.0, %v3011
  %v3013 = vpop.f32.mrb[0].mxu0
  %3014 = vmatprep.mubr.bf16.mxu0 0
  %3015 = vmatmul.mubr.bf16.gmra.mrb[0].mxu0 %v2007
  %v3016 = vpop.f32.mrb[0].mxu0
  %v3017 = vadd.f32 0.0, %v3016
  %v3018 = vpop.f32.mrb[0].mxu0
  %v3019 = vpop.f32.mrb[0].mxu0
  %v3020 = vadd.f32 0.0, %v3019
  %v3021 = vpop.f32.mrb[0].mxu0
  %3022 = vmatprep.mubr.bf16.mxu0 0
  %3023 = vmatmul.mubr.bf16.gmra.mrb[0].mxu0 %v2010
  %v3024 = vpop.f32.mrb[0].mxu0
  %v3025 = vadd.f32 0.0, %v3024
  %v3026 = vpop.f32.mrb[0].mxu0
  %v3027 = vpop.f32.mrb[0].mxu0
  %v3028 = vadd.f32 0.0, %v3027
  %v3029 = vpop.f32.mrb[0].mxu0
  %3030 = vmatprep.mubr.bf16.mxu0 0
  %3031 = vmatmul.mubr.bf16.gmra.mrb[0].mxu0 %v2013
  %v3032 = vpop.f32.mrb[0].mxu0
  %v3033 = vadd.f32 0.0, %v3032
  %v3034 = vpop.f32.mrb[0].mxu0
  %v3035 = vpop.f32.mrb[0].mxu0
  %v3036 = vadd.f32 0.0, %v3035
  %v3037 = vpop.f32.mrb[0].mxu0
  %3038 = vmatprep.mubr.bf16.mxu0 0
  %3039 = vmatmul.mubr.bf16.gmra.mrb[0].mxu0 %v2016
  %v3040 = vpop.f32.mrb[0].mxu0
  %v3041 = vadd.f32 0.0, %v3040
  %v3042 = vpop.f32.mrb[0].mxu0
  %v3043 = vpop.f32.mrb[0].mxu0
  %v3044 = vadd.f32 0.0, %v3043
  %v3045 = vpop.f32.mrb[0].mxu0
  %3046 = vmatprep.mubr.bf16.mxu0 0
  %3047 = vmatmul.mubr.bf16.gmra.mrb[0].mxu0 %v2019
  %v3048 = vpop.f32.mrb[0].mxu0
  %v3049 = vadd.f32 0.0, %v3048
  %v3050 = vpop.f32.mrb[0].mxu0
  %v3051 = vpop.f32.mrb[0].mxu0
  %v3052 = vadd.f32 0.0, %v3051
  %v3053 = vpop.f32.mrb[0].mxu0
  %3054 = vmatprep.mubr.bf16.mxu0 0
  %3055 = vmatmul.mubr.bf16.gmra.mrb[0].mxu0 %v2022
  %v3056 = vpop.f32.mrb[0].mxu0
  %v3057 = vadd.f32 0.0, %v3056
  %v3058 = vpop.f32.mrb[0].mxu0
  %v3059 = vpop.f32.mrb[0].mxu0
  %v3060 = vadd.f32 0.0, %v3059
  %v3061 = vpop.f32.mrb[0].mxu0
  %3062 = vmatprep.mubr.bf16.mxu0 0
  %3063 = vmatmul.mubr.bf16.gmra.mrb[0].mxu0 %v2025
  %v3064 = vpop.f32.mrb[0].mxu0
  %v3065 = vadd.f32 0.0, %v3064
  %v3066 = vpop.f32.mrb[0].mxu0
  %v3067 = vpop.f32.mrb[0].mxu0
  %v3068 = vadd.f32 0.0, %v3067
  %v3069 = vpop.f32.mrb[0].mxu0
  %3070 = vmatprep.mubr.bf16.mxu0 0
  %3071 = vmatmul.mubr.bf16.gmra.mrb[0].mxu0 %v2028
  %v3072 = vpop.f32.mrb[0].mxu0
  %v3073 = vadd.f32 0.0, %v3072
  %v3074 = vpop.f32.mrb[0].mxu0
  %v3075 = vpop.f32.mrb[0].mxu0
  %v3076 = vadd.f32 0.0, %v3075
  %v3077 = vpop.f32.mrb[0].mxu0
  %3078 = vmatprep.mubr.bf16.mxu0 0
  %3079 = vmatmul.mubr.bf16.gmra.mrb[0].mxu0 %v2031
  %v3080 = vpop.f32.mrb[0].mxu0
  %v3081 = vadd.f32 0.0, %v3080
  %v3082 = vpop.f32.mrb[0].mxu0
  %v3083 = vpop.f32.mrb[0].mxu0
  %v3084 = vadd.f32 0.0, %v3083
  %v3085 = vpop.f32.mrb[0].mxu0
  %3086 = vmatprep.mubr.bf16.mxu0 0
  %3087 = vmatmul.mubr.bf16.gmra.mrb[0].mxu0 %v2034
  %v3088 = vpop.f32.mrb[0].mxu0
  %v3089 = vadd.f32 0.0, %v3088
  %v3090 = vpop.f32.mrb[0].mxu0
  %v3091 = vpop.f32.mrb[0].mxu0
  %v3092 = vadd.f32 0.0, %v3091
  %v3093 = vpop.f32.mrb[0].mxu0
  %3094 = vmatprep.mubr.bf16.mxu0 0
  %3095 = vmatmul.mubr.bf16.gmra.mrb[0].mxu0 %v2037
  %v3096 = vpop.f32.mrb[0].mxu0
  %v3097 = vadd.f32 0.0, %v3096
  %v3098 = vpop.f32.mrb[0].mxu0
  %v3099 = vpop.f32.mrb[0].mxu0
  %v3100 = vadd.f32 0.0, %v3099
  %v3101 = vpop.f32.mrb[0].mxu0
  %3102 = vmatprep.mubr.bf16.mxu0 0
  %3103 = vmatmul.mubr.bf16.gmra.mrb[0].mxu0 %v2040
  %v3104 = vpop.f32.mrb[0].mxu0
  %v3105 = vadd.f32 0.0, %v3104
  %v3106 = vpop.f32.mrb[0].mxu0
  %v3107 = vpop.f32.mrb[0].mxu0
  %v3108 = vadd.f32 0.0, %v3107
  %v3109 = vpop.f32.mrb[0].mxu0
  %3110 = vmatprep.mubr.bf16.mxu0 0
  %3111 = vmatmul.mubr.bf16.gmra.mrb[0].mxu0 %v2043
  %v3112 = vpop.f32.mrb[0].mxu0
  %v3113 = vadd.f32 0.0, %v3112
  %v3114 = vpop.f32.mrb[0].mxu0
  %v3115 = vpop.f32.mrb[0].mxu0
  %v3116 = vadd.f32 0.0, %v3115
  %v3117 = vpop.f32.mrb[0].mxu0
  %3118 = vmatprep.mubr.bf16.mxu0 0
  %3119 = vmatmul.mubr.bf16.gmra.mrb[0].mxu0 %v2046
  %v3120 = vpop.f32.mrb[0].mxu0
  %v3121 = vadd.f32 0.0, %v3120
  %v3122 = vpop.f32.mrb[0].mxu0
  %v3123 = vpop.f32.mrb[0].mxu0
  %v3124 = vadd.f32 0.0, %v3123
  %v3125 = vpop.f32.mrb[0].mxu0
  %3126 = vmatprep.mubr.bf16.mxu0 0
  %3127 = vmatmul.mubr.bf16.gmra.mrb[0].mxu0 %v2049
  %v3128 = vpop.f32.mrb[0].mxu0
  %v3129 = vadd.f32 0.0, %v3128
  %v3130 = vpop.f32.mrb[0].mxu0
  %v3131 = vpop.f32.mrb[0].mxu0
  %v3132 = vadd.f32 0.0, %v3131
  %v3133 = vpop.f32.mrb[0].mxu0
  %3134 = vmatprep.mubr.bf16.mxu0 0
  %3135 = vmatmul.mubr.bf16.gmra.mrb[0].mxu0 %v2052
  %v3136 = vpop.f32.mrb[0].mxu0
  %v3137 = vadd.f32 0.0, %v3136
  %v3138 = vpop.f32.mrb[0].mxu0
  %v3139 = vpop.f32.mrb[0].mxu0
  %v3140 = vadd.f32 0.0, %v3139
  %v3141 = vpop.f32.mrb[0].mxu0
  %3142 = vmatprep.mubr.bf16.mxu0 0
  %3143 = vmatmul.mubr.bf16.gmra.mrb[0].mxu0 %v2055
  %v3144 = vpop.f32.mrb[0].mxu0
  %v3145 = vadd.f32 0.0, %v3144
  %v3146 = vpop.f32.mrb[0].mxu0
  %v3147 = vpop.f32.mrb[0].mxu0
  %v3148 = vadd.f32 0.0, %v3147
  %v3149 = vpop.f32.mrb[0].mxu0
  %3150 = vmatprep.mubr.bf16.mxu0 0
  %3151 = vmatmul.mubr.bf16.gmra.mrb[0].mxu0 %v2058
  %v3152 = vpop.f32.mrb[0].mxu0
  %v3153 = vadd.f32 0.0, %v3152
  %v3154 = vpop.f32.mrb[0].mxu0
  %v3155 = vpop.f32.mrb[0].mxu0
  %v3156 = vadd.f32 0.0, %v3155
  %v3157 = vpop.f32.mrb[0].mxu0
  %3158 = vmatprep.mubr.bf16.mxu0 0
  %3159 = vmatmul.mubr.bf16.gmra.mrb[0].mxu0 %v2061
  %v3160 = vpop.f32.mrb[0].mxu0
  %v3161 = vadd.f32 0.0, %v3160
  %v3162 = vpop.f32.mrb[0].mxu0
  %v3163 = vpop.f32.mrb[0].mxu0
  %v3164 = vadd.f32 0.0, %v3163
  %v3165 = vpop.f32.mrb[0].mxu0
  %3166 = vmatprep.mubr.bf16.mxu0 0
  %3167 = vmatmul.mubr.bf16.gmra.mrb[0].mxu0 %v2064
  %v3168 = vpop.f32.mrb[0].mxu0
  %v3169 = vadd.f32 0.0, %v3168
  %v3170 = vpop.f32.mrb[0].mxu0
  %v3171 = vpop.f32.mrb[0].mxu0
  %v3172 = vadd.f32 0.0, %v3171
  %v3173 = vpop.f32.mrb[0].mxu0
  %3174 = vmatprep.mubr.bf16.mxu0 0
  %3175 = vmatmul.mubr.bf16.gmra.mrb[0].mxu0 %v2067
  %v3176 = vpop.f32.mrb[0].mxu0
  %v3177 = vadd.f32 0.0, %v3176
  %v3178 = vpop.f32.mrb[0].mxu0
  %v3179 = vpop.f32.mrb[0].mxu0
  %v3180 = vadd.f32 0.0, %v3179
  %v3181 = vpop.f32.mrb[0].mxu0
  %3182 = vmatprep.mubr.bf16.mxu0 0
  %3183 = vmatmul.mubr.bf16.gmra.mrb[0].mxu0 %v2070
  %v3184 = vpop.f32.mrb[0].mxu0
  %v3185 = vadd.f32 0.0, %v3184
  %v3186 = vpop.f32.mrb[0].mxu0
  %v3187 = vpop.f32.mrb[0].mxu0
  %v3188 = vadd.f32 0.0, %v3187
  %v3189 = vpop.f32.mrb[0].mxu0
  %3190 = vmatprep.mubr.bf16.mxu0 0
  %3191 = vmatmul.mubr.bf16.gmra.mrb[0].mxu0 %v2073
  %v3192 = vpop.f32.mrb[0].mxu0
  %v3193 = vadd.f32 0.0, %v3192
  %v3194 = vpop.f32.mrb[0].mxu0
  %v3195 = vpop.f32.mrb[0].mxu0
  %v3196 = vadd.f32 0.0, %v3195
  %v3197 = vpop.f32.mrb[0].mxu0
  %3198 = vmatprep.mubr.bf16.mxu0 0
  %3199 = vmatmul.mubr.bf16.gmra.mrb[0].mxu0 %v2076
  %v3200 = vpop.f32.mrb[0].mxu0
  %v3201 = vadd.f32 0.0, %v3200
  %v3202 = vpop.f32.mrb[0].mxu0
  %v3203 = vpop.f32.mrb[0].mxu0
  %v3204 = vadd.f32 0.0, %v3203
  %v3205 = vpop.f32.mrb[0].mxu0
  %3206 = vmatprep.mubr.bf16.mxu0 0
  %3207 = vmatmul.mubr.bf16.gmra.mrb[0].mxu0 %v2079
  %v3208 = vpop.f32.mrb[0].mxu0
  %v3209 = vadd.f32 0.0, %v3208
  %v3210 = vpop.f32.mrb[0].mxu0
  %v3211 = vpop.f32.mrb[0].mxu0
  %v3212 = vadd.f32 0.0, %v3211
  %v3213 = vpop.f32.mrb[0].mxu0
  %3214 = vmatprep.mubr.bf16.mxu0 0
  %3215 = vmatmul.mubr.bf16.gmra.mrb[0].mxu0 %v2082
  %v3216 = vpop.f32.mrb[0].mxu0
  %v3217 = vadd.f32 0.0, %v3216
  %v3218 = vpop.f32.mrb[0].mxu0
  %v3219 = vpop.f32.mrb[0].mxu0
  %v3220 = vadd.f32 0.0, %v3219
  %v3221 = vpop.f32.mrb[0].mxu0
  %3222 = vmatprep.mubr.bf16.mxu0 0
  %3223 = vmatmul.mubr.bf16.gmra.mrb[0].mxu0 %v2085
  %v3224 = vpop.f32.mrb[0].mxu0
  %v3225 = vadd.f32 0.0, %v3224
  %v3226 = vpop.f32.mrb[0].mxu0
  %v3227 = vpop.f32.mrb[0].mxu0
  %v3228 = vadd.f32 0.0, %v3227
  %v3229 = vpop.f32.mrb[0].mxu0
  %3230 = vmatprep.mubr.bf16.mxu0 0
  %3231 = vmatmul.mubr.bf16.gmra.mrb[0].mxu0 %v2088
  %v3232 = vpop.f32.mrb[0].mxu0
  %v3233 = vadd.f32 0.0, %v3232
  %v3234 = vpop.f32.mrb[0].mxu0
  %v3235 = vpop.f32.mrb[0].mxu0
  %v3236 = vadd.f32 0.0, %v3235
  %v3237 = vpop.f32.mrb[0].mxu0
  %3238 = vmatprep.mubr.bf16.mxu0 0
  %3239 = vmatmul.mubr.bf16.gmra.mrb[0].mxu0 %v2091
  %v3240 = vpop.f32.mrb[0].mxu0
  %v3241 = vadd.f32 0.0, %v3240
  %v3242 = vpop.f32.mrb[0].mxu0
  %v3243 = vpop.f32.mrb[0].mxu0
  %v3244 = vadd.f32 0.0, %v3243
  %v3245 = vpop.f32.mrb[0].mxu0
  %3246 = vmatprep.mubr.bf16.mxu0 0
  %3247 = vmatmul.mubr.bf16.gmra.mrb[0].mxu0 %v2094
  %v3248 = vpop.f32.mrb[0].mxu0
  %v3249 = vadd.f32 0.0, %v3248
  %v3250 = vpop.f32.mrb[0].mxu0
  %v3251 = vpop.f32.mrb[0].mxu0
  %v3252 = vadd.f32 0.0, %v3251
  %v3253 = vpop.f32.mrb[0].mxu0
  %3254 = vmatprep.mubr.bf16.mxu0 0
  %3255 = vmatmul.mubr.bf16.gmra.mrb[0].mxu0 %v2097
  %v3256 = vpop.f32.mrb[0].mxu0
  %v3257 = vadd.f32 0.0, %v3256
  %v3258 = vpop.f32.mrb[0].mxu0
  %v3259 = vpop.f32.mrb[0].mxu0
  %v3260 = vadd.f32 0.0, %v3259
  %v3261 = vpop.f32.mrb[0].mxu0
  %3262 = vmatprep.mubr.bf16.mxu0 0
  %3263 = vmatmul.mubr.bf16.gmra.mrb[0].mxu0 %v2100
  %v3264 = vpop.f32.mrb[0].mxu0
  %v3265 = vadd.f32 0.0, %v3264
  %v3266 = vpop.f32.mrb[0].mxu0
  %v3267 = vpop.f32.mrb[0].mxu0
  %v3268 = vadd.f32 0.0, %v3267
  %v3269 = vpop.f32.mrb[0].mxu0
  %3270 = vmatprep.mubr.bf16.mxu0 0
  %3271 = vmatmul.mubr.bf16.gmra.mrb[0].mxu0 %v2103
  %v3272 = vpop.f32.mrb[0].mxu0
  %v3273 = vadd.f32 0.0, %v3272
  %v3274 = vpop.f32.mrb[0].mxu0
  %v3275 = vpop.f32.mrb[0].mxu0
  %v3276 = vadd.f32 0.0, %v3275
  %v3277 = vpop.f32.mrb[0].mxu0
  %3278 = vmatprep.mubr.bf16.mxu0 0
  %3279 = vmatmul.mubr.bf16.gmra.mrb[0].mxu0 %v2106
  %v3280 = vpop.f32.mrb[0].mxu0
  %v3281 = vadd.f32 0.0, %v3280
  %v3282 = vpop.f32.mrb[0].mxu0
  %v3283 = vpop.f32.mrb[0].mxu0
  %v3284 = vadd.f32 0.0, %v3283
  %v3285 = vpop.f32.mrb[0].mxu0
  %3286 = vmatprep.mubr.bf16.mxu0 0
  %3287 = vmatmul.mubr.bf16.gmra.mrb[0].mxu0 %v2109
  %v3288 = vpop.f32.mrb[0].mxu0
  %v3289 = vadd.f32 0.0, %v3288
  %v3290 = vpop.f32.mrb[0].mxu0
  %v3291 = vpop.f32.mrb[0].mxu0
  %v3292 = vadd.f32 0.0, %v3291
  %v3293 = vpop.f32.mrb[0].mxu0
  %3294 = vmatprep.mubr.bf16.mxu0 0
  %3295 = vmatmul.mubr.bf16.gmra.mrb[0].mxu0 %v2112
  %v3296 = vpop.f32.mrb[0].mxu0
  %v3297 = vadd.f32 0.0, %v3296
  %v3298 = vpop.f32.mrb[0].mxu0
  %v3299 = vpop.f32.mrb[0].mxu0
  %v3300 = vadd.f32 0.0, %v3299
  %v3301 = vpop.f32.mrb[0].mxu0
  %3302 = vmatprep.mubr.bf16.mxu0 0
  %3303 = vmatmul.mubr.bf16.gmra.mrb[0].mxu0 %v2115
  %v3304 = vpop.f32.mrb[0].mxu0
  %v3305 = vadd.f32 0.0, %v3304
  %v3306 = vpop.f32.mrb[0].mxu0
  %v3307 = vpop.f32.mrb[0].mxu0
  %v3308 = vadd.f32 0.0, %v3307
  %v3309 = vpop.f32.mrb[0].mxu0
  %3310 = vmatprep.mubr.bf16.mxu0 0
  %3311 = vmatmul.mubr.bf16.gmra.mrb[0].mxu0 %v2118
  %v3312 = vpop.f32.mrb[0].mxu0
  %v3313 = vadd.f32 0.0, %v3312
  %v3314 = vpop.f32.mrb[0].mxu0
  %v3315 = vpop.f32.mrb[0].mxu0
  %v3316 = vadd.f32 0.0, %v3315
  %v3317 = vpop.f32.mrb[0].mxu0
  %3318 = vmatprep.mubr.bf16.mxu0 0
  %3319 = vmatmul.mubr.bf16.gmra.mrb[0].mxu0 %v2121
  %v3320 = vpop.f32.mrb[0].mxu0
  %v3321 = vadd.f32 0.0, %v3320
  %v3322 = vpop.f32.mrb[0].mxu0
  %v3323 = vpop.f32.mrb[0].mxu0
  %v3324 = vadd.f32 0.0, %v3323
  %v3325 = vpop.f32.mrb[0].mxu0
  %3326 = vmatprep.mubr.bf16.mxu0 0
  %3327 = vmatmul.mubr.bf16.gmra.mrb[0].mxu0 %v2124
  %v3328 = vpop.f32.mrb[0].mxu0
  %v3329 = vadd.f32 0.0, %v3328
  %v3330 = vpop.f32.mrb[0].mxu0
  %v3331 = vpop.f32.mrb[0].mxu0
  %v3332 = vadd.f32 0.0, %v3331
  %v3333 = vpop.f32.mrb[0].mxu0
  %3334 = vmatprep.mubr.bf16.mxu0 0
  %3335 = vmatmul.mubr.bf16.gmra.mrb[0].mxu0 %v2127
  %v3336 = vpop.f32.mrb[0].mxu0
  %v3337 = vadd.f32 0.0, %v3336
  %v3338 = vpop.f32.mrb[0].mxu0
  %v3339 = vpop.f32.mrb[0].mxu0
  %v3340 = vadd.f32 0.0, %v3339
  %v3341 = vpop.f32.mrb[0].mxu0
  %3342 = vmatprep.mubr.bf16.mxu0 0
  %3343 = vmatmul.mubr.bf16.gmra.mrb[0].mxu0 %v2130
  %v3344 = vpop.f32.mrb[0].mxu0
  %v3345 = vadd.f32 0.0, %v3344
  %v3346 = vpop.f32.mrb[0].mxu0
  %v3347 = vpop.f32.mrb[0].mxu0
  %v3348 = vadd.f32 0.0, %v3347
  %v3349 = vpop.f32.mrb[0].mxu0
  %3350 = vmatprep.mubr.bf16.mxu0 0
  %3351 = vmatmul.mubr.bf16.gmra.mrb[0].mxu0 %v2133
  %v3352 = vpop.f32.mrb[0].mxu0
  %v3353 = vadd.f32 0.0, %v3352
  %v3354 = vpop.f32.mrb[0].mxu0
  %v3355 = vpop.f32.mrb[0].mxu0
  %v3356 = vadd.f32 0.0, %v3355
  %v3357 = vpop.f32.mrb[0].mxu0
  %3358 = vmatprep.mubr.bf16.mxu0 0
  %3359 = vmatmul.mubr.bf16.gmra.mrb[0].mxu0 %v2136
  %v3360 = vpop.f32.mrb[0].mxu0
  %v3361 = vadd.f32 0.0, %v3360
  %v3362 = vpop.f32.mrb[0].mxu0
  %v3363 = vpop.f32.mrb[0].mxu0
  %v3364 = vadd.f32 0.0, %v3363
  %v3365 = vpop.f32.mrb[0].mxu0
  %3366 = vmatprep.mubr.bf16.mxu0 0
  %3367 = vmatmul.mubr.bf16.gmra.mrb[0].mxu0 %v2139
  %v3368 = vpop.f32.mrb[0].mxu0
  %v3369 = vadd.f32 0.0, %v3368
  %v3370 = vpop.f32.mrb[0].mxu0
  %v3371 = vpop.f32.mrb[0].mxu0
  %v3372 = vadd.f32 0.0, %v3371
  %v3373 = vpop.f32.mrb[0].mxu0
  %3374 = vmatprep.mubr.bf16.mxu0 0
  %3375 = vmatmul.mubr.bf16.gmra.mrb[0].mxu0 %v2142
  %v3376 = vpop.f32.mrb[0].mxu0
  %v3377 = vadd.f32 0.0, %v3376
  %v3378 = vpop.f32.mrb[0].mxu0
  %v3379 = vpop.f32.mrb[0].mxu0
  %v3380 = vadd.f32 0.0, %v3379
  %v3381 = vpop.f32.mrb[0].mxu0
  %3382 = vmatprep.mubr.bf16.mxu0 0
  %3383 = vmatmul.mubr.bf16.gmra.mrb[0].mxu0 %v2145
  %v3384 = vpop.f32.mrb[0].mxu0
  %v3385 = vadd.f32 0.0, %v3384
  %v3386 = vpop.f32.mrb[0].mxu0
  %v3387 = vpop.f32.mrb[0].mxu0
  %v3388 = vadd.f32 0.0, %v3387
  %v3389 = vpop.f32.mrb[0].mxu0
  %3390 = vmatprep.mubr.bf16.mxu0 0
  %3391 = vmatmul.mubr.bf16.gmra.mrb[0].mxu0 %v2148
  %v3392 = vpop.f32.mrb[0].mxu0
  %v3393 = vadd.f32 0.0, %v3392
  %v3394 = vpop.f32.mrb[0].mxu0
  %v3395 = vpop.f32.mrb[0].mxu0
  %v3396 = vadd.f32 0.0, %v3395
  %v3397 = vpop.f32.mrb[0].mxu0
  %3398 = vmatprep.mubr.bf16.mxu0 0
  %3399 = vmatmul.mubr.bf16.gmra.mrb[0].mxu0 %v2151
  %v3400 = vpop.f32.mrb[0].mxu0
  %v3401 = vadd.f32 0.0, %v3400
  %v3402 = vpop.f32.mrb[0].mxu0
  %v3403 = vpop.f32.mrb[0].mxu0
  %v3404 = vadd.f32 0.0, %v3403
  %v3405 = vpop.f32.mrb[0].mxu0
  %3406 = vmatprep.mubr.bf16.mxu0 0
  %3407 = vmatmul.mubr.bf16.gmra.mrb[0].mxu0 %v2154
  %v3408 = vpop.f32.mrb[0].mxu0
  %v3409 = vadd.f32 0.0, %v3408
  %v3410 = vpop.f32.mrb[0].mxu0
  %v3411 = vpop.f32.mrb[0].mxu0
  %v3412 = vadd.f32 0.0, %v3411
  %v3413 = vpop.f32.mrb[0].mxu0
  %3414 = vmatprep.mubr.bf16.mxu0 0
  %3415 = vmatmul.mubr.bf16.gmra.mrb[0].mxu0 %v2157
  %v3416 = vpop.f32.mrb[0].mxu0
  %v3417 = vadd.f32 0.0, %v3416
  %v3418 = vpop.f32.mrb[0].mxu0
  %v3419 = vpop.f32.mrb[0].mxu0
  %v3420 = vadd.f32 0.0, %v3419
  %v3421 = vpop.f32.mrb[0].mxu0
  %3422 = vmatprep.mubr.bf16.mxu0 0
  %3423 = vmatmul.mubr.bf16.gmra.mrb[0].mxu0 %v2160
  %v3424 = vpop.f32.mrb[0].mxu0
  %v3425 = vadd.f32 0.0, %v3424
  %v3426 = vpop.f32.mrb[0].mxu0
  %v3427 = vpop.f32.mrb[0].mxu0
  %v3428 = vadd.f32 0.0, %v3427
  %v3429 = vpop.f32.mrb[0].mxu0
  %3430 = vmatprep.mubr.bf16.mxu0 0
  %3431 = vmatmul.mubr.bf16.gmra.mrb[0].mxu0 %v2163
  %v3432 = vpop.f32.mrb[0].mxu0
  %v3433 = vadd.f32 0.0, %v3432
  %v3434 = vpop.f32.mrb[0].mxu0
  %v3435 = vpop.f32.mrb[0].mxu0
  %v3436 = vadd.f32 0.0, %v3435
  %v3437 = vpop.f32.mrb[0].mxu0
  %3438 = vmatprep.mubr.bf16.mxu0 0
  %3439 = vmatmul.mubr.bf16.gmra.mrb[0].mxu0 %v2166
  %v3440 = vpop.f32.mrb[0].mxu0
  %v3441 = vadd.f32 0.0, %v3440
  %v3442 = vpop.f32.mrb[0].mxu0
  %v3443 = vpop.f32.mrb[0].mxu0
  %v3444 = vadd.f32 0.0, %v3443
  %v3445 = vpop.f32.mrb[0].mxu0
  %3446 = vmatprep.mubr.bf16.mxu0 0
  %3447 = vmatmul.mubr.bf16.gmra.mrb[0].mxu0 %v2169
  %v3448 = vpop.f32.mrb[0].mxu0
  %v3449 = vadd.f32 0.0, %v3448
  %v3450 = vpop.f32.mrb[0].mxu0
  %v3451 = vpop.f32.mrb[0].mxu0
  %v3452 = vadd.f32 0.0, %v3451
  %v3453 = vpop.f32.mrb[0].mxu0
  %3454 = vmatprep.mubr.bf16.mxu0 0
  %3455 = vmatmul.mubr.bf16.gmra.mrb[0].mxu0 %v2172
  %v3456 = vpop.f32.mrb[0].mxu0
  %v3457 = vadd.f32 0.0, %v3456
  %v3458 = vpop.f32.mrb[0].mxu0
  %v3459 = vpop.f32.mrb[0].mxu0
  %v3460 = vadd.f32 0.0, %v3459
  %v3461 = vpop.f32.mrb[0].mxu0
  %3462 = vmatprep.mubr.bf16.mxu0 0
  %3463 = vmatmul.mubr.bf16.gmra.mrb[0].mxu0 %v2175
  %v3464 = vpop.f32.mrb[0].mxu0
  %v3465 = vadd.f32 0.0, %v3464
  %v3466 = vpop.f32.mrb[0].mxu0
  %v3467 = vpop.f32.mrb[0].mxu0
  %v3468 = vadd.f32 0.0, %v3467
  %v3469 = vpop.f32.mrb[0].mxu0
  %3470 = vmatprep.mubr.bf16.mxu0 0
  %3471 = vmatmul.mubr.bf16.gmra.mrb[0].mxu0 %v2178
  %v3472 = vpop.f32.mrb[0].mxu0
  %v3473 = vadd.f32 0.0, %v3472
  %v3474 = vpop.f32.mrb[0].mxu0
  %v3475 = vpop.f32.mrb[0].mxu0
  %v3476 = vadd.f32 0.0, %v3475
  %v3477 = vpop.f32.mrb[0].mxu0
  %3478 = vmatprep.mubr.bf16.mxu0 0
  %3479 = vmatmul.mubr.bf16.gmra.mrb[0].mxu0 %v2181
  %v3480 = vpop.f32.mrb[0].mxu0
  %v3481 = vadd.f32 0.0, %v3480
  %v3482 = vpop.f32.mrb[0].mxu0
  %v3483 = vpop.f32.mrb[0].mxu0
  %v3484 = vadd.f32 0.0, %v3483
  %v3485 = vpop.f32.mrb[0].mxu0
  %3486 = vmatprep.mubr.bf16.mxu0 0
  %3487 = vmatmul.mubr.bf16.gmra.mrb[0].mxu0 %v2184
  %v3488 = vpop.f32.mrb[0].mxu0
  %v3489 = vadd.f32 0.0, %v3488
  %v3490 = vpop.f32.mrb[0].mxu0
  %v3491 = vpop.f32.mrb[0].mxu0
  %v3492 = vadd.f32 0.0, %v3491
  %v3493 = vpop.f32.mrb[0].mxu0
  %3494 = vmatprep.mubr.bf16.mxu0 0
  %3495 = vmatmul.mubr.bf16.gmra.mrb[0].mxu0 %v2187
  %v3496 = vpop.f32.mrb[0].mxu0
  %v3497 = vadd.f32 0.0, %v3496
  %v3498 = vpop.f32.mrb[0].mxu0
  %v3499 = vpop.f32.mrb[0].mxu0
  %v3500 = vadd.f32 0.0, %v3499
  %v3501 = vpop.f32.mrb[0].mxu0
  %3502 = vmatprep.mubr.bf16.mxu0 0
  %3503 = vmatmul.mubr.bf16.gmra.mrb[0].mxu0 %v2190
  %v3504 = vpop.f32.mrb[0].mxu0
  %v3505 = vadd.f32 0.0, %v3504
  %v3506 = vpop.f32.mrb[0].mxu0
  %v3507 = vpop.f32.mrb[0].mxu0
  %v3508 = vadd.f32 0.0, %v3507
  %v3509 = vpop.f32.mrb[0].mxu0
  %3510 = vmatprep.mubr.bf16.mxu0 0
  %3511 = vmatmul.mubr.bf16.gmra.mrb[0].mxu0 %v2193
  %v3512 = vpop.f32.mrb[0].mxu0
  %v3513 = vadd.f32 0.0, %v3512
  %v3514 = vpop.f32.mrb[0].mxu0
  %v3515 = vpop.f32.mrb[0].mxu0
  %v3516 = vadd.f32 0.0, %v3515
  %v3517 = vpop.f32.mrb[0].mxu0
  %3518 = vmatprep.mubr.bf16.mxu0 0
  %3519 = vmatmul.mubr.bf16.gmra.mrb[0].mxu0 %v2196
  %v3520 = vpop.f32.mrb[0].mxu0
  %v3521 = vadd.f32 0.0, %v3520
  %v3522 = vpop.f32.mrb[0].mxu0
  %v3523 = vpop.f32.mrb[0].mxu0
  %v3524 = vadd.f32 0.0, %v3523
  %v3525 = vpop.f32.mrb[0].mxu0
  %3526 = vmatprep.mubr.bf16.mxu0 0
  %3527 = vmatmul.mubr.bf16.gmra.mrb[0].mxu0 %v2199
  %v3528 = vpop.f32.mrb[0].mxu0
  %v3529 = vadd.f32 0.0, %v3528
  %v3530 = vpop.f32.mrb[0].mxu0
  %v3531 = vpop.f32.mrb[0].mxu0
  %v3532 = vadd.f32 0.0, %v3531
  %v3533 = vpop.f32.mrb[0].mxu0
  %3534 = vmatprep.mubr.bf16.mxu0 0
  %3535 = vmatmul.mubr.bf16.gmra.mrb[0].mxu0 %v2202
  %v3536 = vpop.f32.mrb[0].mxu0
  %v3537 = vadd.f32 0.0, %v3536
  %v3538 = vpop.f32.mrb[0].mxu0
  %v3539 = vpop.f32.mrb[0].mxu0
  %v3540 = vadd.f32 0.0, %v3539
  %v3541 = vpop.f32.mrb[0].mxu0
  %3542 = vmatprep.mubr.bf16.mxu0 0
  %3543 = vmatmul.mubr.bf16.gmra.mrb[0].mxu0 %v2205
  %v3544 = vpop.f32.mrb[0].mxu0
  %v3545 = vadd.f32 0.0, %v3544
  %v3546 = vpop.f32.mrb[0].mxu0
  %v3547 = vpop.f32.mrb[0].mxu0
  %v3548 = vadd.f32 0.0, %v3547
  %v3549 = vpop.f32.mrb[0].mxu0
  %3550 = vmatprep.mubr.bf16.mxu0 0
  %3551 = vmatmul.mubr.bf16.gmra.mrb[0].mxu0 %v2208
  %v3552 = vpop.f32.mrb[0].mxu0
  %v3553 = vadd.f32 0.0, %v3552
  %v3554 = vpop.f32.mrb[0].mxu0
  %v3555 = vpop.f32.mrb[0].mxu0
  %v3556 = vadd.f32 0.0, %v3555
  %v3557 = vpop.f32.mrb[0].mxu0
  %3558 = vmatprep.mubr.bf16.mxu0 0
  %3559 = vmatmul.mubr.bf16.gmra.mrb[0].mxu0 %v2211
  %v3560 = vpop.f32.mrb[0].mxu0
  %v3561 = vadd.f32 0.0, %v3560
  %v3562 = vpop.f32.mrb[0].mxu0
  %v3563 = vpop.f32.mrb[0].mxu0
  %v3564 = vadd.f32 0.0, %v3563
  %v3565 = vpop.f32.mrb[0].mxu0
  %3566 = vmatprep.mubr.bf16.mxu0 0
  %3567 = vmatmul.mubr.bf16.gmra.mrb[0].mxu0 %v2214
  %v3568 = vpop.f32.mrb[0].mxu0
  %v3569 = vadd.f32 0.0, %v3568
  %v3570 = vpop.f32.mrb[0].mxu0
  %v3571 = vpop.f32.mrb[0].mxu0
  %v3572 = vadd.f32 0.0, %v3571
  %v3573 = vpop.f32.mrb[0].mxu0
  %3574 = vmatprep.mubr.bf16.mxu0 0
  %3575 = vmatmul.mubr.bf16.gmra.mrb[0].mxu0 %v2217
  %v3576 = vpop.f32.mrb[0].mxu0
  %v3577 = vadd.f32 0.0, %v3576
  %v3578 = vpop.f32.mrb[0].mxu0
  %v3579 = vpop.f32.mrb[0].mxu0
  %v3580 = vadd.f32 0.0, %v3579
  %v3581 = vpop.f32.mrb[0].mxu0
  %3582 = vmatprep.mubr.bf16.mxu0 0
  %3583 = vmatmul.mubr.bf16.gmra.mrb[0].mxu0 %v2220
  %v3584 = vpop.f32.mrb[0].mxu0
  %v3585 = vadd.f32 0.0, %v3584
  %v3586 = vpop.f32.mrb[0].mxu0
  %v3587 = vpop.f32.mrb[0].mxu0
  %v3588 = vadd.f32 0.0, %v3587
  %v3589 = vpop.f32.mrb[0].mxu0
  %3590 = vmatprep.mubr.bf16.mxu0 0
  %3591 = vmatmul.mubr.bf16.gmra.mrb[0].mxu0 %v2223
  %v3592 = vpop.f32.mrb[0].mxu0
  %v3593 = vadd.f32 0.0, %v3592
  %v3594 = vpop.f32.mrb[0].mxu0
  %v3595 = vpop.f32.mrb[0].mxu0
  %v3596 = vadd.f32 0.0, %v3595
  %v3597 = vpop.f32.mrb[0].mxu0
  %3598 = vmatprep.mubr.bf16.mxu0 0
  %3599 = vmatmul.mubr.bf16.gmra.mrb[0].mxu0 %v2226
  %v3600 = vpop.f32.mrb[0].mxu0
  %v3601 = vadd.f32 0.0, %v3600
  %v3602 = vpop.f32.mrb[0].mxu0
  %v3603 = vpop.f32.mrb[0].mxu0
  %v3604 = vadd.f32 0.0, %v3603
  %v3605 = vpop.f32.mrb[0].mxu0
  %3606 = vmatprep.mubr.bf16.mxu0 0
  %3607 = vmatmul.mubr.bf16.gmra.mrb[0].mxu0 %v2229
  %v3608 = vpop.f32.mrb[0].mxu0
  %v3609 = vadd.f32 0.0, %v3608
  %v3610 = vpop.f32.mrb[0].mxu0
  %v3611 = vpop.f32.mrb[0].mxu0
  %v3612 = vadd.f32 0.0, %v3611
  %v3613 = vpop.f32.mrb[0].mxu0
  %3614 = vmatprep.mubr.bf16.mxu0 0
  %3615 = vmatmul.mubr.bf16.gmra.mrb[0].mxu0 %v2232
  %v3616 = vpop.f32.mrb[0].mxu0
  %v3617 = vadd.f32 0.0, %v3616
  %v3618 = vpop.f32.mrb[0].mxu0
  %v3619 = vpop.f32.mrb[0].mxu0
  %v3620 = vadd.f32 0.0, %v3619
  %v3621 = vpop.f32.mrb[0].mxu0
  %3622 = vmatprep.mubr.bf16.mxu0 0
  %3623 = vmatmul.mubr.bf16.gmra.mrb[0].mxu0 %v2235
  %v3624 = vpop.f32.mrb[0].mxu0
  %v3625 = vadd.f32 0.0, %v3624
  %v3626 = vpop.f32.mrb[0].mxu0
  %v3627 = vpop.f32.mrb[0].mxu0
  %v3628 = vadd.f32 0.0, %v3627
  %v3629 = vpop.f32.mrb[0].mxu0
  %3630 = vmatprep.mubr.bf16.mxu0 0
  %3631 = vmatmul.mubr.bf16.gmra.mrb[0].mxu0 %v2238
  %v3632 = vpop.f32.mrb[0].mxu0
  %v3633 = vadd.f32 0.0, %v3632
  %v3634 = vpop.f32.mrb[0].mxu0
  %v3635 = vpop.f32.mrb[0].mxu0
  %v3636 = vadd.f32 0.0, %v3635
  %v3637 = vpop.f32.mrb[0].mxu0
  %3638 = vmatprep.mubr.bf16.mxu0 0
  %3639 = vmatmul.mubr.bf16.gmra.mrb[0].mxu0 %v2241
  %v3640 = vpop.f32.mrb[0].mxu0
  %v3641 = vadd.f32 0.0, %v3640
  %v3642 = vpop.f32.mrb[0].mxu0
  %v3643 = vpop.f32.mrb[0].mxu0
  %v3644 = vadd.f32 0.0, %v3643
  %v3645 = vpop.f32.mrb[0].mxu0
  %3646 = vmatprep.mubr.bf16.mxu0 0
  %3647 = vmatmul.mubr.bf16.gmra.mrb[0].mxu0 %v2244
  %v3648 = vpop.f32.mrb[0].mxu0
  %v3649 = vadd.f32 0.0, %v3648
  %v3650 = vpop.f32.mrb[0].mxu0
  %v3651 = vpop.f32.mrb[0].mxu0
  %v3652 = vadd.f32 0.0, %v3651
  %v3653 = vpop.f32.mrb[0].mxu0
  %3654 = vmatprep.mubr.bf16.mxu0 0
  %3655 = vmatmul.mubr.bf16.gmra.mrb[0].mxu0 %v2247
  %v3656 = vpop.f32.mrb[0].mxu0
  %v3657 = vadd.f32 0.0, %v3656
  %v3658 = vpop.f32.mrb[0].mxu0
  %v3659 = vpop.f32.mrb[0].mxu0
  %v3660 = vadd.f32 0.0, %v3659
  %v3661 = vpop.f32.mrb[0].mxu0
  %3662 = vmatprep.mubr.bf16.mxu0 0
  %3663 = vmatmul.mubr.bf16.gmra.mrb[0].mxu0 %v2250
  %v3664 = vpop.f32.mrb[0].mxu0
  %v3665 = vadd.f32 0.0, %v3664
  %v3666 = vpop.f32.mrb[0].mxu0
  %v3667 = vpop.f32.mrb[0].mxu0
  %v3668 = vadd.f32 0.0, %v3667
  %v3669 = vpop.f32.mrb[0].mxu0
  %3670 = vmatprep.mubr.bf16.mxu0 0
  %3671 = vmatmul.mubr.bf16.gmra.mrb[0].mxu0 %v2253
  %v3672 = vpop.f32.mrb[0].mxu0
  %v3673 = vadd.f32 0.0, %v3672
  %v3674 = vpop.f32.mrb[0].mxu0
  %v3675 = vpop.f32.mrb[0].mxu0
  %v3676 = vadd.f32 0.0, %v3675
  %v3677 = vpop.f32.mrb[0].mxu0
  %3678 = vmatprep.mubr.bf16.mxu0 0
  %3679 = vmatmul.mubr.bf16.gmra.mrb[0].mxu0 %v2256
  %v3680 = vpop.f32.mrb[0].mxu0
  %v3681 = vadd.f32 0.0, %v3680
  %v3682 = vpop.f32.mrb[0].mxu0
  %v3683 = vpop.f32.mrb[0].mxu0
  %v3684 = vadd.f32 0.0, %v3683
  %v3685 = vpop.f32.mrb[0].mxu0
  %3686 = vmatprep.mubr.bf16.mxu0 0
  %3687 = vmatmul.mubr.bf16.gmra.mrb[0].mxu0 %v2259
  %v3688 = vpop.f32.mrb[0].mxu0
  %v3689 = vadd.f32 0.0, %v3688
  %v3690 = vpop.f32.mrb[0].mxu0
  %v3691 = vpop.f32.mrb[0].mxu0
  %v3692 = vadd.f32 0.0, %v3691
  %v3693 = vpop.f32.mrb[0].mxu0
  %3694 = vmatprep.mubr.bf16.mxu0 0
  %3695 = vmatmul.mubr.bf16.gmra.mrb[0].mxu0 %v2262
  %v3696 = vpop.f32.mrb[0].mxu0
  %v3697 = vadd.f32 0.0, %v3696
  %v3698 = vpop.f32.mrb[0].mxu0
  %v3699 = vpop.f32.mrb[0].mxu0
  %v3700 = vadd.f32 0.0, %v3699
  %v3701 = vpop.f32.mrb[0].mxu0
  %3702 = vmatprep.mubr.bf16.mxu0 0
  %3703 = vmatmul.mubr.bf16.gmra.mrb[0].mxu0 %v2265
  %v3704 = vpop.f32.mrb[0].mxu0
  %v3705 = vadd.f32 0.0, %v3704
  %v3706 = vpop.f32.mrb[0].mxu0
  %v3707 = vpop.f32.mrb[0].mxu0
  %v3708 = vadd.f32 0.0, %v3707
  %v3709 = vpop.f32.mrb[0].mxu0
  %3710 = vmatprep.mubr.bf16.mxu0 0
  %3711 = vmatmul.mubr.bf16.gmra.mrb[0].mxu0 %v2268
  %v3712 = vpop.f32.mrb[0].mxu0
  %v3713 = vadd.f32 0.0, %v3712
  %v3714 = vpop.f32.mrb[0].mxu0
  %v3715 = vpop.f32.mrb[0].mxu0
  %v3716 = vadd.f32 0.0, %v3715
  %v3717 = vpop.f32.mrb[0].mxu0
  %3718 = vmatprep.mubr.bf16.mxu0 0
  %3719 = vmatmul.mubr.bf16.gmra.mrb[0].mxu0 %v2271
  %v3720 = vpop.f32.mrb[0].mxu0
  %v3721 = vadd.f32 0.0, %v3720
  %v3722 = vpop.f32.mrb[0].mxu0
  %v3723 = vpop.f32.mrb[0].mxu0
  %v3724 = vadd.f32 0.0, %v3723
  %v3725 = vpop.f32.mrb[0].mxu0
  %3726 = vmatprep.mubr.bf16.mxu0 0
  %3727 = vmatmul.mubr.bf16.gmra.mrb[0].mxu0 %v2274
  %v3728 = vpop.f32.mrb[0].mxu0
  %v3729 = vadd.f32 0.0, %v3728
  %v3730 = vpop.f32.mrb[0].mxu0
  %v3731 = vpop.f32.mrb[0].mxu0
  %v3732 = vadd.f32 0.0, %v3731
  %v3733 = vpop.f32.mrb[0].mxu0
  %3734 = vmatprep.mubr.bf16.mxu0 0
  %3735 = vmatmul.mubr.bf16.gmra.mrb[0].mxu0 %v2277
  %v3736 = vpop.f32.mrb[0].mxu0
  %v3737 = vadd.f32 0.0, %v3736
  %v3738 = vpop.f32.mrb[0].mxu0
  %v3739 = vpop.f32.mrb[0].mxu0
  %v3740 = vadd.f32 0.0, %v3739
  %v3741 = vpop.f32.mrb[0].mxu0
  %3742 = vmatprep.mubr.bf16.mxu0 0
  %3743 = vmatmul.mubr.bf16.gmra.mrb[0].mxu0 %v2280
  %v3744 = vpop.f32.mrb[0].mxu0
  %v3745 = vadd.f32 0.0, %v3744
  %v3746 = vpop.f32.mrb[0].mxu0
  %v3747 = vpop.f32.mrb[0].mxu0
  %v3748 = vadd.f32 0.0, %v3747
  %v3749 = vpop.f32.mrb[0].mxu0
  %3750 = vmatprep.mubr.bf16.mxu0 0
  %3751 = vmatmul.mubr.bf16.gmra.mrb[0].mxu0 %v2283
  %v3752 = vpop.f32.mrb[0].mxu0
  %v3753 = vadd.f32 0.0, %v3752
  %v3754 = vpop.f32.mrb[0].mxu0
  %v3755 = vpop.f32.mrb[0].mxu0
  %v3756 = vadd.f32 0.0, %v3755
  %v3757 = vpop.f32.mrb[0].mxu0
  %3758 = vmatprep.mubr.bf16.mxu0 0
  %3759 = vmatmul.mubr.bf16.gmra.mrb[0].mxu0 %v2286
  %v3760 = vpop.f32.mrb[0].mxu0
  %v3761 = vadd.f32 0.0, %v3760
  %v3762 = vpop.f32.mrb[0].mxu0
  %v3763 = vpop.f32.mrb[0].mxu0
  %v3764 = vadd.f32 0.0, %v3763
  %v3765 = vpop.f32.mrb[0].mxu0
  %3766 = vmatprep.mubr.bf16.mxu0 0
  %3767 = vmatmul.mubr.bf16.gmra.mrb[0].mxu0 %v2289
  %v3768 = vpop.f32.mrb[0].mxu0
  %v3769 = vadd.f32 0.0, %v3768
  %v3770 = vpop.f32.mrb[0].mxu0
  %v3771 = vpop.f32.mrb[0].mxu0
  %v3772 = vadd.f32 0.0, %v3771
  %v3773 = vpop.f32.mrb[0].mxu0
  %3774 = vmatprep.mubr.bf16.mxu0 0
  %3775 = vmatmul.mubr.bf16.gmra.mrb[0].mxu0 %v2292
  %v3776 = vpop.f32.mrb[0].mxu0
  %v3777 = vadd.f32 0.0, %v3776
  %v3778 = vpop.f32.mrb[0].mxu0
  %v3779 = vpop.f32.mrb[0].mxu0
  %v3780 = vadd.f32 0.0, %v3779
  %v3781 = vpop.f32.mrb[0].mxu0
  %3782 = vmatprep.mubr.bf16.mxu0 0
  %3783 = vmatmul.mubr.bf16.gmra.mrb[0].mxu0 %v2295
  %v3784 = vpop.f32.mrb[0].mxu0
  %v3785 = vadd.f32 0.0, %v3784
  %v3786 = vpop.f32.mrb[0].mxu0
  %v3787 = vpop.f32.mrb[0].mxu0
  %v3788 = vadd.f32 0.0, %v3787
  %v3789 = vpop.f32.mrb[0].mxu0
  %3790 = vmatprep.mubr.bf16.mxu0 0
  %3791 = vmatmul.mubr.bf16.gmra.mrb[0].mxu0 %v2298
  %v3792 = vpop.f32.mrb[0].mxu0
  %v3793 = vadd.f32 0.0, %v3792
  %v3794 = vpop.f32.mrb[0].mxu0
  %v3795 = vpop.f32.mrb[0].mxu0
  %v3796 = vadd.f32 0.0, %v3795
  %v3797 = vpop.f32.mrb[0].mxu0
  %3798 = vmatprep.mubr.bf16.mxu0 0
  %3799 = vmatmul.mubr.bf16.gmra.mrb[0].mxu0 %v2301
  %v3800 = vpop.f32.mrb[0].mxu0
  %v3801 = vadd.f32 0.0, %v3800
  %v3802 = vpop.f32.mrb[0].mxu0
  %v3803 = vpop.f32.mrb[0].mxu0
  %v3804 = vadd.f32 0.0, %v3803
  %v3805 = vpop.f32.mrb[0].mxu0
  %3806 = vmatprep.mubr.bf16.mxu0 0
  %3807 = vmatmul.mubr.bf16.gmra.mrb[0].mxu0 %v2304
  %v3808 = vpop.f32.mrb[0].mxu0
  %v3809 = vadd.f32 0.0, %v3808
  %v3810 = vpop.f32.mrb[0].mxu0
  %v3811 = vpop.f32.mrb[0].mxu0
  %v3812 = vadd.f32 0.0, %v3811
  %v3813 = vpop.f32.mrb[0].mxu0
  %3814 = vmatprep.mubr.bf16.mxu0 0
  %3815 = vmatmul.mubr.bf16.gmra.mrb[0].mxu0 %v2307
  %v3816 = vpop.f32.mrb[0].mxu0
  %v3817 = vadd.f32 0.0, %v3816
  %v3818 = vpop.f32.mrb[0].mxu0
  %v3819 = vpop.f32.mrb[0].mxu0
  %v3820 = vadd.f32 0.0, %v3819
  %v3821 = vpop.f32.mrb[0].mxu0
  %3822 = vmatprep.mubr.bf16.mxu0 0
  %3823 = vmatmul.mubr.bf16.gmra.mrb[0].mxu0 %v2310
  %v3824 = vpop.f32.mrb[0].mxu0
  %v3825 = vadd.f32 0.0, %v3824
  %v3826 = vpop.f32.mrb[0].mxu0
  %v3827 = vpop.f32.mrb[0].mxu0
  %v3828 = vadd.f32 0.0, %v3827
  %v3829 = vpop.f32.mrb[0].mxu0
  %3830 = vmatprep.mubr.bf16.mxu0 0
  %3831 = vmatmul.mubr.bf16.gmra.mrb[0].mxu0 %v2313
  %v3832 = vpop.f32.mrb[0].mxu0
  %v3833 = vadd.f32 0.0, %v3832
  %v3834 = vpop.f32.mrb[0].mxu0
  %v3835 = vpop.f32.mrb[0].mxu0
  %v3836 = vadd.f32 0.0, %v3835
  %v3837 = vpop.f32.mrb[0].mxu0
  %3838 = vmatprep.mubr.bf16.mxu0 0
  %3839 = vmatmul.mubr.bf16.gmra.mrb[0].mxu0 %v2316
  %v3840 = vpop.f32.mrb[0].mxu0
  %v3841 = vadd.f32 0.0, %v3840
  %v3842 = vpop.f32.mrb[0].mxu0
  %v3843 = vpop.f32.mrb[0].mxu0
  %v3844 = vadd.f32 0.0, %v3843
  %v3845 = vpop.f32.mrb[0].mxu0
  %3846 = vmatprep.mubr.bf16.mxu0 0
  %3847 = vmatmul.mubr.bf16.gmra.mrb[0].mxu0 %v2319
  %v3848 = vpop.f32.mrb[0].mxu0
  %v3849 = vadd.f32 0.0, %v3848
  %v3850 = vpop.f32.mrb[0].mxu0
  %v3851 = vpop.f32.mrb[0].mxu0
  %v3852 = vadd.f32 0.0, %v3851
  %v3853 = vpop.f32.mrb[0].mxu0
  %3854 = vmatprep.mubr.bf16.mxu0 0
  %3855 = vmatmul.mubr.bf16.gmra.mrb[0].mxu0 %v2322
  %v3856 = vpop.f32.mrb[0].mxu0
  %v3857 = vadd.f32 0.0, %v3856
  %v3858 = vpop.f32.mrb[0].mxu0
  %v3859 = vpop.f32.mrb[0].mxu0
  %v3860 = vadd.f32 0.0, %v3859
  %v3861 = vpop.f32.mrb[0].mxu0
  %3862 = vmatprep.mubr.bf16.mxu0 0
  %3863 = vmatmul.mubr.bf16.gmra.mrb[0].mxu0 %v2325
  %v3864 = vpop.f32.mrb[0].mxu0
  %v3865 = vadd.f32 0.0, %v3864
  %v3866 = vpop.f32.mrb[0].mxu0
  %v3867 = vpop.f32.mrb[0].mxu0
  %v3868 = vadd.f32 0.0, %v3867
  %v3869 = vpop.f32.mrb[0].mxu0
  %3870 = vmatprep.mubr.bf16.mxu0 0
  %3871 = vmatmul.mubr.bf16.gmra.mrb[0].mxu0 %v2328
  %v3872 = vpop.f32.mrb[0].mxu0
  %v3873 = vadd.f32 0.0, %v3872
  %v3874 = vpop.f32.mrb[0].mxu0
  %v3875 = vpop.f32.mrb[0].mxu0
  %v3876 = vadd.f32 0.0, %v3875
  %v3877 = vpop.f32.mrb[0].mxu0
  %3878 = vmatprep.mubr.bf16.mxu0 0
  %3879 = vmatmul.mubr.bf16.gmra.mrb[0].mxu0 %v2331
  %v3880 = vpop.f32.mrb[0].mxu0
  %v3881 = vadd.f32 0.0, %v3880
  %v3882 = vpop.f32.mrb[0].mxu0
  %v3883 = vpop.f32.mrb[0].mxu0
  %v3884 = vadd.f32 0.0, %v3883
  %v3885 = vpop.f32.mrb[0].mxu0
  %3886 = vmatprep.mubr.bf16.mxu0 0
  %3887 = vmatmul.mubr.bf16.gmra.mrb[0].mxu0 %v2334
  %v3888 = vpop.f32.mrb[0].mxu0
  %v3889 = vadd.f32 0.0, %v3888
  %v3890 = vpop.f32.mrb[0].mxu0
  %v3891 = vpop.f32.mrb[0].mxu0
  %v3892 = vadd.f32 0.0, %v3891
  %v3893 = vpop.f32.mrb[0].mxu0
  %3894 = vmatprep.mubr.bf16.mxu0 0
  %3895 = vmatmul.mubr.bf16.gmra.mrb[0].mxu0 %v2337
  %v3896 = vpop.f32.mrb[0].mxu0
  %v3897 = vadd.f32 0.0, %v3896
  %v3898 = vpop.f32.mrb[0].mxu0
  %v3899 = vpop.f32.mrb[0].mxu0
  %v3900 = vadd.f32 0.0, %v3899
  %v3901 = vpop.f32.mrb[0].mxu0
  %3902 = vmatprep.mubr.bf16.mxu0 0
  %3903 = vmatmul.mubr.bf16.gmra.mrb[0].mxu0 %v2340
  %v3904 = vpop.f32.mrb[0].mxu0
  %v3905 = vadd.f32 0.0, %v3904
  %v3906 = vpop.f32.mrb[0].mxu0
  %v3907 = vpop.f32.mrb[0].mxu0
  %v3908 = vadd.f32 0.0, %v3907
  %v3909 = vpop.f32.mrb[0].mxu0
  %3910 = vmatprep.mubr.bf16.mxu0 0
  %3911 = vmatmul.mubr.bf16.gmra.mrb[0].mxu0 %v2343
  %v3912 = vpop.f32.mrb[0].mxu0
  %v3913 = vadd.f32 0.0, %v3912
  %v3914 = vpop.f32.mrb[0].mxu0
  %v3915 = vpop.f32.mrb[0].mxu0
  %v3916 = vadd.f32 0.0, %v3915
  %v3917 = vpop.f32.mrb[0].mxu0
  %3918 = vmatprep.mubr.bf16.mxu0 0
  %3919 = vmatmul.mubr.bf16.gmra.mrb[0].mxu0 %v2346
  %v3920 = vpop.f32.mrb[0].mxu0
  %v3921 = vadd.f32 0.0, %v3920
  %v3922 = vpop.f32.mrb[0].mxu0
  %v3923 = vpop.f32.mrb[0].mxu0
  %v3924 = vadd.f32 0.0, %v3923
  %v3925 = vpop.f32.mrb[0].mxu0
  %3926 = vmatprep.mubr.bf16.mxu0 0
  %3927 = vmatmul.mubr.bf16.gmra.mrb[0].mxu0 %v2349
  %v3928 = vpop.f32.mrb[0].mxu0
  %v3929 = vadd.f32 0.0, %v3928
  %v3930 = vpop.f32.mrb[0].mxu0
  %v3931 = vpop.f32.mrb[0].mxu0
  %v3932 = vadd.f32 0.0, %v3931
  %v3933 = vpop.f32.mrb[0].mxu0
  %3934 = vmatprep.mubr.bf16.mxu0 0
  %3935 = vmatmul.mubr.bf16.gmra.mrb[0].mxu0 %v2352
  %v3936 = vpop.f32.mrb[0].mxu0
  %v3937 = vadd.f32 0.0, %v3936
  %v3938 = vpop.f32.mrb[0].mxu0
  %v3939 = vpop.f32.mrb[0].mxu0
  %v3940 = vadd.f32 0.0, %v3939
  %v3941 = vpop.f32.mrb[0].mxu0
  %3942 = vmatprep.mubr.bf16.mxu0 0
  %3943 = vmatmul.mubr.bf16.gmra.mrb[0].mxu0 %v2355
  %v3944 = vpop.f32.mrb[0].mxu0
  %v3945 = vadd.f32 0.0, %v3944
  %v3946 = vpop.f32.mrb[0].mxu0
  %v3947 = vpop.f32.mrb[0].mxu0
  %v3948 = vadd.f32 0.0, %v3947
  %v3949 = vpop.f32.mrb[0].mxu0
  %3950 = vmatprep.mubr.bf16.mxu0 0
  %3951 = vmatmul.mubr.bf16.gmra.mrb[0].mxu0 %v2358
  %v3952 = vpop.f32.mrb[0].mxu0
  %v3953 = vadd.f32 0.0, %v3952
  %v3954 = vpop.f32.mrb[0].mxu0
  %v3955 = vpop.f32.mrb[0].mxu0
  %v3956 = vadd.f32 0.0, %v3955
  %v3957 = vpop.f32.mrb[0].mxu0
  %3958 = vmatprep.mubr.bf16.mxu0 0
  %3959 = vmatmul.mubr.bf16.gmra.mrb[0].mxu0 %v2361
  %v3960 = vpop.f32.mrb[0].mxu0
  %v3961 = vadd.f32 0.0, %v3960
  %v3962 = vpop.f32.mrb[0].mxu0
  %v3963 = vpop.f32.mrb[0].mxu0
  %v3964 = vadd.f32 0.0, %v3963
  %v3965 = vpop.f32.mrb[0].mxu0
  %3966 = vmatprep.mubr.bf16.mxu0 0
  %3967 = vmatmul.mubr.bf16.gmra.mrb[0].mxu0 %v2364
  %v3968 = vpop.f32.mrb[0].mxu0
  %v3969 = vadd.f32 0.0, %v3968
  %v3970 = vpop.f32.mrb[0].mxu0
  %v3971 = vpop.f32.mrb[0].mxu0
  %v3972 = vadd.f32 0.0, %v3971
  %v3973 = vpop.f32.mrb[0].mxu0
  %3974 = vmatprep.mubr.bf16.mxu0 0
  %3975 = vmatmul.mubr.bf16.gmra.mrb[0].mxu0 %v2367
  %v3976 = vpop.f32.mrb[0].mxu0
  %v3977 = vadd.f32 0.0, %v3976
  %v3978 = vpop.f32.mrb[0].mxu0
  %v3979 = vpop.f32.mrb[0].mxu0
  %v3980 = vadd.f32 0.0, %v3979
  %v3981 = vpop.f32.mrb[0].mxu0
  %3982 = vmatprep.mubr.bf16.mxu0 0
  %3983 = vmatmul.mubr.bf16.gmra.mrb[0].mxu0 %v2370
  %v3984 = vpop.f32.mrb[0].mxu0
  %v3985 = vadd.f32 0.0, %v3984
  %v3986 = vpop.f32.mrb[0].mxu0
  %v3987 = vpop.f32.mrb[0].mxu0
  %v3988 = vadd.f32 0.0, %v3987
  %v3989 = vpop.f32.mrb[0].mxu0
  %3990 = vmatprep.mubr.bf16.mxu0 0
  %3991 = vmatmul.mubr.bf16.gmra.mrb[0].mxu0 %v2373
  %v3992 = vpop.f32.mrb[0].mxu0
  %v3993 = vadd.f32 0.0, %v3992
  %v3994 = vpop.f32.mrb[0].mxu0
  %v3995 = vpop.f32.mrb[0].mxu0
  %v3996 = vadd.f32 0.0, %v3995
  %v3997 = vpop.f32.mrb[0].mxu0
  %3998 = vmatprep.mubr.bf16.mxu0 0
  %3999 = vmatmul.mubr.bf16.gmra.mrb[0].mxu0 %v2376
  %v4000 = vpop.f32.mrb[0].mxu0
  %v4001 = vadd.f32 0.0, %v4000
  %v4002 = vpop.f32.mrb[0].mxu0
  %v4003 = vpop.f32.mrb[0].mxu0
  %v4004 = vadd.f32 0.0, %v4003
  %v4005 = vpop.f32.mrb[0].mxu0
  %4006 = vmatprep.mubr.bf16.mxu0 0
  %4007 = vmatmul.mubr.bf16.gmra.mrb[0].mxu0 %v2379
  %v4008 = vpop.f32.mrb[0].mxu0
  %v4009 = vadd.f32 0.0, %v4008
  %v4010 = vpop.f32.mrb[0].mxu0
  %v4011 = vpop.f32.mrb[0].mxu0
  %v4012 = vadd.f32 0.0, %v4011
  %v4013 = vpop.f32.mrb[0].mxu0
  %4014 = vmatprep.mubr.bf16.mxu0 0
  %4015 = vmatmul.mubr.bf16.gmra.mrb[0].mxu0 %v2382
  %v4016 = vpop.f32.mrb[0].mxu0
  %v4017 = vadd.f32 0.0, %v4016
  %v4018 = vpop.f32.mrb[0].mxu0
  %v4019 = vpop.f32.mrb[0].mxu0
  %v4020 = vadd.f32 0.0, %v4019
  %v4021 = vpop.f32.mrb[0].mxu0
  %4022 = vmatprep.mubr.bf16.mxu0 0
  %4023 = vmatmul.mubr.bf16.gmra.mrb[0].mxu0 %v2385
  %v4024 = vpop.f32.mrb[0].mxu0
  %v4025 = vadd.f32 0.0, %v4024
  %v4026 = vpop.f32.mrb[0].mxu0
  %v4027 = vpop.f32.mrb[0].mxu0
  %v4028 = vadd.f32 0.0, %v4027
  %v4029 = vpop.f32.mrb[0].mxu0
  %4030 = vmatprep.mubr.bf16.mxu0 0
  %4031 = vmatmul.mubr.bf16.gmra.mrb[0].mxu0 %v2388
  %v4032 = vpop.f32.mrb[0].mxu0
  %v4033 = vadd.f32 0.0, %v4032
  %v4034 = vpop.f32.mrb[0].mxu0
  %v4035 = vpop.f32.mrb[0].mxu0
  %v4036 = vadd.f32 0.0, %v4035
  %v4037 = vpop.f32.mrb[0].mxu0
  %4038 = vmatprep.mubr.bf16.mxu0 0
  %4039 = vmatmul.mubr.bf16.gmra.mrb[0].mxu0 %v2391
  %v4040 = vpop.f32.mrb[0].mxu0
  %v4041 = vadd.f32 0.0, %v4040
  %v4042 = vpop.f32.mrb[0].mxu0
  %v4043 = vpop.f32.mrb[0].mxu0
  %v4044 = vadd.f32 0.0, %v4043
  %v4045 = vpop.f32.mrb[0].mxu0
  %4046 = vmatprep.mubr.bf16.mxu0 0
  %4047 = vmatmul.mubr.bf16.gmra.mrb[0].mxu0 %v2394
  %v4048 = vpop.f32.mrb[0].mxu0
  %v4049 = vadd.f32 0.0, %v4048
  %v4050 = vpop.f32.mrb[0].mxu0
  %v4051 = vpop.f32.mrb[0].mxu0
  %v4052 = vadd.f32 0.0, %v4051
  %v4053 = vpop.f32.mrb[0].mxu0
  %4054 = vmatprep.mubr.bf16.mxu0 0
  %4055 = vmatmul.mubr.bf16.gmra.mrb[0].mxu0 %v2397
  %v4056 = vpop.f32.mrb[0].mxu0
  %v4057 = vadd.f32 0.0, %v4056
  %v4058 = vpop.f32.mrb[0].mxu0
  %v4059 = vpop.f32.mrb[0].mxu0
  %v4060 = vadd.f32 0.0, %v4059
  %v4061 = vpop.f32.mrb[0].mxu0
  %4062 = vmatprep.mubr.bf16.mxu0 0
  %4063 = vmatmul.mubr.bf16.gmra.mrb[0].mxu0 %v2400
  %v4064 = vpop.f32.mrb[0].mxu0
  %v4065 = vadd.f32 0.0, %v4064
  %v4066 = vpop.f32.mrb[0].mxu0
  %v4067 = vpop.f32.mrb[0].mxu0
  %v4068 = vadd.f32 0.0, %v4067
  %v4069 = vpop.f32.mrb[0].mxu0
  %4070 = vmatprep.mubr.bf16.mxu0 0
  %4071 = vmatmul.mubr.bf16.gmra.mrb[0].mxu0 %v2403
  %v4072 = vpop.f32.mrb[0].mxu0
  %v4073 = vadd.f32 0.0, %v4072
  %v4074 = vpop.f32.mrb[0].mxu0
  %v4075 = vpop.f32.mrb[0].mxu0
  %v4076 = vadd.f32 0.0, %v4075
  %v4077 = vpop.f32.mrb[0].mxu0
  %4078 = vmatprep.mubr.bf16.mxu0 0
  %4079 = vmatmul.mubr.bf16.gmra.mrb[0].mxu0 %v2406
  %v4080 = vpop.f32.mrb[0].mxu0
  %v4081 = vadd.f32 0.0, %v4080
  %v4082 = vpop.f32.mrb[0].mxu0
  %v4083 = vpop.f32.mrb[0].mxu0
  %v4084 = vadd.f32 0.0, %v4083
  %v4085 = vpop.f32.mrb[0].mxu0
  %4086 = vmatprep.mubr.bf16.mxu0 0
  %4087 = vmatmul.mubr.bf16.gmra.mrb[0].mxu0 %v2409
  %v4088 = vpop.f32.mrb[0].mxu0
  %v4089 = vadd.f32 0.0, %v4088
  %v4090 = vpop.f32.mrb[0].mxu0
  %v4091 = vpop.f32.mrb[0].mxu0
  %v4092 = vadd.f32 0.0, %v4091
  %v4093 = vpop.f32.mrb[0].mxu0
  %4094 = vmatprep.mubr.bf16.mxu0 0
  %4095 = vmatmul.mubr.bf16.gmra.mrb[0].mxu0 %v2412
  %v4096 = vpop.f32.mrb[0].mxu0
  %v4097 = vadd.f32 0.0, %v4096
  %v4098 = vpop.f32.mrb[0].mxu0
  %v4099 = vpop.f32.mrb[0].mxu0
  %v4100 = vadd.f32 0.0, %v4099
  %v4101 = vpop.f32.mrb[0].mxu0
  %4102 = vmatprep.mubr.bf16.mxu0 0
  %4103 = vmatmul.mubr.bf16.gmra.mrb[0].mxu0 %v2415
  %v4104 = vpop.f32.mrb[0].mxu0
  %v4105 = vadd.f32 0.0, %v4104
  %v4106 = vpop.f32.mrb[0].mxu0
  %v4107 = vpop.f32.mrb[0].mxu0
  %v4108 = vadd.f32 0.0, %v4107
  %v4109 = vpop.f32.mrb[0].mxu0
  %4110 = vmatprep.mubr.bf16.mxu0 0
  %4111 = vmatmul.mubr.bf16.gmra.mrb[0].mxu0 %v2418
  %v4112 = vpop.f32.mrb[0].mxu0
  %v4113 = vadd.f32 0.0, %v4112
  %v4114 = vpop.f32.mrb[0].mxu0
  %v4115 = vpop.f32.mrb[0].mxu0
  %v4116 = vadd.f32 0.0, %v4115
  %v4117 = vpop.f32.mrb[0].mxu0
  %4118 = vmatprep.mubr.bf16.mxu0 0
  %4119 = vmatmul.mubr.bf16.gmra.mrb[0].mxu0 %v2421
  %v4120 = vpop.f32.mrb[0].mxu0
  %v4121 = vadd.f32 0.0, %v4120
  %v4122 = vpop.f32.mrb[0].mxu0
  %v4123 = vpop.f32.mrb[0].mxu0
  %v4124 = vadd.f32 0.0, %v4123
  %v4125 = vpop.f32.mrb[0].mxu0
  %4126 = vmatprep.mubr.bf16.mxu0 0
  %4127 = vmatmul.mubr.bf16.gmra.mrb[0].mxu0 %v2424
  %v4128 = vpop.f32.mrb[0].mxu0
  %v4129 = vadd.f32 0.0, %v4128
  %v4130 = vpop.f32.mrb[0].mxu0
  %v4131 = vpop.f32.mrb[0].mxu0
  %v4132 = vadd.f32 0.0, %v4131
  %v4133 = vpop.f32.mrb[0].mxu0
  %4134 = vmatprep.mubr.bf16.mxu0 0
  %4135 = vmatmul.mubr.bf16.gmra.mrb[0].mxu0 %v2427
  %v4136 = vpop.f32.mrb[0].mxu0
  %v4137 = vadd.f32 0.0, %v4136
  %v4138 = vpop.f32.mrb[0].mxu0
  %v4139 = vpop.f32.mrb[0].mxu0
  %v4140 = vadd.f32 0.0, %v4139
  %v4141 = vpop.f32.mrb[0].mxu0
  %4142 = vmatprep.mubr.bf16.mxu0 0
  %4143 = vmatmul.mubr.bf16.gmra.mrb[0].mxu0 %v2430
  %v4144 = vpop.f32.mrb[0].mxu0
  %v4145 = vadd.f32 0.0, %v4144
  %v4146 = vpop.f32.mrb[0].mxu0
  %v4147 = vpop.f32.mrb[0].mxu0
  %v4148 = vadd.f32 0.0, %v4147
  %v4149 = vpop.f32.mrb[0].mxu0
  %4150 = vmatprep.mubr.bf16.mxu0 0
  %4151 = vmatmul.mubr.bf16.gmra.mrb[0].mxu0 %v2433
  %v4152 = vpop.f32.mrb[0].mxu0
  %v4153 = vadd.f32 0.0, %v4152
  %v4154 = vpop.f32.mrb[0].mxu0
  %v4155 = vpop.f32.mrb[0].mxu0
  %v4156 = vadd.f32 0.0, %v4155
  %v4157 = vpop.f32.mrb[0].mxu0
  %4158 = vmatprep.mubr.bf16.mxu0 0
  %4159 = vmatmul.mubr.bf16.gmra.mrb[0].mxu0 %v2436
  %v4160 = vpop.f32.mrb[0].mxu0
  %v4161 = vadd.f32 0.0, %v4160
  %v4162 = vpop.f32.mrb[0].mxu0
  %v4163 = vpop.f32.mrb[0].mxu0
  %v4164 = vadd.f32 0.0, %v4163
  %v4165 = vpop.f32.mrb[0].mxu0
  %4166 = vmatprep.mubr.bf16.mxu0 0
  %4167 = vmatmul.mubr.bf16.gmra.mrb[0].mxu0 %v2439
  %v4168 = vpop.f32.mrb[0].mxu0
  %v4169 = vadd.f32 0.0, %v4168
  %v4170 = vpop.f32.mrb[0].mxu0
  %v4171 = vpop.f32.mrb[0].mxu0
  %v4172 = vadd.f32 0.0, %v4171
  %v4173 = vpop.f32.mrb[0].mxu0
  %4174 = vmatprep.mubr.bf16.mxu0 0
  %4175 = vmatmul.mubr.bf16.gmra.mrb[0].mxu0 %v2442
  %v4176 = vpop.f32.mrb[0].mxu0
  %v4177 = vadd.f32 0.0, %v4176
  %v4178 = vpop.f32.mrb[0].mxu0
  %v4179 = vpop.f32.mrb[0].mxu0
  %v4180 = vadd.f32 0.0, %v4179
  %v4181 = vpop.f32.mrb[0].mxu0
  %4182 = vmatprep.mubr.bf16.mxu0 0
  %4183 = vmatmul.mubr.bf16.gmra.mrb[0].mxu0 %v2445
  %v4184 = vpop.f32.mrb[0].mxu0
  %v4185 = vadd.f32 0.0, %v4184
  %v4186 = vpop.f32.mrb[0].mxu0
  %v4187 = vpop.f32.mrb[0].mxu0
  %v4188 = vadd.f32 0.0, %v4187
  %v4189 = vpop.f32.mrb[0].mxu0
  %4190 = vmatprep.mubr.bf16.mxu0 0
  %4191 = vmatmul.mubr.bf16.gmra.mrb[0].mxu0 %v2448
  %v4192 = vpop.f32.mrb[0].mxu0
  %v4193 = vadd.f32 0.0, %v4192
  %v4194 = vpop.f32.mrb[0].mxu0
  %v4195 = vpop.f32.mrb[0].mxu0
  %v4196 = vadd.f32 0.0, %v4195
  %v4197 = vpop.f32.mrb[0].mxu0
  %4198 = vmatprep.mubr.bf16.mxu0 0
  %4199 = vmatmul.mubr.bf16.gmra.mrb[0].mxu0 %v2451
  %v4200 = vpop.f32.mrb[0].mxu0
  %v4201 = vadd.f32 0.0, %v4200
  %v4202 = vpop.f32.mrb[0].mxu0
  %v4203 = vpop.f32.mrb[0].mxu0
  %v4204 = vadd.f32 0.0, %v4203
  %v4205 = vpop.f32.mrb[0].mxu0
  %4206 = vmatprep.mubr.bf16.mxu0 0
  %4207 = vmatmul.mubr.bf16.gmra.mrb[0].mxu0 %v2454
  %v4208 = vpop.f32.mrb[0].mxu0
  %v4209 = vadd.f32 0.0, %v4208
  %v4210 = vpop.f32.mrb[0].mxu0
  %v4211 = vpop.f32.mrb[0].mxu0
  %v4212 = vadd.f32 0.0, %v4211
  %v4213 = vpop.f32.mrb[0].mxu0
  %4214 = vmatprep.mubr.bf16.mxu0 0
  %4215 = vmatmul.mubr.bf16.gmra.mrb[0].mxu0 %v2457
  %v4216 = vpop.f32.mrb[0].mxu0
  %v4217 = vadd.f32 0.0, %v4216
  %v4218 = vpop.f32.mrb[0].mxu0
  %v4219 = vpop.f32.mrb[0].mxu0
  %v4220 = vadd.f32 0.0, %v4219
  %v4221 = vpop.f32.mrb[0].mxu0
  %4222 = vmatprep.mubr.bf16.mxu0 0
  %4223 = vmatmul.mubr.bf16.gmra.mrb[0].mxu0 %v2460
  %v4224 = vpop.f32.mrb[0].mxu0
  %v4225 = vadd.f32 0.0, %v4224
  %v4226 = vpop.f32.mrb[0].mxu0
  %v4227 = vpop.f32.mrb[0].mxu0
  %v4228 = vadd.f32 0.0, %v4227
  %v4229 = vpop.f32.mrb[0].mxu0
  %4230 = vmatprep.mubr.bf16.mxu0 0
  %4231 = vmatmul.mubr.bf16.gmra.mrb[0].mxu0 %v2463
  %v4232 = vpop.f32.mrb[0].mxu0
  %v4233 = vadd.f32 0.0, %v4232
  %v4234 = vpop.f32.mrb[0].mxu0
  %v4235 = vpop.f32.mrb[0].mxu0
  %v4236 = vadd.f32 0.0, %v4235
  %v4237 = vpop.f32.mrb[0].mxu0
  %4238 = vmatprep.mubr.bf16.mxu0 0
  %4239 = vmatmul.mubr.bf16.gmra.mrb[0].mxu0 %v2466
  %v4240 = vpop.f32.mrb[0].mxu0
  %v4241 = vadd.f32 0.0, %v4240
  %v4242 = vpop.f32.mrb[0].mxu0
  %v4243 = vpop.f32.mrb[0].mxu0
  %v4244 = vadd.f32 0.0, %v4243
  %v4245 = vpop.f32.mrb[0].mxu0
  %4246 = vmatprep.mubr.bf16.mxu0 0
  %4247 = vmatmul.mubr.bf16.gmra.mrb[0].mxu0 %v2469
  %v4248 = vpop.f32.mrb[0].mxu0
  %v4249 = vadd.f32 0.0, %v4248
  %v4250 = vpop.f32.mrb[0].mxu0
  %v4251 = vpop.f32.mrb[0].mxu0
  %v4252 = vadd.f32 0.0, %v4251
  %v4253 = vpop.f32.mrb[0].mxu0
  %4254 = vmatprep.mubr.bf16.mxu0 0
  %4255 = vmatmul.mubr.bf16.gmra.mrb[0].mxu0 %v2472
  %v4256 = vpop.f32.mrb[0].mxu0
  %v4257 = vadd.f32 0.0, %v4256
  %v4258 = vpop.f32.mrb[0].mxu0
  %v4259 = vpop.f32.mrb[0].mxu0
  %v4260 = vadd.f32 0.0, %v4259
  %v4261 = vpop.f32.mrb[0].mxu0
  %4262 = vmatprep.mubr.bf16.mxu0 0
  %4263 = vmatmul.mubr.bf16.gmra.mrb[0].mxu0 %v2475
  %v4264 = vpop.f32.mrb[0].mxu0
  %v4265 = vadd.f32 0.0, %v4264
  %v4266 = vpop.f32.mrb[0].mxu0
  %v4267 = vpop.f32.mrb[0].mxu0
  %v4268 = vadd.f32 0.0, %v4267
  %v4269 = vpop.f32.mrb[0].mxu0
  %4270 = vmatprep.mubr.bf16.mxu0 0
  %4271 = vmatmul.mubr.bf16.gmra.mrb[0].mxu0 %v2478
  %v4272 = vpop.f32.mrb[0].mxu0
  %v4273 = vadd.f32 0.0, %v4272
  %v4274 = vpop.f32.mrb[0].mxu0
  %v4275 = vpop.f32.mrb[0].mxu0
  %v4276 = vadd.f32 0.0, %v4275
  %v4277 = vpop.f32.mrb[0].mxu0
  %4278 = vmatprep.mubr.bf16.mxu0 0
  %4279 = vmatmul.mubr.bf16.gmra.mrb[0].mxu0 %v2481
  %v4280 = vpop.f32.mrb[0].mxu0
  %v4281 = vadd.f32 0.0, %v4280
  %v4282 = vpop.f32.mrb[0].mxu0
  %v4283 = vpop.f32.mrb[0].mxu0
  %v4284 = vadd.f32 0.0, %v4283
  %v4285 = vpop.f32.mrb[0].mxu0
  %4286 = vmatprep.mubr.bf16.mxu0 0
  %4287 = vmatmul.mubr.bf16.gmra.mrb[0].mxu0 %v2484
  %v4288 = vpop.f32.mrb[0].mxu0
  %v4289 = vadd.f32 0.0, %v4288
  %v4290 = vpop.f32.mrb[0].mxu0
  %v4291 = vpop.f32.mrb[0].mxu0
  %v4292 = vadd.f32 0.0, %v4291
  %v4293 = vpop.f32.mrb[0].mxu0
  %4294 = vmatprep.mubr.bf16.mxu0 0
  %4295 = vmatmul.mubr.bf16.gmra.mrb[0].mxu0 %v2487
  %v4296 = vpop.f32.mrb[0].mxu0
  %v4297 = vadd.f32 0.0, %v4296
  %v4298 = vpop.f32.mrb[0].mxu0
  %v4299 = vpop.f32.mrb[0].mxu0
  %v4300 = vadd.f32 0.0, %v4299
  %v4301 = vpop.f32.mrb[0].mxu0
  %4302 = vmatprep.mubr.bf16.mxu0 0
  %4303 = vmatmul.mubr.bf16.gmra.mrb[0].mxu0 %v2490
  %v4304 = vpop.f32.mrb[0].mxu0
  %v4305 = vadd.f32 0.0, %v4304
  %v4306 = vpop.f32.mrb[0].mxu0
  %v4307 = vpop.f32.mrb[0].mxu0
  %v4308 = vadd.f32 0.0, %v4307
  %v4309 = vpop.f32.mrb[0].mxu0
  %4310 = vmatprep.mubr.bf16.mxu0 0
  %4311 = vmatmul.mubr.bf16.gmra.mrb[0].mxu0 %v2493
  %v4312 = vpop.f32.mrb[0].mxu0
  %v4313 = vadd.f32 0.0, %v4312
  %v4314 = vpop.f32.mrb[0].mxu0
  %v4315 = vpop.f32.mrb[0].mxu0
  %v4316 = vadd.f32 0.0, %v4315
  %v4317 = vpop.f32.mrb[0].mxu0
  %4318 = vmatprep.mubr.bf16.mxu0 0
  %4319 = vmatmul.mubr.bf16.gmra.mrb[0].mxu0 %v2496
  %v4320 = vpop.f32.mrb[0].mxu0
  %v4321 = vadd.f32 0.0, %v4320
  %v4322 = vpop.f32.mrb[0].mxu0
  %v4323 = vpop.f32.mrb[0].mxu0
  %v4324 = vadd.f32 0.0, %v4323
  %v4325 = vpop.f32.mrb[0].mxu0
  %4326 = vmatprep.mubr.bf16.mxu0 0
  %4327 = vmatmul.mubr.bf16.gmra.mrb[0].mxu0 %v2499
  %v4328 = vpop.f32.mrb[0].mxu0
  %v4329 = vadd.f32 0.0, %v4328
  %v4330 = vpop.f32.mrb[0].mxu0
  %v4331 = vpop.f32.mrb[0].mxu0
  %v4332 = vadd.f32 0.0, %v4331
  %v4333 = vpop.f32.mrb[0].mxu0
  %4334 = vmatprep.mubr.bf16.mxu0 0
  %4335 = vmatmul.mubr.bf16.gmra.mrb[0].mxu0 %v2502
  %v4336 = vpop.f32.mrb[0].mxu0
  %v4337 = vadd.f32 0.0, %v4336
  %v4338 = vpop.f32.mrb[0].mxu0
  %v4339 = vpop.f32.mrb[0].mxu0
  %v4340 = vadd.f32 0.0, %v4339
  %v4341 = vpop.f32.mrb[0].mxu0
  %4342 = vmatprep.mubr.bf16.mxu0 0
  %4343 = vmatmul.mubr.bf16.gmra.mrb[0].mxu0 %v2505
  %v4344 = vpop.f32.mrb[0].mxu0
  %v4345 = vadd.f32 0.0, %v4344
  %v4346 = vpop.f32.mrb[0].mxu0
  %v4347 = vpop.f32.mrb[0].mxu0
  %v4348 = vadd.f32 0.0, %v4347
  %v4349 = vpop.f32.mrb[0].mxu0
  %4350 = vmatprep.mubr.bf16.mxu0 0
  %4351 = vmatmul.mubr.bf16.gmra.mrb[0].mxu0 %v2508
  %v4352 = vpop.f32.mrb[0].mxu0
  %v4353 = vadd.f32 0.0, %v4352
  %v4354 = vpop.f32.mrb[0].mxu0
  %v4355 = vpop.f32.mrb[0].mxu0
  %v4356 = vadd.f32 0.0, %v4355
  %v4357 = vpop.f32.mrb[0].mxu0
  %4358 = vmatprep.mubr.bf16.mxu0 0
  %4359 = vmatmul.mubr.bf16.gmra.mrb[0].mxu0 %v2511
  %v4360 = vpop.f32.mrb[0].mxu0
  %v4361 = vadd.f32 0.0, %v4360
  %v4362 = vpop.f32.mrb[0].mxu0
  %v4363 = vpop.f32.mrb[0].mxu0
  %v4364 = vadd.f32 0.0, %v4363
  %v4365 = vpop.f32.mrb[0].mxu0
  %4366 = vmatprep.mubr.bf16.mxu0 0
  %4367 = vmatmul.mubr.bf16.gmra.mrb[0].mxu0 %v2514
  %v4368 = vpop.f32.mrb[0].mxu0
  %v4369 = vadd.f32 0.0, %v4368
  %v4370 = vpop.f32.mrb[0].mxu0
  %v4371 = vpop.f32.mrb[0].mxu0
  %v4372 = vadd.f32 0.0, %v4371
  %v4373 = vpop.f32.mrb[0].mxu0
  %4374 = vmatprep.mubr.bf16.mxu0 0
  %4375 = vmatmul.mubr.bf16.gmra.mrb[0].mxu0 %v2517
  %v4376 = vpop.f32.mrb[0].mxu0
  %v4377 = vadd.f32 0.0, %v4376
  %v4378 = vpop.f32.mrb[0].mxu0
  %v4379 = vpop.f32.mrb[0].mxu0
  %v4380 = vadd.f32 0.0, %v4379
  %v4381 = vpop.f32.mrb[0].mxu0
  %4382 = vmatprep.mubr.bf16.mxu0 0
  %4383 = vmatmul.mubr.bf16.gmra.mrb[0].mxu0 %v2520
  %v4384 = vpop.f32.mrb[0].mxu0
  %v4385 = vadd.f32 0.0, %v4384
  %v4386 = vpop.f32.mrb[0].mxu0
  %v4387 = vpop.f32.mrb[0].mxu0
  %v4388 = vadd.f32 0.0, %v4387
  %v4389 = vpop.f32.mrb[0].mxu0
  %4390 = vmatprep.mubr.bf16.mxu0 0
  %4391 = vmatmul.mubr.bf16.gmra.mrb[0].mxu0 %v2523
  %v4392 = vpop.f32.mrb[0].mxu0
  %v4393 = vadd.f32 0.0, %v4392
  %v4394 = vpop.f32.mrb[0].mxu0
  %v4395 = vpop.f32.mrb[0].mxu0
  %v4396 = vadd.f32 0.0, %v4395
  %v4397 = vpop.f32.mrb[0].mxu0
  %4398 = vmatprep.mubr.bf16.mxu0 0
  %4399 = vmatmul.mubr.bf16.gmra.mrb[0].mxu0 %v2526
  %v4400 = vpop.f32.mrb[0].mxu0
  %v4401 = vadd.f32 0.0, %v4400
  %v4402 = vpop.f32.mrb[0].mxu0
  %v4403 = vpop.f32.mrb[0].mxu0
  %v4404 = vadd.f32 0.0, %v4403
  %v4405 = vpop.f32.mrb[0].mxu0
  %4406 = vmatprep.mubr.bf16.mxu0 0
  %4407 = vmatmul.mubr.bf16.gmra.mrb[0].mxu0 %v2529
  %v4408 = vpop.f32.mrb[0].mxu0
  %v4409 = vadd.f32 0.0, %v4408
  %v4410 = vpop.f32.mrb[0].mxu0
  %v4411 = vpop.f32.mrb[0].mxu0
  %v4412 = vadd.f32 0.0, %v4411
  %v4413 = vpop.f32.mrb[0].mxu0
  %4414 = vmatprep.mubr.bf16.mxu0 0
  %4415 = vmatmul.mubr.bf16.gmra.mrb[0].mxu0 %v2532
  %v4416 = vpop.f32.mrb[0].mxu0
  %v4417 = vadd.f32 0.0, %v4416
  %v4418 = vpop.f32.mrb[0].mxu0
  %v4419 = vpop.f32.mrb[0].mxu0
  %v4420 = vadd.f32 0.0, %v4419
  %v4421 = vpop.f32.mrb[0].mxu0
  %4422 = vmatprep.mubr.bf16.mxu0 0
  %4423 = vmatmul.mubr.bf16.gmra.mrb[0].mxu0 %v2535
  %v4424 = vpop.f32.mrb[0].mxu0
  %v4425 = vadd.f32 0.0, %v4424
  %v4426 = vpop.f32.mrb[0].mxu0
  %v4427 = vpop.f32.mrb[0].mxu0
  %v4428 = vadd.f32 0.0, %v4427
  %v4429 = vpop.f32.mrb[0].mxu0
  %4430 = vmatprep.mubr.bf16.mxu0 0
  %4431 = vmatmul.mubr.bf16.gmra.mrb[0].mxu0 %v2538
  %v4432 = vpop.f32.mrb[0].mxu0
  %v4433 = vadd.f32 0.0, %v4432
  %v4434 = vpop.f32.mrb[0].mxu0
  %v4435 = vpop.f32.mrb[0].mxu0
  %v4436 = vadd.f32 0.0, %v4435
  %v4437 = vpop.f32.mrb[0].mxu0
  %4438 = vmatprep.mubr.bf16.mxu0 0
  %4439 = vmatmul.mubr.bf16.gmra.mrb[0].mxu0 %v2541
  %v4440 = vpop.f32.mrb[0].mxu0
  %v4441 = vadd.f32 0.0, %v4440
  %v4442 = vpop.f32.mrb[0].mxu0
  %v4443 = vpop.f32.mrb[0].mxu0
  %v4444 = vadd.f32 0.0, %v4443
  %v4445 = vpop.f32.mrb[0].mxu0
  %4446 = vmatprep.mubr.bf16.mxu0 0
  %4447 = vmatmul.mubr.bf16.gmra.mrb[0].mxu0 %v2544
  %v4448 = vpop.f32.mrb[0].mxu0
  %v4449 = vadd.f32 0.0, %v4448
  %v4450 = vpop.f32.mrb[0].mxu0
  %v4451 = vpop.f32.mrb[0].mxu0
  %v4452 = vadd.f32 0.0, %v4451
  %v4453 = vpop.f32.mrb[0].mxu0
  %4454 = vmatprep.mubr.bf16.mxu0 0
  %4455 = vmatmul.mubr.bf16.gmra.mrb[0].mxu0 %v2547
  %v4456 = vpop.f32.mrb[0].mxu0
  %v4457 = vadd.f32 0.0, %v4456
  %v4458 = vpop.f32.mrb[0].mxu0
  %v4459 = vpop.f32.mrb[0].mxu0
  %v4460 = vadd.f32 0.0, %v4459
  %v4461 = vpop.f32.mrb[0].mxu0
  %4462 = vmatprep.mubr.bf16.mxu0 0
  %4463 = vmatmul.mubr.bf16.gmra.mrb[0].mxu0 %v2550
  %v4464 = vpop.f32.mrb[0].mxu0
  %v4465 = vadd.f32 0.0, %v4464
  %v4466 = vpop.f32.mrb[0].mxu0
  %v4467 = vpop.f32.mrb[0].mxu0
  %v4468 = vadd.f32 0.0, %v4467
  %v4469 = vpop.f32.mrb[0].mxu0
  %4470 = vmatprep.mubr.bf16.mxu0 0
  %4471 = vmatmul.mubr.bf16.gmra.mrb[0].mxu0 %v2553
  %v4472 = vpop.f32.mrb[0].mxu0
  %v4473 = vadd.f32 0.0, %v4472
  %v4474 = vpop.f32.mrb[0].mxu0
  %v4475 = vpop.f32.mrb[0].mxu0
  %v4476 = vadd.f32 0.0, %v4475
  %v4477 = vpop.f32.mrb[0].mxu0
  %4478 = vmatprep.mubr.bf16.mxu0 0
  %4479 = vmatmul.mubr.bf16.gmra.mrb[0].mxu0 %v2556
  %v4480 = vpop.f32.mrb[0].mxu0
  %v4481 = vadd.f32 0.0, %v4480
  %v4482 = vpop.f32.mrb[0].mxu0
  %v4483 = vpop.f32.mrb[0].mxu0
  %v4484 = vadd.f32 0.0, %v4483
  %v4485 = vpop.f32.mrb[0].mxu0
  %4486 = vmatprep.mubr.bf16.mxu0 0
  %4487 = vmatmul.mubr.bf16.gmra.mrb[0].mxu0 %v2559
  %v4488 = vpop.f32.mrb[0].mxu0
  %v4489 = vadd.f32 0.0, %v4488
  %v4490 = vpop.f32.mrb[0].mxu0
  %v4491 = vpop.f32.mrb[0].mxu0
  %v4492 = vadd.f32 0.0, %v4491
  %v4493 = vpop.f32.mrb[0].mxu0
  %4494 = vmatprep.mubr.bf16.mxu0 0
  %4495 = vmatmul.mubr.bf16.gmra.mrb[0].mxu0 %v2562
  %v4496 = vpop.f32.mrb[0].mxu0
  %v4497 = vadd.f32 0.0, %v4496
  %v4498 = vpop.f32.mrb[0].mxu0
  %v4499 = vpop.f32.mrb[0].mxu0
  %v4500 = vadd.f32 0.0, %v4499
  %v4501 = vpop.f32.mrb[0].mxu0
  %4502 = vmatprep.mubr.bf16.mxu0 0
  %4503 = vmatmul.mubr.bf16.gmra.mrb[0].mxu0 %v2565
  %v4504 = vpop.f32.mrb[0].mxu0
  %v4505 = vadd.f32 0.0, %v4504
  %v4506 = vpop.f32.mrb[0].mxu0
  %v4507 = vpop.f32.mrb[0].mxu0
  %v4508 = vadd.f32 0.0, %v4507
  %v4509 = vpop.f32.mrb[0].mxu0
  %4510 = vmatprep.mubr.bf16.mxu0 0
  %4511 = vmatmul.mubr.bf16.gmra.mrb[0].mxu0 %v2568
  %v4512 = vpop.f32.mrb[0].mxu0
  %v4513 = vadd.f32 0.0, %v4512
  %v4514 = vpop.f32.mrb[0].mxu0
  %v4515 = vpop.f32.mrb[0].mxu0
  %v4516 = vadd.f32 0.0, %v4515
  %v4517 = vpop.f32.mrb[0].mxu0
  %4518 = vmatprep.mubr.bf16.mxu0 0
  %4519 = vmatmul.mubr.bf16.gmra.mrb[0].mxu0 %v2571
  %v4520 = vpop.f32.mrb[0].mxu0
  %v4521 = vadd.f32 0.0, %v4520
  %v4522 = vpop.f32.mrb[0].mxu0
  %v4523 = vpop.f32.mrb[0].mxu0
  %v4524 = vadd.f32 0.0, %v4523
  %v4525 = vpop.f32.mrb[0].mxu0
  %4526 = vmatprep.mubr.bf16.mxu0 0
  %4527 = vmatmul.mubr.bf16.gmra.mrb[0].mxu0 %v2574
  %v4528 = vpop.f32.mrb[0].mxu0
  %v4529 = vadd.f32 0.0, %v4528
  %v4530 = vpop.f32.mrb[0].mxu0
  %v4531 = vpop.f32.mrb[0].mxu0
  %v4532 = vadd.f32 0.0, %v4531
  %v4533 = vpop.f32.mrb[0].mxu0
  %4534 = vmatprep.mubr.bf16.mxu0 0
  %4535 = vmatmul.mubr.bf16.gmra.mrb[0].mxu0 %v2577
  %v4536 = vpop.f32.mrb[0].mxu0
  %v4537 = vadd.f32 0.0, %v4536
  %v4538 = vpop.f32.mrb[0].mxu0
  %v4539 = vpop.f32.mrb[0].mxu0
  %v4540 = vadd.f32 0.0, %v4539
  %v4541 = vpop.f32.mrb[0].mxu0
  %4542 = vmatprep.mubr.bf16.mxu0 0
  %4543 = vmatmul.mubr.bf16.gmra.mrb[0].mxu0 %v2580
  %v4544 = vpop.f32.mrb[0].mxu0
  %v4545 = vadd.f32 0.0, %v4544
  %v4546 = vpop.f32.mrb[0].mxu0
  %v4547 = vpop.f32.mrb[0].mxu0
  %v4548 = vadd.f32 0.0, %v4547
  %v4549 = vpop.f32.mrb[0].mxu0
  %4550 = vmatprep.mubr.bf16.mxu0 0
  %4551 = vmatmul.mubr.bf16.gmra.mrb[0].mxu0 %v2583
  %v4552 = vpop.f32.mrb[0].mxu0
  %v4553 = vadd.f32 0.0, %v4552
  %v4554 = vpop.f32.mrb[0].mxu0
  %v4555 = vpop.f32.mrb[0].mxu0
  %v4556 = vadd.f32 0.0, %v4555
  %v4557 = vpop.f32.mrb[0].mxu0
  %4558 = vmatprep.mubr.bf16.mxu0 0
  %4559 = vmatmul.mubr.bf16.gmra.mrb[0].mxu0 %v2586
  %v4560 = vpop.f32.mrb[0].mxu0
  %v4561 = vadd.f32 0.0, %v4560
  %v4562 = vpop.f32.mrb[0].mxu0
  %v4563 = vpop.f32.mrb[0].mxu0
  %v4564 = vadd.f32 0.0, %v4563
  %v4565 = vpop.f32.mrb[0].mxu0
  %4566 = vmatprep.mubr.bf16.mxu0 0
  %4567 = vmatmul.mubr.bf16.gmra.mrb[0].mxu0 %v2589
  %v4568 = vpop.f32.mrb[0].mxu0
  %v4569 = vadd.f32 0.0, %v4568
  %v4570 = vpop.f32.mrb[0].mxu0
  %v4571 = vpop.f32.mrb[0].mxu0
  %v4572 = vadd.f32 0.0, %v4571
  %v4573 = vpop.f32.mrb[0].mxu0
  %4574 = vmatprep.mubr.bf16.mxu0 0
  %4575 = vmatmul.mubr.bf16.gmra.mrb[0].mxu0 %v2592
  %v4576 = vpop.f32.mrb[0].mxu0
  %v4577 = vadd.f32 0.0, %v4576
  %v4578 = vpop.f32.mrb[0].mxu0
  %v4579 = vpop.f32.mrb[0].mxu0
  %v4580 = vadd.f32 0.0, %v4579
  %v4581 = vpop.f32.mrb[0].mxu0
  %4582 = vmatprep.mubr.bf16.mxu0 0
  %4583 = vmatmul.mubr.bf16.gmra.mrb[0].mxu0 %v2595
  %v4584 = vpop.f32.mrb[0].mxu0
  %v4585 = vadd.f32 0.0, %v4584
  %v4586 = vpop.f32.mrb[0].mxu0
  %v4587 = vpop.f32.mrb[0].mxu0
  %v4588 = vadd.f32 0.0, %v4587
  %v4589 = vpop.f32.mrb[0].mxu0
  %4590 = vmatprep.mubr.bf16.mxu0 0
  %4591 = vmatmul.mubr.bf16.gmra.mrb[0].mxu0 %v2598
  %v4592 = vpop.f32.mrb[0].mxu0
  %v4593 = vadd.f32 0.0, %v4592
  %v4594 = vpop.f32.mrb[0].mxu0
  %v4595 = vpop.f32.mrb[0].mxu0
  %v4596 = vadd.f32 0.0, %v4595
  %v4597 = vpop.f32.mrb[0].mxu0
  %4598 = vmatprep.mubr.bf16.mxu0 0
  %4599 = vmatmul.mubr.bf16.gmra.mrb[0].mxu0 %v2601
  %v4600 = vpop.f32.mrb[0].mxu0
  %v4601 = vadd.f32 0.0, %v4600
  %v4602 = vpop.f32.mrb[0].mxu0
  %v4603 = vpop.f32.mrb[0].mxu0
  %v4604 = vadd.f32 0.0, %v4603
  %v4605 = vpop.f32.mrb[0].mxu0
  %4606 = vmatprep.mubr.bf16.mxu0 0
  %4607 = vmatmul.mubr.bf16.gmra.mrb[0].mxu0 %v2604
  %v4608 = vpop.f32.mrb[0].mxu0
  %v4609 = vadd.f32 0.0, %v4608
  %v4610 = vpop.f32.mrb[0].mxu0
  %v4611 = vpop.f32.mrb[0].mxu0
  %v4612 = vadd.f32 0.0, %v4611
  %v4613 = vpop.f32.mrb[0].mxu0
  %4614 = vmatprep.mubr.bf16.mxu0 0
  %4615 = vmatmul.mubr.bf16.gmra.mrb[0].mxu0 %v2607
  %v4616 = vpop.f32.mrb[0].mxu0
  %v4617 = vadd.f32 0.0, %v4616
  %v4618 = vpop.f32.mrb[0].mxu0
  %v4619 = vpop.f32.mrb[0].mxu0
  %v4620 = vadd.f32 0.0, %v4619
  %v4621 = vpop.f32.mrb[0].mxu0
  %4622 = vmatprep.mubr.bf16.mxu0 0
  %4623 = vmatmul.mubr.bf16.gmra.mrb[0].mxu0 %v2610
  %v4624 = vpop.f32.mrb[0].mxu0
  %v4625 = vadd.f32 0.0, %v4624
  %v4626 = vpop.f32.mrb[0].mxu0
  %v4627 = vpop.f32.mrb[0].mxu0
  %v4628 = vadd.f32 0.0, %v4627
  %v4629 = vpop.f32.mrb[0].mxu0
  %4630 = vmatprep.mubr.bf16.mxu0 0
  %4631 = vmatmul.mubr.bf16.gmra.mrb[0].mxu0 %v2613
  %v4632 = vpop.f32.mrb[0].mxu0
  %v4633 = vadd.f32 0.0, %v4632
  %v4634 = vpop.f32.mrb[0].mxu0
  %v4635 = vpop.f32.mrb[0].mxu0
  %v4636 = vadd.f32 0.0, %v4635
  %v4637 = vpop.f32.mrb[0].mxu0
  %4638 = vmatprep.mubr.bf16.mxu0 0
  %4639 = vmatmul.mubr.bf16.gmra.mrb[0].mxu0 %v2616
  %v4640 = vpop.f32.mrb[0].mxu0
  %v4641 = vadd.f32 0.0, %v4640
  %v4642 = vpop.f32.mrb[0].mxu0
  %v4643 = vpop.f32.mrb[0].mxu0
  %v4644 = vadd.f32 0.0, %v4643
  %v4645 = vpop.f32.mrb[0].mxu0
  %4646 = vmatprep.mubr.bf16.mxu0 0
  %4647 = vmatmul.mubr.bf16.gmra.mrb[0].mxu0 %v2619
  %v4648 = vpop.f32.mrb[0].mxu0
  %v4649 = vadd.f32 0.0, %v4648
  %v4650 = vpop.f32.mrb[0].mxu0
  %v4651 = vpop.f32.mrb[0].mxu0
  %v4652 = vadd.f32 0.0, %v4651
  %v4653 = vpop.f32.mrb[0].mxu0
  %4654 = vmatprep.mubr.bf16.mxu0 0
  %4655 = vmatmul.mubr.bf16.gmra.mrb[0].mxu0 %v2622
  %v4656 = vpop.f32.mrb[0].mxu0
  %v4657 = vadd.f32 0.0, %v4656
  %v4658 = vpop.f32.mrb[0].mxu0
  %v4659 = vpop.f32.mrb[0].mxu0
  %v4660 = vadd.f32 0.0, %v4659
  %v4661 = vpop.f32.mrb[0].mxu0
  %4662 = vmatprep.mubr.bf16.mxu0 0
  %4663 = vmatmul.mubr.bf16.gmra.mrb[0].mxu0 %v2625
  %v4664 = vpop.f32.mrb[0].mxu0
  %v4665 = vadd.f32 0.0, %v4664
  %v4666 = vpop.f32.mrb[0].mxu0
  %v4667 = vpop.f32.mrb[0].mxu0
  %v4668 = vadd.f32 0.0, %v4667
  %v4669 = vpop.f32.mrb[0].mxu0
  %4670 = vmatprep.mubr.bf16.mxu0 0
  %4671 = vmatmul.mubr.bf16.gmra.mrb[0].mxu0 %v2628
  %v4672 = vpop.f32.mrb[0].mxu0
  %v4673 = vadd.f32 0.0, %v4672
  %v4674 = vpop.f32.mrb[0].mxu0
  %v4675 = vpop.f32.mrb[0].mxu0
  %v4676 = vadd.f32 0.0, %v4675
  %v4677 = vpop.f32.mrb[0].mxu0
  %4678 = vmatprep.mubr.bf16.mxu0 0
  %4679 = vmatmul.mubr.bf16.gmra.mrb[0].mxu0 %v2631
  %v4680 = vpop.f32.mrb[0].mxu0
  %v4681 = vadd.f32 0.0, %v4680
  %v4682 = vpop.f32.mrb[0].mxu0
  %v4683 = vpop.f32.mrb[0].mxu0
  %v4684 = vadd.f32 0.0, %v4683
  %v4685 = vpop.f32.mrb[0].mxu0
  %4686 = vmatprep.mubr.bf16.mxu0 0
  %4687 = vmatmul.mubr.bf16.gmra.mrb[0].mxu0 %v2634
  %v4688 = vpop.f32.mrb[0].mxu0
  %v4689 = vadd.f32 0.0, %v4688
  %v4690 = vpop.f32.mrb[0].mxu0
  %v4691 = vpop.f32.mrb[0].mxu0
  %v4692 = vadd.f32 0.0, %v4691
  %v4693 = vpop.f32.mrb[0].mxu0
  %4694 = vmatprep.mubr.bf16.mxu0 0
  %4695 = vmatmul.mubr.bf16.gmra.mrb[0].mxu0 %v2637
  %v4696 = vpop.f32.mrb[0].mxu0
  %v4697 = vadd.f32 0.0, %v4696
  %v4698 = vpop.f32.mrb[0].mxu0
  %v4699 = vpop.f32.mrb[0].mxu0
  %v4700 = vadd.f32 0.0, %v4699
  %v4701 = vpop.f32.mrb[0].mxu0
  %4702 = vmatprep.mubr.bf16.mxu0 0
  %4703 = vmatmul.mubr.bf16.gmra.mrb[0].mxu0 %v2640
  %v4704 = vpop.f32.mrb[0].mxu0
  %v4705 = vadd.f32 0.0, %v4704
  %v4706 = vpop.f32.mrb[0].mxu0
  %v4707 = vpop.f32.mrb[0].mxu0
  %v4708 = vadd.f32 0.0, %v4707
  %v4709 = vpop.f32.mrb[0].mxu0
  %4710 = vmatprep.mubr.bf16.mxu0 0
  %4711 = vmatmul.mubr.bf16.gmra.mrb[0].mxu0 %v2643
  %v4712 = vpop.f32.mrb[0].mxu0
  %v4713 = vadd.f32 0.0, %v4712
  %v4714 = vpop.f32.mrb[0].mxu0
  %v4715 = vpop.f32.mrb[0].mxu0
  %v4716 = vadd.f32 0.0, %v4715
  %v4717 = vpop.f32.mrb[0].mxu0
  %4718 = vmatprep.mubr.bf16.mxu0 0
  %4719 = vmatmul.mubr.bf16.gmra.mrb[0].mxu0 %v2646
  %v4720 = vpop.f32.mrb[0].mxu0
  %v4721 = vadd.f32 0.0, %v4720
  %v4722 = vpop.f32.mrb[0].mxu0
  %v4723 = vpop.f32.mrb[0].mxu0
  %v4724 = vadd.f32 0.0, %v4723
  %v4725 = vpop.f32.mrb[0].mxu0
  %4726 = vmatprep.mubr.bf16.mxu0 0
  %4727 = vmatmul.mubr.bf16.gmra.mrb[0].mxu0 %v2649
  %v4728 = vpop.f32.mrb[0].mxu0
  %v4729 = vadd.f32 0.0, %v4728
  %v4730 = vpop.f32.mrb[0].mxu0
  %v4731 = vpop.f32.mrb[0].mxu0
  %v4732 = vadd.f32 0.0, %v4731
  %v4733 = vpop.f32.mrb[0].mxu0
  %4734 = vmatprep.mubr.bf16.mxu0 0
  %4735 = vmatmul.mubr.bf16.gmra.mrb[0].mxu0 %v2652
  %v4736 = vpop.f32.mrb[0].mxu0
  %v4737 = vadd.f32 0.0, %v4736
  %v4738 = vpop.f32.mrb[0].mxu0
  %v4739 = vpop.f32.mrb[0].mxu0
  %v4740 = vadd.f32 0.0, %v4739
  %v4741 = vpop.f32.mrb[0].mxu0
  %4742 = vmatprep.mubr.bf16.mxu0 0
  %4743 = vmatmul.mubr.bf16.gmra.mrb[0].mxu0 %v2655
  %v4744 = vpop.f32.mrb[0].mxu0
  %v4745 = vadd.f32 0.0, %v4744
  %v4746 = vpop.f32.mrb[0].mxu0
  %v4747 = vpop.f32.mrb[0].mxu0
  %v4748 = vadd.f32 0.0, %v4747
  %v4749 = vpop.f32.mrb[0].mxu0
  %4750 = vmatprep.mubr.bf16.mxu0 0
  %4751 = vmatmul.mubr.bf16.gmra.mrb[0].mxu0 %v2658
  %v4752 = vpop.f32.mrb[0].mxu0
  %v4753 = vadd.f32 0.0, %v4752
  %v4754 = vpop.f32.mrb[0].mxu0
  %v4755 = vpop.f32.mrb[0].mxu0
  %v4756 = vadd.f32 0.0, %v4755
  %v4757 = vpop.f32.mrb[0].mxu0
  %4758 = vmatprep.mubr.bf16.mxu0 0
  %4759 = vmatmul.mubr.bf16.gmra.mrb[0].mxu0 %v2661
  %v4760 = vpop.f32.mrb[0].mxu0
  %v4761 = vadd.f32 0.0, %v4760
  %v4762 = vpop.f32.mrb[0].mxu0
  %v4763 = vpop.f32.mrb[0].mxu0
  %v4764 = vadd.f32 0.0, %v4763
  %v4765 = vpop.f32.mrb[0].mxu0
  %4766 = vmatprep.mubr.bf16.mxu0 0
  %4767 = vmatmul.mubr.bf16.gmra.mrb[0].mxu0 %v2664
  %v4768 = vpop.f32.mrb[0].mxu0
  %v4769 = vadd.f32 0.0, %v4768
  %v4770 = vpop.f32.mrb[0].mxu0
  %v4771 = vpop.f32.mrb[0].mxu0
  %v4772 = vadd.f32 0.0, %v4771
  %v4773 = vpop.f32.mrb[0].mxu0
  %4774 = vmatprep.mubr.bf16.mxu0 0
  %4775 = vmatmul.mubr.bf16.gmra.mrb[0].mxu0 %v2667
  %v4776 = vpop.f32.mrb[0].mxu0
  %v4777 = vadd.f32 0.0, %v4776
  %v4778 = vpop.f32.mrb[0].mxu0
  %v4779 = vpop.f32.mrb[0].mxu0
  %v4780 = vadd.f32 0.0, %v4779
  %v4781 = vpop.f32.mrb[0].mxu0
  %4782 = vmatprep.mubr.bf16.mxu0 0
  %4783 = vmatmul.mubr.bf16.gmra.mrb[0].mxu0 %v2670
  %v4784 = vpop.f32.mrb[0].mxu0
  %v4785 = vadd.f32 0.0, %v4784
  %v4786 = vpop.f32.mrb[0].mxu0
  %v4787 = vpop.f32.mrb[0].mxu0
  %v4788 = vadd.f32 0.0, %v4787
  %v4789 = vpop.f32.mrb[0].mxu0
  %4790 = vmatprep.mubr.bf16.mxu0 0
  %4791 = vmatmul.mubr.bf16.gmra.mrb[0].mxu0 %v2673
  %v4792 = vpop.f32.mrb[0].mxu0
  %v4793 = vadd.f32 0.0, %v4792
  %v4794 = vpop.f32.mrb[0].mxu0
  %v4795 = vpop.f32.mrb[0].mxu0
  %v4796 = vadd.f32 0.0, %v4795
  %v4797 = vpop.f32.mrb[0].mxu0
  %4798 = vmatprep.mubr.bf16.mxu0 0
  %4799 = vmatmul.mubr.bf16.gmra.mrb[0].mxu0 %v2676
  %v4800 = vpop.f32.mrb[0].mxu0
  %v4801 = vadd.f32 0.0, %v4800
  %v4802 = vpop.f32.mrb[0].mxu0
  %v4803 = vpop.f32.mrb[0].mxu0
  %v4804 = vadd.f32 0.0, %v4803
  %v4805 = vpop.f32.mrb[0].mxu0
  %4806 = vmatprep.mubr.bf16.mxu0 0
  %4807 = vmatmul.mubr.bf16.gmra.mrb[0].mxu0 %v2679
  %v4808 = vpop.f32.mrb[0].mxu0
  %v4809 = vadd.f32 0.0, %v4808
  %v4810 = vpop.f32.mrb[0].mxu0
  %v4811 = vpop.f32.mrb[0].mxu0
  %v4812 = vadd.f32 0.0, %v4811
  %v4813 = vpop.f32.mrb[0].mxu0
  %4814 = vmatprep.mubr.bf16.mxu0 0
  %4815 = vmatmul.mubr.bf16.gmra.mrb[0].mxu0 %v2682
  %v4816 = vpop.f32.mrb[0].mxu0
  %v4817 = vadd.f32 0.0, %v4816
  %v4818 = vpop.f32.mrb[0].mxu0
  %v4819 = vpop.f32.mrb[0].mxu0
  %v4820 = vadd.f32 0.0, %v4819
  %v4821 = vpop.f32.mrb[0].mxu0
  %4822 = vmatprep.mubr.bf16.mxu0 0
  %4823 = vmatmul.mubr.bf16.gmra.mrb[0].mxu0 %v2685
  %v4824 = vpop.f32.mrb[0].mxu0
  %v4825 = vadd.f32 0.0, %v4824
  %v4826 = vpop.f32.mrb[0].mxu0
  %v4827 = vpop.f32.mrb[0].mxu0
  %v4828 = vadd.f32 0.0, %v4827
  %v4829 = vpop.f32.mrb[0].mxu0
  %4830 = vmatprep.mubr.bf16.mxu0 0
  %4831 = vmatmul.mubr.bf16.gmra.mrb[0].mxu0 %v2688
  %v4832 = vpop.f32.mrb[0].mxu0
  %v4833 = vadd.f32 0.0, %v4832
  %v4834 = vpop.f32.mrb[0].mxu0
  %v4835 = vpop.f32.mrb[0].mxu0
  %v4836 = vadd.f32 0.0, %v4835
  %v4837 = vpop.f32.mrb[0].mxu0
  %4838 = vmatprep.mubr.bf16.mxu0 0
  %4839 = vmatmul.mubr.bf16.gmra.mrb[0].mxu0 %v2691
  %v4840 = vpop.f32.mrb[0].mxu0
  %v4841 = vadd.f32 0.0, %v4840
  %v4842 = vpop.f32.mrb[0].mxu0
  %v4843 = vpop.f32.mrb[0].mxu0
  %v4844 = vadd.f32 0.0, %v4843
  %v4845 = vpop.f32.mrb[0].mxu0
  %4846 = vmatprep.mubr.bf16.mxu0 0
  %4847 = vmatmul.mubr.bf16.gmra.mrb[0].mxu0 %v2694
  %v4848 = vpop.f32.mrb[0].mxu0
  %v4849 = vadd.f32 0.0, %v4848
  %v4850 = vpop.f32.mrb[0].mxu0
  %v4851 = vpop.f32.mrb[0].mxu0
  %v4852 = vadd.f32 0.0, %v4851
  %v4853 = vpop.f32.mrb[0].mxu0
  %4854 = vmatprep.mubr.bf16.mxu0 0
  %4855 = vmatmul.mubr.bf16.gmra.mrb[0].mxu0 %v2697
  %v4856 = vpop.f32.mrb[0].mxu0
  %v4857 = vadd.f32 0.0, %v4856
  %v4858 = vpop.f32.mrb[0].mxu0
  %v4859 = vpop.f32.mrb[0].mxu0
  %v4860 = vadd.f32 0.0, %v4859
  %v4861 = vpop.f32.mrb[0].mxu0
  %4862 = vmatprep.mubr.bf16.mxu0 0
  %4863 = vmatmul.mubr.bf16.gmra.mrb[0].mxu0 %v2700
  %v4864 = vpop.f32.mrb[0].mxu0
  %v4865 = vadd.f32 0.0, %v4864
  %v4866 = vpop.f32.mrb[0].mxu0
  %v4867 = vpop.f32.mrb[0].mxu0
  %v4868 = vadd.f32 0.0, %v4867
  %v4869 = vpop.f32.mrb[0].mxu0
  %4870 = vmatprep.mubr.bf16.mxu0 0
  %4871 = vmatmul.mubr.bf16.gmra.mrb[0].mxu0 %v2703
  %v4872 = vpop.f32.mrb[0].mxu0
  %v4873 = vadd.f32 0.0, %v4872
  %v4874 = vpop.f32.mrb[0].mxu0
  %v4875 = vpop.f32.mrb[0].mxu0
  %v4876 = vadd.f32 0.0, %v4875
  %v4877 = vpop.f32.mrb[0].mxu0
  %4878 = vmatprep.mubr.bf16.mxu0 0
  %4879 = vmatmul.mubr.bf16.gmra.mrb[0].mxu0 %v2706
  %v4880 = vpop.f32.mrb[0].mxu0
  %v4881 = vadd.f32 0.0, %v4880
  %v4882 = vpop.f32.mrb[0].mxu0
  %v4883 = vpop.f32.mrb[0].mxu0
  %v4884 = vadd.f32 0.0, %v4883
  %v4885 = vpop.f32.mrb[0].mxu0
  %4886 = vmatprep.mubr.bf16.mxu0 0
  %4887 = vmatmul.mubr.bf16.gmra.mrb[0].mxu0 %v2709
  %v4888 = vpop.f32.mrb[0].mxu0
  %v4889 = vadd.f32 0.0, %v4888
  %v4890 = vpop.f32.mrb[0].mxu0
  %v4891 = vpop.f32.mrb[0].mxu0
  %v4892 = vadd.f32 0.0, %v4891
  %v4893 = vpop.f32.mrb[0].mxu0
  %4894 = vdwg.mxu0
  %v4895 = vmax.f32 %v2753, %v3289
  %v4896 = vmax.f32 %v2756, %v3292
  %v4897 = vmax.f32 %v2761, %v3297
  %v4898 = vmax.f32 %v2764, %v3300
  %v4899 = vmax.f32 %v2769, %v3305
  %v4900 = vmax.f32 %v2772, %v3308
  %v4901 = vmax.f32 %v2777, %v3313
  %v4902 = vmax.f32 %v2780, %v3316
  %v4903 = vmax.f32 %v2785, %v3321
  %v4904 = vmax.f32 %v2788, %v3324
  %v4905 = vmax.f32 %v2793, %v3329
  %v4906 = vmax.f32 %v2796, %v3332
  %v4907 = vmax.f32 %v2801, %v3337
  %v4908 = vmax.f32 %v2804, %v3340
  %v4909 = vmax.f32 %v2809, %v3345
  %v4910 = vmax.f32 %v2812, %v3348
  %v4911 = vmax.f32 %v2817, %v3353
  %v4912 = vmax.f32 %v2820, %v3356
  %v4913 = vmax.f32 %v2825, %v3361
  %v4914 = vmax.f32 %v2828, %v3364
  %v4915 = vmax.f32 %v2833, %v3369
  %v4916 = vmax.f32 %v2836, %v3372
  %v4917 = vmax.f32 %v2841, %v3377
  %v4918 = vmax.f32 %v2844, %v3380
  %v4919 = vmax.f32 %v2849, %v3385
  %v4920 = vmax.f32 %v2852, %v3388
  %v4921 = vmax.f32 %v2857, %v3393
  %v4922 = vmax.f32 %v2860, %v3396
  %v4923 = vmax.f32 %v2865, %v3401
  %v4924 = vmax.f32 %v2868, %v3404
  %v4925 = vmax.f32 %v2873, %v3409
  %v4926 = vmax.f32 %v2876, %v3412
  %v4927 = vmax.f32 %v2881, %v3417
  %v4928 = vmax.f32 %v2884, %v3420
  %v4929 = vmax.f32 %v2889, %v3425
  %v4930 = vmax.f32 %v2892, %v3428
  %v4931 = vmax.f32 %v2897, %v3433
  %v4932 = vmax.f32 %v2900, %v3436
  %v4933 = vmax.f32 %v2905, %v3441
  %v4934 = vmax.f32 %v2908, %v3444
  %v4935 = vmax.f32 %v2913, %v3449
  %v4936 = vmax.f32 %v2916, %v3452
  %v4937 = vmax.f32 %v2921, %v3457
  %v4938 = vmax.f32 %v2924, %v3460
  %v4939 = vmax.f32 %v2929, %v3465
  %v4940 = vmax.f32 %v2932, %v3468
  %v4941 = vmax.f32 %v2937, %v3473
  %v4942 = vmax.f32 %v2940, %v3476
  %v4943 = vmax.f32 %v2945, %v3481
  %v4944 = vmax.f32 %v2948, %v3484
  %v4945 = vmax.f32 %v2953, %v3489
  %v4946 = vmax.f32 %v2956, %v3492
  %v4947 = vmax.f32 %v2961, %v3497
  %v4948 = vmax.f32 %v2964, %v3500
  %v4949 = vmax.f32 %v2969, %v3505
  %v4950 = vmax.f32 %v2972, %v3508
  %v4951 = vmax.f32 %v2977, %v3513
  %v4952 = vmax.f32 %v2980, %v3516
  %v4953 = vmax.f32 %v2985, %v3521
  %v4954 = vmax.f32 %v2988, %v3524
  %v4955 = vmax.f32 %v2993, %v3529
  %v4956 = vmax.f32 %v2996, %v3532
  %v4957 = vmax.f32 %v3001, %v3537
  %v4958 = vmax.f32 %v3004, %v3540
  %v4959 = vmax.f32 %v3009, %v3545
  %v4960 = vmax.f32 %v3012, %v3548
  %v4961 = vmax.f32 %v3017, %v3553
  %v4962 = vmax.f32 %v3020, %v3556
  %v4963 = vmax.f32 %v3025, %v3561
  %v4964 = vmax.f32 %v3028, %v3564
  %v4965 = vmax.f32 %v3033, %v3569
  %v4966 = vmax.f32 %v3036, %v3572
  %v4967 = vmax.f32 %v3041, %v3577
  %v4968 = vmax.f32 %v3044, %v3580
  %v4969 = vmax.f32 %v3049, %v3585
  %v4970 = vmax.f32 %v3052, %v3588
  %v4971 = vmax.f32 %v3057, %v3593
  %v4972 = vmax.f32 %v3060, %v3596
  %v4973 = vmax.f32 %v3065, %v3601
  %v4974 = vmax.f32 %v3068, %v3604
  %v4975 = vmax.f32 %v3073, %v3609
  %v4976 = vmax.f32 %v3076, %v3612
  %v4977 = vmax.f32 %v3081, %v3617
  %v4978 = vmax.f32 %v3084, %v3620
  %v4979 = vmax.f32 %v3089, %v3625
  %v4980 = vmax.f32 %v3092, %v3628
  %v4981 = vmax.f32 %v3097, %v3633
  %v4982 = vmax.f32 %v3100, %v3636
  %v4983 = vmax.f32 %v3105, %v3641
  %v4984 = vmax.f32 %v3108, %v3644
  %v4985 = vmax.f32 %v3113, %v3649
  %v4986 = vmax.f32 %v3116, %v3652
  %v4987 = vmax.f32 %v3121, %v3657
  %v4988 = vmax.f32 %v3124, %v3660
  %v4989 = vmax.f32 %v3129, %v3665
  %v4990 = vmax.f32 %v3132, %v3668
  %v4991 = vmax.f32 %v3137, %v3673
  %v4992 = vmax.f32 %v3140, %v3676
  %v4993 = vmax.f32 %v3145, %v3681
  %v4994 = vmax.f32 %v3148, %v3684
  %v4995 = vmax.f32 %v3153, %v3689
  %v4996 = vmax.f32 %v3156, %v3692
  %v4997 = vmax.f32 %v3161, %v3697
  %v4998 = vmax.f32 %v3164, %v3700
  %v4999 = vmax.f32 %v3169, %v3705
  %v5000 = vmax.f32 %v3172, %v3708
  %v5001 = vmax.f32 %v3177, %v3713
  %v5002 = vmax.f32 %v3180, %v3716
  %v5003 = vmax.f32 %v3185, %v3721
  %v5004 = vmax.f32 %v3188, %v3724
  %v5005 = vmax.f32 %v3193, %v3729
  %v5006 = vmax.f32 %v3196, %v3732
  %v5007 = vmax.f32 %v3201, %v3737
  %v5008 = vmax.f32 %v3204, %v3740
  %v5009 = vmax.f32 %v3209, %v3745
  %v5010 = vmax.f32 %v3212, %v3748
  %v5011 = vmax.f32 %v3217, %v3753
  %v5012 = vmax.f32 %v3220, %v3756
  %v5013 = vmax.f32 %v3225, %v3761
  %v5014 = vmax.f32 %v3228, %v3764
  %v5015 = vmax.f32 %v3233, %v3769
  %v5016 = vmax.f32 %v3236, %v3772
  %v5017 = vmax.f32 %v3241, %v3777
  %v5018 = vmax.f32 %v3244, %v3780
  %v5019 = vmax.f32 %v3249, %v3785
  %v5020 = vmax.f32 %v3252, %v3788
  %v5021 = vmax.f32 %v3257, %v3793
  %v5022 = vmax.f32 %v3260, %v3796
  %v5023 = vmax.f32 %v3265, %v3801
  %v5024 = vmax.f32 %v3268, %v3804
  %v5025 = vmax.f32 %v3273, %v3809
  %v5026 = vmax.f32 %v3276, %v3812
  %v5027 = vmax.f32 %v3281, %v3817
  %v5028 = vmax.f32 %v3284, %v3820
  %v5029 = vmax.f32 %v3825, %v4361
  %v5030 = vmax.f32 %v3828, %v4364
  %v5031 = vmax.f32 %v3833, %v4369
  %v5032 = vmax.f32 %v3836, %v4372
  %v5033 = vmax.f32 %v3841, %v4377
  %v5034 = vmax.f32 %v3844, %v4380
  %v5035 = vmax.f32 %v3849, %v4385
  %v5036 = vmax.f32 %v3852, %v4388
  %v5037 = vmax.f32 %v3857, %v4393
  %v5038 = vmax.f32 %v3860, %v4396
  %v5039 = vmax.f32 %v3865, %v4401
  %v5040 = vmax.f32 %v3868, %v4404
  %v5041 = vmax.f32 %v3873, %v4409
  %v5042 = vmax.f32 %v3876, %v4412
  %v5043 = vmax.f32 %v3881, %v4417
  %v5044 = vmax.f32 %v3884, %v4420
  %v5045 = vmax.f32 %v3889, %v4425
  %v5046 = vmax.f32 %v3892, %v4428
  %v5047 = vmax.f32 %v3897, %v4433
  %v5048 = vmax.f32 %v3900, %v4436
  %v5049 = vmax.f32 %v3905, %v4441
  %v5050 = vmax.f32 %v3908, %v4444
  %v5051 = vmax.f32 %v3913, %v4449
  %v5052 = vmax.f32 %v3916, %v4452
  %v5053 = vmax.f32 %v3921, %v4457
  %v5054 = vmax.f32 %v3924, %v4460
  %v5055 = vmax.f32 %v3929, %v4465
  %v5056 = vmax.f32 %v3932, %v4468
  %v5057 = vmax.f32 %v3937, %v4473
  %v5058 = vmax.f32 %v3940, %v4476
  %v5059 = vmax.f32 %v3945, %v4481
  %v5060 = vmax.f32 %v3948, %v4484
  %v5061 = vmax.f32 %v3953, %v4489
  %v5062 = vmax.f32 %v3956, %v4492
  %v5063 = vmax.f32 %v3961, %v4497
  %v5064 = vmax.f32 %v3964, %v4500
  %v5065 = vmax.f32 %v3969, %v4505
  %v5066 = vmax.f32 %v3972, %v4508
  %v5067 = vmax.f32 %v3977, %v4513
  %v5068 = vmax.f32 %v3980, %v4516
  %v5069 = vmax.f32 %v3985, %v4521
  %v5070 = vmax.f32 %v3988, %v4524
  %v5071 = vmax.f32 %v3993, %v4529
  %v5072 = vmax.f32 %v3996, %v4532
  %v5073 = vmax.f32 %v4001, %v4537
  %v5074 = vmax.f32 %v4004, %v4540
  %v5075 = vmax.f32 %v4009, %v4545
  %v5076 = vmax.f32 %v4012, %v4548
  %v5077 = vmax.f32 %v4017, %v4553
  %v5078 = vmax.f32 %v4020, %v4556
  %v5079 = vmax.f32 %v4025, %v4561
  %v5080 = vmax.f32 %v4028, %v4564
  %v5081 = vmax.f32 %v4033, %v4569
  %v5082 = vmax.f32 %v4036, %v4572
  %v5083 = vmax.f32 %v4041, %v4577
  %v5084 = vmax.f32 %v4044, %v4580
  %v5085 = vmax.f32 %v4049, %v4585
  %v5086 = vmax.f32 %v4052, %v4588
  %v5087 = vmax.f32 %v4057, %v4593
  %v5088 = vmax.f32 %v4060, %v4596
  %v5089 = vmax.f32 %v4065, %v4601
  %v5090 = vmax.f32 %v4068, %v4604
  %v5091 = vmax.f32 %v4073, %v4609
  %v5092 = vmax.f32 %v4076, %v4612
  %v5093 = vmax.f32 %v4081, %v4617
  %v5094 = vmax.f32 %v4084, %v4620
  %v5095 = vmax.f32 %v4089, %v4625
  %v5096 = vmax.f32 %v4092, %v4628
  %v5097 = vmax.f32 %v4097, %v4633
  %v5098 = vmax.f32 %v4100, %v4636
  %v5099 = vmax.f32 %v4105, %v4641
  %v5100 = vmax.f32 %v4108, %v4644
  %v5101 = vmax.f32 %v4113, %v4649
  %v5102 = vmax.f32 %v4116, %v4652
  %v5103 = vmax.f32 %v4121, %v4657
  %v5104 = vmax.f32 %v4124, %v4660
  %v5105 = vmax.f32 %v4129, %v4665
  %v5106 = vmax.f32 %v4132, %v4668
  %v5107 = vmax.f32 %v4137, %v4673
  %v5108 = vmax.f32 %v4140, %v4676
  %v5109 = vmax.f32 %v4145, %v4681
  %v5110 = vmax.f32 %v4148, %v4684
  %v5111 = vmax.f32 %v4153, %v4689
  %v5112 = vmax.f32 %v4156, %v4692
  %v5113 = vmax.f32 %v4161, %v4697
  %v5114 = vmax.f32 %v4164, %v4700
  %v5115 = vmax.f32 %v4169, %v4705
  %v5116 = vmax.f32 %v4172, %v4708
  %v5117 = vmax.f32 %v4177, %v4713
  %v5118 = vmax.f32 %v4180, %v4716
  %v5119 = vmax.f32 %v4185, %v4721
  %v5120 = vmax.f32 %v4188, %v4724
  %v5121 = vmax.f32 %v4193, %v4729
  %v5122 = vmax.f32 %v4196, %v4732
  %v5123 = vmax.f32 %v4201, %v4737
  %v5124 = vmax.f32 %v4204, %v4740
  %v5125 = vmax.f32 %v4209, %v4745
  %v5126 = vmax.f32 %v4212, %v4748
  %v5127 = vmax.f32 %v4217, %v4753
  %v5128 = vmax.f32 %v4220, %v4756
  %v5129 = vmax.f32 %v4225, %v4761
  %v5130 = vmax.f32 %v4228, %v4764
  %v5131 = vmax.f32 %v4233, %v4769
  %v5132 = vmax.f32 %v4236, %v4772
  %v5133 = vmax.f32 %v4241, %v4777
  %v5134 = vmax.f32 %v4244, %v4780
  %v5135 = vmax.f32 %v4249, %v4785
  %v5136 = vmax.f32 %v4252, %v4788
  %v5137 = vmax.f32 %v4257, %v4793
  %v5138 = vmax.f32 %v4260, %v4796
  %v5139 = vmax.f32 %v4265, %v4801
  %v5140 = vmax.f32 %v4268, %v4804
  %v5141 = vmax.f32 %v4273, %v4809
  %v5142 = vmax.f32 %v4276, %v4812
  %v5143 = vmax.f32 %v4281, %v4817
  %v5144 = vmax.f32 %v4284, %v4820
  %v5145 = vmax.f32 %v4289, %v4825
  %v5146 = vmax.f32 %v4292, %v4828
  %v5147 = vmax.f32 %v4297, %v4833
  %v5148 = vmax.f32 %v4300, %v4836
  %v5149 = vmax.f32 %v4305, %v4841
  %v5150 = vmax.f32 %v4308, %v4844
  %v5151 = vmax.f32 %v4313, %v4849
  %v5152 = vmax.f32 %v4316, %v4852
  %v5153 = vmax.f32 %v4321, %v4857
  %v5154 = vmax.f32 %v4324, %v4860
  %v5155 = vmax.f32 %v4329, %v4865
  %v5156 = vmax.f32 %v4332, %v4868
  %v5157 = vmax.f32 %v4337, %v4873
  %v5158 = vmax.f32 %v4340, %v4876
  %v5159 = vmax.f32 %v4345, %v4881
  %v5160 = vmax.f32 %v4348, %v4884
  %v5161 = vmax.f32 %v4353, %v4889
  %v5162 = vmax.f32 %v4356, %v4892
  %v5163 = vmax.f32 %v4895, %v5029
  %v5164 = vmax.f32 %v4896, %v5030
  %v5165 = vmax.f32 %v4897, %v5031
  %v5166 = vmax.f32 %v4898, %v5032
  %v5167 = vmax.f32 %v4899, %v5033
  %v5168 = vmax.f32 %v4900, %v5034
  %v5169 = vmax.f32 %v4901, %v5035
  %v5170 = vmax.f32 %v4902, %v5036
  %v5171 = vmax.f32 %v4903, %v5037
  %v5172 = vmax.f32 %v4904, %v5038
  %v5173 = vmax.f32 %v4905, %v5039
  %v5174 = vmax.f32 %v4906, %v5040
  %v5175 = vmax.f32 %v4907, %v5041
  %v5176 = vmax.f32 %v4908, %v5042
  %v5177 = vmax.f32 %v4909, %v5043
  %v5178 = vmax.f32 %v4910, %v5044
  %v5179 = vmax.f32 %v4911, %v5045
  %v5180 = vmax.f32 %v4912, %v5046
  %v5181 = vmax.f32 %v4913, %v5047
  %v5182 = vmax.f32 %v4914, %v5048
  %v5183 = vmax.f32 %v4915, %v5049
  %v5184 = vmax.f32 %v4916, %v5050
  %v5185 = vmax.f32 %v4917, %v5051
  %v5186 = vmax.f32 %v4918, %v5052
  %v5187 = vmax.f32 %v4919, %v5053
  %v5188 = vmax.f32 %v4920, %v5054
  %v5189 = vmax.f32 %v4921, %v5055
  %v5190 = vmax.f32 %v4922, %v5056
  %v5191 = vmax.f32 %v4923, %v5057
  %v5192 = vmax.f32 %v4924, %v5058
  %v5193 = vmax.f32 %v4925, %v5059
  %v5194 = vmax.f32 %v4926, %v5060
  %v5195 = vmax.f32 %v4927, %v5061
  %v5196 = vmax.f32 %v4928, %v5062
  %v5197 = vmax.f32 %v4929, %v5063
  %v5198 = vmax.f32 %v4930, %v5064
  %v5199 = vmax.f32 %v4931, %v5065
  %v5200 = vmax.f32 %v4932, %v5066
  %v5201 = vmax.f32 %v4933, %v5067
  %v5202 = vmax.f32 %v4934, %v5068
  %v5203 = vmax.f32 %v4935, %v5069
  %v5204 = vmax.f32 %v4936, %v5070
  %v5205 = vmax.f32 %v4937, %v5071
  %v5206 = vmax.f32 %v4938, %v5072
  %v5207 = vmax.f32 %v4939, %v5073
  %v5208 = vmax.f32 %v4940, %v5074
  %v5209 = vmax.f32 %v4941, %v5075
  %v5210 = vmax.f32 %v4942, %v5076
  %v5211 = vmax.f32 %v4943, %v5077
  %v5212 = vmax.f32 %v4944, %v5078
  %v5213 = vmax.f32 %v4945, %v5079
  %v5214 = vmax.f32 %v4946, %v5080
  %v5215 = vmax.f32 %v4947, %v5081
  %v5216 = vmax.f32 %v4948, %v5082
  %v5217 = vmax.f32 %v4949, %v5083
  %v5218 = vmax.f32 %v4950, %v5084
  %v5219 = vmax.f32 %v4951, %v5085
  %v5220 = vmax.f32 %v4952, %v5086
  %v5221 = vmax.f32 %v4953, %v5087
  %v5222 = vmax.f32 %v4954, %v5088
  %v5223 = vmax.f32 %v4955, %v5089
  %v5224 = vmax.f32 %v4956, %v5090
  %v5225 = vmax.f32 %v4957, %v5091
  %v5226 = vmax.f32 %v4958, %v5092
  %v5227 = vmax.f32 %v4959, %v5093
  %v5228 = vmax.f32 %v4960, %v5094
  %v5229 = vmax.f32 %v4961, %v5095
  %v5230 = vmax.f32 %v4962, %v5096
  %v5231 = vmax.f32 %v4963, %v5097
  %v5232 = vmax.f32 %v4964, %v5098
  %v5233 = vmax.f32 %v4965, %v5099
  %v5234 = vmax.f32 %v4966, %v5100
  %v5235 = vmax.f32 %v4967, %v5101
  %v5236 = vmax.f32 %v4968, %v5102
  %v5237 = vmax.f32 %v4969, %v5103
  %v5238 = vmax.f32 %v4970, %v5104
  %v5239 = vmax.f32 %v4971, %v5105
  %v5240 = vmax.f32 %v4972, %v5106
  %v5241 = vmax.f32 %v4973, %v5107
  %v5242 = vmax.f32 %v4974, %v5108
  %v5243 = vmax.f32 %v4975, %v5109
  %v5244 = vmax.f32 %v4976, %v5110
  %v5245 = vmax.f32 %v4977, %v5111
  %v5246 = vmax.f32 %v4978, %v5112
  %v5247 = vmax.f32 %v4979, %v5113
  %v5248 = vmax.f32 %v4980, %v5114
  %v5249 = vmax.f32 %v4981, %v5115
  %v5250 = vmax.f32 %v4982, %v5116
  %v5251 = vmax.f32 %v4983, %v5117
  %v5252 = vmax.f32 %v4984, %v5118
  %v5253 = vmax.f32 %v4985, %v5119
  %v5254 = vmax.f32 %v4986, %v5120
  %v5255 = vmax.f32 %v4987, %v5121
  %v5256 = vmax.f32 %v4988, %v5122
  %v5257 = vmax.f32 %v4989, %v5123
  %v5258 = vmax.f32 %v4990, %v5124
  %v5259 = vmax.f32 %v4991, %v5125
  %v5260 = vmax.f32 %v4992, %v5126
  %v5261 = vmax.f32 %v4993, %v5127
  %v5262 = vmax.f32 %v4994, %v5128
  %v5263 = vmax.f32 %v4995, %v5129
  %v5264 = vmax.f32 %v4996, %v5130
  %v5265 = vmax.f32 %v4997, %v5131
  %v5266 = vmax.f32 %v4998, %v5132
  %v5267 = vmax.f32 %v4999, %v5133
  %v5268 = vmax.f32 %v5000, %v5134
  %v5269 = vmax.f32 %v5001, %v5135
  %v5270 = vmax.f32 %v5002, %v5136
  %v5271 = vmax.f32 %v5003, %v5137
  %v5272 = vmax.f32 %v5004, %v5138
  %v5273 = vmax.f32 %v5005, %v5139
  %v5274 = vmax.f32 %v5006, %v5140
  %v5275 = vmax.f32 %v5007, %v5141
  %v5276 = vmax.f32 %v5008, %v5142
  %v5277 = vmax.f32 %v5009, %v5143
  %v5278 = vmax.f32 %v5010, %v5144
  %v5279 = vmax.f32 %v5011, %v5145
  %v5280 = vmax.f32 %v5012, %v5146
  %v5281 = vmax.f32 %v5013, %v5147
  %v5282 = vmax.f32 %v5014, %v5148
  %v5283 = vmax.f32 %v5015, %v5149
  %v5284 = vmax.f32 %v5016, %v5150
  %v5285 = vmax.f32 %v5017, %v5151
  %v5286 = vmax.f32 %v5018, %v5152
  %v5287 = vmax.f32 %v5019, %v5153
  %v5288 = vmax.f32 %v5020, %v5154
  %v5289 = vmax.f32 %v5021, %v5155
  %v5290 = vmax.f32 %v5022, %v5156
  %v5291 = vmax.f32 %v5023, %v5157
  %v5292 = vmax.f32 %v5024, %v5158
  %v5293 = vmax.f32 %v5025, %v5159
  %v5294 = vmax.f32 %v5026, %v5160
  %v5295 = vmax.f32 %v5027, %v5161
  %v5296 = vmax.f32 %v5028, %v5162
  %v5297 = vld [vmem:[%s2] sm:$0x1]
  %v5299 = vlaneseq
  %v5300 = vshrl.u32 %v5299, 7
  %v5301 = vsub.s32 0, %v5300
  %v5302 = vrot.slane %v5297, %v5301
  %v5304 = vadd.f32 %v5163, %v5302
  %v5305 = vadd.f32 %v5164, %v5302
  %v5306 = vadd.f32 %v5165, %v5302
  %v5307 = vadd.f32 %v5166, %v5302
  %v5308 = vadd.f32 %v5167, %v5302
  %v5309 = vadd.f32 %v5168, %v5302
  %v5310 = vadd.f32 %v5169, %v5302
  %v5311 = vadd.f32 %v5170, %v5302
  %v5312 = vadd.f32 %v5171, %v5302
  %v5313 = vadd.f32 %v5172, %v5302
  %v5314 = vadd.f32 %v5173, %v5302
  %v5315 = vadd.f32 %v5174, %v5302
  %v5316 = vadd.f32 %v5175, %v5302
  %v5317 = vadd.f32 %v5176, %v5302
  %v5318 = vadd.f32 %v5177, %v5302
  %v5319 = vadd.f32 %v5178, %v5302
  %v5320 = vadd.f32 %v5179, %v5302
  %v5321 = vadd.f32 %v5180, %v5302
  %v5322 = vadd.f32 %v5181, %v5302
  %v5323 = vadd.f32 %v5182, %v5302
  %v5324 = vadd.f32 %v5183, %v5302
  %v5325 = vadd.f32 %v5184, %v5302
  %v5326 = vadd.f32 %v5185, %v5302
  %v5327 = vadd.f32 %v5186, %v5302
  %v5328 = vadd.f32 %v5187, %v5302
  %v5329 = vadd.f32 %v5188, %v5302
  %v5330 = vadd.f32 %v5189, %v5302
  %v5331 = vadd.f32 %v5190, %v5302
  %v5332 = vadd.f32 %v5191, %v5302
  %v5333 = vadd.f32 %v5192, %v5302
  %v5334 = vadd.f32 %v5193, %v5302
  %v5335 = vadd.f32 %v5194, %v5302
  %v5336 = vadd.f32 %v5195, %v5302
  %v5337 = vadd.f32 %v5196, %v5302
  %v5338 = vadd.f32 %v5197, %v5302
  %v5339 = vadd.f32 %v5198, %v5302
  %v5340 = vadd.f32 %v5199, %v5302
  %v5341 = vadd.f32 %v5200, %v5302
  %v5342 = vadd.f32 %v5201, %v5302
  %v5343 = vadd.f32 %v5202, %v5302
  %v5344 = vadd.f32 %v5203, %v5302
  %v5345 = vadd.f32 %v5204, %v5302
  %v5346 = vadd.f32 %v5205, %v5302
  %v5347 = vadd.f32 %v5206, %v5302
  %v5348 = vadd.f32 %v5207, %v5302
  %v5349 = vadd.f32 %v5208, %v5302
  %v5350 = vadd.f32 %v5209, %v5302
  %v5351 = vadd.f32 %v5210, %v5302
  %v5352 = vadd.f32 %v5211, %v5302
  %v5353 = vadd.f32 %v5212, %v5302
  %v5354 = vadd.f32 %v5213, %v5302
  %v5355 = vadd.f32 %v5214, %v5302
  %v5356 = vadd.f32 %v5215, %v5302
  %v5357 = vadd.f32 %v5216, %v5302
  %v5358 = vadd.f32 %v5217, %v5302
  %v5359 = vadd.f32 %v5218, %v5302
  %v5360 = vadd.f32 %v5219, %v5302
  %v5361 = vadd.f32 %v5220, %v5302
  %v5362 = vadd.f32 %v5221, %v5302
  %v5363 = vadd.f32 %v5222, %v5302
  %v5364 = vadd.f32 %v5223, %v5302
  %v5365 = vadd.f32 %v5224, %v5302
  %v5366 = vadd.f32 %v5225, %v5302
  %v5367 = vadd.f32 %v5226, %v5302
  %v5368 = vadd.f32 %v5227, %v5302
  %v5369 = vadd.f32 %v5228, %v5302
  %v5370 = vadd.f32 %v5229, %v5302
  %v5371 = vadd.f32 %v5230, %v5302
  %v5372 = vadd.f32 %v5231, %v5302
  %v5373 = vadd.f32 %v5232, %v5302
  %v5374 = vadd.f32 %v5233, %v5302
  %v5375 = vadd.f32 %v5234, %v5302
  %v5376 = vadd.f32 %v5235, %v5302
  %v5377 = vadd.f32 %v5236, %v5302
  %v5378 = vadd.f32 %v5237, %v5302
  %v5379 = vadd.f32 %v5238, %v5302
  %v5380 = vadd.f32 %v5239, %v5302
  %v5381 = vadd.f32 %v5240, %v5302
  %v5382 = vadd.f32 %v5241, %v5302
  %v5383 = vadd.f32 %v5242, %v5302
  %v5384 = vadd.f32 %v5243, %v5302
  %v5385 = vadd.f32 %v5244, %v5302
  %v5386 = vadd.f32 %v5245, %v5302
  %v5387 = vadd.f32 %v5246, %v5302
  %v5388 = vadd.f32 %v5247, %v5302
  %v5389 = vadd.f32 %v5248, %v5302
  %v5390 = vadd.f32 %v5249, %v5302
  %v5391 = vadd.f32 %v5250, %v5302
  %v5392 = vadd.f32 %v5251, %v5302
  %v5393 = vadd.f32 %v5252, %v5302
  %v5394 = vadd.f32 %v5253, %v5302
  %v5395 = vadd.f32 %v5254, %v5302
  %v5396 = vadd.f32 %v5255, %v5302
  %v5397 = vadd.f32 %v5256, %v5302
  %v5398 = vadd.f32 %v5257, %v5302
  %v5399 = vadd.f32 %v5258, %v5302
  %v5400 = vadd.f32 %v5259, %v5302
  %v5401 = vadd.f32 %v5260, %v5302
  %v5402 = vadd.f32 %v5261, %v5302
  %v5403 = vadd.f32 %v5262, %v5302
  %v5404 = vadd.f32 %v5263, %v5302
  %v5405 = vadd.f32 %v5264, %v5302
  %v5406 = vadd.f32 %v5265, %v5302
  %v5407 = vadd.f32 %v5266, %v5302
  %v5408 = vadd.f32 %v5267, %v5302
  %v5409 = vadd.f32 %v5268, %v5302
  %v5410 = vadd.f32 %v5269, %v5302
  %v5411 = vadd.f32 %v5270, %v5302
  %v5412 = vadd.f32 %v5271, %v5302
  %v5413 = vadd.f32 %v5272, %v5302
  %v5414 = vadd.f32 %v5273, %v5302
  %v5415 = vadd.f32 %v5274, %v5302
  %v5416 = vadd.f32 %v5275, %v5302
  %v5417 = vadd.f32 %v5276, %v5302
  %v5418 = vadd.f32 %v5277, %v5302
  %v5419 = vadd.f32 %v5278, %v5302
  %v5420 = vadd.f32 %v5279, %v5302
  %v5421 = vadd.f32 %v5280, %v5302
  %v5422 = vadd.f32 %v5281, %v5302
  %v5423 = vadd.f32 %v5282, %v5302
  %v5424 = vadd.f32 %v5283, %v5302
  %v5425 = vadd.f32 %v5284, %v5302
  %v5426 = vadd.f32 %v5285, %v5302
  %v5427 = vadd.f32 %v5286, %v5302
  %v5428 = vadd.f32 %v5287, %v5302
  %v5429 = vadd.f32 %v5288, %v5302
  %v5430 = vadd.f32 %v5289, %v5302
  %v5431 = vadd.f32 %v5290, %v5302
  %v5432 = vadd.f32 %v5291, %v5302
  %v5433 = vadd.f32 %v5292, %v5302
  %v5434 = vadd.f32 %v5293, %v5302
  %v5435 = vadd.f32 %v5294, %v5302
  %v5436 = vadd.f32 %v5295, %v5302
  %v5437 = vadd.f32 %v5296, %v5302
  %v5438 = vmax.f32 %v5304, 0.0
  %v5439 = vmax.f32 %v5305, 0.0
  %v5440 = vmax.f32 %v5306, 0.0
  %v5441 = vmax.f32 %v5307, 0.0
  %v5442 = vmax.f32 %v5308, 0.0
  %v5443 = vmax.f32 %v5309, 0.0
  %v5444 = vmax.f32 %v5310, 0.0
  %v5445 = vmax.f32 %v5311, 0.0
  %v5446 = vmax.f32 %v5312, 0.0
  %v5447 = vmax.f32 %v5313, 0.0
  %v5448 = vmax.f32 %v5314, 0.0
  %v5449 = vmax.f32 %v5315, 0.0
  %v5450 = vmax.f32 %v5316, 0.0
  %v5451 = vmax.f32 %v5317, 0.0
  %v5452 = vmax.f32 %v5318, 0.0
  %v5453 = vmax.f32 %v5319, 0.0
  %v5454 = vmax.f32 %v5320, 0.0
  %v5455 = vmax.f32 %v5321, 0.0
  %v5456 = vmax.f32 %v5322, 0.0
  %v5457 = vmax.f32 %v5323, 0.0
  %v5458 = vmax.f32 %v5324, 0.0
  %v5459 = vmax.f32 %v5325, 0.0
  %v5460 = vmax.f32 %v5326, 0.0
  %v5461 = vmax.f32 %v5327, 0.0
  %v5462 = vmax.f32 %v5328, 0.0
  %v5463 = vmax.f32 %v5329, 0.0
  %v5464 = vmax.f32 %v5330, 0.0
  %v5465 = vmax.f32 %v5331, 0.0
  %v5466 = vmax.f32 %v5332, 0.0
  %v5467 = vmax.f32 %v5333, 0.0
  %v5468 = vmax.f32 %v5334, 0.0
  %v5469 = vmax.f32 %v5335, 0.0
  %v5470 = vmax.f32 %v5336, 0.0
  %v5471 = vmax.f32 %v5337, 0.0
  %v5472 = vmax.f32 %v5338, 0.0
  %v5473 = vmax.f32 %v5339, 0.0
  %v5474 = vmax.f32 %v5340, 0.0
  %v5475 = vmax.f32 %v5341, 0.0
  %v5476 = vmax.f32 %v5342, 0.0
  %v5477 = vmax.f32 %v5343, 0.0
  %v5478 = vmax.f32 %v5344, 0.0
  %v5479 = vmax.f32 %v5345, 0.0
  %v5480 = vmax.f32 %v5346, 0.0
  %v5481 = vmax.f32 %v5347, 0.0
  %v5482 = vmax.f32 %v5348, 0.0
  %v5483 = vmax.f32 %v5349, 0.0
  %v5484 = vmax.f32 %v5350, 0.0
  %v5485 = vmax.f32 %v5351, 0.0
  %v5486 = vmax.f32 %v5352, 0.0
  %v5487 = vmax.f32 %v5353, 0.0
  %v5488 = vmax.f32 %v5354, 0.0
  %v5489 = vmax.f32 %v5355, 0.0
  %v5490 = vmax.f32 %v5356, 0.0
  %v5491 = vmax.f32 %v5357, 0.0
  %v5492 = vmax.f32 %v5358, 0.0
  %v5493 = vmax.f32 %v5359, 0.0
  %v5494 = vmax.f32 %v5360, 0.0
  %v5495 = vmax.f32 %v5361, 0.0
  %v5496 = vmax.f32 %v5362, 0.0
  %v5497 = vmax.f32 %v5363, 0.0
  %v5498 = vmax.f32 %v5364, 0.0
  %v5499 = vmax.f32 %v5365, 0.0
  %v5500 = vmax.f32 %v5366, 0.0
  %v5501 = vmax.f32 %v5367, 0.0
  %v5502 = vmax.f32 %v5368, 0.0
  %v5503 = vmax.f32 %v5369, 0.0
  %v5504 = vmax.f32 %v5370, 0.0
  %v5505 = vmax.f32 %v5371, 0.0
  %v5506 = vmax.f32 %v5372, 0.0
  %v5507 = vmax.f32 %v5373, 0.0
  %v5508 = vmax.f32 %v5374, 0.0
  %v5509 = vmax.f32 %v5375, 0.0
  %v5510 = vmax.f32 %v5376, 0.0
  %v5511 = vmax.f32 %v5377, 0.0
  %v5512 = vmax.f32 %v5378, 0.0
  %v5513 = vmax.f32 %v5379, 0.0
  %v5514 = vmax.f32 %v5380, 0.0
  %v5515 = vmax.f32 %v5381, 0.0
  %v5516 = vmax.f32 %v5382, 0.0
  %v5517 = vmax.f32 %v5383, 0.0
  %v5518 = vmax.f32 %v5384, 0.0
  %v5519 = vmax.f32 %v5385, 0.0
  %v5520 = vmax.f32 %v5386, 0.0
  %v5521 = vmax.f32 %v5387, 0.0
  %v5522 = vmax.f32 %v5388, 0.0
  %v5523 = vmax.f32 %v5389, 0.0
  %v5524 = vmax.f32 %v5390, 0.0
  %v5525 = vmax.f32 %v5391, 0.0
  %v5526 = vmax.f32 %v5392, 0.0
  %v5527 = vmax.f32 %v5393, 0.0
  %v5528 = vmax.f32 %v5394, 0.0
  %v5529 = vmax.f32 %v5395, 0.0
  %v5530 = vmax.f32 %v5396, 0.0
  %v5531 = vmax.f32 %v5397, 0.0
  %v5532 = vmax.f32 %v5398, 0.0
  %v5533 = vmax.f32 %v5399, 0.0
  %v5534 = vmax.f32 %v5400, 0.0
  %v5535 = vmax.f32 %v5401, 0.0
  %v5536 = vmax.f32 %v5402, 0.0
  %v5537 = vmax.f32 %v5403, 0.0
  %v5538 = vmax.f32 %v5404, 0.0
  %v5539 = vmax.f32 %v5405, 0.0
  %v5540 = vmax.f32 %v5406, 0.0
  %v5541 = vmax.f32 %v5407, 0.0
  %v5542 = vmax.f32 %v5408, 0.0
  %v5543 = vmax.f32 %v5409, 0.0
  %v5544 = vmax.f32 %v5410, 0.0
  %v5545 = vmax.f32 %v5411, 0.0
  %v5546 = vmax.f32 %v5412, 0.0
  %v5547 = vmax.f32 %v5413, 0.0
  %v5548 = vmax.f32 %v5414, 0.0
  %v5549 = vmax.f32 %v5415, 0.0
  %v5550 = vmax.f32 %v5416, 0.0
  %v5551 = vmax.f32 %v5417, 0.0
  %v5552 = vmax.f32 %v5418, 0.0
  %v5553 = vmax.f32 %v5419, 0.0
  %v5554 = vmax.f32 %v5420, 0.0
  %v5555 = vmax.f32 %v5421, 0.0
  %v5556 = vmax.f32 %v5422, 0.0
  %v5557 = vmax.f32 %v5423, 0.0
  %v5558 = vmax.f32 %v5424, 0.0
  %v5559 = vmax.f32 %v5425, 0.0
  %v5560 = vmax.f32 %v5426, 0.0
  %v5561 = vmax.f32 %v5427, 0.0
  %v5562 = vmax.f32 %v5428, 0.0
  %v5563 = vmax.f32 %v5429, 0.0
  %v5564 = vmax.f32 %v5430, 0.0
  %v5565 = vmax.f32 %v5431, 0.0
  %v5566 = vmax.f32 %v5432, 0.0
  %v5567 = vmax.f32 %v5433, 0.0
  %v5568 = vmax.f32 %v5434, 0.0
  %v5569 = vmax.f32 %v5435, 0.0
  %v5570 = vmax.f32 %v5436, 0.0
  %v5571 = vmax.f32 %v5437, 0.0
  %v5572 = vpack.c.bf16 %v5439, %v5438
  %v5573 = vpack.c.bf16 %v5441, %v5440
  %v5574 = vpack.c.bf16 %v5443, %v5442
  %v5575 = vpack.c.bf16 %v5445, %v5444
  %v5576 = vpack.c.bf16 %v5447, %v5446
  %v5577 = vpack.c.bf16 %v5449, %v5448
  %v5578 = vpack.c.bf16 %v5451, %v5450
  %v5579 = vpack.c.bf16 %v5453, %v5452
  %v5580 = vpack.c.bf16 %v5455, %v5454
  %v5581 = vpack.c.bf16 %v5457, %v5456
  %v5582 = vpack.c.bf16 %v5459, %v5458
  %v5583 = vpack.c.bf16 %v5461, %v5460
  %v5584 = vpack.c.bf16 %v5463, %v5462
  %v5585 = vpack.c.bf16 %v5465, %v5464
  %v5586 = vpack.c.bf16 %v5467, %v5466
  %v5587 = vpack.c.bf16 %v5469, %v5468
  %v5588 = vpack.c.bf16 %v5471, %v5470
  %v5589 = vpack.c.bf16 %v5473, %v5472
  %v5590 = vpack.c.bf16 %v5475, %v5474
  %v5591 = vpack.c.bf16 %v5477, %v5476
  %v5592 = vpack.c.bf16 %v5479, %v5478
  %v5593 = vpack.c.bf16 %v5481, %v5480
  %v5594 = vpack.c.bf16 %v5483, %v5482
  %v5595 = vpack.c.bf16 %v5485, %v5484
  %v5596 = vpack.c.bf16 %v5487, %v5486
  %v5597 = vpack.c.bf16 %v5489, %v5488
  %v5598 = vpack.c.bf16 %v5491, %v5490
  %v5599 = vpack.c.bf16 %v5493, %v5492
  %v5600 = vpack.c.bf16 %v5495, %v5494
  %v5601 = vpack.c.bf16 %v5497, %v5496
  %v5602 = vpack.c.bf16 %v5499, %v5498
  %v5603 = vpack.c.bf16 %v5501, %v5500
  %v5604 = vpack.c.bf16 %v5503, %v5502
  %v5605 = vpack.c.bf16 %v5505, %v5504
  %v5606 = vpack.c.bf16 %v5507, %v5506
  %v5607 = vpack.c.bf16 %v5509, %v5508
  %v5608 = vpack.c.bf16 %v5511, %v5510
  %v5609 = vpack.c.bf16 %v5513, %v5512
  %v5610 = vpack.c.bf16 %v5515, %v5514
  %v5611 = vpack.c.bf16 %v5517, %v5516
  %v5612 = vpack.c.bf16 %v5519, %v5518
  %v5613 = vpack.c.bf16 %v5521, %v5520
  %v5614 = vpack.c.bf16 %v5523, %v5522
  %v5615 = vpack.c.bf16 %v5525, %v5524
  %v5616 = vpack.c.bf16 %v5527, %v5526
  %v5617 = vpack.c.bf16 %v5529, %v5528
  %v5618 = vpack.c.bf16 %v5531, %v5530
  %v5619 = vpack.c.bf16 %v5533, %v5532
  %v5620 = vpack.c.bf16 %v5535, %v5534
  %v5621 = vpack.c.bf16 %v5537, %v5536
  %v5622 = vpack.c.bf16 %v5539, %v5538
  %v5623 = vpack.c.bf16 %v5541, %v5540
  %v5624 = vpack.c.bf16 %v5543, %v5542
  %v5625 = vpack.c.bf16 %v5545, %v5544
  %v5626 = vpack.c.bf16 %v5547, %v5546
  %v5627 = vpack.c.bf16 %v5549, %v5548
  %v5628 = vpack.c.bf16 %v5551, %v5550
  %v5629 = vpack.c.bf16 %v5553, %v5552
  %v5630 = vpack.c.bf16 %v5555, %v5554
  %v5631 = vpack.c.bf16 %v5557, %v5556
  %v5632 = vpack.c.bf16 %v5559, %v5558
  %v5633 = vpack.c.bf16 %v5561, %v5560
  %v5634 = vpack.c.bf16 %v5563, %v5562
  %v5635 = vpack.c.bf16 %v5565, %v5564
  %v5636 = vpack.c.bf16 %v5567, %v5566
  %v5637 = vpack.c.bf16 %v5569, %v5568
  %v5638 = vpack.c.bf16 %v5571, %v5570
  %v5706 = vunpack.c.l.b16 %v5572
  %v5707 = vunpack.c.h.b16 %v5572
  %v5708 = vunpack.c.l.b16 %v5573
  %v5709 = vunpack.c.h.b16 %v5573
  %v5710 = vunpack.c.l.b16 %v5574
  %v5711 = vunpack.c.h.b16 %v5574
  %v5712 = vunpack.c.l.b16 %v5575
  %v5713 = vunpack.c.h.b16 %v5575
  %v5714 = vunpack.c.l.b16 %v5576
  %v5715 = vunpack.c.h.b16 %v5576
  %v5716 = vunpack.c.l.b16 %v5577
  %v5717 = vunpack.c.h.b16 %v5577
  %v5718 = vunpack.c.l.b16 %v5578
  %v5719 = vunpack.c.h.b16 %v5578
  %v5720 = vunpack.c.l.b16 %v5579
  %v5721 = vunpack.c.h.b16 %v5579
  %v5722 = vunpack.c.l.b16 %v5580
  %v5723 = vunpack.c.h.b16 %v5580
  %v5724 = vunpack.c.l.b16 %v5581
  %v5725 = vunpack.c.h.b16 %v5581
  %v5726 = vunpack.c.l.b16 %v5582
  %v5727 = vunpack.c.h.b16 %v5582
  %v5728 = vunpack.c.l.b16 %v5583
  %v5729 = vunpack.c.h.b16 %v5583
  %v5730 = vunpack.c.l.b16 %v5584
  %v5731 = vunpack.c.h.b16 %v5584
  %v5732 = vunpack.c.l.b16 %v5585
  %v5733 = vunpack.c.h.b16 %v5585
  %v5734 = vunpack.c.l.b16 %v5586
  %v5735 = vunpack.c.h.b16 %v5586
  %v5736 = vunpack.c.l.b16 %v5587
  %v5737 = vunpack.c.h.b16 %v5587
  %v5738 = vunpack.c.l.b16 %v5588
  %v5739 = vunpack.c.h.b16 %v5588
  %v5740 = vunpack.c.l.b16 %v5589
  %v5741 = vunpack.c.h.b16 %v5589
  %v5742 = vunpack.c.l.b16 %v5590
  %v5743 = vunpack.c.h.b16 %v5590
  %v5744 = vunpack.c.l.b16 %v5591
  %v5745 = vunpack.c.h.b16 %v5591
  %v5746 = vunpack.c.l.b16 %v5592
  %v5747 = vunpack.c.h.b16 %v5592
  %v5748 = vunpack.c.l.b16 %v5593
  %v5749 = vunpack.c.h.b16 %v5593
  %v5750 = vunpack.c.l.b16 %v5594
  %v5751 = vunpack.c.h.b16 %v5594
  %v5752 = vunpack.c.l.b16 %v5595
  %v5753 = vunpack.c.h.b16 %v5595
  %v5754 = vunpack.c.l.b16 %v5596
  %v5755 = vunpack.c.h.b16 %v5596
  %v5756 = vunpack.c.l.b16 %v5597
  %v5757 = vunpack.c.h.b16 %v5597
  %v5758 = vunpack.c.l.b16 %v5598
  %v5759 = vunpack.c.h.b16 %v5598
  %v5760 = vunpack.c.l.b16 %v5599
  %v5761 = vunpack.c.h.b16 %v5599
  %v5762 = vunpack.c.l.b16 %v5600
  %v5763 = vunpack.c.h.b16 %v5600
  %v5764 = vunpack.c.l.b16 %v5601
  %v5765 = vunpack.c.h.b16 %v5601
  %v5766 = vunpack.c.l.b16 %v5602
  %v5767 = vunpack.c.h.b16 %v5602
  %v5768 = vunpack.c.l.b16 %v5603
  %v5769 = vunpack.c.h.b16 %v5603
  %v5770 = vunpack.c.l.b16 %v5604
  %v5771 = vunpack.c.h.b16 %v5604
  %v5772 = vunpack.c.l.b16 %v5605
  %v5773 = vunpack.c.h.b16 %v5605
  %v5774 = vunpack.c.l.b16 %v5606
  %v5775 = vunpack.c.h.b16 %v5606
  %v5776 = vunpack.c.l.b16 %v5607
  %v5777 = vunpack.c.h.b16 %v5607
  %v5778 = vunpack.c.l.b16 %v5608
  %v5779 = vunpack.c.h.b16 %v5608
  %v5780 = vunpack.c.l.b16 %v5609
  %v5781 = vunpack.c.h.b16 %v5609
  %v5782 = vunpack.c.l.b16 %v5610
  %v5783 = vunpack.c.h.b16 %v5610
  %v5784 = vunpack.c.l.b16 %v5611
  %v5785 = vunpack.c.h.b16 %v5611
  %v5786 = vunpack.c.l.b16 %v5612
  %v5787 = vunpack.c.h.b16 %v5612
  %v5788 = vunpack.c.l.b16 %v5613
  %v5789 = vunpack.c.h.b16 %v5613
  %v5790 = vunpack.c.l.b16 %v5614
  %v5791 = vunpack.c.h.b16 %v5614
  %v5792 = vunpack.c.l.b16 %v5615
  %v5793 = vunpack.c.h.b16 %v5615
  %v5794 = vunpack.c.l.b16 %v5616
  %v5795 = vunpack.c.h.b16 %v5616
  %v5796 = vunpack.c.l.b16 %v5617
  %v5797 = vunpack.c.h.b16 %v5617
  %v5798 = vunpack.c.l.b16 %v5618
  %v5799 = vunpack.c.h.b16 %v5618
  %v5800 = vunpack.c.l.b16 %v5619
  %v5801 = vunpack.c.h.b16 %v5619
  %v5802 = vunpack.c.l.b16 %v5620
  %v5803 = vunpack.c.h.b16 %v5620
  %v5804 = vunpack.c.l.b16 %v5621
  %v5805 = vunpack.c.h.b16 %v5621
  %v5806 = vunpack.c.l.b16 %v5622
  %v5807 = vunpack.c.h.b16 %v5622
  %v5808 = vunpack.c.l.b16 %v5623
  %v5809 = vunpack.c.h.b16 %v5623
  %v5810 = vunpack.c.l.b16 %v5624
  %v5811 = vunpack.c.h.b16 %v5624
  %v5812 = vunpack.c.l.b16 %v5625
  %v5813 = vunpack.c.h.b16 %v5625
  %v5814 = vunpack.c.l.b16 %v5626
  %v5815 = vunpack.c.h.b16 %v5626
  %v5816 = vunpack.c.l.b16 %v5627
  %v5817 = vunpack.c.h.b16 %v5627
  %v5818 = vunpack.c.l.b16 %v5628
  %v5819 = vunpack.c.h.b16 %v5628
  %v5820 = vunpack.c.l.b16 %v5629
  %v5821 = vunpack.c.h.b16 %v5629
  %v5822 = vunpack.c.l.b16 %v5630
  %v5823 = vunpack.c.h.b16 %v5630
  %v5824 = vunpack.c.l.b16 %v5631
  %v5825 = vunpack.c.h.b16 %v5631
  %v5826 = vunpack.c.l.b16 %v5632
  %v5827 = vunpack.c.h.b16 %v5632
  %v5828 = vunpack.c.l.b16 %v5633
  %v5829 = vunpack.c.h.b16 %v5633
  %v5830 = vunpack.c.l.b16 %v5634
  %v5831 = vunpack.c.h.b16 %v5634
  %v5832 = vunpack.c.l.b16 %v5635
  %v5833 = vunpack.c.h.b16 %v5635
  %v5834 = vunpack.c.l.b16 %v5636
  %v5835 = vunpack.c.h.b16 %v5636
  %v5836 = vunpack.c.l.b16 %v5637
  %v5837 = vunpack.c.h.b16 %v5637
  %v5838 = vunpack.c.l.b16 %v5638
  %v5839 = vunpack.c.h.b16 %v5638
  %v5840 = vpack.c.b16 %v5706, %v5706
  %v5841 = vpack.c.b16 %v5707, %v5707
  %v5842 = vpack.c.b16 %v5708, %v5708
  %v5843 = vpack.c.b16 %v5709, %v5709
  %v5844 = vpack.c.b16 %v5710, %v5710
  %v5845 = vpack.c.b16 %v5711, %v5711
  %v5846 = vpack.c.b16 %v5712, %v5712
  %v5847 = vpack.c.b16 %v5713, %v5713
  %v5848 = vpack.c.b16 %v5714, %v5714
  %v5849 = vpack.c.b16 %v5715, %v5715
  %v5850 = vpack.c.b16 %v5716, %v5716
  %v5851 = vpack.c.b16 %v5717, %v5717
  %v5852 = vpack.c.b16 %v5718, %v5718
  %v5853 = vpack.c.b16 %v5719, %v5719
  %v5854 = vpack.c.b16 %v5720, %v5720
  %v5855 = vpack.c.b16 %v5721, %v5721
  %v5856 = vpack.c.b16 %v5722, %v5722
  %v5857 = vpack.c.b16 %v5723, %v5723
  %v5858 = vpack.c.b16 %v5724, %v5724
  %v5859 = vpack.c.b16 %v5725, %v5725
  %v5860 = vpack.c.b16 %v5726, %v5726
  %v5861 = vpack.c.b16 %v5727, %v5727
  %v5862 = vpack.c.b16 %v5728, %v5728
  %v5863 = vpack.c.b16 %v5729, %v5729
  %v5864 = vpack.c.b16 %v5730, %v5730
  %v5865 = vpack.c.b16 %v5731, %v5731
  %v5866 = vpack.c.b16 %v5732, %v5732
  %v5867 = vpack.c.b16 %v5733, %v5733
  %v5868 = vpack.c.b16 %v5734, %v5734
  %v5869 = vpack.c.b16 %v5735, %v5735
  %v5870 = vpack.c.b16 %v5736, %v5736
  %v5871 = vpack.c.b16 %v5737, %v5737
  %v5872 = vpack.c.b16 %v5738, %v5738
  %v5873 = vpack.c.b16 %v5739, %v5739
  %v5874 = vpack.c.b16 %v5740, %v5740
  %v5875 = vpack.c.b16 %v5741, %v5741
  %v5876 = vpack.c.b16 %v5742, %v5742
  %v5877 = vpack.c.b16 %v5743, %v5743
  %v5878 = vpack.c.b16 %v5744, %v5744
  %v5879 = vpack.c.b16 %v5745, %v5745
  %v5880 = vpack.c.b16 %v5746, %v5746
  %v5881 = vpack.c.b16 %v5747, %v5747
  %v5882 = vpack.c.b16 %v5748, %v5748
  %v5883 = vpack.c.b16 %v5749, %v5749
  %v5884 = vpack.c.b16 %v5750, %v5750
  %v5885 = vpack.c.b16 %v5751, %v5751
  %v5886 = vpack.c.b16 %v5752, %v5752
  %v5887 = vpack.c.b16 %v5753, %v5753
  %v5888 = vpack.c.b16 %v5754, %v5754
  %v5889 = vpack.c.b16 %v5755, %v5755
  %v5890 = vpack.c.b16 %v5756, %v5756
  %v5891 = vpack.c.b16 %v5757, %v5757
  %v5892 = vpack.c.b16 %v5758, %v5758
  %v5893 = vpack.c.b16 %v5759, %v5759
  %v5894 = vpack.c.b16 %v5760, %v5760
  %v5895 = vpack.c.b16 %v5761, %v5761
  %v5896 = vpack.c.b16 %v5762, %v5762
  %v5897 = vpack.c.b16 %v5763, %v5763
  %v5898 = vpack.c.b16 %v5764, %v5764
  %v5899 = vpack.c.b16 %v5765, %v5765
  %v5900 = vpack.c.b16 %v5766, %v5766
  %v5901 = vpack.c.b16 %v5767, %v5767
  %v5902 = vpack.c.b16 %v5768, %v5768
  %v5903 = vpack.c.b16 %v5769, %v5769
  %v5904 = vpack.c.b16 %v5770, %v5770
  %v5905 = vpack.c.b16 %v5771, %v5771
  %v5906 = vpack.c.b16 %v5772, %v5772
  %v5907 = vpack.c.b16 %v5773, %v5773
  %v5908 = vpack.c.b16 %v5774, %v5774
  %v5909 = vpack.c.b16 %v5775, %v5775
  %v5910 = vpack.c.b16 %v5776, %v5776
  %v5911 = vpack.c.b16 %v5777, %v5777
  %v5912 = vpack.c.b16 %v5778, %v5778
  %v5913 = vpack.c.b16 %v5779, %v5779
  %v5914 = vpack.c.b16 %v5780, %v5780
  %v5915 = vpack.c.b16 %v5781, %v5781
  %v5916 = vpack.c.b16 %v5782, %v5782
  %v5917 = vpack.c.b16 %v5783, %v5783
  %v5918 = vpack.c.b16 %v5784, %v5784
  %v5919 = vpack.c.b16 %v5785, %v5785
  %v5920 = vpack.c.b16 %v5786, %v5786
  %v5921 = vpack.c.b16 %v5787, %v5787
  %v5922 = vpack.c.b16 %v5788, %v5788
  %v5923 = vpack.c.b16 %v5789, %v5789
  %v5924 = vpack.c.b16 %v5790, %v5790
  %v5925 = vpack.c.b16 %v5791, %v5791
  %v5926 = vpack.c.b16 %v5792, %v5792
  %v5927 = vpack.c.b16 %v5793, %v5793
  %v5928 = vpack.c.b16 %v5794, %v5794
  %v5929 = vpack.c.b16 %v5795, %v5795
  %v5930 = vpack.c.b16 %v5796, %v5796
  %v5931 = vpack.c.b16 %v5797, %v5797
  %v5932 = vpack.c.b16 %v5798, %v5798
  %v5933 = vpack.c.b16 %v5799, %v5799
  %v5934 = vpack.c.b16 %v5800, %v5800
  %v5935 = vpack.c.b16 %v5801, %v5801
  %v5936 = vpack.c.b16 %v5802, %v5802
  %v5937 = vpack.c.b16 %v5803, %v5803
  %v5938 = vpack.c.b16 %v5804, %v5804
  %v5939 = vpack.c.b16 %v5805, %v5805
  %v5940 = vpack.c.b16 %v5806, %v5806
  %v5941 = vpack.c.b16 %v5807, %v5807
  %v5942 = vpack.c.b16 %v5808, %v5808
  %v5943 = vpack.c.b16 %v5809, %v5809
  %v5944 = vpack.c.b16 %v5810, %v5810
  %v5945 = vpack.c.b16 %v5811, %v5811
  %v5946 = vpack.c.b16 %v5812, %v5812
  %v5947 = vpack.c.b16 %v5813, %v5813
  %v5948 = vpack.c.b16 %v5814, %v5814
  %v5949 = vpack.c.b16 %v5815, %v5815
  %v5950 = vpack.c.b16 %v5816, %v5816
  %v5951 = vpack.c.b16 %v5817, %v5817
  %v5952 = vpack.c.b16 %v5818, %v5818
  %v5953 = vpack.c.b16 %v5819, %v5819
  %v5954 = vpack.c.b16 %v5820, %v5820
  %v5955 = vpack.c.b16 %v5821, %v5821
  %v5956 = vpack.c.b16 %v5822, %v5822
  %v5957 = vpack.c.b16 %v5823, %v5823
  %v5958 = vpack.c.b16 %v5824, %v5824
  %v5959 = vpack.c.b16 %v5825, %v5825
  %v5960 = vpack.c.b16 %v5826, %v5826
  %v5961 = vpack.c.b16 %v5827, %v5827
  %v5962 = vpack.c.b16 %v5828, %v5828
  %v5963 = vpack.c.b16 %v5829, %v5829
  %v5964 = vpack.c.b16 %v5830, %v5830
  %v5965 = vpack.c.b16 %v5831, %v5831
  %v5966 = vpack.c.b16 %v5832, %v5832
  %v5967 = vpack.c.b16 %v5833, %v5833
  %v5968 = vpack.c.b16 %v5834, %v5834
  %v5969 = vpack.c.b16 %v5835, %v5835
  %v5970 = vpack.c.b16 %v5836, %v5836
  %v5971 = vpack.c.b16 %v5837, %v5837
  %v5972 = vpack.c.b16 %v5838, %v5838
  %v5973 = vpack.c.b16 %v5839, %v5839
  %6108 = vst [vmem:[%s3] sm:$0xf] %v5840
  %6109 = vst [vmem:[%s3 + $0x4] sm:$0xf] %v5841
  %6110 = vst [vmem:[%s3 + $0x8] sm:$0xf] %v5842
  %6111 = vst [vmem:[%s3 + $0xc] sm:$0xf] %v5843
  %6112 = vst [vmem:[%s3 + $0x10] sm:$0xf] %v5844
  %6113 = vst [vmem:[%s3 + $0x14] sm:$0xf] %v5845
  %6114 = vst [vmem:[%s3 + $0x18] sm:$0xf] %v5846
  %6115 = vst [vmem:[%s3 + $0x1c] sm:$0xf] %v5847
  %6116 = vst [vmem:[%s3 + $0x20] sm:$0xf] %v5848
  %6117 = vst [vmem:[%s3 + $0x24] sm:$0xf] %v5849
  %6118 = vst [vmem:[%s3 + $0x28] sm:$0xf] %v5850
  %6119 = vst [vmem:[%s3 + $0x2c] sm:$0xf] %v5851
  %6120 = vst [vmem:[%s3 + $0x30] sm:$0xf] %v5852
  %6121 = vst [vmem:[%s3 + $0x34] sm:$0xf] %v5853
  %6122 = vst [vmem:[%s3 + $0x38] sm:$0xf] %v5854
  %6123 = vst [vmem:[%s3 + $0x3c] sm:$0xf] %v5855
  %6124 = vst [vmem:[%s3 + $0x40] sm:$0xf] %v5856
  %6125 = vst [vmem:[%s3 + $0x44] sm:$0xf] %v5857
  %6126 = vst [vmem:[%s3 + $0x48] sm:$0xf] %v5858
  %6127 = vst [vmem:[%s3 + $0x4c] sm:$0xf] %v5859
  %6128 = vst [vmem:[%s3 + $0x50] sm:$0xf] %v5860
  %6129 = vst [vmem:[%s3 + $0x54] sm:$0xf] %v5861
  %6130 = vst [vmem:[%s3 + $0x58] sm:$0xf] %v5862
  %6131 = vst [vmem:[%s3 + $0x5c] sm:$0xf] %v5863
  %6132 = vst [vmem:[%s3 + $0x60] sm:$0xf] %v5864
  %6133 = vst [vmem:[%s3 + $0x64] sm:$0xf] %v5865
  %6134 = vst [vmem:[%s3 + $0x68] sm:$0xf] %v5866
  %6135 = vst [vmem:[%s3 + $0x6c] sm:$0xf] %v5867
  %6136 = vst [vmem:[%s3 + $0x70] sm:$0xf] %v5868
  %6137 = vst [vmem:[%s3 + $0x74] sm:$0xf] %v5869
  %6138 = vst [vmem:[%s3 + $0x78] sm:$0xf] %v5870
  %6139 = vst [vmem:[%s3 + $0x7c] sm:$0xf] %v5871
  %6140 = vst [vmem:[%s3 + $0x80] sm:$0xf] %v5872
  %6141 = vst [vmem:[%s3 + $0x84] sm:$0xf] %v5873
  %6142 = vst [vmem:[%s3 + $0x88] sm:$0xf] %v5874
  %6143 = vst [vmem:[%s3 + $0x8c] sm:$0xf] %v5875
  %6144 = vst [vmem:[%s3 + $0x90] sm:$0xf] %v5876
  %6145 = vst [vmem:[%s3 + $0x94] sm:$0xf] %v5877
  %6146 = vst [vmem:[%s3 + $0x98] sm:$0xf] %v5878
  %6147 = vst [vmem:[%s3 + $0x9c] sm:$0xf] %v5879
  %6148 = vst [vmem:[%s3 + $0xa0] sm:$0xf] %v5880
  %6149 = vst [vmem:[%s3 + $0xa4] sm:$0xf] %v5881
  %6150 = vst [vmem:[%s3 + $0xa8] sm:$0xf] %v5882
  %6151 = vst [vmem:[%s3 + $0xac] sm:$0xf] %v5883
  %6152 = vst [vmem:[%s3 + $0xb0] sm:$0xf] %v5884
  %6153 = vst [vmem:[%s3 + $0xb4] sm:$0xf] %v5885
  %6154 = vst [vmem:[%s3 + $0xb8] sm:$0xf] %v5886
  %6155 = vst [vmem:[%s3 + $0xbc] sm:$0xf] %v5887
  %6156 = vst [vmem:[%s3 + $0xc0] sm:$0xf] %v5888
  %6157 = vst [vmem:[%s3 + $0xc4] sm:$0xf] %v5889
  %6158 = vst [vmem:[%s3 + $0xc8] sm:$0xf] %v5890
  %6159 = vst [vmem:[%s3 + $0xcc] sm:$0xf] %v5891
  %6160 = vst [vmem:[%s3 + $0xd0] sm:$0xf] %v5892
  %6161 = vst [vmem:[%s3 + $0xd4] sm:$0xf] %v5893
  %6162 = vst [vmem:[%s3 + $0xd8] sm:$0xf] %v5894
  %6163 = vst [vmem:[%s3 + $0xdc] sm:$0xf] %v5895
  %6164 = vst [vmem:[%s3 + $0xe0] sm:$0xf] %v5896
  %6165 = vst [vmem:[%s3 + $0xe4] sm:$0xf] %v5897
  %6166 = vst [vmem:[%s3 + $0xe8] sm:$0xf] %v5898
  %6167 = vst [vmem:[%s3 + $0xec] sm:$0xf] %v5899
  %6168 = vst [vmem:[%s3 + $0xf0] sm:$0xf] %v5900
  %6169 = vst [vmem:[%s3 + $0xf4] sm:$0xf] %v5901
  %6170 = vst [vmem:[%s3 + $0xf8] sm:$0xf] %v5902
  %6171 = vst [vmem:[%s3 + $0xfc] sm:$0xf] %v5903
  %6172 = vst [vmem:[%s3 + $0x100] sm:$0xf] %v5904
  %6173 = vst [vmem:[%s3 + $0x104] sm:$0xf] %v5905
  %6174 = vst [vmem:[%s3 + $0x108] sm:$0xf] %v5906
  %6175 = vst [vmem:[%s3 + $0x10c] sm:$0xf] %v5907
  %6176 = vst [vmem:[%s3 + $0x110] sm:$0xf] %v5908
  %6177 = vst [vmem:[%s3 + $0x114] sm:$0xf] %v5909
  %6178 = vst [vmem:[%s3 + $0x118] sm:$0xf] %v5910
  %6179 = vst [vmem:[%s3 + $0x11c] sm:$0xf] %v5911
  %6180 = vst [vmem:[%s3 + $0x120] sm:$0xf] %v5912
  %6181 = vst [vmem:[%s3 + $0x124] sm:$0xf] %v5913
  %6182 = vst [vmem:[%s3 + $0x128] sm:$0xf] %v5914
  %6183 = vst [vmem:[%s3 + $0x12c] sm:$0xf] %v5915
  %6184 = vst [vmem:[%s3 + $0x130] sm:$0xf] %v5916
  %6185 = vst [vmem:[%s3 + $0x134] sm:$0xf] %v5917
  %6186 = vst [vmem:[%s3 + $0x138] sm:$0xf] %v5918
  %6187 = vst [vmem:[%s3 + $0x13c] sm:$0xf] %v5919
  %6188 = vst [vmem:[%s3 + $0x140] sm:$0xf] %v5920
  %6189 = vst [vmem:[%s3 + $0x144] sm:$0xf] %v5921
  %6190 = vst [vmem:[%s3 + $0x148] sm:$0xf] %v5922
  %6191 = vst [vmem:[%s3 + $0x14c] sm:$0xf] %v5923
  %6192 = vst [vmem:[%s3 + $0x150] sm:$0xf] %v5924
  %6193 = vst [vmem:[%s3 + $0x154] sm:$0xf] %v5925
  %6194 = vst [vmem:[%s3 + $0x158] sm:$0xf] %v5926
  %6195 = vst [vmem:[%s3 + $0x15c] sm:$0xf] %v5927
  %6196 = vst [vmem:[%s3 + $0x160] sm:$0xf] %v5928
  %6197 = vst [vmem:[%s3 + $0x164] sm:$0xf] %v5929
  %6198 = vst [vmem:[%s3 + $0x168] sm:$0xf] %v5930
  %6199 = vst [vmem:[%s3 + $0x16c] sm:$0xf] %v5931
  %6200 = vst [vmem:[%s3 + $0x170] sm:$0xf] %v5932
  %6201 = vst [vmem:[%s3 + $0x174] sm:$0xf] %v5933
  %6202 = vst [vmem:[%s3 + $0x178] sm:$0xf] %v5934
  %6203 = vst [vmem:[%s3 + $0x17c] sm:$0xf] %v5935
  %6204 = vst [vmem:[%s3 + $0x180] sm:$0xf] %v5936
  %6205 = vst [vmem:[%s3 + $0x184] sm:$0xf] %v5937
  %6206 = vst [vmem:[%s3 + $0x188] sm:$0xf] %v5938
  %6207 = vst [vmem:[%s3 + $0x18c] sm:$0xf] %v5939
  %6208 = vst [vmem:[%s3 + $0x190] sm:$0xf] %v5940
  %6209 = vst [vmem:[%s3 + $0x194] sm:$0xf] %v5941
  %6210 = vst [vmem:[%s3 + $0x198] sm:$0xf] %v5942
  %6211 = vst [vmem:[%s3 + $0x19c] sm:$0xf] %v5943
  %6212 = vst [vmem:[%s3 + $0x1a0] sm:$0xf] %v5944
  %6213 = vst [vmem:[%s3 + $0x1a4] sm:$0xf] %v5945
  %6214 = vst [vmem:[%s3 + $0x1a8] sm:$0xf] %v5946
  %6215 = vst [vmem:[%s3 + $0x1ac] sm:$0xf] %v5947
  %6216 = vst [vmem:[%s3 + $0x1b0] sm:$0xf] %v5948
  %6217 = vst [vmem:[%s3 + $0x1b4] sm:$0xf] %v5949
  %6218 = vst [vmem:[%s3 + $0x1b8] sm:$0xf] %v5950
  %6219 = vst [vmem:[%s3 + $0x1bc] sm:$0xf] %v5951
  %6220 = vst [vmem:[%s3 + $0x1c0] sm:$0xf] %v5952
  %6221 = vst [vmem:[%s3 + $0x1c4] sm:$0xf] %v5953
  %6222 = vst [vmem:[%s3 + $0x1c8] sm:$0xf] %v5954
  %6223 = vst [vmem:[%s3 + $0x1cc] sm:$0xf] %v5955
  %6224 = vst [vmem:[%s3 + $0x1d0] sm:$0xf] %v5956
  %6225 = vst [vmem:[%s3 + $0x1d4] sm:$0xf] %v5957
  %6226 = vst [vmem:[%s3 + $0x1d8] sm:$0xf] %v5958
  %6227 = vst [vmem:[%s3 + $0x1dc] sm:$0xf] %v5959
  %6228 = vst [vmem:[%s3 + $0x1e0] sm:$0xf] %v5960
  %6229 = vst [vmem:[%s3 + $0x1e4] sm:$0xf] %v5961
  %6230 = vst [vmem:[%s3 + $0x1e8] sm:$0xf] %v5962
  %6231 = vst [vmem:[%s3 + $0x1ec] sm:$0xf] %v5963
  %6232 = vst [vmem:[%s3 + $0x1f0] sm:$0xf] %v5964
  %6233 = vst [vmem:[%s3 + $0x1f4] sm:$0xf] %v5965
  %6234 = vst [vmem:[%s3 + $0x1f8] sm:$0xf] %v5966
  %6235 = vst [vmem:[%s3 + $0x1fc] sm:$0xf] %v5967
  %6236 = vst [vmem:[%s3 + $0x200] sm:$0xf] %v5968
  %6237 = vst [vmem:[%s3 + $0x204] sm:$0xf] %v5969
  %6238 = vst [vmem:[%s3 + $0x208] sm:$0xf] %v5970
  %6239 = vst [vmem:[%s3 + $0x20c] sm:$0xf] %v5971
  %6240 = vst [vmem:[%s3 + $0x210] sm:$0xf] %v5972
  %6241 = vst [vmem:[%s3 + $0x214] sm:$0xf] %v5973
  // Predicated region
  $region14: #{net_forward.3} parent=0 // pred_check
    _
  $region15: #{net_forward.3} parent=0 // pred_check_branch
    %6243 = sbr.rel (0) target = $region17
  $region16: #{net_forward.3} parent=0 // pred_region
    _
  $region17: #{net_forward.3} parent=0 // pred_fallthru
    _
  // Predicated region
  $region18: #{net_forward.3} parent=0 // pred_check
    _
  $region19: #{net_forward.3} parent=0 // pred_check_branch
    %6245 = sbr.rel (0) target = $region21
  $region20: #{net_forward.3} parent=0 // pred_region
    _
  $region21: #{net_forward.3} parent=0 // pred_fallthru
    _

// kernel: net_forward.4
$region0: #{net_forward.4}
  #allocation0 [shape = 'u32[]', space=smem, size = 0x4, offset = 0x4, fixed_abs, tag = 'smem constant byte address 0x4 - core index']
  #allocation1 [shape = 'u32[144,128]{1,0:T(1,128)}', space=vmem, size = 0x12000, scoped, tag = 'internal scratch']
  %s0 = inlined_call_operand.vmem [shape: bf16[704,1152], index: 0, kind: input, shape index: {}]
  %s1 = inlined_call_operand.vmem [shape: bf16[1152,128], index: 1, kind: input, shape index: {}]
  %s2 = inlined_call_operand.vmem [shape: f32[1,128], index: 2, kind: input, shape index: {}]
  %s3 = inlined_call_operand.vmem [shape: bf16[176,128], index: 3, kind: output, shape index: {}]
  %s4 = sld [smem:[#allocation0]]
  $region22: #{net_forward.4} parent=0
    _
  %s6 = ssub.s32 1, %s4
  %s7 = scalar_select 0, %s6, %s4
  // Predicated region
  $region2: #{net_forward.4} parent=0 // pred_check
    _
  $region3: #{net_forward.4} parent=0 // pred_check_branch
    %9 = sbr.rel (0) target = $region5
  $region4: #{net_forward.4} parent=0 // pred_region
    _
  $region5: #{net_forward.4} parent=0 // pred_fallthru
    _
  // Predicated region
  $region6: #{net_forward.4} parent=0 // pred_check
    _
  $region7: #{net_forward.4} parent=0 // pred_check_branch
    %11 = sbr.rel (0) target = $region9
  $region8: #{net_forward.4} parent=0 // pred_region
    _
  $region9: #{net_forward.4} parent=0 // pred_fallthru
    _
  // Predicated region
  $region10: #{net_forward.4} parent=0 // pred_check
    _
  $region11: #{net_forward.4} parent=0 // pred_check_branch
    %13 = sbr.rel (0) target = $region13
  $region12: #{net_forward.4} parent=0 // pred_region
    _
  $region13: #{net_forward.4} parent=0 // pred_fallthru
    _
  %v15 = vld [vmem:[%s0] sm:$0xff]
  %v16 = vld [vmem:[%s0 + $0x8] sm:$0xff]
  %v17 = vld [vmem:[%s0 + $0x10] sm:$0xff]
  %v18 = vld [vmem:[%s0 + $0x18] sm:$0xff]
  %v19 = vld [vmem:[%s0 + $0x20] sm:$0xf]
  %v20 = vld [vmem:[%s0 + $0x24] sm:$0xff]
  %v21 = vld [vmem:[%s0 + $0x2c] sm:$0xff]
  %v22 = vld [vmem:[%s0 + $0x34] sm:$0xff]
  %v23 = vld [vmem:[%s0 + $0x3c] sm:$0xff]
  %v24 = vld [vmem:[%s0 + $0x44] sm:$0xf]
  %v25 = vld [vmem:[%s0 + $0x48] sm:$0xff]
  %v26 = vld [vmem:[%s0 + $0x50] sm:$0xff]
  %v27 = vld [vmem:[%s0 + $0x58] sm:$0xff]
  %v28 = vld [vmem:[%s0 + $0x60] sm:$0xff]
  %v29 = vld [vmem:[%s0 + $0x68] sm:$0xf]
  %v30 = vld [vmem:[%s0 + $0x6c] sm:$0xff]
  %v31 = vld [vmem:[%s0 + $0x74] sm:$0xff]
  %v32 = vld [vmem:[%s0 + $0x7c] sm:$0xff]
  %v33 = vld [vmem:[%s0 + $0x84] sm:$0xff]
  %v34 = vld [vmem:[%s0 + $0x8c] sm:$0xf]
  %v35 = vld [vmem:[%s0 + $0x90] sm:$0xff]
  %v36 = vld [vmem:[%s0 + $0x98] sm:$0xff]
  %v37 = vld [vmem:[%s0 + $0xa0] sm:$0xff]
  %v38 = vld [vmem:[%s0 + $0xa8] sm:$0xff]
  %v39 = vld [vmem:[%s0 + $0xb0] sm:$0xf]
  %v40 = vld [vmem:[%s0 + $0xb4] sm:$0xff]
  %v41 = vld [vmem:[%s0 + $0xbc] sm:$0xff]
  %v42 = vld [vmem:[%s0 + $0xc4] sm:$0xff]
  %v43 = vld [vmem:[%s0 + $0xcc] sm:$0xff]
  %v44 = vld [vmem:[%s0 + $0xd4] sm:$0xf]
  %v45 = vld [vmem:[%s0 + $0xd8] sm:$0xff]
  %v46 = vld [vmem:[%s0 + $0xe0] sm:$0xff]
  %v47 = vld [vmem:[%s0 + $0xe8] sm:$0xff]
  %v48 = vld [vmem:[%s0 + $0xf0] sm:$0xff]
  %v49 = vld [vmem:[%s0 + $0xf8] sm:$0xf]
  %v50 = vld [vmem:[%s0 + $0xfc] sm:$0xff]
  %v51 = vld [vmem:[%s0 + $0x104] sm:$0xff]
  %v52 = vld [vmem:[%s0 + $0x10c] sm:$0xff]
  %v53 = vld [vmem:[%s0 + $0x114] sm:$0xff]
  %v54 = vld [vmem:[%s0 + $0x11c] sm:$0xf]
  %v55 = vld [vmem:[%s0 + $0x120] sm:$0xff]
  %v56 = vld [vmem:[%s0 + $0x128] sm:$0xff]
  %v57 = vld [vmem:[%s0 + $0x130] sm:$0xff]
  %v58 = vld [vmem:[%s0 + $0x138] sm:$0xff]
  %v59 = vld [vmem:[%s0 + $0x140] sm:$0xf]
  %v60 = vld [vmem:[%s0 + $0x144] sm:$0xff]
  %v61 = vld [vmem:[%s0 + $0x14c] sm:$0xff]
  %v62 = vld [vmem:[%s0 + $0x154] sm:$0xff]
  %v63 = vld [vmem:[%s0 + $0x15c] sm:$0xff]
  %v64 = vld [vmem:[%s0 + $0x164] sm:$0xf]
  %v65 = vld [vmem:[%s0 + $0x168] sm:$0xff]
  %v66 = vld [vmem:[%s0 + $0x170] sm:$0xff]
  %v67 = vld [vmem:[%s0 + $0x178] sm:$0xff]
  %v68 = vld [vmem:[%s0 + $0x180] sm:$0xff]
  %v69 = vld [vmem:[%s0 + $0x188] sm:$0xf]
  %v70 = vld [vmem:[%s0 + $0x18c] sm:$0xff]
  %v71 = vld [vmem:[%s0 + $0x194] sm:$0xff]
  %v72 = vld [vmem:[%s0 + $0x19c] sm:$0xff]
  %v73 = vld [vmem:[%s0 + $0x1a4] sm:$0xff]
  %v74 = vld [vmem:[%s0 + $0x1ac] sm:$0xf]
  %v75 = vld [vmem:[%s0 + $0x1b0] sm:$0xff]
  %v76 = vld [vmem:[%s0 + $0x1b8] sm:$0xff]
  %v77 = vld [vmem:[%s0 + $0x1c0] sm:$0xff]
  %v78 = vld [vmem:[%s0 + $0x1c8] sm:$0xff]
  %v79 = vld [vmem:[%s0 + $0x1d0] sm:$0xf]
  %v80 = vld [vmem:[%s0 + $0x1d4] sm:$0xff]
  %v81 = vld [vmem:[%s0 + $0x1dc] sm:$0xff]
  %v82 = vld [vmem:[%s0 + $0x1e4] sm:$0xff]
  %v83 = vld [vmem:[%s0 + $0x1ec] sm:$0xff]
  %v84 = vld [vmem:[%s0 + $0x1f4] sm:$0xf]
  %v85 = vld [vmem:[%s0 + $0x1f8] sm:$0xff]
  %v86 = vld [vmem:[%s0 + $0x200] sm:$0xff]
  %v87 = vld [vmem:[%s0 + $0x208] sm:$0xff]
  %v88 = vld [vmem:[%s0 + $0x210] sm:$0xff]
  %v89 = vld [vmem:[%s0 + $0x218] sm:$0xf]
  %v90 = vld [vmem:[%s0 + $0x21c] sm:$0xff]
  %v91 = vld [vmem:[%s0 + $0x224] sm:$0xff]
  %v92 = vld [vmem:[%s0 + $0x22c] sm:$0xff]
  %v93 = vld [vmem:[%s0 + $0x234] sm:$0xff]
  %v94 = vld [vmem:[%s0 + $0x23c] sm:$0xf]
  %v95 = vld [vmem:[%s0 + $0x240] sm:$0xff]
  %v96 = vld [vmem:[%s0 + $0x248] sm:$0xff]
  %v97 = vld [vmem:[%s0 + $0x250] sm:$0xff]
  %v98 = vld [vmem:[%s0 + $0x258] sm:$0xff]
  %v99 = vld [vmem:[%s0 + $0x260] sm:$0xf]
  %v100 = vld [vmem:[%s0 + $0x264] sm:$0xff]
  %v101 = vld [vmem:[%s0 + $0x26c] sm:$0xff]
  %v102 = vld [vmem:[%s0 + $0x274] sm:$0xff]
  %v103 = vld [vmem:[%s0 + $0x27c] sm:$0xff]
  %v104 = vld [vmem:[%s0 + $0x284] sm:$0xf]
  %v105 = vld [vmem:[%s0 + $0x288] sm:$0xff]
  %v106 = vld [vmem:[%s0 + $0x290] sm:$0xff]
  %v107 = vld [vmem:[%s0 + $0x298] sm:$0xff]
  %v108 = vld [vmem:[%s0 + $0x2a0] sm:$0xff]
  %v109 = vld [vmem:[%s0 + $0x2a8] sm:$0xf]
  %v110 = vld [vmem:[%s0 + $0x2ac] sm:$0xff]
  %v111 = vld [vmem:[%s0 + $0x2b4] sm:$0xff]
  %v112 = vld [vmem:[%s0 + $0x2bc] sm:$0xff]
  %v113 = vld [vmem:[%s0 + $0x2c4] sm:$0xff]
  %v114 = vld [vmem:[%s0 + $0x2cc] sm:$0xf]
  %v115 = vld [vmem:[%s0 + $0x2d0] sm:$0xff]
  %v116 = vld [vmem:[%s0 + $0x2d8] sm:$0xff]
  %v117 = vld [vmem:[%s0 + $0x2e0] sm:$0xff]
  %v118 = vld [vmem:[%s0 + $0x2e8] sm:$0xff]
  %v119 = vld [vmem:[%s0 + $0x2f0] sm:$0xf]
  %v120 = vld [vmem:[%s0 + $0x2f4] sm:$0xff]
  %v121 = vld [vmem:[%s0 + $0x2fc] sm:$0xff]
  %v122 = vld [vmem:[%s0 + $0x304] sm:$0xff]
  %v123 = vld [vmem:[%s0 + $0x30c] sm:$0xff]
  %v124 = vld [vmem:[%s0 + $0x314] sm:$0xf]
  %v125 = vld [vmem:[%s0 + $0x318] sm:$0xff]
  %v126 = vld [vmem:[%s0 + $0x320] sm:$0xff]
  %v127 = vld [vmem:[%s0 + $0x328] sm:$0xff]
  %v128 = vld [vmem:[%s0 + $0x330] sm:$0xff]
  %v129 = vld [vmem:[%s0 + $0x338] sm:$0xf]
  %v130 = vld [vmem:[%s0 + $0x33c] sm:$0xff]
  %v131 = vld [vmem:[%s0 + $0x344] sm:$0xff]
  %v132 = vld [vmem:[%s0 + $0x34c] sm:$0xff]
  %v133 = vld [vmem:[%s0 + $0x354] sm:$0xff]
  %v134 = vld [vmem:[%s0 + $0x35c] sm:$0xf]
  %v135 = vld [vmem:[%s0 + $0x360] sm:$0xff]
  %v136 = vld [vmem:[%s0 + $0x368] sm:$0xff]
  %v137 = vld [vmem:[%s0 + $0x370] sm:$0xff]
  %v138 = vld [vmem:[%s0 + $0x378] sm:$0xff]
  %v139 = vld [vmem:[%s0 + $0x380] sm:$0xf]
  %v140 = vld [vmem:[%s0 + $0x384] sm:$0xff]
  %v141 = vld [vmem:[%s0 + $0x38c] sm:$0xff]
  %v142 = vld [vmem:[%s0 + $0x394] sm:$0xff]
  %v143 = vld [vmem:[%s0 + $0x39c] sm:$0xff]
  %v144 = vld [vmem:[%s0 + $0x3a4] sm:$0xf]
  %v145 = vld [vmem:[%s0 + $0x3a8] sm:$0xff]
  %v146 = vld [vmem:[%s0 + $0x3b0] sm:$0xff]
  %v147 = vld [vmem:[%s0 + $0x3b8] sm:$0xff]
  %v148 = vld [vmem:[%s0 + $0x3c0] sm:$0xff]
  %v149 = vld [vmem:[%s0 + $0x3c8] sm:$0xf]
  %v150 = vld [vmem:[%s0 + $0x3cc] sm:$0xff]
  %v151 = vld [vmem:[%s0 + $0x3d4] sm:$0xff]
  %v152 = vld [vmem:[%s0 + $0x3dc] sm:$0xff]
  %v153 = vld [vmem:[%s0 + $0x3e4] sm:$0xff]
  %v154 = vld [vmem:[%s0 + $0x3ec] sm:$0xf]
  %v155 = vld [vmem:[%s0 + $0x3f0] sm:$0xff]
  %v156 = vld [vmem:[%s0 + $0x3f8] sm:$0xff]
  %v157 = vld [vmem:[%s0 + $0x400] sm:$0xff]
  %v158 = vld [vmem:[%s0 + $0x408] sm:$0xff]
  %v159 = vld [vmem:[%s0 + $0x410] sm:$0xf]
  %v160 = vld [vmem:[%s0 + $0x414] sm:$0xff]
  %v161 = vld [vmem:[%s0 + $0x41c] sm:$0xff]
  %v162 = vld [vmem:[%s0 + $0x424] sm:$0xff]
  %v163 = vld [vmem:[%s0 + $0x42c] sm:$0xff]
  %v164 = vld [vmem:[%s0 + $0x434] sm:$0xf]
  %v165 = vld [vmem:[%s0 + $0x438] sm:$0xff]
  %v166 = vld [vmem:[%s0 + $0x440] sm:$0xff]
  %v167 = vld [vmem:[%s0 + $0x448] sm:$0xff]
  %v168 = vld [vmem:[%s0 + $0x450] sm:$0xff]
  %v169 = vld [vmem:[%s0 + $0x458] sm:$0xf]
  %v170 = vld [vmem:[%s0 + $0x45c] sm:$0xff]
  %v171 = vld [vmem:[%s0 + $0x464] sm:$0xff]
  %v172 = vld [vmem:[%s0 + $0x46c] sm:$0xff]
  %v173 = vld [vmem:[%s0 + $0x474] sm:$0xff]
  %v174 = vld [vmem:[%s0 + $0x47c] sm:$0xf]
  %v175 = vld [vmem:[%s0 + $0x480] sm:$0xff]
  %v176 = vld [vmem:[%s0 + $0x488] sm:$0xff]
  %v177 = vld [vmem:[%s0 + $0x490] sm:$0xff]
  %v178 = vld [vmem:[%s0 + $0x498] sm:$0xff]
  %v179 = vld [vmem:[%s0 + $0x4a0] sm:$0xf]
  %v180 = vld [vmem:[%s0 + $0x4a4] sm:$0xff]
  %v181 = vld [vmem:[%s0 + $0x4ac] sm:$0xff]
  %v182 = vld [vmem:[%s0 + $0x4b4] sm:$0xff]
  %v183 = vld [vmem:[%s0 + $0x4bc] sm:$0xff]
  %v184 = vld [vmem:[%s0 + $0x4c4] sm:$0xf]
  %v185 = vld [vmem:[%s0 + $0x4c8] sm:$0xff]
  %v186 = vld [vmem:[%s0 + $0x4d0] sm:$0xff]
  %v187 = vld [vmem:[%s0 + $0x4d8] sm:$0xff]
  %v188 = vld [vmem:[%s0 + $0x4e0] sm:$0xff]
  %v189 = vld [vmem:[%s0 + $0x4e8] sm:$0xf]
  %v190 = vld [vmem:[%s0 + $0x4ec] sm:$0xff]
  %v191 = vld [vmem:[%s0 + $0x4f4] sm:$0xff]
  %v192 = vld [vmem:[%s0 + $0x4fc] sm:$0xff]
  %v193 = vld [vmem:[%s0 + $0x504] sm:$0xff]
  %v194 = vld [vmem:[%s0 + $0x50c] sm:$0xf]
  %v195 = vld [vmem:[%s0 + $0x510] sm:$0xff]
  %v196 = vld [vmem:[%s0 + $0x518] sm:$0xff]
  %v197 = vld [vmem:[%s0 + $0x520] sm:$0xff]
  %v198 = vld [vmem:[%s0 + $0x528] sm:$0xff]
  %v199 = vld [vmem:[%s0 + $0x530] sm:$0xf]
  %v200 = vld [vmem:[%s0 + $0x534] sm:$0xff]
  %v201 = vld [vmem:[%s0 + $0x53c] sm:$0xff]
  %v202 = vld [vmem:[%s0 + $0x544] sm:$0xff]
  %v203 = vld [vmem:[%s0 + $0x54c] sm:$0xff]
  %v204 = vld [vmem:[%s0 + $0x554] sm:$0xf]
  %v205 = vld [vmem:[%s0 + $0x558] sm:$0xff]
  %v206 = vld [vmem:[%s0 + $0x560] sm:$0xff]
  %v207 = vld [vmem:[%s0 + $0x568] sm:$0xff]
  %v208 = vld [vmem:[%s0 + $0x570] sm:$0xff]
  %v209 = vld [vmem:[%s0 + $0x578] sm:$0xf]
  %v210 = vld [vmem:[%s0 + $0x57c] sm:$0xff]
  %v211 = vld [vmem:[%s0 + $0x584] sm:$0xff]
  %v212 = vld [vmem:[%s0 + $0x58c] sm:$0xff]
  %v213 = vld [vmem:[%s0 + $0x594] sm:$0xff]
  %v214 = vld [vmem:[%s0 + $0x59c] sm:$0xf]
  %v215 = vld [vmem:[%s0 + $0x5a0] sm:$0xff]
  %v216 = vld [vmem:[%s0 + $0x5a8] sm:$0xff]
  %v217 = vld [vmem:[%s0 + $0x5b0] sm:$0xff]
  %v218 = vld [vmem:[%s0 + $0x5b8] sm:$0xff]
  %v219 = vld [vmem:[%s0 + $0x5c0] sm:$0xf]
  %v220 = vld [vmem:[%s0 + $0x5c4] sm:$0xff]
  %v221 = vld [vmem:[%s0 + $0x5cc] sm:$0xff]
  %v222 = vld [vmem:[%s0 + $0x5d4] sm:$0xff]
  %v223 = vld [vmem:[%s0 + $0x5dc] sm:$0xff]
  %v224 = vld [vmem:[%s0 + $0x5e4] sm:$0xf]
  %v225 = vld [vmem:[%s0 + $0x5e8] sm:$0xff]
  %v226 = vld [vmem:[%s0 + $0x5f0] sm:$0xff]
  %v227 = vld [vmem:[%s0 + $0x5f8] sm:$0xff]
  %v228 = vld [vmem:[%s0 + $0x600] sm:$0xff]
  %v229 = vld [vmem:[%s0 + $0x608] sm:$0xf]
  %v230 = vld [vmem:[%s0 + $0x60c] sm:$0xff]
  %v231 = vld [vmem:[%s0 + $0x614] sm:$0xff]
  %v232 = vld [vmem:[%s0 + $0x61c] sm:$0xff]
  %v233 = vld [vmem:[%s0 + $0x624] sm:$0xff]
  %v234 = vld [vmem:[%s0 + $0x62c] sm:$0xf]
  %v235 = vld [vmem:[%s0 + $0x630] sm:$0xff]
  %v236 = vld [vmem:[%s0 + $0x638] sm:$0xff]
  %v237 = vld [vmem:[%s0 + $0x640] sm:$0xff]
  %v238 = vld [vmem:[%s0 + $0x648] sm:$0xff]
  %v239 = vld [vmem:[%s0 + $0x650] sm:$0xf]
  %v240 = vld [vmem:[%s0 + $0x654] sm:$0xff]
  %v241 = vld [vmem:[%s0 + $0x65c] sm:$0xff]
  %v242 = vld [vmem:[%s0 + $0x664] sm:$0xff]
  %v243 = vld [vmem:[%s0 + $0x66c] sm:$0xff]
  %v244 = vld [vmem:[%s0 + $0x674] sm:$0xf]
  %v245 = vld [vmem:[%s0 + $0x678] sm:$0xff]
  %v246 = vld [vmem:[%s0 + $0x680] sm:$0xff]
  %v247 = vld [vmem:[%s0 + $0x688] sm:$0xff]
  %v248 = vld [vmem:[%s0 + $0x690] sm:$0xff]
  %v249 = vld [vmem:[%s0 + $0x698] sm:$0xf]
  %v250 = vld [vmem:[%s0 + $0x69c] sm:$0xff]
  %v251 = vld [vmem:[%s0 + $0x6a4] sm:$0xff]
  %v252 = vld [vmem:[%s0 + $0x6ac] sm:$0xff]
  %v253 = vld [vmem:[%s0 + $0x6b4] sm:$0xff]
  %v254 = vld [vmem:[%s0 + $0x6bc] sm:$0xf]
  %v255 = vld [vmem:[%s0 + $0x6c0] sm:$0xff]
  %v256 = vld [vmem:[%s0 + $0x6c8] sm:$0xff]
  %v257 = vld [vmem:[%s0 + $0x6d0] sm:$0xff]
  %v258 = vld [vmem:[%s0 + $0x6d8] sm:$0xff]
  %v259 = vld [vmem:[%s0 + $0x6e0] sm:$0xf]
  %v260 = vld [vmem:[%s0 + $0x6e4] sm:$0xff]
  %v261 = vld [vmem:[%s0 + $0x6ec] sm:$0xff]
  %v262 = vld [vmem:[%s0 + $0x6f4] sm:$0xff]
  %v263 = vld [vmem:[%s0 + $0x6fc] sm:$0xff]
  %v264 = vld [vmem:[%s0 + $0x704] sm:$0xf]
  %v265 = vld [vmem:[%s0 + $0x708] sm:$0xff]
  %v266 = vld [vmem:[%s0 + $0x710] sm:$0xff]
  %v267 = vld [vmem:[%s0 + $0x718] sm:$0xff]
  %v268 = vld [vmem:[%s0 + $0x720] sm:$0xff]
  %v269 = vld [vmem:[%s0 + $0x728] sm:$0xf]
  %v270 = vld [vmem:[%s0 + $0x72c] sm:$0xff]
  %v271 = vld [vmem:[%s0 + $0x734] sm:$0xff]
  %v272 = vld [vmem:[%s0 + $0x73c] sm:$0xff]
  %v273 = vld [vmem:[%s0 + $0x744] sm:$0xff]
  %v274 = vld [vmem:[%s0 + $0x74c] sm:$0xf]
  %v275 = vld [vmem:[%s0 + $0x750] sm:$0xff]
  %v276 = vld [vmem:[%s0 + $0x758] sm:$0xff]
  %v277 = vld [vmem:[%s0 + $0x760] sm:$0xff]
  %v278 = vld [vmem:[%s0 + $0x768] sm:$0xff]
  %v279 = vld [vmem:[%s0 + $0x770] sm:$0xf]
  %v280 = vld [vmem:[%s0 + $0x774] sm:$0xff]
  %v281 = vld [vmem:[%s0 + $0x77c] sm:$0xff]
  %v282 = vld [vmem:[%s0 + $0x784] sm:$0xff]
  %v283 = vld [vmem:[%s0 + $0x78c] sm:$0xff]
  %v284 = vld [vmem:[%s0 + $0x794] sm:$0xf]
  %v285 = vld [vmem:[%s0 + $0x798] sm:$0xff]
  %v286 = vld [vmem:[%s0 + $0x7a0] sm:$0xff]
  %v287 = vld [vmem:[%s0 + $0x7a8] sm:$0xff]
  %v288 = vld [vmem:[%s0 + $0x7b0] sm:$0xff]
  %v289 = vld [vmem:[%s0 + $0x7b8] sm:$0xf]
  %v290 = vld [vmem:[%s0 + $0x7bc] sm:$0xff]
  %v291 = vld [vmem:[%s0 + $0x7c4] sm:$0xff]
  %v292 = vld [vmem:[%s0 + $0x7cc] sm:$0xff]
  %v293 = vld [vmem:[%s0 + $0x7d4] sm:$0xff]
  %v294 = vld [vmem:[%s0 + $0x7dc] sm:$0xf]
  %v295 = vld [vmem:[%s0 + $0x7e0] sm:$0xff]
  %v296 = vld [vmem:[%s0 + $0x7e8] sm:$0xff]
  %v297 = vld [vmem:[%s0 + $0x7f0] sm:$0xff]
  %v298 = vld [vmem:[%s0 + $0x7f8] sm:$0xff]
  %v299 = vld [vmem:[%s0 + $0x800] sm:$0xf]
  %v300 = vld [vmem:[%s0 + $0x804] sm:$0xff]
  %v301 = vld [vmem:[%s0 + $0x80c] sm:$0xff]
  %v302 = vld [vmem:[%s0 + $0x814] sm:$0xff]
  %v303 = vld [vmem:[%s0 + $0x81c] sm:$0xff]
  %v304 = vld [vmem:[%s0 + $0x824] sm:$0xf]
  %v305 = vld [vmem:[%s0 + $0x828] sm:$0xff]
  %v306 = vld [vmem:[%s0 + $0x830] sm:$0xff]
  %v307 = vld [vmem:[%s0 + $0x838] sm:$0xff]
  %v308 = vld [vmem:[%s0 + $0x840] sm:$0xff]
  %v309 = vld [vmem:[%s0 + $0x848] sm:$0xf]
  %v310 = vld [vmem:[%s0 + $0x84c] sm:$0xff]
  %v311 = vld [vmem:[%s0 + $0x854] sm:$0xff]
  %v312 = vld [vmem:[%s0 + $0x85c] sm:$0xff]
  %v313 = vld [vmem:[%s0 + $0x864] sm:$0xff]
  %v314 = vld [vmem:[%s0 + $0x86c] sm:$0xf]
  %v315 = vld [vmem:[%s0 + $0x870] sm:$0xff]
  %v316 = vld [vmem:[%s0 + $0x878] sm:$0xff]
  %v317 = vld [vmem:[%s0 + $0x880] sm:$0xff]
  %v318 = vld [vmem:[%s0 + $0x888] sm:$0xff]
  %v319 = vld [vmem:[%s0 + $0x890] sm:$0xf]
  %v320 = vld [vmem:[%s0 + $0x894] sm:$0xff]
  %v321 = vld [vmem:[%s0 + $0x89c] sm:$0xff]
  %v322 = vld [vmem:[%s0 + $0x8a4] sm:$0xff]
  %v323 = vld [vmem:[%s0 + $0x8ac] sm:$0xff]
  %v324 = vld [vmem:[%s0 + $0x8b4] sm:$0xf]
  %v325 = vld [vmem:[%s0 + $0x8b8] sm:$0xff]
  %v326 = vld [vmem:[%s0 + $0x8c0] sm:$0xff]
  %v327 = vld [vmem:[%s0 + $0x8c8] sm:$0xff]
  %v328 = vld [vmem:[%s0 + $0x8d0] sm:$0xff]
  %v329 = vld [vmem:[%s0 + $0x8d8] sm:$0xf]
  %v330 = vld [vmem:[%s0 + $0x8dc] sm:$0xff]
  %v331 = vld [vmem:[%s0 + $0x8e4] sm:$0xff]
  %v332 = vld [vmem:[%s0 + $0x8ec] sm:$0xff]
  %v333 = vld [vmem:[%s0 + $0x8f4] sm:$0xff]
  %v334 = vld [vmem:[%s0 + $0x8fc] sm:$0xf]
  %v335 = vld [vmem:[%s0 + $0x900] sm:$0xff]
  %v336 = vld [vmem:[%s0 + $0x908] sm:$0xff]
  %v337 = vld [vmem:[%s0 + $0x910] sm:$0xff]
  %v338 = vld [vmem:[%s0 + $0x918] sm:$0xff]
  %v339 = vld [vmem:[%s0 + $0x920] sm:$0xf]
  %v340 = vld [vmem:[%s0 + $0x924] sm:$0xff]
  %v341 = vld [vmem:[%s0 + $0x92c] sm:$0xff]
  %v342 = vld [vmem:[%s0 + $0x934] sm:$0xff]
  %v343 = vld [vmem:[%s0 + $0x93c] sm:$0xff]
  %v344 = vld [vmem:[%s0 + $0x944] sm:$0xf]
  %v345 = vld [vmem:[%s0 + $0x948] sm:$0xff]
  %v346 = vld [vmem:[%s0 + $0x950] sm:$0xff]
  %v347 = vld [vmem:[%s0 + $0x958] sm:$0xff]
  %v348 = vld [vmem:[%s0 + $0x960] sm:$0xff]
  %v349 = vld [vmem:[%s0 + $0x968] sm:$0xf]
  %v350 = vld [vmem:[%s0 + $0x96c] sm:$0xff]
  %v351 = vld [vmem:[%s0 + $0x974] sm:$0xff]
  %v352 = vld [vmem:[%s0 + $0x97c] sm:$0xff]
  %v353 = vld [vmem:[%s0 + $0x984] sm:$0xff]
  %v354 = vld [vmem:[%s0 + $0x98c] sm:$0xf]
  %v355 = vld [vmem:[%s0 + $0x990] sm:$0xff]
  %v356 = vld [vmem:[%s0 + $0x998] sm:$0xff]
  %v357 = vld [vmem:[%s0 + $0x9a0] sm:$0xff]
  %v358 = vld [vmem:[%s0 + $0x9a8] sm:$0xff]
  %v359 = vld [vmem:[%s0 + $0x9b0] sm:$0xf]
  %v360 = vld [vmem:[%s0 + $0x9b4] sm:$0xff]
  %v361 = vld [vmem:[%s0 + $0x9bc] sm:$0xff]
  %v362 = vld [vmem:[%s0 + $0x9c4] sm:$0xff]
  %v363 = vld [vmem:[%s0 + $0x9cc] sm:$0xff]
  %v364 = vld [vmem:[%s0 + $0x9d4] sm:$0xf]
  %v365 = vld [vmem:[%s0 + $0x9d8] sm:$0xff]
  %v366 = vld [vmem:[%s0 + $0x9e0] sm:$0xff]
  %v367 = vld [vmem:[%s0 + $0x9e8] sm:$0xff]
  %v368 = vld [vmem:[%s0 + $0x9f0] sm:$0xff]
  %v369 = vld [vmem:[%s0 + $0x9f8] sm:$0xf]
  %v370 = vld [vmem:[%s0 + $0x9fc] sm:$0xff]
  %v371 = vld [vmem:[%s0 + $0xa04] sm:$0xff]
  %v372 = vld [vmem:[%s0 + $0xa0c] sm:$0xff]
  %v373 = vld [vmem:[%s0 + $0xa14] sm:$0xff]
  %v374 = vld [vmem:[%s0 + $0xa1c] sm:$0xf]
  %v375 = vld [vmem:[%s0 + $0xa20] sm:$0xff]
  %v376 = vld [vmem:[%s0 + $0xa28] sm:$0xff]
  %v377 = vld [vmem:[%s0 + $0xa30] sm:$0xff]
  %v378 = vld [vmem:[%s0 + $0xa38] sm:$0xff]
  %v379 = vld [vmem:[%s0 + $0xa40] sm:$0xf]
  %v380 = vld [vmem:[%s0 + $0xa44] sm:$0xff]
  %v381 = vld [vmem:[%s0 + $0xa4c] sm:$0xff]
  %v382 = vld [vmem:[%s0 + $0xa54] sm:$0xff]
  %v383 = vld [vmem:[%s0 + $0xa5c] sm:$0xff]
  %v384 = vld [vmem:[%s0 + $0xa64] sm:$0xf]
  %v385 = vld [vmem:[%s0 + $0xa68] sm:$0xff]
  %v386 = vld [vmem:[%s0 + $0xa70] sm:$0xff]
  %v387 = vld [vmem:[%s0 + $0xa78] sm:$0xff]
  %v388 = vld [vmem:[%s0 + $0xa80] sm:$0xff]
  %v389 = vld [vmem:[%s0 + $0xa88] sm:$0xf]
  %v390 = vld [vmem:[%s0 + $0xa8c] sm:$0xff]
  %v391 = vld [vmem:[%s0 + $0xa94] sm:$0xff]
  %v392 = vld [vmem:[%s0 + $0xa9c] sm:$0xff]
  %v393 = vld [vmem:[%s0 + $0xaa4] sm:$0xff]
  %v394 = vld [vmem:[%s0 + $0xaac] sm:$0xf]
  %v395 = vld [vmem:[%s0 + $0xab0] sm:$0xff]
  %v396 = vld [vmem:[%s0 + $0xab8] sm:$0xff]
  %v397 = vld [vmem:[%s0 + $0xac0] sm:$0xff]
  %v398 = vld [vmem:[%s0 + $0xac8] sm:$0xff]
  %v399 = vld [vmem:[%s0 + $0xad0] sm:$0xf]
  %v400 = vld [vmem:[%s0 + $0xad4] sm:$0xff]
  %v401 = vld [vmem:[%s0 + $0xadc] sm:$0xff]
  %v402 = vld [vmem:[%s0 + $0xae4] sm:$0xff]
  %v403 = vld [vmem:[%s0 + $0xaec] sm:$0xff]
  %v404 = vld [vmem:[%s0 + $0xaf4] sm:$0xf]
  %v405 = vld [vmem:[%s0 + $0xaf8] sm:$0xff]
  %v406 = vld [vmem:[%s0 + $0xb00] sm:$0xff]
  %v407 = vld [vmem:[%s0 + $0xb08] sm:$0xff]
  %v408 = vld [vmem:[%s0 + $0xb10] sm:$0xff]
  %v409 = vld [vmem:[%s0 + $0xb18] sm:$0xf]
  %v410 = vld [vmem:[%s0 + $0xb1c] sm:$0xff]
  %v411 = vld [vmem:[%s0 + $0xb24] sm:$0xff]
  %v412 = vld [vmem:[%s0 + $0xb2c] sm:$0xff]
  %v413 = vld [vmem:[%s0 + $0xb34] sm:$0xff]
  %v414 = vld [vmem:[%s0 + $0xb3c] sm:$0xf]
  %v415 = vld [vmem:[%s0 + $0xb40] sm:$0xff]
  %v416 = vld [vmem:[%s0 + $0xb48] sm:$0xff]
  %v417 = vld [vmem:[%s0 + $0xb50] sm:$0xff]
  %v418 = vld [vmem:[%s0 + $0xb58] sm:$0xff]
  %v419 = vld [vmem:[%s0 + $0xb60] sm:$0xf]
  %v420 = vld [vmem:[%s0 + $0xb64] sm:$0xff]
  %v421 = vld [vmem:[%s0 + $0xb6c] sm:$0xff]
  %v422 = vld [vmem:[%s0 + $0xb74] sm:$0xff]
  %v423 = vld [vmem:[%s0 + $0xb7c] sm:$0xff]
  %v424 = vld [vmem:[%s0 + $0xb84] sm:$0xf]
  %v425 = vld [vmem:[%s0 + $0xb88] sm:$0xff]
  %v426 = vld [vmem:[%s0 + $0xb90] sm:$0xff]
  %v427 = vld [vmem:[%s0 + $0xb98] sm:$0xff]
  %v428 = vld [vmem:[%s0 + $0xba0] sm:$0xff]
  %v429 = vld [vmem:[%s0 + $0xba8] sm:$0xf]
  %v430 = vld [vmem:[%s0 + $0xbac] sm:$0xff]
  %v431 = vld [vmem:[%s0 + $0xbb4] sm:$0xff]
  %v432 = vld [vmem:[%s0 + $0xbbc] sm:$0xff]
  %v433 = vld [vmem:[%s0 + $0xbc4] sm:$0xff]
  %v434 = vld [vmem:[%s0 + $0xbcc] sm:$0xf]
  %v435 = vld [vmem:[%s0 + $0xbd0] sm:$0xff]
  %v436 = vld [vmem:[%s0 + $0xbd8] sm:$0xff]
  %v437 = vld [vmem:[%s0 + $0xbe0] sm:$0xff]
  %v438 = vld [vmem:[%s0 + $0xbe8] sm:$0xff]
  %v439 = vld [vmem:[%s0 + $0xbf0] sm:$0xf]
  %v440 = vld [vmem:[%s0 + $0xbf4] sm:$0xff]
  %v441 = vld [vmem:[%s0 + $0xbfc] sm:$0xff]
  %v442 = vld [vmem:[%s0 + $0xc04] sm:$0xff]
  %v443 = vld [vmem:[%s0 + $0xc0c] sm:$0xff]
  %v444 = vld [vmem:[%s0 + $0xc14] sm:$0xf]
  %v445 = vld [vmem:[%s0 + $0xc18] sm:$0xff]
  %v446 = vld [vmem:[%s0 + $0xc20] sm:$0xff]
  %v447 = vld [vmem:[%s0 + $0xc28] sm:$0xff]
  %v448 = vld [vmem:[%s0 + $0xc30] sm:$0xff]
  %v449 = vld [vmem:[%s0 + $0xc38] sm:$0xf]
  %v450 = vld [vmem:[%s0 + $0xc3c] sm:$0xff]
  %v451 = vld [vmem:[%s0 + $0xc44] sm:$0xff]
  %v452 = vld [vmem:[%s0 + $0xc4c] sm:$0xff]
  %v453 = vld [vmem:[%s0 + $0xc54] sm:$0xff]
  %v454 = vld [vmem:[%s0 + $0xc5c] sm:$0xf]
  %v455 = vld [vmem:[%s1] sm:$0xf]
  %v456 = vld [vmem:[%s1 + $0x4] sm:$0xf]
  %v457 = vld [vmem:[%s1 + $0x8] sm:$0xf]
  %v458 = vld [vmem:[%s1 + $0xc] sm:$0xf]
  %v459 = vld [vmem:[%s1 + $0x10] sm:$0xf]
  %v460 = vld [vmem:[%s1 + $0x14] sm:$0xf]
  %v461 = vld [vmem:[%s1 + $0x18] sm:$0xf]
  %v462 = vld [vmem:[%s1 + $0x1c] sm:$0xf]
  %v463 = vld [vmem:[%s1 + $0x20] sm:$0xf]
  %v464 = vld [vmem:[%s1 + $0x24] sm:$0xf]
  %v465 = vld [vmem:[%s1 + $0x28] sm:$0xf]
  %v466 = vld [vmem:[%s1 + $0x2c] sm:$0xf]
  %v467 = vld [vmem:[%s1 + $0x30] sm:$0xf]
  %v468 = vld [vmem:[%s1 + $0x34] sm:$0xf]
  %v469 = vld [vmem:[%s1 + $0x38] sm:$0xf]
  %v470 = vld [vmem:[%s1 + $0x3c] sm:$0xf]
  %v471 = vld [vmem:[%s1 + $0x40] sm:$0xf]
  %v472 = vld [vmem:[%s1 + $0x44] sm:$0xf]
  %v473 = vld [vmem:[%s1 + $0x48] sm:$0xf]
  %v474 = vld [vmem:[%s1 + $0x4c] sm:$0xf]
  %v475 = vld [vmem:[%s1 + $0x50] sm:$0xf]
  %v476 = vld [vmem:[%s1 + $0x54] sm:$0xf]
  %v477 = vld [vmem:[%s1 + $0x58] sm:$0xf]
  %v478 = vld [vmem:[%s1 + $0x5c] sm:$0xf]
  %v479 = vld [vmem:[%s1 + $0x60] sm:$0xf]
  %v480 = vld [vmem:[%s1 + $0x64] sm:$0xf]
  %v481 = vld [vmem:[%s1 + $0x68] sm:$0xf]
  %v482 = vld [vmem:[%s1 + $0x6c] sm:$0xf]
  %v483 = vld [vmem:[%s1 + $0x70] sm:$0xf]
  %v484 = vld [vmem:[%s1 + $0x74] sm:$0xf]
  %v485 = vld [vmem:[%s1 + $0x78] sm:$0xf]
  %v486 = vld [vmem:[%s1 + $0x7c] sm:$0xf]
  %v487 = vld [vmem:[%s1 + $0x80] sm:$0xf]
  %v488 = vld [vmem:[%s1 + $0x84] sm:$0xf]
  %v489 = vld [vmem:[%s1 + $0x88] sm:$0xf]
  %v490 = vld [vmem:[%s1 + $0x8c] sm:$0xf]
  %v491 = vld [vmem:[%s1 + $0x90] sm:$0xf]
  %v492 = vld [vmem:[%s1 + $0x94] sm:$0xf]
  %v493 = vld [vmem:[%s1 + $0x98] sm:$0xf]
  %v494 = vld [vmem:[%s1 + $0x9c] sm:$0xf]
  %v495 = vld [vmem:[%s1 + $0xa0] sm:$0xf]
  %v496 = vld [vmem:[%s1 + $0xa4] sm:$0xf]
  %v497 = vld [vmem:[%s1 + $0xa8] sm:$0xf]
  %v498 = vld [vmem:[%s1 + $0xac] sm:$0xf]
  %v499 = vld [vmem:[%s1 + $0xb0] sm:$0xf]
  %v500 = vld [vmem:[%s1 + $0xb4] sm:$0xf]
  %v501 = vld [vmem:[%s1 + $0xb8] sm:$0xf]
  %v502 = vld [vmem:[%s1 + $0xbc] sm:$0xf]
  %v503 = vld [vmem:[%s1 + $0xc0] sm:$0xf]
  %v504 = vld [vmem:[%s1 + $0xc4] sm:$0xf]
  %v505 = vld [vmem:[%s1 + $0xc8] sm:$0xf]
  %v506 = vld [vmem:[%s1 + $0xcc] sm:$0xf]
  %v507 = vld [vmem:[%s1 + $0xd0] sm:$0xf]
  %v508 = vld [vmem:[%s1 + $0xd4] sm:$0xf]
  %v509 = vld [vmem:[%s1 + $0xd8] sm:$0xf]
  %v510 = vld [vmem:[%s1 + $0xdc] sm:$0xf]
  %v511 = vld [vmem:[%s1 + $0xe0] sm:$0xf]
  %v512 = vld [vmem:[%s1 + $0xe4] sm:$0xf]
  %v513 = vld [vmem:[%s1 + $0xe8] sm:$0xf]
  %v514 = vld [vmem:[%s1 + $0xec] sm:$0xf]
  %v515 = vld [vmem:[%s1 + $0xf0] sm:$0xf]
  %v516 = vld [vmem:[%s1 + $0xf4] sm:$0xf]
  %v517 = vld [vmem:[%s1 + $0xf8] sm:$0xf]
  %v518 = vld [vmem:[%s1 + $0xfc] sm:$0xf]
  %v519 = vld [vmem:[%s1 + $0x100] sm:$0xf]
  %v520 = vld [vmem:[%s1 + $0x104] sm:$0xf]
  %v521 = vld [vmem:[%s1 + $0x108] sm:$0xf]
  %v522 = vld [vmem:[%s1 + $0x10c] sm:$0xf]
  %v523 = vld [vmem:[%s1 + $0x110] sm:$0xf]
  %v524 = vld [vmem:[%s1 + $0x114] sm:$0xf]
  %v525 = vld [vmem:[%s1 + $0x118] sm:$0xf]
  %v526 = vld [vmem:[%s1 + $0x11c] sm:$0xf]
  %v527 = vld [vmem:[%s1 + $0x120] sm:$0xf]
  %v528 = vld [vmem:[%s1 + $0x124] sm:$0xf]
  %v529 = vld [vmem:[%s1 + $0x128] sm:$0xf]
  %v530 = vld [vmem:[%s1 + $0x12c] sm:$0xf]
  %v531 = vld [vmem:[%s1 + $0x130] sm:$0xf]
  %v532 = vld [vmem:[%s1 + $0x134] sm:$0xf]
  %v533 = vld [vmem:[%s1 + $0x138] sm:$0xf]
  %v534 = vld [vmem:[%s1 + $0x13c] sm:$0xf]
  %v535 = vld [vmem:[%s1 + $0x140] sm:$0xf]
  %v536 = vld [vmem:[%s1 + $0x144] sm:$0xf]
  %v537 = vld [vmem:[%s1 + $0x148] sm:$0xf]
  %v538 = vld [vmem:[%s1 + $0x14c] sm:$0xf]
  %v539 = vld [vmem:[%s1 + $0x150] sm:$0xf]
  %v540 = vld [vmem:[%s1 + $0x154] sm:$0xf]
  %v541 = vld [vmem:[%s1 + $0x158] sm:$0xf]
  %v542 = vld [vmem:[%s1 + $0x15c] sm:$0xf]
  %v543 = vld [vmem:[%s1 + $0x160] sm:$0xf]
  %v544 = vld [vmem:[%s1 + $0x164] sm:$0xf]
  %v545 = vld [vmem:[%s1 + $0x168] sm:$0xf]
  %v546 = vld [vmem:[%s1 + $0x16c] sm:$0xf]
  %v547 = vld [vmem:[%s1 + $0x170] sm:$0xf]
  %v548 = vld [vmem:[%s1 + $0x174] sm:$0xf]
  %v549 = vld [vmem:[%s1 + $0x178] sm:$0xf]
  %v550 = vld [vmem:[%s1 + $0x17c] sm:$0xf]
  %v551 = vld [vmem:[%s1 + $0x180] sm:$0xf]
  %v552 = vld [vmem:[%s1 + $0x184] sm:$0xf]
  %v553 = vld [vmem:[%s1 + $0x188] sm:$0xf]
  %v554 = vld [vmem:[%s1 + $0x18c] sm:$0xf]
  %v555 = vld [vmem:[%s1 + $0x190] sm:$0xf]
  %v556 = vld [vmem:[%s1 + $0x194] sm:$0xf]
  %v557 = vld [vmem:[%s1 + $0x198] sm:$0xf]
  %v558 = vld [vmem:[%s1 + $0x19c] sm:$0xf]
  %v559 = vld [vmem:[%s1 + $0x1a0] sm:$0xf]
  %v560 = vld [vmem:[%s1 + $0x1a4] sm:$0xf]
  %v561 = vld [vmem:[%s1 + $0x1a8] sm:$0xf]
  %v562 = vld [vmem:[%s1 + $0x1ac] sm:$0xf]
  %v563 = vld [vmem:[%s1 + $0x1b0] sm:$0xf]
  %v564 = vld [vmem:[%s1 + $0x1b4] sm:$0xf]
  %v565 = vld [vmem:[%s1 + $0x1b8] sm:$0xf]
  %v566 = vld [vmem:[%s1 + $0x1bc] sm:$0xf]
  %v567 = vld [vmem:[%s1 + $0x1c0] sm:$0xf]
  %v568 = vld [vmem:[%s1 + $0x1c4] sm:$0xf]
  %v569 = vld [vmem:[%s1 + $0x1c8] sm:$0xf]
  %v570 = vld [vmem:[%s1 + $0x1cc] sm:$0xf]
  %v571 = vld [vmem:[%s1 + $0x1d0] sm:$0xf]
  %v572 = vld [vmem:[%s1 + $0x1d4] sm:$0xf]
  %v573 = vld [vmem:[%s1 + $0x1d8] sm:$0xf]
  %v574 = vld [vmem:[%s1 + $0x1dc] sm:$0xf]
  %v575 = vld [vmem:[%s1 + $0x1e0] sm:$0xf]
  %v576 = vld [vmem:[%s1 + $0x1e4] sm:$0xf]
  %v577 = vld [vmem:[%s1 + $0x1e8] sm:$0xf]
  %v578 = vld [vmem:[%s1 + $0x1ec] sm:$0xf]
  %v579 = vld [vmem:[%s1 + $0x1f0] sm:$0xf]
  %v580 = vld [vmem:[%s1 + $0x1f4] sm:$0xf]
  %v581 = vld [vmem:[%s1 + $0x1f8] sm:$0xf]
  %v582 = vld [vmem:[%s1 + $0x1fc] sm:$0xf]
  %v583 = vld [vmem:[%s1 + $0x200] sm:$0xf]
  %v584 = vld [vmem:[%s1 + $0x204] sm:$0xf]
  %v585 = vld [vmem:[%s1 + $0x208] sm:$0xf]
  %v586 = vld [vmem:[%s1 + $0x20c] sm:$0xf]
  %v587 = vld [vmem:[%s1 + $0x210] sm:$0xf]
  %v588 = vld [vmem:[%s1 + $0x214] sm:$0xf]
  %v589 = vld [vmem:[%s1 + $0x218] sm:$0xf]
  %v590 = vld [vmem:[%s1 + $0x21c] sm:$0xf]
  %v591 = vld [vmem:[%s1 + $0x220] sm:$0xf]
  %v592 = vld [vmem:[%s1 + $0x224] sm:$0xf]
  %v593 = vld [vmem:[%s1 + $0x228] sm:$0xf]
  %v594 = vld [vmem:[%s1 + $0x22c] sm:$0xf]
  %v595 = vld [vmem:[%s1 + $0x230] sm:$0xf]
  %v596 = vld [vmem:[%s1 + $0x234] sm:$0xf]
  %v597 = vld [vmem:[%s1 + $0x238] sm:$0xf]
  %v598 = vld [vmem:[%s1 + $0x23c] sm:$0xf]
  %v1039 = vunpack.c.l.b16 %v15
  %v1040 = vunpack.c.h.b16 %v15
  %v1041 = vunpack.c.l.b16 %v16
  %v1042 = vunpack.c.h.b16 %v16
  %v1043 = vunpack.c.l.b16 %v17
  %v1044 = vunpack.c.h.b16 %v17
  %v1045 = vunpack.c.l.b16 %v18
  %v1046 = vunpack.c.h.b16 %v18
  %v1047 = vunpack.c.l.b16 %v19
  %v1048 = vunpack.c.l.b16 %v20
  %v1049 = vunpack.c.h.b16 %v20
  %v1050 = vunpack.c.l.b16 %v21
  %v1051 = vunpack.c.h.b16 %v21
  %v1052 = vunpack.c.l.b16 %v22
  %v1053 = vunpack.c.h.b16 %v22
  %v1054 = vunpack.c.l.b16 %v23
  %v1055 = vunpack.c.h.b16 %v23
  %v1056 = vunpack.c.l.b16 %v24
  %v1057 = vunpack.c.l.b16 %v25
  %v1058 = vunpack.c.h.b16 %v25
  %v1059 = vunpack.c.l.b16 %v26
  %v1060 = vunpack.c.h.b16 %v26
  %v1061 = vunpack.c.l.b16 %v27
  %v1062 = vunpack.c.h.b16 %v27
  %v1063 = vunpack.c.l.b16 %v28
  %v1064 = vunpack.c.h.b16 %v28
  %v1065 = vunpack.c.l.b16 %v29
  %v1066 = vunpack.c.l.b16 %v30
  %v1067 = vunpack.c.h.b16 %v30
  %v1068 = vunpack.c.l.b16 %v31
  %v1069 = vunpack.c.h.b16 %v31
  %v1070 = vunpack.c.l.b16 %v32
  %v1071 = vunpack.c.h.b16 %v32
  %v1072 = vunpack.c.l.b16 %v33
  %v1073 = vunpack.c.h.b16 %v33
  %v1074 = vunpack.c.l.b16 %v34
  %v1075 = vunpack.c.l.b16 %v35
  %v1076 = vunpack.c.h.b16 %v35
  %v1077 = vunpack.c.l.b16 %v36
  %v1078 = vunpack.c.h.b16 %v36
  %v1079 = vunpack.c.l.b16 %v37
  %v1080 = vunpack.c.h.b16 %v37
  %v1081 = vunpack.c.l.b16 %v38
  %v1082 = vunpack.c.h.b16 %v38
  %v1083 = vunpack.c.l.b16 %v39
  %v1084 = vunpack.c.l.b16 %v40
  %v1085 = vunpack.c.h.b16 %v40
  %v1086 = vunpack.c.l.b16 %v41
  %v1087 = vunpack.c.h.b16 %v41
  %v1088 = vunpack.c.l.b16 %v42
  %v1089 = vunpack.c.h.b16 %v42
  %v1090 = vunpack.c.l.b16 %v43
  %v1091 = vunpack.c.h.b16 %v43
  %v1092 = vunpack.c.l.b16 %v44
  %v1093 = vunpack.c.l.b16 %v45
  %v1094 = vunpack.c.h.b16 %v45
  %v1095 = vunpack.c.l.b16 %v46
  %v1096 = vunpack.c.h.b16 %v46
  %v1097 = vunpack.c.l.b16 %v47
  %v1098 = vunpack.c.h.b16 %v47
  %v1099 = vunpack.c.l.b16 %v48
  %v1100 = vunpack.c.h.b16 %v48
  %v1101 = vunpack.c.l.b16 %v49
  %v1102 = vunpack.c.l.b16 %v50
  %v1103 = vunpack.c.h.b16 %v50
  %v1104 = vunpack.c.l.b16 %v51
  %v1105 = vunpack.c.h.b16 %v51
  %v1106 = vunpack.c.l.b16 %v52
  %v1107 = vunpack.c.h.b16 %v52
  %v1108 = vunpack.c.l.b16 %v53
  %v1109 = vunpack.c.h.b16 %v53
  %v1110 = vunpack.c.l.b16 %v54
  %v1111 = vunpack.c.l.b16 %v55
  %v1112 = vunpack.c.h.b16 %v55
  %v1113 = vunpack.c.l.b16 %v56
  %v1114 = vunpack.c.h.b16 %v56
  %v1115 = vunpack.c.l.b16 %v57
  %v1116 = vunpack.c.h.b16 %v57
  %v1117 = vunpack.c.l.b16 %v58
  %v1118 = vunpack.c.h.b16 %v58
  %v1119 = vunpack.c.l.b16 %v59
  %v1120 = vunpack.c.l.b16 %v60
  %v1121 = vunpack.c.h.b16 %v60
  %v1122 = vunpack.c.l.b16 %v61
  %v1123 = vunpack.c.h.b16 %v61
  %v1124 = vunpack.c.l.b16 %v62
  %v1125 = vunpack.c.h.b16 %v62
  %v1126 = vunpack.c.l.b16 %v63
  %v1127 = vunpack.c.h.b16 %v63
  %v1128 = vunpack.c.l.b16 %v64
  %v1129 = vunpack.c.l.b16 %v65
  %v1130 = vunpack.c.h.b16 %v65
  %v1131 = vunpack.c.l.b16 %v66
  %v1132 = vunpack.c.h.b16 %v66
  %v1133 = vunpack.c.l.b16 %v67
  %v1134 = vunpack.c.h.b16 %v67
  %v1135 = vunpack.c.l.b16 %v68
  %v1136 = vunpack.c.h.b16 %v68
  %v1137 = vunpack.c.l.b16 %v69
  %v1138 = vunpack.c.l.b16 %v70
  %v1139 = vunpack.c.h.b16 %v70
  %v1140 = vunpack.c.l.b16 %v71
  %v1141 = vunpack.c.h.b16 %v71
  %v1142 = vunpack.c.l.b16 %v72
  %v1143 = vunpack.c.h.b16 %v72
  %v1144 = vunpack.c.l.b16 %v73
  %v1145 = vunpack.c.h.b16 %v73
  %v1146 = vunpack.c.l.b16 %v74
  %v1147 = vunpack.c.l.b16 %v75
  %v1148 = vunpack.c.h.b16 %v75
  %v1149 = vunpack.c.l.b16 %v76
  %v1150 = vunpack.c.h.b16 %v76
  %v1151 = vunpack.c.l.b16 %v77
  %v1152 = vunpack.c.h.b16 %v77
  %v1153 = vunpack.c.l.b16 %v78
  %v1154 = vunpack.c.h.b16 %v78
  %v1155 = vunpack.c.l.b16 %v79
  %v1156 = vunpack.c.l.b16 %v80
  %v1157 = vunpack.c.h.b16 %v80
  %v1158 = vunpack.c.l.b16 %v81
  %v1159 = vunpack.c.h.b16 %v81
  %v1160 = vunpack.c.l.b16 %v82
  %v1161 = vunpack.c.h.b16 %v82
  %v1162 = vunpack.c.l.b16 %v83
  %v1163 = vunpack.c.h.b16 %v83
  %v1164 = vunpack.c.l.b16 %v84
  %v1165 = vunpack.c.l.b16 %v85
  %v1166 = vunpack.c.h.b16 %v85
  %v1167 = vunpack.c.l.b16 %v86
  %v1168 = vunpack.c.h.b16 %v86
  %v1169 = vunpack.c.l.b16 %v87
  %v1170 = vunpack.c.h.b16 %v87
  %v1171 = vunpack.c.l.b16 %v88
  %v1172 = vunpack.c.h.b16 %v88
  %v1173 = vunpack.c.l.b16 %v89
  %v1174 = vunpack.c.l.b16 %v90
  %v1175 = vunpack.c.h.b16 %v90
  %v1176 = vunpack.c.l.b16 %v91
  %v1177 = vunpack.c.h.b16 %v91
  %v1178 = vunpack.c.l.b16 %v92
  %v1179 = vunpack.c.h.b16 %v92
  %v1180 = vunpack.c.l.b16 %v93
  %v1181 = vunpack.c.h.b16 %v93
  %v1182 = vunpack.c.l.b16 %v94
  %v1183 = vunpack.c.l.b16 %v95
  %v1184 = vunpack.c.h.b16 %v95
  %v1185 = vunpack.c.l.b16 %v96
  %v1186 = vunpack.c.h.b16 %v96
  %v1187 = vunpack.c.l.b16 %v97
  %v1188 = vunpack.c.h.b16 %v97
  %v1189 = vunpack.c.l.b16 %v98
  %v1190 = vunpack.c.h.b16 %v98
  %v1191 = vunpack.c.l.b16 %v99
  %v1192 = vunpack.c.l.b16 %v100
  %v1193 = vunpack.c.h.b16 %v100
  %v1194 = vunpack.c.l.b16 %v101
  %v1195 = vunpack.c.h.b16 %v101
  %v1196 = vunpack.c.l.b16 %v102
  %v1197 = vunpack.c.h.b16 %v102
  %v1198 = vunpack.c.l.b16 %v103
  %v1199 = vunpack.c.h.b16 %v103
  %v1200 = vunpack.c.l.b16 %v104
  %v1201 = vunpack.c.l.b16 %v105
  %v1202 = vunpack.c.h.b16 %v105
  %v1203 = vunpack.c.l.b16 %v106
  %v1204 = vunpack.c.h.b16 %v106
  %v1205 = vunpack.c.l.b16 %v107
  %v1206 = vunpack.c.h.b16 %v107
  %v1207 = vunpack.c.l.b16 %v108
  %v1208 = vunpack.c.h.b16 %v108
  %v1209 = vunpack.c.l.b16 %v109
  %v1210 = vunpack.c.l.b16 %v110
  %v1211 = vunpack.c.h.b16 %v110
  %v1212 = vunpack.c.l.b16 %v111
  %v1213 = vunpack.c.h.b16 %v111
  %v1214 = vunpack.c.l.b16 %v112
  %v1215 = vunpack.c.h.b16 %v112
  %v1216 = vunpack.c.l.b16 %v113
  %v1217 = vunpack.c.h.b16 %v113
  %v1218 = vunpack.c.l.b16 %v114
  %v1219 = vunpack.c.l.b16 %v115
  %v1220 = vunpack.c.h.b16 %v115
  %v1221 = vunpack.c.l.b16 %v116
  %v1222 = vunpack.c.h.b16 %v116
  %v1223 = vunpack.c.l.b16 %v117
  %v1224 = vunpack.c.h.b16 %v117
  %v1225 = vunpack.c.l.b16 %v118
  %v1226 = vunpack.c.h.b16 %v118
  %v1227 = vunpack.c.l.b16 %v119
  %v1228 = vunpack.c.l.b16 %v120
  %v1229 = vunpack.c.h.b16 %v120
  %v1230 = vunpack.c.l.b16 %v121
  %v1231 = vunpack.c.h.b16 %v121
  %v1232 = vunpack.c.l.b16 %v122
  %v1233 = vunpack.c.h.b16 %v122
  %v1234 = vunpack.c.l.b16 %v123
  %v1235 = vunpack.c.h.b16 %v123
  %v1236 = vunpack.c.l.b16 %v124
  %v1237 = vunpack.c.l.b16 %v125
  %v1238 = vunpack.c.h.b16 %v125
  %v1239 = vunpack.c.l.b16 %v126
  %v1240 = vunpack.c.h.b16 %v126
  %v1241 = vunpack.c.l.b16 %v127
  %v1242 = vunpack.c.h.b16 %v127
  %v1243 = vunpack.c.l.b16 %v128
  %v1244 = vunpack.c.h.b16 %v128
  %v1245 = vunpack.c.l.b16 %v129
  %v1246 = vunpack.c.l.b16 %v130
  %v1247 = vunpack.c.h.b16 %v130
  %v1248 = vunpack.c.l.b16 %v131
  %v1249 = vunpack.c.h.b16 %v131
  %v1250 = vunpack.c.l.b16 %v132
  %v1251 = vunpack.c.h.b16 %v132
  %v1252 = vunpack.c.l.b16 %v133
  %v1253 = vunpack.c.h.b16 %v133
  %v1254 = vunpack.c.l.b16 %v134
  %v1255 = vunpack.c.l.b16 %v135
  %v1256 = vunpack.c.h.b16 %v135
  %v1257 = vunpack.c.l.b16 %v136
  %v1258 = vunpack.c.h.b16 %v136
  %v1259 = vunpack.c.l.b16 %v137
  %v1260 = vunpack.c.h.b16 %v137
  %v1261 = vunpack.c.l.b16 %v138
  %v1262 = vunpack.c.h.b16 %v138
  %v1263 = vunpack.c.l.b16 %v139
  %v1264 = vunpack.c.l.b16 %v140
  %v1265 = vunpack.c.h.b16 %v140
  %v1266 = vunpack.c.l.b16 %v141
  %v1267 = vunpack.c.h.b16 %v141
  %v1268 = vunpack.c.l.b16 %v142
  %v1269 = vunpack.c.h.b16 %v142
  %v1270 = vunpack.c.l.b16 %v143
  %v1271 = vunpack.c.h.b16 %v143
  %v1272 = vunpack.c.l.b16 %v144
  %v1273 = vunpack.c.l.b16 %v145
  %v1274 = vunpack.c.h.b16 %v145
  %v1275 = vunpack.c.l.b16 %v146
  %v1276 = vunpack.c.h.b16 %v146
  %v1277 = vunpack.c.l.b16 %v147
  %v1278 = vunpack.c.h.b16 %v147
  %v1279 = vunpack.c.l.b16 %v148
  %v1280 = vunpack.c.h.b16 %v148
  %v1281 = vunpack.c.l.b16 %v149
  %v1282 = vunpack.c.l.b16 %v150
  %v1283 = vunpack.c.h.b16 %v150
  %v1284 = vunpack.c.l.b16 %v151
  %v1285 = vunpack.c.h.b16 %v151
  %v1286 = vunpack.c.l.b16 %v152
  %v1287 = vunpack.c.h.b16 %v152
  %v1288 = vunpack.c.l.b16 %v153
  %v1289 = vunpack.c.h.b16 %v153
  %v1290 = vunpack.c.l.b16 %v154
  %v1291 = vunpack.c.l.b16 %v155
  %v1292 = vunpack.c.h.b16 %v155
  %v1293 = vunpack.c.l.b16 %v156
  %v1294 = vunpack.c.h.b16 %v156
  %v1295 = vunpack.c.l.b16 %v157
  %v1296 = vunpack.c.h.b16 %v157
  %v1297 = vunpack.c.l.b16 %v158
  %v1298 = vunpack.c.h.b16 %v158
  %v1299 = vunpack.c.l.b16 %v159
  %v1300 = vunpack.c.l.b16 %v160
  %v1301 = vunpack.c.h.b16 %v160
  %v1302 = vunpack.c.l.b16 %v161
  %v1303 = vunpack.c.h.b16 %v161
  %v1304 = vunpack.c.l.b16 %v162
  %v1305 = vunpack.c.h.b16 %v162
  %v1306 = vunpack.c.l.b16 %v163
  %v1307 = vunpack.c.h.b16 %v163
  %v1308 = vunpack.c.l.b16 %v164
  %v1309 = vunpack.c.l.b16 %v165
  %v1310 = vunpack.c.h.b16 %v165
  %v1311 = vunpack.c.l.b16 %v166
  %v1312 = vunpack.c.h.b16 %v166
  %v1313 = vunpack.c.l.b16 %v167
  %v1314 = vunpack.c.h.b16 %v167
  %v1315 = vunpack.c.l.b16 %v168
  %v1316 = vunpack.c.h.b16 %v168
  %v1317 = vunpack.c.l.b16 %v169
  %v1318 = vunpack.c.l.b16 %v170
  %v1319 = vunpack.c.h.b16 %v170
  %v1320 = vunpack.c.l.b16 %v171
  %v1321 = vunpack.c.h.b16 %v171
  %v1322 = vunpack.c.l.b16 %v172
  %v1323 = vunpack.c.h.b16 %v172
  %v1324 = vunpack.c.l.b16 %v173
  %v1325 = vunpack.c.h.b16 %v173
  %v1326 = vunpack.c.l.b16 %v174
  %v1327 = vunpack.c.l.b16 %v175
  %v1328 = vunpack.c.h.b16 %v175
  %v1329 = vunpack.c.l.b16 %v176
  %v1330 = vunpack.c.h.b16 %v176
  %v1331 = vunpack.c.l.b16 %v177
  %v1332 = vunpack.c.h.b16 %v177
  %v1333 = vunpack.c.l.b16 %v178
  %v1334 = vunpack.c.h.b16 %v178
  %v1335 = vunpack.c.l.b16 %v179
  %v1336 = vunpack.c.l.b16 %v180
  %v1337 = vunpack.c.h.b16 %v180
  %v1338 = vunpack.c.l.b16 %v181
  %v1339 = vunpack.c.h.b16 %v181
  %v1340 = vunpack.c.l.b16 %v182
  %v1341 = vunpack.c.h.b16 %v182
  %v1342 = vunpack.c.l.b16 %v183
  %v1343 = vunpack.c.h.b16 %v183
  %v1344 = vunpack.c.l.b16 %v184
  %v1345 = vunpack.c.l.b16 %v185
  %v1346 = vunpack.c.h.b16 %v185
  %v1347 = vunpack.c.l.b16 %v186
  %v1348 = vunpack.c.h.b16 %v186
  %v1349 = vunpack.c.l.b16 %v187
  %v1350 = vunpack.c.h.b16 %v187
  %v1351 = vunpack.c.l.b16 %v188
  %v1352 = vunpack.c.h.b16 %v188
  %v1353 = vunpack.c.l.b16 %v189
  %v1354 = vunpack.c.l.b16 %v190
  %v1355 = vunpack.c.h.b16 %v190
  %v1356 = vunpack.c.l.b16 %v191
  %v1357 = vunpack.c.h.b16 %v191
  %v1358 = vunpack.c.l.b16 %v192
  %v1359 = vunpack.c.h.b16 %v192
  %v1360 = vunpack.c.l.b16 %v193
  %v1361 = vunpack.c.h.b16 %v193
  %v1362 = vunpack.c.l.b16 %v194
  %v1363 = vunpack.c.l.b16 %v195
  %v1364 = vunpack.c.h.b16 %v195
  %v1365 = vunpack.c.l.b16 %v196
  %v1366 = vunpack.c.h.b16 %v196
  %v1367 = vunpack.c.l.b16 %v197
  %v1368 = vunpack.c.h.b16 %v197
  %v1369 = vunpack.c.l.b16 %v198
  %v1370 = vunpack.c.h.b16 %v198
  %v1371 = vunpack.c.l.b16 %v199
  %v1372 = vunpack.c.l.b16 %v200
  %v1373 = vunpack.c.h.b16 %v200
  %v1374 = vunpack.c.l.b16 %v201
  %v1375 = vunpack.c.h.b16 %v201
  %v1376 = vunpack.c.l.b16 %v202
  %v1377 = vunpack.c.h.b16 %v202
  %v1378 = vunpack.c.l.b16 %v203
  %v1379 = vunpack.c.h.b16 %v203
  %v1380 = vunpack.c.l.b16 %v204
  %v1381 = vunpack.c.l.b16 %v205
  %v1382 = vunpack.c.h.b16 %v205
  %v1383 = vunpack.c.l.b16 %v206
  %v1384 = vunpack.c.h.b16 %v206
  %v1385 = vunpack.c.l.b16 %v207
  %v1386 = vunpack.c.h.b16 %v207
  %v1387 = vunpack.c.l.b16 %v208
  %v1388 = vunpack.c.h.b16 %v208
  %v1389 = vunpack.c.l.b16 %v209
  %v1390 = vunpack.c.l.b16 %v210
  %v1391 = vunpack.c.h.b16 %v210
  %v1392 = vunpack.c.l.b16 %v211
  %v1393 = vunpack.c.h.b16 %v211
  %v1394 = vunpack.c.l.b16 %v212
  %v1395 = vunpack.c.h.b16 %v212
  %v1396 = vunpack.c.l.b16 %v213
  %v1397 = vunpack.c.h.b16 %v213
  %v1398 = vunpack.c.l.b16 %v214
  %v1399 = vunpack.c.l.b16 %v215
  %v1400 = vunpack.c.h.b16 %v215
  %v1401 = vunpack.c.l.b16 %v216
  %v1402 = vunpack.c.h.b16 %v216
  %v1403 = vunpack.c.l.b16 %v217
  %v1404 = vunpack.c.h.b16 %v217
  %v1405 = vunpack.c.l.b16 %v218
  %v1406 = vunpack.c.h.b16 %v218
  %v1407 = vunpack.c.l.b16 %v219
  %v1408 = vunpack.c.l.b16 %v220
  %v1409 = vunpack.c.h.b16 %v220
  %v1410 = vunpack.c.l.b16 %v221
  %v1411 = vunpack.c.h.b16 %v221
  %v1412 = vunpack.c.l.b16 %v222
  %v1413 = vunpack.c.h.b16 %v222
  %v1414 = vunpack.c.l.b16 %v223
  %v1415 = vunpack.c.h.b16 %v223
  %v1416 = vunpack.c.l.b16 %v224
  %v1417 = vunpack.c.l.b16 %v225
  %v1418 = vunpack.c.h.b16 %v225
  %v1419 = vunpack.c.l.b16 %v226
  %v1420 = vunpack.c.h.b16 %v226
  %v1421 = vunpack.c.l.b16 %v227
  %v1422 = vunpack.c.h.b16 %v227
  %v1423 = vunpack.c.l.b16 %v228
  %v1424 = vunpack.c.h.b16 %v228
  %v1425 = vunpack.c.l.b16 %v229
  %v1426 = vunpack.c.l.b16 %v230
  %v1427 = vunpack.c.h.b16 %v230
  %v1428 = vunpack.c.l.b16 %v231
  %v1429 = vunpack.c.h.b16 %v231
  %v1430 = vunpack.c.l.b16 %v232
  %v1431 = vunpack.c.h.b16 %v232
  %v1432 = vunpack.c.l.b16 %v233
  %v1433 = vunpack.c.h.b16 %v233
  %v1434 = vunpack.c.l.b16 %v234
  %v1435 = vunpack.c.l.b16 %v235
  %v1436 = vunpack.c.h.b16 %v235
  %v1437 = vunpack.c.l.b16 %v236
  %v1438 = vunpack.c.h.b16 %v236
  %v1439 = vunpack.c.l.b16 %v237
  %v1440 = vunpack.c.h.b16 %v237
  %v1441 = vunpack.c.l.b16 %v238
  %v1442 = vunpack.c.h.b16 %v238
  %v1443 = vunpack.c.l.b16 %v239
  %v1444 = vunpack.c.l.b16 %v240
  %v1445 = vunpack.c.h.b16 %v240
  %v1446 = vunpack.c.l.b16 %v241
  %v1447 = vunpack.c.h.b16 %v241
  %v1448 = vunpack.c.l.b16 %v242
  %v1449 = vunpack.c.h.b16 %v242
  %v1450 = vunpack.c.l.b16 %v243
  %v1451 = vunpack.c.h.b16 %v243
  %v1452 = vunpack.c.l.b16 %v244
  %v1453 = vunpack.c.l.b16 %v245
  %v1454 = vunpack.c.h.b16 %v245
  %v1455 = vunpack.c.l.b16 %v246
  %v1456 = vunpack.c.h.b16 %v246
  %v1457 = vunpack.c.l.b16 %v247
  %v1458 = vunpack.c.h.b16 %v247
  %v1459 = vunpack.c.l.b16 %v248
  %v1460 = vunpack.c.h.b16 %v248
  %v1461 = vunpack.c.l.b16 %v249
  %v1462 = vunpack.c.l.b16 %v250
  %v1463 = vunpack.c.h.b16 %v250
  %v1464 = vunpack.c.l.b16 %v251
  %v1465 = vunpack.c.h.b16 %v251
  %v1466 = vunpack.c.l.b16 %v252
  %v1467 = vunpack.c.h.b16 %v252
  %v1468 = vunpack.c.l.b16 %v253
  %v1469 = vunpack.c.h.b16 %v253
  %v1470 = vunpack.c.l.b16 %v254
  %v1471 = vunpack.c.l.b16 %v255
  %v1472 = vunpack.c.h.b16 %v255
  %v1473 = vunpack.c.l.b16 %v256
  %v1474 = vunpack.c.h.b16 %v256
  %v1475 = vunpack.c.l.b16 %v257
  %v1476 = vunpack.c.h.b16 %v257
  %v1477 = vunpack.c.l.b16 %v258
  %v1478 = vunpack.c.h.b16 %v258
  %v1479 = vunpack.c.l.b16 %v259
  %v1480 = vunpack.c.l.b16 %v260
  %v1481 = vunpack.c.h.b16 %v260
  %v1482 = vunpack.c.l.b16 %v261
  %v1483 = vunpack.c.h.b16 %v261
  %v1484 = vunpack.c.l.b16 %v262
  %v1485 = vunpack.c.h.b16 %v262
  %v1486 = vunpack.c.l.b16 %v263
  %v1487 = vunpack.c.h.b16 %v263
  %v1488 = vunpack.c.l.b16 %v264
  %v1489 = vunpack.c.l.b16 %v265
  %v1490 = vunpack.c.h.b16 %v265
  %v1491 = vunpack.c.l.b16 %v266
  %v1492 = vunpack.c.h.b16 %v266
  %v1493 = vunpack.c.l.b16 %v267
  %v1494 = vunpack.c.h.b16 %v267
  %v1495 = vunpack.c.l.b16 %v268
  %v1496 = vunpack.c.h.b16 %v268
  %v1497 = vunpack.c.l.b16 %v269
  %v1498 = vunpack.c.l.b16 %v270
  %v1499 = vunpack.c.h.b16 %v270
  %v1500 = vunpack.c.l.b16 %v271
  %v1501 = vunpack.c.h.b16 %v271
  %v1502 = vunpack.c.l.b16 %v272
  %v1503 = vunpack.c.h.b16 %v272
  %v1504 = vunpack.c.l.b16 %v273
  %v1505 = vunpack.c.h.b16 %v273
  %v1506 = vunpack.c.l.b16 %v274
  %v1507 = vunpack.c.l.b16 %v275
  %v1508 = vunpack.c.h.b16 %v275
  %v1509 = vunpack.c.l.b16 %v276
  %v1510 = vunpack.c.h.b16 %v276
  %v1511 = vunpack.c.l.b16 %v277
  %v1512 = vunpack.c.h.b16 %v277
  %v1513 = vunpack.c.l.b16 %v278
  %v1514 = vunpack.c.h.b16 %v278
  %v1515 = vunpack.c.l.b16 %v279
  %v1516 = vunpack.c.l.b16 %v280
  %v1517 = vunpack.c.h.b16 %v280
  %v1518 = vunpack.c.l.b16 %v281
  %v1519 = vunpack.c.h.b16 %v281
  %v1520 = vunpack.c.l.b16 %v282
  %v1521 = vunpack.c.h.b16 %v282
  %v1522 = vunpack.c.l.b16 %v283
  %v1523 = vunpack.c.h.b16 %v283
  %v1524 = vunpack.c.l.b16 %v284
  %v1525 = vunpack.c.l.b16 %v285
  %v1526 = vunpack.c.h.b16 %v285
  %v1527 = vunpack.c.l.b16 %v286
  %v1528 = vunpack.c.h.b16 %v286
  %v1529 = vunpack.c.l.b16 %v287
  %v1530 = vunpack.c.h.b16 %v287
  %v1531 = vunpack.c.l.b16 %v288
  %v1532 = vunpack.c.h.b16 %v288
  %v1533 = vunpack.c.l.b16 %v289
  %v1534 = vunpack.c.l.b16 %v290
  %v1535 = vunpack.c.h.b16 %v290
  %v1536 = vunpack.c.l.b16 %v291
  %v1537 = vunpack.c.h.b16 %v291
  %v1538 = vunpack.c.l.b16 %v292
  %v1539 = vunpack.c.h.b16 %v292
  %v1540 = vunpack.c.l.b16 %v293
  %v1541 = vunpack.c.h.b16 %v293
  %v1542 = vunpack.c.l.b16 %v294
  %v1543 = vunpack.c.l.b16 %v295
  %v1544 = vunpack.c.h.b16 %v295
  %v1545 = vunpack.c.l.b16 %v296
  %v1546 = vunpack.c.h.b16 %v296
  %v1547 = vunpack.c.l.b16 %v297
  %v1548 = vunpack.c.h.b16 %v297
  %v1549 = vunpack.c.l.b16 %v298
  %v1550 = vunpack.c.h.b16 %v298
  %v1551 = vunpack.c.l.b16 %v299
  %v1552 = vunpack.c.l.b16 %v300
  %v1553 = vunpack.c.h.b16 %v300
  %v1554 = vunpack.c.l.b16 %v301
  %v1555 = vunpack.c.h.b16 %v301
  %v1556 = vunpack.c.l.b16 %v302
  %v1557 = vunpack.c.h.b16 %v302
  %v1558 = vunpack.c.l.b16 %v303
  %v1559 = vunpack.c.h.b16 %v303
  %v1560 = vunpack.c.l.b16 %v304
  %v1561 = vunpack.c.l.b16 %v305
  %v1562 = vunpack.c.h.b16 %v305
  %v1563 = vunpack.c.l.b16 %v306
  %v1564 = vunpack.c.h.b16 %v306
  %v1565 = vunpack.c.l.b16 %v307
  %v1566 = vunpack.c.h.b16 %v307
  %v1567 = vunpack.c.l.b16 %v308
  %v1568 = vunpack.c.h.b16 %v308
  %v1569 = vunpack.c.l.b16 %v309
  %v1570 = vunpack.c.l.b16 %v310
  %v1571 = vunpack.c.h.b16 %v310
  %v1572 = vunpack.c.l.b16 %v311
  %v1573 = vunpack.c.h.b16 %v311
  %v1574 = vunpack.c.l.b16 %v312
  %v1575 = vunpack.c.h.b16 %v312
  %v1576 = vunpack.c.l.b16 %v313
  %v1577 = vunpack.c.h.b16 %v313
  %v1578 = vunpack.c.l.b16 %v314
  %v1579 = vunpack.c.l.b16 %v315
  %v1580 = vunpack.c.h.b16 %v315
  %v1581 = vunpack.c.l.b16 %v316
  %v1582 = vunpack.c.h.b16 %v316
  %v1583 = vunpack.c.l.b16 %v317
  %v1584 = vunpack.c.h.b16 %v317
  %v1585 = vunpack.c.l.b16 %v318
  %v1586 = vunpack.c.h.b16 %v318
  %v1587 = vunpack.c.l.b16 %v319
  %v1588 = vunpack.c.l.b16 %v320
  %v1589 = vunpack.c.h.b16 %v320
  %v1590 = vunpack.c.l.b16 %v321
  %v1591 = vunpack.c.h.b16 %v321
  %v1592 = vunpack.c.l.b16 %v322
  %v1593 = vunpack.c.h.b16 %v322
  %v1594 = vunpack.c.l.b16 %v323
  %v1595 = vunpack.c.h.b16 %v323
  %v1596 = vunpack.c.l.b16 %v324
  %v1597 = vunpack.c.l.b16 %v325
  %v1598 = vunpack.c.h.b16 %v325
  %v1599 = vunpack.c.l.b16 %v326
  %v1600 = vunpack.c.h.b16 %v326
  %v1601 = vunpack.c.l.b16 %v327
  %v1602 = vunpack.c.h.b16 %v327
  %v1603 = vunpack.c.l.b16 %v328
  %v1604 = vunpack.c.h.b16 %v328
  %v1605 = vunpack.c.l.b16 %v329
  %v1606 = vunpack.c.l.b16 %v330
  %v1607 = vunpack.c.h.b16 %v330
  %v1608 = vunpack.c.l.b16 %v331
  %v1609 = vunpack.c.h.b16 %v331
  %v1610 = vunpack.c.l.b16 %v332
  %v1611 = vunpack.c.h.b16 %v332
  %v1612 = vunpack.c.l.b16 %v333
  %v1613 = vunpack.c.h.b16 %v333
  %v1614 = vunpack.c.l.b16 %v334
  %v1615 = vunpack.c.l.b16 %v335
  %v1616 = vunpack.c.h.b16 %v335
  %v1617 = vunpack.c.l.b16 %v336
  %v1618 = vunpack.c.h.b16 %v336
  %v1619 = vunpack.c.l.b16 %v337
  %v1620 = vunpack.c.h.b16 %v337
  %v1621 = vunpack.c.l.b16 %v338
  %v1622 = vunpack.c.h.b16 %v338
  %v1623 = vunpack.c.l.b16 %v339
  %v1624 = vunpack.c.l.b16 %v340
  %v1625 = vunpack.c.h.b16 %v340
  %v1626 = vunpack.c.l.b16 %v341
  %v1627 = vunpack.c.h.b16 %v341
  %v1628 = vunpack.c.l.b16 %v342
  %v1629 = vunpack.c.h.b16 %v342
  %v1630 = vunpack.c.l.b16 %v343
  %v1631 = vunpack.c.h.b16 %v343
  %v1632 = vunpack.c.l.b16 %v344
  %v1633 = vunpack.c.l.b16 %v345
  %v1634 = vunpack.c.h.b16 %v345
  %v1635 = vunpack.c.l.b16 %v346
  %v1636 = vunpack.c.h.b16 %v346
  %v1637 = vunpack.c.l.b16 %v347
  %v1638 = vunpack.c.h.b16 %v347
  %v1639 = vunpack.c.l.b16 %v348
  %v1640 = vunpack.c.h.b16 %v348
  %v1641 = vunpack.c.l.b16 %v349
  %v1642 = vunpack.c.l.b16 %v350
  %v1643 = vunpack.c.h.b16 %v350
  %v1644 = vunpack.c.l.b16 %v351
  %v1645 = vunpack.c.h.b16 %v351
  %v1646 = vunpack.c.l.b16 %v352
  %v1647 = vunpack.c.h.b16 %v352
  %v1648 = vunpack.c.l.b16 %v353
  %v1649 = vunpack.c.h.b16 %v353
  %v1650 = vunpack.c.l.b16 %v354
  %v1651 = vunpack.c.l.b16 %v355
  %v1652 = vunpack.c.h.b16 %v355
  %v1653 = vunpack.c.l.b16 %v356
  %v1654 = vunpack.c.h.b16 %v356
  %v1655 = vunpack.c.l.b16 %v357
  %v1656 = vunpack.c.h.b16 %v357
  %v1657 = vunpack.c.l.b16 %v358
  %v1658 = vunpack.c.h.b16 %v358
  %v1659 = vunpack.c.l.b16 %v359
  %v1660 = vunpack.c.l.b16 %v360
  %v1661 = vunpack.c.h.b16 %v360
  %v1662 = vunpack.c.l.b16 %v361
  %v1663 = vunpack.c.h.b16 %v361
  %v1664 = vunpack.c.l.b16 %v362
  %v1665 = vunpack.c.h.b16 %v362
  %v1666 = vunpack.c.l.b16 %v363
  %v1667 = vunpack.c.h.b16 %v363
  %v1668 = vunpack.c.l.b16 %v364
  %v1669 = vunpack.c.l.b16 %v365
  %v1670 = vunpack.c.h.b16 %v365
  %v1671 = vunpack.c.l.b16 %v366
  %v1672 = vunpack.c.h.b16 %v366
  %v1673 = vunpack.c.l.b16 %v367
  %v1674 = vunpack.c.h.b16 %v367
  %v1675 = vunpack.c.l.b16 %v368
  %v1676 = vunpack.c.h.b16 %v368
  %v1677 = vunpack.c.l.b16 %v369
  %v1678 = vunpack.c.l.b16 %v370
  %v1679 = vunpack.c.h.b16 %v370
  %v1680 = vunpack.c.l.b16 %v371
  %v1681 = vunpack.c.h.b16 %v371
  %v1682 = vunpack.c.l.b16 %v372
  %v1683 = vunpack.c.h.b16 %v372
  %v1684 = vunpack.c.l.b16 %v373
  %v1685 = vunpack.c.h.b16 %v373
  %v1686 = vunpack.c.l.b16 %v374
  %v1687 = vunpack.c.l.b16 %v375
  %v1688 = vunpack.c.h.b16 %v375
  %v1689 = vunpack.c.l.b16 %v376
  %v1690 = vunpack.c.h.b16 %v376
  %v1691 = vunpack.c.l.b16 %v377
  %v1692 = vunpack.c.h.b16 %v377
  %v1693 = vunpack.c.l.b16 %v378
  %v1694 = vunpack.c.h.b16 %v378
  %v1695 = vunpack.c.l.b16 %v379
  %v1696 = vunpack.c.l.b16 %v380
  %v1697 = vunpack.c.h.b16 %v380
  %v1698 = vunpack.c.l.b16 %v381
  %v1699 = vunpack.c.h.b16 %v381
  %v1700 = vunpack.c.l.b16 %v382
  %v1701 = vunpack.c.h.b16 %v382
  %v1702 = vunpack.c.l.b16 %v383
  %v1703 = vunpack.c.h.b16 %v383
  %v1704 = vunpack.c.l.b16 %v384
  %v1705 = vunpack.c.l.b16 %v385
  %v1706 = vunpack.c.h.b16 %v385
  %v1707 = vunpack.c.l.b16 %v386
  %v1708 = vunpack.c.h.b16 %v386
  %v1709 = vunpack.c.l.b16 %v387
  %v1710 = vunpack.c.h.b16 %v387
  %v1711 = vunpack.c.l.b16 %v388
  %v1712 = vunpack.c.h.b16 %v388
  %v1713 = vunpack.c.l.b16 %v389
  %v1714 = vunpack.c.l.b16 %v390
  %v1715 = vunpack.c.h.b16 %v390
  %v1716 = vunpack.c.l.b16 %v391
  %v1717 = vunpack.c.h.b16 %v391
  %v1718 = vunpack.c.l.b16 %v392
  %v1719 = vunpack.c.h.b16 %v392
  %v1720 = vunpack.c.l.b16 %v393
  %v1721 = vunpack.c.h.b16 %v393
  %v1722 = vunpack.c.l.b16 %v394
  %v1723 = vunpack.c.l.b16 %v395
  %v1724 = vunpack.c.h.b16 %v395
  %v1725 = vunpack.c.l.b16 %v396
  %v1726 = vunpack.c.h.b16 %v396
  %v1727 = vunpack.c.l.b16 %v397
  %v1728 = vunpack.c.h.b16 %v397
  %v1729 = vunpack.c.l.b16 %v398
  %v1730 = vunpack.c.h.b16 %v398
  %v1731 = vunpack.c.l.b16 %v399
  %v1732 = vunpack.c.l.b16 %v400
  %v1733 = vunpack.c.h.b16 %v400
  %v1734 = vunpack.c.l.b16 %v401
  %v1735 = vunpack.c.h.b16 %v401
  %v1736 = vunpack.c.l.b16 %v402
  %v1737 = vunpack.c.h.b16 %v402
  %v1738 = vunpack.c.l.b16 %v403
  %v1739 = vunpack.c.h.b16 %v403
  %v1740 = vunpack.c.l.b16 %v404
  %v1741 = vunpack.c.l.b16 %v405
  %v1742 = vunpack.c.h.b16 %v405
  %v1743 = vunpack.c.l.b16 %v406
  %v1744 = vunpack.c.h.b16 %v406
  %v1745 = vunpack.c.l.b16 %v407
  %v1746 = vunpack.c.h.b16 %v407
  %v1747 = vunpack.c.l.b16 %v408
  %v1748 = vunpack.c.h.b16 %v408
  %v1749 = vunpack.c.l.b16 %v409
  %v1750 = vunpack.c.l.b16 %v410
  %v1751 = vunpack.c.h.b16 %v410
  %v1752 = vunpack.c.l.b16 %v411
  %v1753 = vunpack.c.h.b16 %v411
  %v1754 = vunpack.c.l.b16 %v412
  %v1755 = vunpack.c.h.b16 %v412
  %v1756 = vunpack.c.l.b16 %v413
  %v1757 = vunpack.c.h.b16 %v413
  %v1758 = vunpack.c.l.b16 %v414
  %v1759 = vunpack.c.l.b16 %v415
  %v1760 = vunpack.c.h.b16 %v415
  %v1761 = vunpack.c.l.b16 %v416
  %v1762 = vunpack.c.h.b16 %v416
  %v1763 = vunpack.c.l.b16 %v417
  %v1764 = vunpack.c.h.b16 %v417
  %v1765 = vunpack.c.l.b16 %v418
  %v1766 = vunpack.c.h.b16 %v418
  %v1767 = vunpack.c.l.b16 %v419
  %v1768 = vunpack.c.l.b16 %v420
  %v1769 = vunpack.c.h.b16 %v420
  %v1770 = vunpack.c.l.b16 %v421
  %v1771 = vunpack.c.h.b16 %v421
  %v1772 = vunpack.c.l.b16 %v422
  %v1773 = vunpack.c.h.b16 %v422
  %v1774 = vunpack.c.l.b16 %v423
  %v1775 = vunpack.c.h.b16 %v423
  %v1776 = vunpack.c.l.b16 %v424
  %v1777 = vunpack.c.l.b16 %v425
  %v1778 = vunpack.c.h.b16 %v425
  %v1779 = vunpack.c.l.b16 %v426
  %v1780 = vunpack.c.h.b16 %v426
  %v1781 = vunpack.c.l.b16 %v427
  %v1782 = vunpack.c.h.b16 %v427
  %v1783 = vunpack.c.l.b16 %v428
  %v1784 = vunpack.c.h.b16 %v428
  %v1785 = vunpack.c.l.b16 %v429
  %v1786 = vunpack.c.l.b16 %v430
  %v1787 = vunpack.c.h.b16 %v430
  %v1788 = vunpack.c.l.b16 %v431
  %v1789 = vunpack.c.h.b16 %v431
  %v1790 = vunpack.c.l.b16 %v432
  %v1791 = vunpack.c.h.b16 %v432
  %v1792 = vunpack.c.l.b16 %v433
  %v1793 = vunpack.c.h.b16 %v433
  %v1794 = vunpack.c.l.b16 %v434
  %v1795 = vunpack.c.l.b16 %v435
  %v1796 = vunpack.c.h.b16 %v435
  %v1797 = vunpack.c.l.b16 %v436
  %v1798 = vunpack.c.h.b16 %v436
  %v1799 = vunpack.c.l.b16 %v437
  %v1800 = vunpack.c.h.b16 %v437
  %v1801 = vunpack.c.l.b16 %v438
  %v1802 = vunpack.c.h.b16 %v438
  %v1803 = vunpack.c.l.b16 %v439
  %v1804 = vunpack.c.l.b16 %v440
  %v1805 = vunpack.c.h.b16 %v440
  %v1806 = vunpack.c.l.b16 %v441
  %v1807 = vunpack.c.h.b16 %v441
  %v1808 = vunpack.c.l.b16 %v442
  %v1809 = vunpack.c.h.b16 %v442
  %v1810 = vunpack.c.l.b16 %v443
  %v1811 = vunpack.c.h.b16 %v443
  %v1812 = vunpack.c.l.b16 %v444
  %v1813 = vunpack.c.l.b16 %v445
  %v1814 = vunpack.c.h.b16 %v445
  %v1815 = vunpack.c.l.b16 %v446
  %v1816 = vunpack.c.h.b16 %v446
  %v1817 = vunpack.c.l.b16 %v447
  %v1818 = vunpack.c.h.b16 %v447
  %v1819 = vunpack.c.l.b16 %v448
  %v1820 = vunpack.c.h.b16 %v448
  %v1821 = vunpack.c.l.b16 %v449
  %v1822 = vunpack.c.l.b16 %v450
  %v1823 = vunpack.c.h.b16 %v450
  %v1824 = vunpack.c.l.b16 %v451
  %v1825 = vunpack.c.h.b16 %v451
  %v1826 = vunpack.c.l.b16 %v452
  %v1827 = vunpack.c.h.b16 %v452
  %v1828 = vunpack.c.l.b16 %v453
  %v1829 = vunpack.c.h.b16 %v453
  %v1830 = vunpack.c.l.b16 %v454
  %v1831 = vpack.c.b16 %v1048, %v1039
  %v1832 = vpack.c.b16 %v1049, %v1040
  %v1833 = vpack.c.b16 %v1050, %v1041
  %v1834 = vpack.c.b16 %v1051, %v1042
  %v1835 = vpack.c.b16 %v1052, %v1043
  %v1836 = vpack.c.b16 %v1053, %v1044
  %v1837 = vpack.c.b16 %v1054, %v1045
  %v1838 = vpack.c.b16 %v1055, %v1046
  %v1839 = vpack.c.b16 %v1056, %v1047
  %v1840 = vpack.c.b16 %v1066, %v1057
  %v1841 = vpack.c.b16 %v1067, %v1058
  %v1842 = vpack.c.b16 %v1068, %v1059
  %v1843 = vpack.c.b16 %v1069, %v1060
  %v1844 = vpack.c.b16 %v1070, %v1061
  %v1845 = vpack.c.b16 %v1071, %v1062
  %v1846 = vpack.c.b16 %v1072, %v1063
  %v1847 = vpack.c.b16 %v1073, %v1064
  %v1848 = vpack.c.b16 %v1074, %v1065
  %v1849 = vpack.c.b16 %v1084, %v1075
  %v1850 = vpack.c.b16 %v1085, %v1076
  %v1851 = vpack.c.b16 %v1086, %v1077
  %v1852 = vpack.c.b16 %v1087, %v1078
  %v1853 = vpack.c.b16 %v1088, %v1079
  %v1854 = vpack.c.b16 %v1089, %v1080
  %v1855 = vpack.c.b16 %v1090, %v1081
  %v1856 = vpack.c.b16 %v1091, %v1082
  %v1857 = vpack.c.b16 %v1092, %v1083
  %v1858 = vpack.c.b16 %v1102, %v1093
  %v1859 = vpack.c.b16 %v1103, %v1094
  %v1860 = vpack.c.b16 %v1104, %v1095
  %v1861 = vpack.c.b16 %v1105, %v1096
  %v1862 = vpack.c.b16 %v1106, %v1097
  %v1863 = vpack.c.b16 %v1107, %v1098
  %v1864 = vpack.c.b16 %v1108, %v1099
  %v1865 = vpack.c.b16 %v1109, %v1100
  %v1866 = vpack.c.b16 %v1110, %v1101
  %v1867 = vpack.c.b16 %v1120, %v1111
  %v1868 = vpack.c.b16 %v1121, %v1112
  %v1869 = vpack.c.b16 %v1122, %v1113
  %v1870 = vpack.c.b16 %v1123, %v1114
  %v1871 = vpack.c.b16 %v1124, %v1115
  %v1872 = vpack.c.b16 %v1125, %v1116
  %v1873 = vpack.c.b16 %v1126, %v1117
  %v1874 = vpack.c.b16 %v1127, %v1118
  %v1875 = vpack.c.b16 %v1128, %v1119
  %v1876 = vpack.c.b16 %v1138, %v1129
  %v1877 = vpack.c.b16 %v1139, %v1130
  %v1878 = vpack.c.b16 %v1140, %v1131
  %v1879 = vpack.c.b16 %v1141, %v1132
  %v1880 = vpack.c.b16 %v1142, %v1133
  %v1881 = vpack.c.b16 %v1143, %v1134
  %v1882 = vpack.c.b16 %v1144, %v1135
  %v1883 = vpack.c.b16 %v1145, %v1136
  %v1884 = vpack.c.b16 %v1146, %v1137
  %v1885 = vpack.c.b16 %v1156, %v1147
  %v1886 = vpack.c.b16 %v1157, %v1148
  %v1887 = vpack.c.b16 %v1158, %v1149
  %v1888 = vpack.c.b16 %v1159, %v1150
  %v1889 = vpack.c.b16 %v1160, %v1151
  %v1890 = vpack.c.b16 %v1161, %v1152
  %v1891 = vpack.c.b16 %v1162, %v1153
  %v1892 = vpack.c.b16 %v1163, %v1154
  %v1893 = vpack.c.b16 %v1164, %v1155
  %v1894 = vpack.c.b16 %v1174, %v1165
  %v1895 = vpack.c.b16 %v1175, %v1166
  %v1896 = vpack.c.b16 %v1176, %v1167
  %v1897 = vpack.c.b16 %v1177, %v1168
  %v1898 = vpack.c.b16 %v1178, %v1169
  %v1899 = vpack.c.b16 %v1179, %v1170
  %v1900 = vpack.c.b16 %v1180, %v1171
  %v1901 = vpack.c.b16 %v1181, %v1172
  %v1902 = vpack.c.b16 %v1182, %v1173
  %v1903 = vpack.c.b16 %v1192, %v1183
  %v1904 = vpack.c.b16 %v1193, %v1184
  %v1905 = vpack.c.b16 %v1194, %v1185
  %v1906 = vpack.c.b16 %v1195, %v1186
  %v1907 = vpack.c.b16 %v1196, %v1187
  %v1908 = vpack.c.b16 %v1197, %v1188
  %v1909 = vpack.c.b16 %v1198, %v1189
  %v1910 = vpack.c.b16 %v1199, %v1190
  %v1911 = vpack.c.b16 %v1200, %v1191
  %v1912 = vpack.c.b16 %v1210, %v1201
  %v1913 = vpack.c.b16 %v1211, %v1202
  %v1914 = vpack.c.b16 %v1212, %v1203
  %v1915 = vpack.c.b16 %v1213, %v1204
  %v1916 = vpack.c.b16 %v1214, %v1205
  %v1917 = vpack.c.b16 %v1215, %v1206
  %v1918 = vpack.c.b16 %v1216, %v1207
  %v1919 = vpack.c.b16 %v1217, %v1208
  %v1920 = vpack.c.b16 %v1218, %v1209
  %v1921 = vpack.c.b16 %v1228, %v1219
  %v1922 = vpack.c.b16 %v1229, %v1220
  %v1923 = vpack.c.b16 %v1230, %v1221
  %v1924 = vpack.c.b16 %v1231, %v1222
  %v1925 = vpack.c.b16 %v1232, %v1223
  %v1926 = vpack.c.b16 %v1233, %v1224
  %v1927 = vpack.c.b16 %v1234, %v1225
  %v1928 = vpack.c.b16 %v1235, %v1226
  %v1929 = vpack.c.b16 %v1236, %v1227
  %v1930 = vpack.c.b16 %v1246, %v1237
  %v1931 = vpack.c.b16 %v1247, %v1238
  %v1932 = vpack.c.b16 %v1248, %v1239
  %v1933 = vpack.c.b16 %v1249, %v1240
  %v1934 = vpack.c.b16 %v1250, %v1241
  %v1935 = vpack.c.b16 %v1251, %v1242
  %v1936 = vpack.c.b16 %v1252, %v1243
  %v1937 = vpack.c.b16 %v1253, %v1244
  %v1938 = vpack.c.b16 %v1254, %v1245
  %v1939 = vpack.c.b16 %v1264, %v1255
  %v1940 = vpack.c.b16 %v1265, %v1256
  %v1941 = vpack.c.b16 %v1266, %v1257
  %v1942 = vpack.c.b16 %v1267, %v1258
  %v1943 = vpack.c.b16 %v1268, %v1259
  %v1944 = vpack.c.b16 %v1269, %v1260
  %v1945 = vpack.c.b16 %v1270, %v1261
  %v1946 = vpack.c.b16 %v1271, %v1262
  %v1947 = vpack.c.b16 %v1272, %v1263
  %v1948 = vpack.c.b16 %v1282, %v1273
  %v1949 = vpack.c.b16 %v1283, %v1274
  %v1950 = vpack.c.b16 %v1284, %v1275
  %v1951 = vpack.c.b16 %v1285, %v1276
  %v1952 = vpack.c.b16 %v1286, %v1277
  %v1953 = vpack.c.b16 %v1287, %v1278
  %v1954 = vpack.c.b16 %v1288, %v1279
  %v1955 = vpack.c.b16 %v1289, %v1280
  %v1956 = vpack.c.b16 %v1290, %v1281
  %v1957 = vpack.c.b16 %v1300, %v1291
  %v1958 = vpack.c.b16 %v1301, %v1292
  %v1959 = vpack.c.b16 %v1302, %v1293
  %v1960 = vpack.c.b16 %v1303, %v1294
  %v1961 = vpack.c.b16 %v1304, %v1295
  %v1962 = vpack.c.b16 %v1305, %v1296
  %v1963 = vpack.c.b16 %v1306, %v1297
  %v1964 = vpack.c.b16 %v1307, %v1298
  %v1965 = vpack.c.b16 %v1308, %v1299
  %v1966 = vpack.c.b16 %v1318, %v1309
  %v1967 = vpack.c.b16 %v1319, %v1310
  %v1968 = vpack.c.b16 %v1320, %v1311
  %v1969 = vpack.c.b16 %v1321, %v1312
  %v1970 = vpack.c.b16 %v1322, %v1313
  %v1971 = vpack.c.b16 %v1323, %v1314
  %v1972 = vpack.c.b16 %v1324, %v1315
  %v1973 = vpack.c.b16 %v1325, %v1316
  %v1974 = vpack.c.b16 %v1326, %v1317
  %v1975 = vpack.c.b16 %v1336, %v1327
  %v1976 = vpack.c.b16 %v1337, %v1328
  %v1977 = vpack.c.b16 %v1338, %v1329
  %v1978 = vpack.c.b16 %v1339, %v1330
  %v1979 = vpack.c.b16 %v1340, %v1331
  %v1980 = vpack.c.b16 %v1341, %v1332
  %v1981 = vpack.c.b16 %v1342, %v1333
  %v1982 = vpack.c.b16 %v1343, %v1334
  %v1983 = vpack.c.b16 %v1344, %v1335
  %v1984 = vpack.c.b16 %v1354, %v1345
  %v1985 = vpack.c.b16 %v1355, %v1346
  %v1986 = vpack.c.b16 %v1356, %v1347
  %v1987 = vpack.c.b16 %v1357, %v1348
  %v1988 = vpack.c.b16 %v1358, %v1349
  %v1989 = vpack.c.b16 %v1359, %v1350
  %v1990 = vpack.c.b16 %v1360, %v1351
  %v1991 = vpack.c.b16 %v1361, %v1352
  %v1992 = vpack.c.b16 %v1362, %v1353
  %v1993 = vpack.c.b16 %v1372, %v1363
  %v1994 = vpack.c.b16 %v1373, %v1364
  %v1995 = vpack.c.b16 %v1374, %v1365
  %v1996 = vpack.c.b16 %v1375, %v1366
  %v1997 = vpack.c.b16 %v1376, %v1367
  %v1998 = vpack.c.b16 %v1377, %v1368
  %v1999 = vpack.c.b16 %v1378, %v1369
  %v2000 = vpack.c.b16 %v1379, %v1370
  %v2001 = vpack.c.b16 %v1380, %v1371
  %v2002 = vpack.c.b16 %v1390, %v1381
  %v2003 = vpack.c.b16 %v1391, %v1382
  %v2004 = vpack.c.b16 %v1392, %v1383
  %v2005 = vpack.c.b16 %v1393, %v1384
  %v2006 = vpack.c.b16 %v1394, %v1385
  %v2007 = vpack.c.b16 %v1395, %v1386
  %v2008 = vpack.c.b16 %v1396, %v1387
  %v2009 = vpack.c.b16 %v1397, %v1388
  %v2010 = vpack.c.b16 %v1398, %v1389
  %v2011 = vpack.c.b16 %v1408, %v1399
  %v2012 = vpack.c.b16 %v1409, %v1400
  %v2013 = vpack.c.b16 %v1410, %v1401
  %v2014 = vpack.c.b16 %v1411, %v1402
  %v2015 = vpack.c.b16 %v1412, %v1403
  %v2016 = vpack.c.b16 %v1413, %v1404
  %v2017 = vpack.c.b16 %v1414, %v1405
  %v2018 = vpack.c.b16 %v1415, %v1406
  %v2019 = vpack.c.b16 %v1416, %v1407
  %v2020 = vpack.c.b16 %v1426, %v1417
  %v2021 = vpack.c.b16 %v1427, %v1418
  %v2022 = vpack.c.b16 %v1428, %v1419
  %v2023 = vpack.c.b16 %v1429, %v1420
  %v2024 = vpack.c.b16 %v1430, %v1421
  %v2025 = vpack.c.b16 %v1431, %v1422
  %v2026 = vpack.c.b16 %v1432, %v1423
  %v2027 = vpack.c.b16 %v1433, %v1424
  %v2028 = vpack.c.b16 %v1434, %v1425
  %v2029 = vpack.c.b16 %v1444, %v1435
  %v2030 = vpack.c.b16 %v1445, %v1436
  %v2031 = vpack.c.b16 %v1446, %v1437
  %v2032 = vpack.c.b16 %v1447, %v1438
  %v2033 = vpack.c.b16 %v1448, %v1439
  %v2034 = vpack.c.b16 %v1449, %v1440
  %v2035 = vpack.c.b16 %v1450, %v1441
  %v2036 = vpack.c.b16 %v1451, %v1442
  %v2037 = vpack.c.b16 %v1452, %v1443
  %v2038 = vpack.c.b16 %v1462, %v1453
  %v2039 = vpack.c.b16 %v1463, %v1454
  %v2040 = vpack.c.b16 %v1464, %v1455
  %v2041 = vpack.c.b16 %v1465, %v1456
  %v2042 = vpack.c.b16 %v1466, %v1457
  %v2043 = vpack.c.b16 %v1467, %v1458
  %v2044 = vpack.c.b16 %v1468, %v1459
  %v2045 = vpack.c.b16 %v1469, %v1460
  %v2046 = vpack.c.b16 %v1470, %v1461
  %v2047 = vpack.c.b16 %v1480, %v1471
  %v2048 = vpack.c.b16 %v1481, %v1472
  %v2049 = vpack.c.b16 %v1482, %v1473
  %v2050 = vpack.c.b16 %v1483, %v1474
  %v2051 = vpack.c.b16 %v1484, %v1475
  %v2052 = vpack.c.b16 %v1485, %v1476
  %v2053 = vpack.c.b16 %v1486, %v1477
  %v2054 = vpack.c.b16 %v1487, %v1478
  %v2055 = vpack.c.b16 %v1488, %v1479
  %v2056 = vpack.c.b16 %v1498, %v1489
  %v2057 = vpack.c.b16 %v1499, %v1490
  %v2058 = vpack.c.b16 %v1500, %v1491
  %v2059 = vpack.c.b16 %v1501, %v1492
  %v2060 = vpack.c.b16 %v1502, %v1493
  %v2061 = vpack.c.b16 %v1503, %v1494
  %v2062 = vpack.c.b16 %v1504, %v1495
  %v2063 = vpack.c.b16 %v1505, %v1496
  %v2064 = vpack.c.b16 %v1506, %v1497
  %v2065 = vpack.c.b16 %v1516, %v1507
  %v2066 = vpack.c.b16 %v1517, %v1508
  %v2067 = vpack.c.b16 %v1518, %v1509
  %v2068 = vpack.c.b16 %v1519, %v1510
  %v2069 = vpack.c.b16 %v1520, %v1511
  %v2070 = vpack.c.b16 %v1521, %v1512
  %v2071 = vpack.c.b16 %v1522, %v1513
  %v2072 = vpack.c.b16 %v1523, %v1514
  %v2073 = vpack.c.b16 %v1524, %v1515
  %v2074 = vpack.c.b16 %v1534, %v1525
  %v2075 = vpack.c.b16 %v1535, %v1526
  %v2076 = vpack.c.b16 %v1536, %v1527
  %v2077 = vpack.c.b16 %v1537, %v1528
  %v2078 = vpack.c.b16 %v1538, %v1529
  %v2079 = vpack.c.b16 %v1539, %v1530
  %v2080 = vpack.c.b16 %v1540, %v1531
  %v2081 = vpack.c.b16 %v1541, %v1532
  %v2082 = vpack.c.b16 %v1542, %v1533
  %v2083 = vpack.c.b16 %v1552, %v1543
  %v2084 = vpack.c.b16 %v1553, %v1544
  %v2085 = vpack.c.b16 %v1554, %v1545
  %v2086 = vpack.c.b16 %v1555, %v1546
  %v2087 = vpack.c.b16 %v1556, %v1547
  %v2088 = vpack.c.b16 %v1557, %v1548
  %v2089 = vpack.c.b16 %v1558, %v1549
  %v2090 = vpack.c.b16 %v1559, %v1550
  %v2091 = vpack.c.b16 %v1560, %v1551
  %v2092 = vpack.c.b16 %v1570, %v1561
  %v2093 = vpack.c.b16 %v1571, %v1562
  %v2094 = vpack.c.b16 %v1572, %v1563
  %v2095 = vpack.c.b16 %v1573, %v1564
  %v2096 = vpack.c.b16 %v1574, %v1565
  %v2097 = vpack.c.b16 %v1575, %v1566
  %v2098 = vpack.c.b16 %v1576, %v1567
  %v2099 = vpack.c.b16 %v1577, %v1568
  %v2100 = vpack.c.b16 %v1578, %v1569
  %v2101 = vpack.c.b16 %v1588, %v1579
  %v2102 = vpack.c.b16 %v1589, %v1580
  %v2103 = vpack.c.b16 %v1590, %v1581
  %v2104 = vpack.c.b16 %v1591, %v1582
  %v2105 = vpack.c.b16 %v1592, %v1583
  %v2106 = vpack.c.b16 %v1593, %v1584
  %v2107 = vpack.c.b16 %v1594, %v1585
  %v2108 = vpack.c.b16 %v1595, %v1586
  %v2109 = vpack.c.b16 %v1596, %v1587
  %v2110 = vpack.c.b16 %v1606, %v1597
  %v2111 = vpack.c.b16 %v1607, %v1598
  %v2112 = vpack.c.b16 %v1608, %v1599
  %v2113 = vpack.c.b16 %v1609, %v1600
  %v2114 = vpack.c.b16 %v1610, %v1601
  %v2115 = vpack.c.b16 %v1611, %v1602
  %v2116 = vpack.c.b16 %v1612, %v1603
  %v2117 = vpack.c.b16 %v1613, %v1604
  %v2118 = vpack.c.b16 %v1614, %v1605
  %v2119 = vpack.c.b16 %v1624, %v1615
  %v2120 = vpack.c.b16 %v1625, %v1616
  %v2121 = vpack.c.b16 %v1626, %v1617
  %v2122 = vpack.c.b16 %v1627, %v1618
  %v2123 = vpack.c.b16 %v1628, %v1619
  %v2124 = vpack.c.b16 %v1629, %v1620
  %v2125 = vpack.c.b16 %v1630, %v1621
  %v2126 = vpack.c.b16 %v1631, %v1622
  %v2127 = vpack.c.b16 %v1632, %v1623
  %v2128 = vpack.c.b16 %v1642, %v1633
  %v2129 = vpack.c.b16 %v1643, %v1634
  %v2130 = vpack.c.b16 %v1644, %v1635
  %v2131 = vpack.c.b16 %v1645, %v1636
  %v2132 = vpack.c.b16 %v1646, %v1637
  %v2133 = vpack.c.b16 %v1647, %v1638
  %v2134 = vpack.c.b16 %v1648, %v1639
  %v2135 = vpack.c.b16 %v1649, %v1640
  %v2136 = vpack.c.b16 %v1650, %v1641
  %v2137 = vpack.c.b16 %v1660, %v1651
  %v2138 = vpack.c.b16 %v1661, %v1652
  %v2139 = vpack.c.b16 %v1662, %v1653
  %v2140 = vpack.c.b16 %v1663, %v1654
  %v2141 = vpack.c.b16 %v1664, %v1655
  %v2142 = vpack.c.b16 %v1665, %v1656
  %v2143 = vpack.c.b16 %v1666, %v1657
  %v2144 = vpack.c.b16 %v1667, %v1658
  %v2145 = vpack.c.b16 %v1668, %v1659
  %v2146 = vpack.c.b16 %v1678, %v1669
  %v2147 = vpack.c.b16 %v1679, %v1670
  %v2148 = vpack.c.b16 %v1680, %v1671
  %v2149 = vpack.c.b16 %v1681, %v1672
  %v2150 = vpack.c.b16 %v1682, %v1673
  %v2151 = vpack.c.b16 %v1683, %v1674
  %v2152 = vpack.c.b16 %v1684, %v1675
  %v2153 = vpack.c.b16 %v1685, %v1676
  %v2154 = vpack.c.b16 %v1686, %v1677
  %v2155 = vpack.c.b16 %v1696, %v1687
  %v2156 = vpack.c.b16 %v1697, %v1688
  %v2157 = vpack.c.b16 %v1698, %v1689
  %v2158 = vpack.c.b16 %v1699, %v1690
  %v2159 = vpack.c.b16 %v1700, %v1691
  %v2160 = vpack.c.b16 %v1701, %v1692
  %v2161 = vpack.c.b16 %v1702, %v1693
  %v2162 = vpack.c.b16 %v1703, %v1694
  %v2163 = vpack.c.b16 %v1704, %v1695
  %v2164 = vpack.c.b16 %v1714, %v1705
  %v2165 = vpack.c.b16 %v1715, %v1706
  %v2166 = vpack.c.b16 %v1716, %v1707
  %v2167 = vpack.c.b16 %v1717, %v1708
  %v2168 = vpack.c.b16 %v1718, %v1709
  %v2169 = vpack.c.b16 %v1719, %v1710
  %v2170 = vpack.c.b16 %v1720, %v1711
  %v2171 = vpack.c.b16 %v1721, %v1712
  %v2172 = vpack.c.b16 %v1722, %v1713
  %v2173 = vpack.c.b16 %v1732, %v1723
  %v2174 = vpack.c.b16 %v1733, %v1724
  %v2175 = vpack.c.b16 %v1734, %v1725
  %v2176 = vpack.c.b16 %v1735, %v1726
  %v2177 = vpack.c.b16 %v1736, %v1727
  %v2178 = vpack.c.b16 %v1737, %v1728
  %v2179 = vpack.c.b16 %v1738, %v1729
  %v2180 = vpack.c.b16 %v1739, %v1730
  %v2181 = vpack.c.b16 %v1740, %v1731
  %v2182 = vpack.c.b16 %v1750, %v1741
  %v2183 = vpack.c.b16 %v1751, %v1742
  %v2184 = vpack.c.b16 %v1752, %v1743
  %v2185 = vpack.c.b16 %v1753, %v1744
  %v2186 = vpack.c.b16 %v1754, %v1745
  %v2187 = vpack.c.b16 %v1755, %v1746
  %v2188 = vpack.c.b16 %v1756, %v1747
  %v2189 = vpack.c.b16 %v1757, %v1748
  %v2190 = vpack.c.b16 %v1758, %v1749
  %v2191 = vpack.c.b16 %v1768, %v1759
  %v2192 = vpack.c.b16 %v1769, %v1760
  %v2193 = vpack.c.b16 %v1770, %v1761
  %v2194 = vpack.c.b16 %v1771, %v1762
  %v2195 = vpack.c.b16 %v1772, %v1763
  %v2196 = vpack.c.b16 %v1773, %v1764
  %v2197 = vpack.c.b16 %v1774, %v1765
  %v2198 = vpack.c.b16 %v1775, %v1766
  %v2199 = vpack.c.b16 %v1776, %v1767
  %v2200 = vpack.c.b16 %v1786, %v1777
  %v2201 = vpack.c.b16 %v1787, %v1778
  %v2202 = vpack.c.b16 %v1788, %v1779
  %v2203 = vpack.c.b16 %v1789, %v1780
  %v2204 = vpack.c.b16 %v1790, %v1781
  %v2205 = vpack.c.b16 %v1791, %v1782
  %v2206 = vpack.c.b16 %v1792, %v1783
  %v2207 = vpack.c.b16 %v1793, %v1784
  %v2208 = vpack.c.b16 %v1794, %v1785
  %v2209 = vpack.c.b16 %v1804, %v1795
  %v2210 = vpack.c.b16 %v1805, %v1796
  %v2211 = vpack.c.b16 %v1806, %v1797
  %v2212 = vpack.c.b16 %v1807, %v1798
  %v2213 = vpack.c.b16 %v1808, %v1799
  %v2214 = vpack.c.b16 %v1809, %v1800
  %v2215 = vpack.c.b16 %v1810, %v1801
  %v2216 = vpack.c.b16 %v1811, %v1802
  %v2217 = vpack.c.b16 %v1812, %v1803
  %v2218 = vpack.c.b16 %v1822, %v1813
  %v2219 = vpack.c.b16 %v1823, %v1814
  %v2220 = vpack.c.b16 %v1824, %v1815
  %v2221 = vpack.c.b16 %v1825, %v1816
  %v2222 = vpack.c.b16 %v1826, %v1817
  %v2223 = vpack.c.b16 %v1827, %v1818
  %v2224 = vpack.c.b16 %v1828, %v1819
  %v2225 = vpack.c.b16 %v1829, %v1820
  %v2226 = vpack.c.b16 %v1830, %v1821
  %v2767 = vunpack.c.l.b16 %v455
  %v2768 = vunpack.c.l.b16 %v456
  %v2769 = vunpack.c.l.b16 %v457
  %v2770 = vunpack.c.l.b16 %v458
  %v2771 = vunpack.c.l.b16 %v459
  %v2772 = vunpack.c.l.b16 %v460
  %v2773 = vunpack.c.l.b16 %v461
  %v2774 = vunpack.c.l.b16 %v462
  %v2775 = vunpack.c.l.b16 %v463
  %v2776 = vunpack.c.l.b16 %v464
  %v2777 = vunpack.c.l.b16 %v465
  %v2778 = vunpack.c.l.b16 %v466
  %v2779 = vunpack.c.l.b16 %v467
  %v2780 = vunpack.c.l.b16 %v468
  %v2781 = vunpack.c.l.b16 %v469
  %v2782 = vunpack.c.l.b16 %v470
  %v2783 = vunpack.c.l.b16 %v471
  %v2784 = vunpack.c.l.b16 %v472
  %v2785 = vunpack.c.l.b16 %v473
  %v2786 = vunpack.c.l.b16 %v474
  %v2787 = vunpack.c.l.b16 %v475
  %v2788 = vunpack.c.l.b16 %v476
  %v2789 = vunpack.c.l.b16 %v477
  %v2790 = vunpack.c.l.b16 %v478
  %v2791 = vunpack.c.l.b16 %v479
  %v2792 = vunpack.c.l.b16 %v480
  %v2793 = vunpack.c.l.b16 %v481
  %v2794 = vunpack.c.l.b16 %v482
  %v2795 = vunpack.c.l.b16 %v483
  %v2796 = vunpack.c.l.b16 %v484
  %v2797 = vunpack.c.l.b16 %v485
  %v2798 = vunpack.c.l.b16 %v486
  %v2799 = vunpack.c.l.b16 %v487
  %v2800 = vunpack.c.l.b16 %v488
  %v2801 = vunpack.c.l.b16 %v489
  %v2802 = vunpack.c.l.b16 %v490
  %v2803 = vunpack.c.l.b16 %v491
  %v2804 = vunpack.c.l.b16 %v492
  %v2805 = vunpack.c.l.b16 %v493
  %v2806 = vunpack.c.l.b16 %v494
  %v2807 = vunpack.c.l.b16 %v495
  %v2808 = vunpack.c.l.b16 %v496
  %v2809 = vunpack.c.l.b16 %v497
  %v2810 = vunpack.c.l.b16 %v498
  %v2811 = vunpack.c.l.b16 %v499
  %v2812 = vunpack.c.l.b16 %v500
  %v2813 = vunpack.c.l.b16 %v501
  %v2814 = vunpack.c.l.b16 %v502
  %v2815 = vunpack.c.l.b16 %v503
  %v2816 = vunpack.c.l.b16 %v504
  %v2817 = vunpack.c.l.b16 %v505
  %v2818 = vunpack.c.l.b16 %v506
  %v2819 = vunpack.c.l.b16 %v507
  %v2820 = vunpack.c.l.b16 %v508
  %v2821 = vunpack.c.l.b16 %v509
  %v2822 = vunpack.c.l.b16 %v510
  %v2823 = vunpack.c.l.b16 %v511
  %v2824 = vunpack.c.l.b16 %v512
  %v2825 = vunpack.c.l.b16 %v513
  %v2826 = vunpack.c.l.b16 %v514
  %v2827 = vunpack.c.l.b16 %v515
  %v2828 = vunpack.c.l.b16 %v516
  %v2829 = vunpack.c.l.b16 %v517
  %v2830 = vunpack.c.l.b16 %v518
  %v2831 = vunpack.c.l.b16 %v519
  %v2832 = vunpack.c.l.b16 %v520
  %v2833 = vunpack.c.l.b16 %v521
  %v2834 = vunpack.c.l.b16 %v522
  %v2835 = vunpack.c.l.b16 %v523
  %v2836 = vunpack.c.l.b16 %v524
  %v2837 = vunpack.c.l.b16 %v525
  %v2838 = vunpack.c.l.b16 %v526
  %v2839 = vunpack.c.l.b16 %v527
  %v2840 = vunpack.c.l.b16 %v528
  %v2841 = vunpack.c.l.b16 %v529
  %v2842 = vunpack.c.l.b16 %v530
  %v2843 = vunpack.c.l.b16 %v531
  %v2844 = vunpack.c.l.b16 %v532
  %v2845 = vunpack.c.l.b16 %v533
  %v2846 = vunpack.c.l.b16 %v534
  %v2847 = vunpack.c.l.b16 %v535
  %v2848 = vunpack.c.l.b16 %v536
  %v2849 = vunpack.c.l.b16 %v537
  %v2850 = vunpack.c.l.b16 %v538
  %v2851 = vunpack.c.l.b16 %v539
  %v2852 = vunpack.c.l.b16 %v540
  %v2853 = vunpack.c.l.b16 %v541
  %v2854 = vunpack.c.l.b16 %v542
  %v2855 = vunpack.c.l.b16 %v543
  %v2856 = vunpack.c.l.b16 %v544
  %v2857 = vunpack.c.l.b16 %v545
  %v2858 = vunpack.c.l.b16 %v546
  %v2859 = vunpack.c.l.b16 %v547
  %v2860 = vunpack.c.l.b16 %v548
  %v2861 = vunpack.c.l.b16 %v549
  %v2862 = vunpack.c.l.b16 %v550
  %v2863 = vunpack.c.l.b16 %v551
  %v2864 = vunpack.c.l.b16 %v552
  %v2865 = vunpack.c.l.b16 %v553
  %v2866 = vunpack.c.l.b16 %v554
  %v2867 = vunpack.c.l.b16 %v555
  %v2868 = vunpack.c.l.b16 %v556
  %v2869 = vunpack.c.l.b16 %v557
  %v2870 = vunpack.c.l.b16 %v558
  %v2871 = vunpack.c.l.b16 %v559
  %v2872 = vunpack.c.l.b16 %v560
  %v2873 = vunpack.c.l.b16 %v561
  %v2874 = vunpack.c.l.b16 %v562
  %v2875 = vunpack.c.l.b16 %v563
  %v2876 = vunpack.c.l.b16 %v564
  %v2877 = vunpack.c.l.b16 %v565
  %v2878 = vunpack.c.l.b16 %v566
  %v2879 = vunpack.c.l.b16 %v567
  %v2880 = vunpack.c.l.b16 %v568
  %v2881 = vunpack.c.l.b16 %v569
  %v2882 = vunpack.c.l.b16 %v570
  %v2883 = vunpack.c.l.b16 %v571
  %v2884 = vunpack.c.l.b16 %v572
  %v2885 = vunpack.c.l.b16 %v573
  %v2886 = vunpack.c.l.b16 %v574
  %v2887 = vunpack.c.l.b16 %v575
  %v2888 = vunpack.c.l.b16 %v576
  %v2889 = vunpack.c.l.b16 %v577
  %v2890 = vunpack.c.l.b16 %v578
  %v2891 = vunpack.c.l.b16 %v579
  %v2892 = vunpack.c.l.b16 %v580
  %v2893 = vunpack.c.l.b16 %v581
  %v2894 = vunpack.c.l.b16 %v582
  %v2895 = vunpack.c.l.b16 %v583
  %v2896 = vunpack.c.l.b16 %v584
  %v2897 = vunpack.c.l.b16 %v585
  %v2898 = vunpack.c.l.b16 %v586
  %v2899 = vunpack.c.l.b16 %v587
  %v2900 = vunpack.c.l.b16 %v588
  %v2901 = vunpack.c.l.b16 %v589
  %v2902 = vunpack.c.l.b16 %v590
  %v2903 = vunpack.c.l.b16 %v591
  %v2904 = vunpack.c.l.b16 %v592
  %v2905 = vunpack.c.l.b16 %v593
  %v2906 = vunpack.c.l.b16 %v594
  %v2907 = vunpack.c.l.b16 %v595
  %v2908 = vunpack.c.l.b16 %v596
  %v2909 = vunpack.c.l.b16 %v597
  %v2910 = vunpack.c.l.b16 %v598
  %v2911 = vpack.c.b16 %v2768, %v2767
  %v2912 = vpack.c.b16 %v2770, %v2769
  %v2913 = vpack.c.b16 %v2772, %v2771
  %v2914 = vpack.c.b16 %v2774, %v2773
  %v2915 = vpack.c.b16 %v2776, %v2775
  %v2916 = vpack.c.b16 %v2778, %v2777
  %v2917 = vpack.c.b16 %v2780, %v2779
  %v2918 = vpack.c.b16 %v2782, %v2781
  %v2919 = vpack.c.b16 %v2784, %v2783
  %v2920 = vpack.c.b16 %v2786, %v2785
  %v2921 = vpack.c.b16 %v2788, %v2787
  %v2922 = vpack.c.b16 %v2790, %v2789
  %v2923 = vpack.c.b16 %v2792, %v2791
  %v2924 = vpack.c.b16 %v2794, %v2793
  %v2925 = vpack.c.b16 %v2796, %v2795
  %v2926 = vpack.c.b16 %v2798, %v2797
  %v2927 = vpack.c.b16 %v2800, %v2799
  %v2928 = vpack.c.b16 %v2802, %v2801
  %v2929 = vpack.c.b16 %v2804, %v2803
  %v2930 = vpack.c.b16 %v2806, %v2805
  %v2931 = vpack.c.b16 %v2808, %v2807
  %v2932 = vpack.c.b16 %v2810, %v2809
  %v2933 = vpack.c.b16 %v2812, %v2811
  %v2934 = vpack.c.b16 %v2814, %v2813
  %v2935 = vpack.c.b16 %v2816, %v2815
  %v2936 = vpack.c.b16 %v2818, %v2817
  %v2937 = vpack.c.b16 %v2820, %v2819
  %v2938 = vpack.c.b16 %v2822, %v2821
  %v2939 = vpack.c.b16 %v2824, %v2823
  %v2940 = vpack.c.b16 %v2826, %v2825
  %v2941 = vpack.c.b16 %v2828, %v2827
  %v2942 = vpack.c.b16 %v2830, %v2829
  %v2943 = vpack.c.b16 %v2832, %v2831
  %v2944 = vpack.c.b16 %v2834, %v2833
  %v2945 = vpack.c.b16 %v2836, %v2835
  %v2946 = vpack.c.b16 %v2838, %v2837
  %v2947 = vpack.c.b16 %v2840, %v2839
  %v2948 = vpack.c.b16 %v2842, %v2841
  %v2949 = vpack.c.b16 %v2844, %v2843
  %v2950 = vpack.c.b16 %v2846, %v2845
  %v2951 = vpack.c.b16 %v2848, %v2847
  %v2952 = vpack.c.b16 %v2850, %v2849
  %v2953 = vpack.c.b16 %v2852, %v2851
  %v2954 = vpack.c.b16 %v2854, %v2853
  %v2955 = vpack.c.b16 %v2856, %v2855
  %v2956 = vpack.c.b16 %v2858, %v2857
  %v2957 = vpack.c.b16 %v2860, %v2859
  %v2958 = vpack.c.b16 %v2862, %v2861
  %v2959 = vpack.c.b16 %v2864, %v2863
  %v2960 = vpack.c.b16 %v2866, %v2865
  %v2961 = vpack.c.b16 %v2868, %v2867
  %v2962 = vpack.c.b16 %v2870, %v2869
  %v2963 = vpack.c.b16 %v2872, %v2871
  %v2964 = vpack.c.b16 %v2874, %v2873
  %v2965 = vpack.c.b16 %v2876, %v2875
  %v2966 = vpack.c.b16 %v2878, %v2877
  %v2967 = vpack.c.b16 %v2880, %v2879
  %v2968 = vpack.c.b16 %v2882, %v2881
  %v2969 = vpack.c.b16 %v2884, %v2883
  %v2970 = vpack.c.b16 %v2886, %v2885
  %v2971 = vpack.c.b16 %v2888, %v2887
  %v2972 = vpack.c.b16 %v2890, %v2889
  %v2973 = vpack.c.b16 %v2892, %v2891
  %v2974 = vpack.c.b16 %v2894, %v2893
  %v2975 = vpack.c.b16 %v2896, %v2895
  %v2976 = vpack.c.b16 %v2898, %v2897
  %v2977 = vpack.c.b16 %v2900, %v2899
  %v2978 = vpack.c.b16 %v2902, %v2901
  %v2979 = vpack.c.b16 %v2904, %v2903
  %v2980 = vpack.c.b16 %v2906, %v2905
  %v2981 = vpack.c.b16 %v2908, %v2907
  %v2982 = vpack.c.b16 %v2910, %v2909
  %3055 = vmatprep.subr.bf16.mxu0 0
  %3056 = vmatpush1.bf16.msra.mxu0 %v2911
  %3057 = vmatprep.subr.bf16.mxu0 0
  %3058 = vmatpush1.bf16.msra.mxu0 %v2912
  %3059 = vmatprep.subr.bf16.mxu0 0
  %3060 = vmatpush1.bf16.msra.mxu0 %v2913
  %3061 = vmatprep.subr.bf16.mxu0 0
  %3062 = vmatpush1.bf16.msra.mxu0 %v2914
  %3063 = vmatprep.subr.bf16.mxu0 0
  %3064 = vmatpush1.bf16.msra.mxu0 %v2915
  %3065 = vmatprep.subr.bf16.mxu0 0
  %3066 = vmatpush1.bf16.msra.mxu0 %v2916
  %3067 = vmatprep.subr.bf16.mxu0 0
  %3068 = vmatpush1.bf16.msra.mxu0 %v2917
  %3069 = vmatprep.subr.bf16.mxu0 0
  %3070 = vmatpush1.bf16.msra.mxu0 %v2918
  %3071 = vmatprep.subr.bf16.mxu0 0
  %3072 = vmatpush1.bf16.msra.mxu0 %v2919
  %3073 = vmatprep.subr.bf16.mxu0 0
  %3074 = vmatpush1.bf16.msra.mxu0 %v2920
  %3075 = vmatprep.subr.bf16.mxu0 0
  %3076 = vmatpush1.bf16.msra.mxu0 %v2921
  %3077 = vmatprep.subr.bf16.mxu0 0
  %3078 = vmatpush1.bf16.msra.mxu0 %v2922
  %3079 = vmatprep.subr.bf16.mxu0 0
  %3080 = vmatpush1.bf16.msra.mxu0 %v2923
  %3081 = vmatprep.subr.bf16.mxu0 0
  %3082 = vmatpush1.bf16.msra.mxu0 %v2924
  %3083 = vmatprep.subr.bf16.mxu0 0
  %3084 = vmatpush1.bf16.msra.mxu0 %v2925
  %3085 = vmatprep.subr.bf16.mxu0 0
  %3086 = vmatpush1.bf16.msra.mxu0 %v2926
  %3087 = vmatprep.mubr.bf16.mxu0 %v1832
  %3088 = vmatmul.mubr.bf16.gmra.mrb[0].mxu0 %v1831
  %v3089 = vpop.f32.mrb[0].mxu0
  %v3090 = vadd.f32 0.0, %v3089
  %v3091 = vpop.f32.mrb[0].mxu0
  %v3092 = vpop.f32.mrb[0].mxu0
  %v3093 = vadd.f32 0.0, %v3092
  %v3094 = vpop.f32.mrb[0].mxu0
  %3095 = vmatprep.mubr.bf16.mxu0 %v1841
  %3096 = vmatmul.mubr.bf16.gmra.mrb[0].mxu0 %v1840
  %v3097 = vpop.f32.mrb[0].mxu0
  %v3098 = vadd.f32 0.0, %v3097
  %v3099 = vpop.f32.mrb[0].mxu0
  %v3100 = vpop.f32.mrb[0].mxu0
  %v3101 = vadd.f32 0.0, %v3100
  %v3102 = vpop.f32.mrb[0].mxu0
  %3103 = vmatprep.mubr.bf16.mxu0 %v1850
  %3104 = vmatmul.mubr.bf16.gmra.mrb[0].mxu0 %v1849
  %v3105 = vpop.f32.mrb[0].mxu0
  %v3106 = vadd.f32 0.0, %v3105
  %v3107 = vpop.f32.mrb[0].mxu0
  %v3108 = vpop.f32.mrb[0].mxu0
  %v3109 = vadd.f32 0.0, %v3108
  %v3110 = vpop.f32.mrb[0].mxu0
  %3111 = vmatprep.mubr.bf16.mxu0 %v1859
  %3112 = vmatmul.mubr.bf16.gmra.mrb[0].mxu0 %v1858
  %v3113 = vpop.f32.mrb[0].mxu0
  %v3114 = vadd.f32 0.0, %v3113
  %v3115 = vpop.f32.mrb[0].mxu0
  %v3116 = vpop.f32.mrb[0].mxu0
  %v3117 = vadd.f32 0.0, %v3116
  %v3118 = vpop.f32.mrb[0].mxu0
  %3119 = vmatprep.mubr.bf16.mxu0 %v1868
  %3120 = vmatmul.mubr.bf16.gmra.mrb[0].mxu0 %v1867
  %v3121 = vpop.f32.mrb[0].mxu0
  %v3122 = vadd.f32 0.0, %v3121
  %v3123 = vpop.f32.mrb[0].mxu0
  %v3124 = vpop.f32.mrb[0].mxu0
  %v3125 = vadd.f32 0.0, %v3124
  %v3126 = vpop.f32.mrb[0].mxu0
  %3127 = vmatprep.mubr.bf16.mxu0 %v1877
  %3128 = vmatmul.mubr.bf16.gmra.mrb[0].mxu0 %v1876
  %v3129 = vpop.f32.mrb[0].mxu0
  %v3130 = vadd.f32 0.0, %v3129
  %v3131 = vpop.f32.mrb[0].mxu0
  %v3132 = vpop.f32.mrb[0].mxu0
  %v3133 = vadd.f32 0.0, %v3132
  %v3134 = vpop.f32.mrb[0].mxu0
  %3135 = vmatprep.mubr.bf16.mxu0 %v1886
  %3136 = vmatmul.mubr.bf16.gmra.mrb[0].mxu0 %v1885
  %v3137 = vpop.f32.mrb[0].mxu0
  %v3138 = vadd.f32 0.0, %v3137
  %v3139 = vpop.f32.mrb[0].mxu0
  %v3140 = vpop.f32.mrb[0].mxu0
  %v3141 = vadd.f32 0.0, %v3140
  %v3142 = vpop.f32.mrb[0].mxu0
  %3143 = vmatprep.mubr.bf16.mxu0 %v1895
  %3144 = vmatmul.mubr.bf16.gmra.mrb[0].mxu0 %v1894
  %v3145 = vpop.f32.mrb[0].mxu0
  %v3146 = vadd.f32 0.0, %v3145
  %v3147 = vpop.f32.mrb[0].mxu0
  %v3148 = vpop.f32.mrb[0].mxu0
  %v3149 = vadd.f32 0.0, %v3148
  %v3150 = vpop.f32.mrb[0].mxu0
  %3151 = vmatprep.mubr.bf16.mxu0 %v1904
  %3152 = vmatmul.mubr.bf16.gmra.mrb[0].mxu0 %v1903
  %v3153 = vpop.f32.mrb[0].mxu0
  %v3154 = vadd.f32 0.0, %v3153
  %v3155 = vpop.f32.mrb[0].mxu0
  %v3156 = vpop.f32.mrb[0].mxu0
  %v3157 = vadd.f32 0.0, %v3156
  %v3158 = vpop.f32.mrb[0].mxu0
  %3159 = vmatprep.mubr.bf16.mxu0 %v1913
  %3160 = vmatmul.mubr.bf16.gmra.mrb[0].mxu0 %v1912
  %v3161 = vpop.f32.mrb[0].mxu0
  %v3162 = vadd.f32 0.0, %v3161
  %v3163 = vpop.f32.mrb[0].mxu0
  %v3164 = vpop.f32.mrb[0].mxu0
  %v3165 = vadd.f32 0.0, %v3164
  %v3166 = vpop.f32.mrb[0].mxu0
  %3167 = vmatprep.mubr.bf16.mxu0 %v1922
  %3168 = vmatmul.mubr.bf16.gmra.mrb[0].mxu0 %v1921
  %v3169 = vpop.f32.mrb[0].mxu0
  %v3170 = vadd.f32 0.0, %v3169
  %v3171 = vpop.f32.mrb[0].mxu0
  %v3172 = vpop.f32.mrb[0].mxu0
  %v3173 = vadd.f32 0.0, %v3172
  %v3174 = vpop.f32.mrb[0].mxu0
  %3175 = vmatprep.mubr.bf16.mxu0 %v1931
  %3176 = vmatmul.mubr.bf16.gmra.mrb[0].mxu0 %v1930
  %v3177 = vpop.f32.mrb[0].mxu0
  %v3178 = vadd.f32 0.0, %v3177
  %v3179 = vpop.f32.mrb[0].mxu0
  %v3180 = vpop.f32.mrb[0].mxu0
  %v3181 = vadd.f32 0.0, %v3180
  %v3182 = vpop.f32.mrb[0].mxu0
  %3183 = vmatprep.mubr.bf16.mxu0 %v1940
  %3184 = vmatmul.mubr.bf16.gmra.mrb[0].mxu0 %v1939
  %v3185 = vpop.f32.mrb[0].mxu0
  %v3186 = vadd.f32 0.0, %v3185
  %v3187 = vpop.f32.mrb[0].mxu0
  %v3188 = vpop.f32.mrb[0].mxu0
  %v3189 = vadd.f32 0.0, %v3188
  %v3190 = vpop.f32.mrb[0].mxu0
  %3191 = vmatprep.mubr.bf16.mxu0 %v1949
  %3192 = vmatmul.mubr.bf16.gmra.mrb[0].mxu0 %v1948
  %v3193 = vpop.f32.mrb[0].mxu0
  %v3194 = vadd.f32 0.0, %v3193
  %v3195 = vpop.f32.mrb[0].mxu0
  %v3196 = vpop.f32.mrb[0].mxu0
  %v3197 = vadd.f32 0.0, %v3196
  %v3198 = vpop.f32.mrb[0].mxu0
  %3199 = vmatprep.mubr.bf16.mxu0 %v1958
  %3200 = vmatmul.mubr.bf16.gmra.mrb[0].mxu0 %v1957
  %v3201 = vpop.f32.mrb[0].mxu0
  %v3202 = vadd.f32 0.0, %v3201
  %v3203 = vpop.f32.mrb[0].mxu0
  %v3204 = vpop.f32.mrb[0].mxu0
  %v3205 = vadd.f32 0.0, %v3204
  %v3206 = vpop.f32.mrb[0].mxu0
  %3207 = vmatprep.mubr.bf16.mxu0 %v1967
  %3208 = vmatmul.mubr.bf16.gmra.mrb[0].mxu0 %v1966
  %v3209 = vpop.f32.mrb[0].mxu0
  %v3210 = vadd.f32 0.0, %v3209
  %v3211 = vpop.f32.mrb[0].mxu0
  %v3212 = vpop.f32.mrb[0].mxu0
  %v3213 = vadd.f32 0.0, %v3212
  %v3214 = vpop.f32.mrb[0].mxu0
  %3215 = vmatprep.mubr.bf16.mxu0 %v1976
  %3216 = vmatmul.mubr.bf16.gmra.mrb[0].mxu0 %v1975
  %v3217 = vpop.f32.mrb[0].mxu0
  %v3218 = vadd.f32 0.0, %v3217
  %v3219 = vpop.f32.mrb[0].mxu0
  %v3220 = vpop.f32.mrb[0].mxu0
  %v3221 = vadd.f32 0.0, %v3220
  %v3222 = vpop.f32.mrb[0].mxu0
  %3223 = vmatprep.mubr.bf16.mxu0 %v1985
  %3224 = vmatmul.mubr.bf16.gmra.mrb[0].mxu0 %v1984
  %v3225 = vpop.f32.mrb[0].mxu0
  %v3226 = vadd.f32 0.0, %v3225
  %v3227 = vpop.f32.mrb[0].mxu0
  %v3228 = vpop.f32.mrb[0].mxu0
  %v3229 = vadd.f32 0.0, %v3228
  %v3230 = vpop.f32.mrb[0].mxu0
  %3231 = vmatprep.mubr.bf16.mxu0 %v1994
  %3232 = vmatmul.mubr.bf16.gmra.mrb[0].mxu0 %v1993
  %v3233 = vpop.f32.mrb[0].mxu0
  %v3234 = vadd.f32 0.0, %v3233
  %v3235 = vpop.f32.mrb[0].mxu0
  %v3236 = vpop.f32.mrb[0].mxu0
  %v3237 = vadd.f32 0.0, %v3236
  %v3238 = vpop.f32.mrb[0].mxu0
  %3239 = vmatprep.mubr.bf16.mxu0 %v2003
  %3240 = vmatmul.mubr.bf16.gmra.mrb[0].mxu0 %v2002
  %v3241 = vpop.f32.mrb[0].mxu0
  %v3242 = vadd.f32 0.0, %v3241
  %v3243 = vpop.f32.mrb[0].mxu0
  %v3244 = vpop.f32.mrb[0].mxu0
  %v3245 = vadd.f32 0.0, %v3244
  %v3246 = vpop.f32.mrb[0].mxu0
  %3247 = vmatprep.mubr.bf16.mxu0 %v2012
  %3248 = vmatmul.mubr.bf16.gmra.mrb[0].mxu0 %v2011
  %v3249 = vpop.f32.mrb[0].mxu0
  %v3250 = vadd.f32 0.0, %v3249
  %v3251 = vpop.f32.mrb[0].mxu0
  %v3252 = vpop.f32.mrb[0].mxu0
  %v3253 = vadd.f32 0.0, %v3252
  %v3254 = vpop.f32.mrb[0].mxu0
  %3255 = vmatprep.mubr.bf16.mxu0 %v2021
  %3256 = vmatmul.mubr.bf16.gmra.mrb[0].mxu0 %v2020
  %v3257 = vpop.f32.mrb[0].mxu0
  %v3258 = vadd.f32 0.0, %v3257
  %v3259 = vpop.f32.mrb[0].mxu0
  %v3260 = vpop.f32.mrb[0].mxu0
  %v3261 = vadd.f32 0.0, %v3260
  %v3262 = vpop.f32.mrb[0].mxu0
  %3263 = vmatprep.mubr.bf16.mxu0 %v2030
  %3264 = vmatmul.mubr.bf16.gmra.mrb[0].mxu0 %v2029
  %v3265 = vpop.f32.mrb[0].mxu0
  %v3266 = vadd.f32 0.0, %v3265
  %v3267 = vpop.f32.mrb[0].mxu0
  %v3268 = vpop.f32.mrb[0].mxu0
  %v3269 = vadd.f32 0.0, %v3268
  %v3270 = vpop.f32.mrb[0].mxu0
  %3271 = vmatprep.mubr.bf16.mxu0 %v2039
  %3272 = vmatmul.mubr.bf16.gmra.mrb[0].mxu0 %v2038
  %v3273 = vpop.f32.mrb[0].mxu0
  %v3274 = vadd.f32 0.0, %v3273
  %v3275 = vpop.f32.mrb[0].mxu0
  %v3276 = vpop.f32.mrb[0].mxu0
  %v3277 = vadd.f32 0.0, %v3276
  %v3278 = vpop.f32.mrb[0].mxu0
  %3279 = vmatprep.mubr.bf16.mxu0 %v2048
  %3280 = vmatmul.mubr.bf16.gmra.mrb[0].mxu0 %v2047
  %v3281 = vpop.f32.mrb[0].mxu0
  %v3282 = vadd.f32 0.0, %v3281
  %v3283 = vpop.f32.mrb[0].mxu0
  %v3284 = vpop.f32.mrb[0].mxu0
  %v3285 = vadd.f32 0.0, %v3284
  %v3286 = vpop.f32.mrb[0].mxu0
  %3287 = vmatprep.mubr.bf16.mxu0 %v2057
  %3288 = vmatmul.mubr.bf16.gmra.mrb[0].mxu0 %v2056
  %v3289 = vpop.f32.mrb[0].mxu0
  %v3290 = vadd.f32 0.0, %v3289
  %v3291 = vpop.f32.mrb[0].mxu0
  %v3292 = vpop.f32.mrb[0].mxu0
  %v3293 = vadd.f32 0.0, %v3292
  %v3294 = vpop.f32.mrb[0].mxu0
  %3295 = vmatprep.mubr.bf16.mxu0 %v2066
  %3296 = vmatmul.mubr.bf16.gmra.mrb[0].mxu0 %v2065
  %v3297 = vpop.f32.mrb[0].mxu0
  %v3298 = vadd.f32 0.0, %v3297
  %v3299 = vpop.f32.mrb[0].mxu0
  %v3300 = vpop.f32.mrb[0].mxu0
  %v3301 = vadd.f32 0.0, %v3300
  %v3302 = vpop.f32.mrb[0].mxu0
  %3303 = vmatprep.mubr.bf16.mxu0 %v2075
  %3304 = vmatmul.mubr.bf16.gmra.mrb[0].mxu0 %v2074
  %v3305 = vpop.f32.mrb[0].mxu0
  %v3306 = vadd.f32 0.0, %v3305
  %v3307 = vpop.f32.mrb[0].mxu0
  %v3308 = vpop.f32.mrb[0].mxu0
  %v3309 = vadd.f32 0.0, %v3308
  %v3310 = vpop.f32.mrb[0].mxu0
  %3311 = vmatprep.mubr.bf16.mxu0 %v2084
  %3312 = vmatmul.mubr.bf16.gmra.mrb[0].mxu0 %v2083
  %v3313 = vpop.f32.mrb[0].mxu0
  %v3314 = vadd.f32 0.0, %v3313
  %v3315 = vpop.f32.mrb[0].mxu0
  %v3316 = vpop.f32.mrb[0].mxu0
  %v3317 = vadd.f32 0.0, %v3316
  %v3318 = vpop.f32.mrb[0].mxu0
  %3319 = vmatprep.mubr.bf16.mxu0 %v2093
  %3320 = vmatmul.mubr.bf16.gmra.mrb[0].mxu0 %v2092
  %v3321 = vpop.f32.mrb[0].mxu0
  %v3322 = vadd.f32 0.0, %v3321
  %v3323 = vpop.f32.mrb[0].mxu0
  %v3324 = vpop.f32.mrb[0].mxu0
  %v3325 = vadd.f32 0.0, %v3324
  %v3326 = vpop.f32.mrb[0].mxu0
  %3327 = vmatprep.mubr.bf16.mxu0 %v2102
  %3328 = vmatmul.mubr.bf16.gmra.mrb[0].mxu0 %v2101
  %v3329 = vpop.f32.mrb[0].mxu0
  %v3330 = vadd.f32 0.0, %v3329
  %v3331 = vpop.f32.mrb[0].mxu0
  %v3332 = vpop.f32.mrb[0].mxu0
  %v3333 = vadd.f32 0.0, %v3332
  %v3334 = vpop.f32.mrb[0].mxu0
  %3335 = vmatprep.mubr.bf16.mxu0 %v2111
  %3336 = vmatmul.mubr.bf16.gmra.mrb[0].mxu0 %v2110
  %v3337 = vpop.f32.mrb[0].mxu0
  %v3338 = vadd.f32 0.0, %v3337
  %v3339 = vpop.f32.mrb[0].mxu0
  %v3340 = vpop.f32.mrb[0].mxu0
  %v3341 = vadd.f32 0.0, %v3340
  %v3342 = vpop.f32.mrb[0].mxu0
  %3343 = vmatprep.mubr.bf16.mxu0 %v2120
  %3344 = vmatmul.mubr.bf16.gmra.mrb[0].mxu0 %v2119
  %v3345 = vpop.f32.mrb[0].mxu0
  %v3346 = vadd.f32 0.0, %v3345
  %v3347 = vpop.f32.mrb[0].mxu0
  %v3348 = vpop.f32.mrb[0].mxu0
  %v3349 = vadd.f32 0.0, %v3348
  %v3350 = vpop.f32.mrb[0].mxu0
  %3351 = vmatprep.mubr.bf16.mxu0 %v2129
  %3352 = vmatmul.mubr.bf16.gmra.mrb[0].mxu0 %v2128
  %v3353 = vpop.f32.mrb[0].mxu0
  %v3354 = vadd.f32 0.0, %v3353
  %v3355 = vpop.f32.mrb[0].mxu0
  %v3356 = vpop.f32.mrb[0].mxu0
  %v3357 = vadd.f32 0.0, %v3356
  %v3358 = vpop.f32.mrb[0].mxu0
  %3359 = vmatprep.mubr.bf16.mxu0 %v2138
  %3360 = vmatmul.mubr.bf16.gmra.mrb[0].mxu0 %v2137
  %v3361 = vpop.f32.mrb[0].mxu0
  %v3362 = vadd.f32 0.0, %v3361
  %v3363 = vpop.f32.mrb[0].mxu0
  %v3364 = vpop.f32.mrb[0].mxu0
  %v3365 = vadd.f32 0.0, %v3364
  %v3366 = vpop.f32.mrb[0].mxu0
  %3367 = vmatprep.mubr.bf16.mxu0 %v2147
  %3368 = vmatmul.mubr.bf16.gmra.mrb[0].mxu0 %v2146
  %v3369 = vpop.f32.mrb[0].mxu0
  %v3370 = vadd.f32 0.0, %v3369
  %v3371 = vpop.f32.mrb[0].mxu0
  %v3372 = vpop.f32.mrb[0].mxu0
  %v3373 = vadd.f32 0.0, %v3372
  %v3374 = vpop.f32.mrb[0].mxu0
  %3375 = vmatprep.mubr.bf16.mxu0 %v2156
  %3376 = vmatmul.mubr.bf16.gmra.mrb[0].mxu0 %v2155
  %v3377 = vpop.f32.mrb[0].mxu0
  %v3378 = vadd.f32 0.0, %v3377
  %v3379 = vpop.f32.mrb[0].mxu0
  %v3380 = vpop.f32.mrb[0].mxu0
  %v3381 = vadd.f32 0.0, %v3380
  %v3382 = vpop.f32.mrb[0].mxu0
  %3383 = vmatprep.mubr.bf16.mxu0 %v2165
  %3384 = vmatmul.mubr.bf16.gmra.mrb[0].mxu0 %v2164
  %v3385 = vpop.f32.mrb[0].mxu0
  %v3386 = vadd.f32 0.0, %v3385
  %v3387 = vpop.f32.mrb[0].mxu0
  %v3388 = vpop.f32.mrb[0].mxu0
  %v3389 = vadd.f32 0.0, %v3388
  %v3390 = vpop.f32.mrb[0].mxu0
  %3391 = vmatprep.mubr.bf16.mxu0 %v2174
  %3392 = vmatmul.mubr.bf16.gmra.mrb[0].mxu0 %v2173
  %v3393 = vpop.f32.mrb[0].mxu0
  %v3394 = vadd.f32 0.0, %v3393
  %v3395 = vpop.f32.mrb[0].mxu0
  %v3396 = vpop.f32.mrb[0].mxu0
  %v3397 = vadd.f32 0.0, %v3396
  %v3398 = vpop.f32.mrb[0].mxu0
  %3399 = vmatprep.mubr.bf16.mxu0 %v2183
  %3400 = vmatmul.mubr.bf16.gmra.mrb[0].mxu0 %v2182
  %v3401 = vpop.f32.mrb[0].mxu0
  %v3402 = vadd.f32 0.0, %v3401
  %v3403 = vpop.f32.mrb[0].mxu0
  %v3404 = vpop.f32.mrb[0].mxu0
  %v3405 = vadd.f32 0.0, %v3404
  %v3406 = vpop.f32.mrb[0].mxu0
  %3407 = vmatprep.mubr.bf16.mxu0 %v2192
  %3408 = vmatmul.mubr.bf16.gmra.mrb[0].mxu0 %v2191
  %v3409 = vpop.f32.mrb[0].mxu0
  %v3410 = vadd.f32 0.0, %v3409
  %v3411 = vpop.f32.mrb[0].mxu0
  %v3412 = vpop.f32.mrb[0].mxu0
  %v3413 = vadd.f32 0.0, %v3412
  %v3414 = vpop.f32.mrb[0].mxu0
  %3415 = vmatprep.mubr.bf16.mxu0 %v2201
  %3416 = vmatmul.mubr.bf16.gmra.mrb[0].mxu0 %v2200
  %v3417 = vpop.f32.mrb[0].mxu0
  %v3418 = vadd.f32 0.0, %v3417
  %v3419 = vpop.f32.mrb[0].mxu0
  %v3420 = vpop.f32.mrb[0].mxu0
  %v3421 = vadd.f32 0.0, %v3420
  %v3422 = vpop.f32.mrb[0].mxu0
  %3423 = vmatprep.mubr.bf16.mxu0 %v2210
  %3424 = vmatmul.mubr.bf16.gmra.mrb[0].mxu0 %v2209
  %v3425 = vpop.f32.mrb[0].mxu0
  %v3426 = vadd.f32 0.0, %v3425
  %v3427 = vpop.f32.mrb[0].mxu0
  %v3428 = vpop.f32.mrb[0].mxu0
  %v3429 = vadd.f32 0.0, %v3428
  %v3430 = vpop.f32.mrb[0].mxu0
  %3431 = vmatprep.mubr.bf16.mxu0 %v2219
  %3432 = vmatmul.mubr.bf16.gmra.mrb[0].mxu0 %v2218
  %v3433 = vpop.f32.mrb[0].mxu0
  %v3434 = vadd.f32 0.0, %v3433
  %v3435 = vpop.f32.mrb[0].mxu0
  %v3436 = vpop.f32.mrb[0].mxu0
  %v3437 = vadd.f32 0.0, %v3436
  %v3438 = vpop.f32.mrb[0].mxu0
  %3439 = vdwg.mxu0
  %3440 = vmatprep.subr.bf16.mxu0 0
  %3441 = vmatpush1.bf16.msra.mxu0 %v2927
  %3442 = vmatprep.subr.bf16.mxu0 0
  %3443 = vmatpush1.bf16.msra.mxu0 %v2928
  %3444 = vmatprep.subr.bf16.mxu0 0
  %3445 = vmatpush1.bf16.msra.mxu0 %v2929
  %3446 = vmatprep.subr.bf16.mxu0 0
  %3447 = vmatpush1.bf16.msra.mxu0 %v2930
  %3448 = vmatprep.subr.bf16.mxu0 0
  %3449 = vmatpush1.bf16.msra.mxu0 %v2931
  %3450 = vmatprep.subr.bf16.mxu0 0
  %3451 = vmatpush1.bf16.msra.mxu0 %v2932
  %3452 = vmatprep.subr.bf16.mxu0 0
  %3453 = vmatpush1.bf16.msra.mxu0 %v2933
  %3454 = vmatprep.subr.bf16.mxu0 0
  %3455 = vmatpush1.bf16.msra.mxu0 %v2934
  %3456 = vmatprep.subr.bf16.mxu0 0
  %3457 = vmatpush1.bf16.msra.mxu0 %v2935
  %3458 = vmatprep.subr.bf16.mxu0 0
  %3459 = vmatpush1.bf16.msra.mxu0 %v2936
  %3460 = vmatprep.subr.bf16.mxu0 0
  %3461 = vmatpush1.bf16.msra.mxu0 %v2937
  %3462 = vmatprep.subr.bf16.mxu0 0
  %3463 = vmatpush1.bf16.msra.mxu0 %v2938
  %3464 = vmatprep.subr.bf16.mxu0 0
  %3465 = vmatpush1.bf16.msra.mxu0 %v2939
  %3466 = vmatprep.subr.bf16.mxu0 0
  %3467 = vmatpush1.bf16.msra.mxu0 %v2940
  %3468 = vmatprep.subr.bf16.mxu0 0
  %3469 = vmatpush1.bf16.msra.mxu0 %v2941
  %3470 = vmatprep.subr.bf16.mxu0 0
  %3471 = vmatpush1.bf16.msra.mxu0 %v2942
  %3472 = vmatprep.mubr.bf16.mxu0 %v1834
  %3473 = vmatmul.mubr.bf16.gmra.mrb[0].mxu0 %v1833
  %v3474 = vpop.f32.mrb[0].mxu0
  %v3475 = vadd.f32 %v3090, %v3474
  %v3476 = vpop.f32.mrb[0].mxu0
  %v3477 = vpop.f32.mrb[0].mxu0
  %v3478 = vadd.f32 %v3093, %v3477
  %v3479 = vpop.f32.mrb[0].mxu0
  %3480 = vmatprep.mubr.bf16.mxu0 %v1843
  %3481 = vmatmul.mubr.bf16.gmra.mrb[0].mxu0 %v1842
  %v3482 = vpop.f32.mrb[0].mxu0
  %v3483 = vadd.f32 %v3098, %v3482
  %v3484 = vpop.f32.mrb[0].mxu0
  %v3485 = vpop.f32.mrb[0].mxu0
  %v3486 = vadd.f32 %v3101, %v3485
  %v3487 = vpop.f32.mrb[0].mxu0
  %3488 = vmatprep.mubr.bf16.mxu0 %v1852
  %3489 = vmatmul.mubr.bf16.gmra.mrb[0].mxu0 %v1851
  %v3490 = vpop.f32.mrb[0].mxu0
  %v3491 = vadd.f32 %v3106, %v3490
  %v3492 = vpop.f32.mrb[0].mxu0
  %v3493 = vpop.f32.mrb[0].mxu0
  %v3494 = vadd.f32 %v3109, %v3493
  %v3495 = vpop.f32.mrb[0].mxu0
  %3496 = vmatprep.mubr.bf16.mxu0 %v1861
  %3497 = vmatmul.mubr.bf16.gmra.mrb[0].mxu0 %v1860
  %v3498 = vpop.f32.mrb[0].mxu0
  %v3499 = vadd.f32 %v3114, %v3498
  %v3500 = vpop.f32.mrb[0].mxu0
  %v3501 = vpop.f32.mrb[0].mxu0
  %v3502 = vadd.f32 %v3117, %v3501
  %v3503 = vpop.f32.mrb[0].mxu0
  %3504 = vmatprep.mubr.bf16.mxu0 %v1870
  %3505 = vmatmul.mubr.bf16.gmra.mrb[0].mxu0 %v1869
  %v3506 = vpop.f32.mrb[0].mxu0
  %v3507 = vadd.f32 %v3122, %v3506
  %v3508 = vpop.f32.mrb[0].mxu0
  %v3509 = vpop.f32.mrb[0].mxu0
  %v3510 = vadd.f32 %v3125, %v3509
  %v3511 = vpop.f32.mrb[0].mxu0
  %3512 = vmatprep.mubr.bf16.mxu0 %v1879
  %3513 = vmatmul.mubr.bf16.gmra.mrb[0].mxu0 %v1878
  %v3514 = vpop.f32.mrb[0].mxu0
  %v3515 = vadd.f32 %v3130, %v3514
  %v3516 = vpop.f32.mrb[0].mxu0
  %v3517 = vpop.f32.mrb[0].mxu0
  %v3518 = vadd.f32 %v3133, %v3517
  %v3519 = vpop.f32.mrb[0].mxu0
  %3520 = vmatprep.mubr.bf16.mxu0 %v1888
  %3521 = vmatmul.mubr.bf16.gmra.mrb[0].mxu0 %v1887
  %v3522 = vpop.f32.mrb[0].mxu0
  %v3523 = vadd.f32 %v3138, %v3522
  %v3524 = vpop.f32.mrb[0].mxu0
  %v3525 = vpop.f32.mrb[0].mxu0
  %v3526 = vadd.f32 %v3141, %v3525
  %v3527 = vpop.f32.mrb[0].mxu0
  %3528 = vmatprep.mubr.bf16.mxu0 %v1897
  %3529 = vmatmul.mubr.bf16.gmra.mrb[0].mxu0 %v1896
  %v3530 = vpop.f32.mrb[0].mxu0
  %v3531 = vadd.f32 %v3146, %v3530
  %v3532 = vpop.f32.mrb[0].mxu0
  %v3533 = vpop.f32.mrb[0].mxu0
  %v3534 = vadd.f32 %v3149, %v3533
  %v3535 = vpop.f32.mrb[0].mxu0
  %3536 = vmatprep.mubr.bf16.mxu0 %v1906
  %3537 = vmatmul.mubr.bf16.gmra.mrb[0].mxu0 %v1905
  %v3538 = vpop.f32.mrb[0].mxu0
  %v3539 = vadd.f32 %v3154, %v3538
  %v3540 = vpop.f32.mrb[0].mxu0
  %v3541 = vpop.f32.mrb[0].mxu0
  %v3542 = vadd.f32 %v3157, %v3541
  %v3543 = vpop.f32.mrb[0].mxu0
  %3544 = vmatprep.mubr.bf16.mxu0 %v1915
  %3545 = vmatmul.mubr.bf16.gmra.mrb[0].mxu0 %v1914
  %v3546 = vpop.f32.mrb[0].mxu0
  %v3547 = vadd.f32 %v3162, %v3546
  %v3548 = vpop.f32.mrb[0].mxu0
  %v3549 = vpop.f32.mrb[0].mxu0
  %v3550 = vadd.f32 %v3165, %v3549
  %v3551 = vpop.f32.mrb[0].mxu0
  %3552 = vmatprep.mubr.bf16.mxu0 %v1924
  %3553 = vmatmul.mubr.bf16.gmra.mrb[0].mxu0 %v1923
  %v3554 = vpop.f32.mrb[0].mxu0
  %v3555 = vadd.f32 %v3170, %v3554
  %v3556 = vpop.f32.mrb[0].mxu0
  %v3557 = vpop.f32.mrb[0].mxu0
  %v3558 = vadd.f32 %v3173, %v3557
  %v3559 = vpop.f32.mrb[0].mxu0
  %3560 = vmatprep.mubr.bf16.mxu0 %v1933
  %3561 = vmatmul.mubr.bf16.gmra.mrb[0].mxu0 %v1932
  %v3562 = vpop.f32.mrb[0].mxu0
  %v3563 = vadd.f32 %v3178, %v3562
  %v3564 = vpop.f32.mrb[0].mxu0
  %v3565 = vpop.f32.mrb[0].mxu0
  %v3566 = vadd.f32 %v3181, %v3565
  %v3567 = vpop.f32.mrb[0].mxu0
  %3568 = vmatprep.mubr.bf16.mxu0 %v1942
  %3569 = vmatmul.mubr.bf16.gmra.mrb[0].mxu0 %v1941
  %v3570 = vpop.f32.mrb[0].mxu0
  %v3571 = vadd.f32 %v3186, %v3570
  %v3572 = vpop.f32.mrb[0].mxu0
  %v3573 = vpop.f32.mrb[0].mxu0
  %v3574 = vadd.f32 %v3189, %v3573
  %v3575 = vpop.f32.mrb[0].mxu0
  %3576 = vmatprep.mubr.bf16.mxu0 %v1951
  %3577 = vmatmul.mubr.bf16.gmra.mrb[0].mxu0 %v1950
  %v3578 = vpop.f32.mrb[0].mxu0
  %v3579 = vadd.f32 %v3194, %v3578
  %v3580 = vpop.f32.mrb[0].mxu0
  %v3581 = vpop.f32.mrb[0].mxu0
  %v3582 = vadd.f32 %v3197, %v3581
  %v3583 = vpop.f32.mrb[0].mxu0
  %3584 = vmatprep.mubr.bf16.mxu0 %v1960
  %3585 = vmatmul.mubr.bf16.gmra.mrb[0].mxu0 %v1959
  %v3586 = vpop.f32.mrb[0].mxu0
  %v3587 = vadd.f32 %v3202, %v3586
  %v3588 = vpop.f32.mrb[0].mxu0
  %v3589 = vpop.f32.mrb[0].mxu0
  %v3590 = vadd.f32 %v3205, %v3589
  %v3591 = vpop.f32.mrb[0].mxu0
  %3592 = vmatprep.mubr.bf16.mxu0 %v1969
  %3593 = vmatmul.mubr.bf16.gmra.mrb[0].mxu0 %v1968
  %v3594 = vpop.f32.mrb[0].mxu0
  %v3595 = vadd.f32 %v3210, %v3594
  %v3596 = vpop.f32.mrb[0].mxu0
  %v3597 = vpop.f32.mrb[0].mxu0
  %v3598 = vadd.f32 %v3213, %v3597
  %v3599 = vpop.f32.mrb[0].mxu0
  %3600 = vmatprep.mubr.bf16.mxu0 %v1978
  %3601 = vmatmul.mubr.bf16.gmra.mrb[0].mxu0 %v1977
  %v3602 = vpop.f32.mrb[0].mxu0
  %v3603 = vadd.f32 %v3218, %v3602
  %v3604 = vpop.f32.mrb[0].mxu0
  %v3605 = vpop.f32.mrb[0].mxu0
  %v3606 = vadd.f32 %v3221, %v3605
  %v3607 = vpop.f32.mrb[0].mxu0
  %3608 = vmatprep.mubr.bf16.mxu0 %v1987
  %3609 = vmatmul.mubr.bf16.gmra.mrb[0].mxu0 %v1986
  %v3610 = vpop.f32.mrb[0].mxu0
  %v3611 = vadd.f32 %v3226, %v3610
  %v3612 = vpop.f32.mrb[0].mxu0
  %v3613 = vpop.f32.mrb[0].mxu0
  %v3614 = vadd.f32 %v3229, %v3613
  %v3615 = vpop.f32.mrb[0].mxu0
  %3616 = vmatprep.mubr.bf16.mxu0 %v1996
  %3617 = vmatmul.mubr.bf16.gmra.mrb[0].mxu0 %v1995
  %v3618 = vpop.f32.mrb[0].mxu0
  %v3619 = vadd.f32 %v3234, %v3618
  %v3620 = vpop.f32.mrb[0].mxu0
  %v3621 = vpop.f32.mrb[0].mxu0
  %v3622 = vadd.f32 %v3237, %v3621
  %v3623 = vpop.f32.mrb[0].mxu0
  %3624 = vmatprep.mubr.bf16.mxu0 %v2005
  %3625 = vmatmul.mubr.bf16.gmra.mrb[0].mxu0 %v2004
  %v3626 = vpop.f32.mrb[0].mxu0
  %v3627 = vadd.f32 %v3242, %v3626
  %v3628 = vpop.f32.mrb[0].mxu0
  %v3629 = vpop.f32.mrb[0].mxu0
  %v3630 = vadd.f32 %v3245, %v3629
  %v3631 = vpop.f32.mrb[0].mxu0
  %3632 = vmatprep.mubr.bf16.mxu0 %v2014
  %3633 = vmatmul.mubr.bf16.gmra.mrb[0].mxu0 %v2013
  %v3634 = vpop.f32.mrb[0].mxu0
  %v3635 = vadd.f32 %v3250, %v3634
  %v3636 = vpop.f32.mrb[0].mxu0
  %v3637 = vpop.f32.mrb[0].mxu0
  %v3638 = vadd.f32 %v3253, %v3637
  %v3639 = vpop.f32.mrb[0].mxu0
  %3640 = vmatprep.mubr.bf16.mxu0 %v2023
  %3641 = vmatmul.mubr.bf16.gmra.mrb[0].mxu0 %v2022
  %v3642 = vpop.f32.mrb[0].mxu0
  %v3643 = vadd.f32 %v3258, %v3642
  %v3644 = vpop.f32.mrb[0].mxu0
  %v3645 = vpop.f32.mrb[0].mxu0
  %v3646 = vadd.f32 %v3261, %v3645
  %v3647 = vpop.f32.mrb[0].mxu0
  %3648 = vmatprep.mubr.bf16.mxu0 %v2032
  %3649 = vmatmul.mubr.bf16.gmra.mrb[0].mxu0 %v2031
  %v3650 = vpop.f32.mrb[0].mxu0
  %v3651 = vadd.f32 %v3266, %v3650
  %v3652 = vpop.f32.mrb[0].mxu0
  %v3653 = vpop.f32.mrb[0].mxu0
  %v3654 = vadd.f32 %v3269, %v3653
  %v3655 = vpop.f32.mrb[0].mxu0
  %3656 = vmatprep.mubr.bf16.mxu0 %v2041
  %3657 = vmatmul.mubr.bf16.gmra.mrb[0].mxu0 %v2040
  %v3658 = vpop.f32.mrb[0].mxu0
  %v3659 = vadd.f32 %v3274, %v3658
  %v3660 = vpop.f32.mrb[0].mxu0
  %v3661 = vpop.f32.mrb[0].mxu0
  %v3662 = vadd.f32 %v3277, %v3661
  %v3663 = vpop.f32.mrb[0].mxu0
  %3664 = vmatprep.mubr.bf16.mxu0 %v2050
  %3665 = vmatmul.mubr.bf16.gmra.mrb[0].mxu0 %v2049
  %v3666 = vpop.f32.mrb[0].mxu0
  %v3667 = vadd.f32 %v3282, %v3666
  %v3668 = vpop.f32.mrb[0].mxu0
  %v3669 = vpop.f32.mrb[0].mxu0
  %v3670 = vadd.f32 %v3285, %v3669
  %v3671 = vpop.f32.mrb[0].mxu0
  %3672 = vmatprep.mubr.bf16.mxu0 %v2059
  %3673 = vmatmul.mubr.bf16.gmra.mrb[0].mxu0 %v2058
  %v3674 = vpop.f32.mrb[0].mxu0
  %v3675 = vadd.f32 %v3290, %v3674
  %v3676 = vpop.f32.mrb[0].mxu0
  %v3677 = vpop.f32.mrb[0].mxu0
  %v3678 = vadd.f32 %v3293, %v3677
  %v3679 = vpop.f32.mrb[0].mxu0
  %3680 = vmatprep.mubr.bf16.mxu0 %v2068
  %3681 = vmatmul.mubr.bf16.gmra.mrb[0].mxu0 %v2067
  %v3682 = vpop.f32.mrb[0].mxu0
  %v3683 = vadd.f32 %v3298, %v3682
  %v3684 = vpop.f32.mrb[0].mxu0
  %v3685 = vpop.f32.mrb[0].mxu0
  %v3686 = vadd.f32 %v3301, %v3685
  %v3687 = vpop.f32.mrb[0].mxu0
  %3688 = vmatprep.mubr.bf16.mxu0 %v2077
  %3689 = vmatmul.mubr.bf16.gmra.mrb[0].mxu0 %v2076
  %v3690 = vpop.f32.mrb[0].mxu0
  %v3691 = vadd.f32 %v3306, %v3690
  %v3692 = vpop.f32.mrb[0].mxu0
  %v3693 = vpop.f32.mrb[0].mxu0
  %v3694 = vadd.f32 %v3309, %v3693
  %v3695 = vpop.f32.mrb[0].mxu0
  %3696 = vmatprep.mubr.bf16.mxu0 %v2086
  %3697 = vmatmul.mubr.bf16.gmra.mrb[0].mxu0 %v2085
  %v3698 = vpop.f32.mrb[0].mxu0
  %v3699 = vadd.f32 %v3314, %v3698
  %v3700 = vpop.f32.mrb[0].mxu0
  %v3701 = vpop.f32.mrb[0].mxu0
  %v3702 = vadd.f32 %v3317, %v3701
  %v3703 = vpop.f32.mrb[0].mxu0
  %3704 = vmatprep.mubr.bf16.mxu0 %v2095
  %3705 = vmatmul.mubr.bf16.gmra.mrb[0].mxu0 %v2094
  %v3706 = vpop.f32.mrb[0].mxu0
  %v3707 = vadd.f32 %v3322, %v3706
  %v3708 = vpop.f32.mrb[0].mxu0
  %v3709 = vpop.f32.mrb[0].mxu0
  %v3710 = vadd.f32 %v3325, %v3709
  %v3711 = vpop.f32.mrb[0].mxu0
  %3712 = vmatprep.mubr.bf16.mxu0 %v2104
  %3713 = vmatmul.mubr.bf16.gmra.mrb[0].mxu0 %v2103
  %v3714 = vpop.f32.mrb[0].mxu0
  %v3715 = vadd.f32 %v3330, %v3714
  %v3716 = vpop.f32.mrb[0].mxu0
  %v3717 = vpop.f32.mrb[0].mxu0
  %v3718 = vadd.f32 %v3333, %v3717
  %v3719 = vpop.f32.mrb[0].mxu0
  %3720 = vmatprep.mubr.bf16.mxu0 %v2113
  %3721 = vmatmul.mubr.bf16.gmra.mrb[0].mxu0 %v2112
  %v3722 = vpop.f32.mrb[0].mxu0
  %v3723 = vadd.f32 %v3338, %v3722
  %v3724 = vpop.f32.mrb[0].mxu0
  %v3725 = vpop.f32.mrb[0].mxu0
  %v3726 = vadd.f32 %v3341, %v3725
  %v3727 = vpop.f32.mrb[0].mxu0
  %3728 = vmatprep.mubr.bf16.mxu0 %v2122
  %3729 = vmatmul.mubr.bf16.gmra.mrb[0].mxu0 %v2121
  %v3730 = vpop.f32.mrb[0].mxu0
  %v3731 = vadd.f32 %v3346, %v3730
  %v3732 = vpop.f32.mrb[0].mxu0
  %v3733 = vpop.f32.mrb[0].mxu0
  %v3734 = vadd.f32 %v3349, %v3733
  %v3735 = vpop.f32.mrb[0].mxu0
  %3736 = vmatprep.mubr.bf16.mxu0 %v2131
  %3737 = vmatmul.mubr.bf16.gmra.mrb[0].mxu0 %v2130
  %v3738 = vpop.f32.mrb[0].mxu0
  %v3739 = vadd.f32 %v3354, %v3738
  %v3740 = vpop.f32.mrb[0].mxu0
  %v3741 = vpop.f32.mrb[0].mxu0
  %v3742 = vadd.f32 %v3357, %v3741
  %v3743 = vpop.f32.mrb[0].mxu0
  %3744 = vmatprep.mubr.bf16.mxu0 %v2140
  %3745 = vmatmul.mubr.bf16.gmra.mrb[0].mxu0 %v2139
  %v3746 = vpop.f32.mrb[0].mxu0
  %v3747 = vadd.f32 %v3362, %v3746
  %v3748 = vpop.f32.mrb[0].mxu0
  %v3749 = vpop.f32.mrb[0].mxu0
  %v3750 = vadd.f32 %v3365, %v3749
  %v3751 = vpop.f32.mrb[0].mxu0
  %3752 = vmatprep.mubr.bf16.mxu0 %v2149
  %3753 = vmatmul.mubr.bf16.gmra.mrb[0].mxu0 %v2148
  %v3754 = vpop.f32.mrb[0].mxu0
  %v3755 = vadd.f32 %v3370, %v3754
  %v3756 = vpop.f32.mrb[0].mxu0
  %v3757 = vpop.f32.mrb[0].mxu0
  %v3758 = vadd.f32 %v3373, %v3757
  %v3759 = vpop.f32.mrb[0].mxu0
  %3760 = vmatprep.mubr.bf16.mxu0 %v2158
  %3761 = vmatmul.mubr.bf16.gmra.mrb[0].mxu0 %v2157
  %v3762 = vpop.f32.mrb[0].mxu0
  %v3763 = vadd.f32 %v3378, %v3762
  %v3764 = vpop.f32.mrb[0].mxu0
  %v3765 = vpop.f32.mrb[0].mxu0
  %v3766 = vadd.f32 %v3381, %v3765
  %v3767 = vpop.f32.mrb[0].mxu0
  %3768 = vmatprep.mubr.bf16.mxu0 %v2167
  %3769 = vmatmul.mubr.bf16.gmra.mrb[0].mxu0 %v2166
  %v3770 = vpop.f32.mrb[0].mxu0
  %v3771 = vadd.f32 %v3386, %v3770
  %v3772 = vpop.f32.mrb[0].mxu0
  %v3773 = vpop.f32.mrb[0].mxu0
  %v3774 = vadd.f32 %v3389, %v3773
  %v3775 = vpop.f32.mrb[0].mxu0
  %3776 = vmatprep.mubr.bf16.mxu0 %v2176
  %3777 = vmatmul.mubr.bf16.gmra.mrb[0].mxu0 %v2175
  %v3778 = vpop.f32.mrb[0].mxu0
  %v3779 = vadd.f32 %v3394, %v3778
  %v3780 = vpop.f32.mrb[0].mxu0
  %v3781 = vpop.f32.mrb[0].mxu0
  %v3782 = vadd.f32 %v3397, %v3781
  %v3783 = vpop.f32.mrb[0].mxu0
  %3784 = vmatprep.mubr.bf16.mxu0 %v2185
  %3785 = vmatmul.mubr.bf16.gmra.mrb[0].mxu0 %v2184
  %v3786 = vpop.f32.mrb[0].mxu0
  %v3787 = vadd.f32 %v3402, %v3786
  %v3788 = vpop.f32.mrb[0].mxu0
  %v3789 = vpop.f32.mrb[0].mxu0
  %v3790 = vadd.f32 %v3405, %v3789
  %v3791 = vpop.f32.mrb[0].mxu0
  %3792 = vmatprep.mubr.bf16.mxu0 %v2194
  %3793 = vmatmul.mubr.bf16.gmra.mrb[0].mxu0 %v2193
  %v3794 = vpop.f32.mrb[0].mxu0
  %v3795 = vadd.f32 %v3410, %v3794
  %v3796 = vpop.f32.mrb[0].mxu0
  %v3797 = vpop.f32.mrb[0].mxu0
  %v3798 = vadd.f32 %v3413, %v3797
  %v3799 = vpop.f32.mrb[0].mxu0
  %3800 = vmatprep.mubr.bf16.mxu0 %v2203
  %3801 = vmatmul.mubr.bf16.gmra.mrb[0].mxu0 %v2202
  %v3802 = vpop.f32.mrb[0].mxu0
  %v3803 = vadd.f32 %v3418, %v3802
  %v3804 = vpop.f32.mrb[0].mxu0
  %v3805 = vpop.f32.mrb[0].mxu0
  %v3806 = vadd.f32 %v3421, %v3805
  %v3807 = vpop.f32.mrb[0].mxu0
  %3808 = vmatprep.mubr.bf16.mxu0 %v2212
  %3809 = vmatmul.mubr.bf16.gmra.mrb[0].mxu0 %v2211
  %v3810 = vpop.f32.mrb[0].mxu0
  %v3811 = vadd.f32 %v3426, %v3810
  %v3812 = vpop.f32.mrb[0].mxu0
  %v3813 = vpop.f32.mrb[0].mxu0
  %v3814 = vadd.f32 %v3429, %v3813
  %v3815 = vpop.f32.mrb[0].mxu0
  %3816 = vmatprep.mubr.bf16.mxu0 %v2221
  %3817 = vmatmul.mubr.bf16.gmra.mrb[0].mxu0 %v2220
  %v3818 = vpop.f32.mrb[0].mxu0
  %v3819 = vadd.f32 %v3434, %v3818
  %v3820 = vpop.f32.mrb[0].mxu0
  %v3821 = vpop.f32.mrb[0].mxu0
  %v3822 = vadd.f32 %v3437, %v3821
  %v3823 = vpop.f32.mrb[0].mxu0
  %3824 = vdwg.mxu0
  %3825 = vmatprep.subr.bf16.mxu0 0
  %3826 = vmatpush1.bf16.msra.mxu0 %v2943
  %3827 = vmatprep.subr.bf16.mxu0 0
  %3828 = vmatpush1.bf16.msra.mxu0 %v2944
  %3829 = vmatprep.subr.bf16.mxu0 0
  %3830 = vmatpush1.bf16.msra.mxu0 %v2945
  %3831 = vmatprep.subr.bf16.mxu0 0
  %3832 = vmatpush1.bf16.msra.mxu0 %v2946
  %3833 = vmatprep.subr.bf16.mxu0 0
  %3834 = vmatpush1.bf16.msra.mxu0 %v2947
  %3835 = vmatprep.subr.bf16.mxu0 0
  %3836 = vmatpush1.bf16.msra.mxu0 %v2948
  %3837 = vmatprep.subr.bf16.mxu0 0
  %3838 = vmatpush1.bf16.msra.mxu0 %v2949
  %3839 = vmatprep.subr.bf16.mxu0 0
  %3840 = vmatpush1.bf16.msra.mxu0 %v2950
  %3841 = vmatprep.subr.bf16.mxu0 0
  %3842 = vmatpush1.bf16.msra.mxu0 %v2951
  %3843 = vmatprep.subr.bf16.mxu0 0
  %3844 = vmatpush1.bf16.msra.mxu0 %v2952
  %3845 = vmatprep.subr.bf16.mxu0 0
  %3846 = vmatpush1.bf16.msra.mxu0 %v2953
  %3847 = vmatprep.subr.bf16.mxu0 0
  %3848 = vmatpush1.bf16.msra.mxu0 %v2954
  %3849 = vmatprep.subr.bf16.mxu0 0
  %3850 = vmatpush1.bf16.msra.mxu0 %v2955
  %3851 = vmatprep.subr.bf16.mxu0 0
  %3852 = vmatpush1.bf16.msra.mxu0 %v2956
  %3853 = vmatprep.subr.bf16.mxu0 0
  %3854 = vmatpush1.bf16.msra.mxu0 %v2957
  %3855 = vmatprep.subr.bf16.mxu0 0
  %3856 = vmatpush1.bf16.msra.mxu0 %v2958
  %3857 = vmatprep.mubr.bf16.mxu0 %v1836
  %3858 = vmatmul.mubr.bf16.gmra.mrb[0].mxu0 %v1835
  %v3859 = vpop.f32.mrb[0].mxu0
  %v3860 = vadd.f32 %v3475, %v3859
  %v3861 = vpop.f32.mrb[0].mxu0
  %v3862 = vpop.f32.mrb[0].mxu0
  %v3863 = vadd.f32 %v3478, %v3862
  %v3864 = vpop.f32.mrb[0].mxu0
  %3865 = vmatprep.mubr.bf16.mxu0 %v1845
  %3866 = vmatmul.mubr.bf16.gmra.mrb[0].mxu0 %v1844
  %v3867 = vpop.f32.mrb[0].mxu0
  %v3868 = vadd.f32 %v3483, %v3867
  %v3869 = vpop.f32.mrb[0].mxu0
  %v3870 = vpop.f32.mrb[0].mxu0
  %v3871 = vadd.f32 %v3486, %v3870
  %v3872 = vpop.f32.mrb[0].mxu0
  %3873 = vmatprep.mubr.bf16.mxu0 %v1854
  %3874 = vmatmul.mubr.bf16.gmra.mrb[0].mxu0 %v1853
  %v3875 = vpop.f32.mrb[0].mxu0
  %v3876 = vadd.f32 %v3491, %v3875
  %v3877 = vpop.f32.mrb[0].mxu0
  %v3878 = vpop.f32.mrb[0].mxu0
  %v3879 = vadd.f32 %v3494, %v3878
  %v3880 = vpop.f32.mrb[0].mxu0
  %3881 = vmatprep.mubr.bf16.mxu0 %v1863
  %3882 = vmatmul.mubr.bf16.gmra.mrb[0].mxu0 %v1862
  %v3883 = vpop.f32.mrb[0].mxu0
  %v3884 = vadd.f32 %v3499, %v3883
  %v3885 = vpop.f32.mrb[0].mxu0
  %v3886 = vpop.f32.mrb[0].mxu0
  %v3887 = vadd.f32 %v3502, %v3886
  %v3888 = vpop.f32.mrb[0].mxu0
  %3889 = vmatprep.mubr.bf16.mxu0 %v1872
  %3890 = vmatmul.mubr.bf16.gmra.mrb[0].mxu0 %v1871
  %v3891 = vpop.f32.mrb[0].mxu0
  %v3892 = vadd.f32 %v3507, %v3891
  %v3893 = vpop.f32.mrb[0].mxu0
  %v3894 = vpop.f32.mrb[0].mxu0
  %v3895 = vadd.f32 %v3510, %v3894
  %v3896 = vpop.f32.mrb[0].mxu0
  %3897 = vmatprep.mubr.bf16.mxu0 %v1881
  %3898 = vmatmul.mubr.bf16.gmra.mrb[0].mxu0 %v1880
  %v3899 = vpop.f32.mrb[0].mxu0
  %v3900 = vadd.f32 %v3515, %v3899
  %v3901 = vpop.f32.mrb[0].mxu0
  %v3902 = vpop.f32.mrb[0].mxu0
  %v3903 = vadd.f32 %v3518, %v3902
  %v3904 = vpop.f32.mrb[0].mxu0
  %3905 = vmatprep.mubr.bf16.mxu0 %v1890
  %3906 = vmatmul.mubr.bf16.gmra.mrb[0].mxu0 %v1889
  %v3907 = vpop.f32.mrb[0].mxu0
  %v3908 = vadd.f32 %v3523, %v3907
  %v3909 = vpop.f32.mrb[0].mxu0
  %v3910 = vpop.f32.mrb[0].mxu0
  %v3911 = vadd.f32 %v3526, %v3910
  %v3912 = vpop.f32.mrb[0].mxu0
  %3913 = vmatprep.mubr.bf16.mxu0 %v1899
  %3914 = vmatmul.mubr.bf16.gmra.mrb[0].mxu0 %v1898
  %v3915 = vpop.f32.mrb[0].mxu0
  %v3916 = vadd.f32 %v3531, %v3915
  %v3917 = vpop.f32.mrb[0].mxu0
  %v3918 = vpop.f32.mrb[0].mxu0
  %v3919 = vadd.f32 %v3534, %v3918
  %v3920 = vpop.f32.mrb[0].mxu0
  %3921 = vmatprep.mubr.bf16.mxu0 %v1908
  %3922 = vmatmul.mubr.bf16.gmra.mrb[0].mxu0 %v1907
  %v3923 = vpop.f32.mrb[0].mxu0
  %v3924 = vadd.f32 %v3539, %v3923
  %v3925 = vpop.f32.mrb[0].mxu0
  %v3926 = vpop.f32.mrb[0].mxu0
  %v3927 = vadd.f32 %v3542, %v3926
  %v3928 = vpop.f32.mrb[0].mxu0
  %3929 = vmatprep.mubr.bf16.mxu0 %v1917
  %3930 = vmatmul.mubr.bf16.gmra.mrb[0].mxu0 %v1916
  %v3931 = vpop.f32.mrb[0].mxu0
  %v3932 = vadd.f32 %v3547, %v3931
  %v3933 = vpop.f32.mrb[0].mxu0
  %v3934 = vpop.f32.mrb[0].mxu0
  %v3935 = vadd.f32 %v3550, %v3934
  %v3936 = vpop.f32.mrb[0].mxu0
  %3937 = vmatprep.mubr.bf16.mxu0 %v1926
  %3938 = vmatmul.mubr.bf16.gmra.mrb[0].mxu0 %v1925
  %v3939 = vpop.f32.mrb[0].mxu0
  %v3940 = vadd.f32 %v3555, %v3939
  %v3941 = vpop.f32.mrb[0].mxu0
  %v3942 = vpop.f32.mrb[0].mxu0
  %v3943 = vadd.f32 %v3558, %v3942
  %v3944 = vpop.f32.mrb[0].mxu0
  %3945 = vmatprep.mubr.bf16.mxu0 %v1935
  %3946 = vmatmul.mubr.bf16.gmra.mrb[0].mxu0 %v1934
  %v3947 = vpop.f32.mrb[0].mxu0
  %v3948 = vadd.f32 %v3563, %v3947
  %v3949 = vpop.f32.mrb[0].mxu0
  %v3950 = vpop.f32.mrb[0].mxu0
  %v3951 = vadd.f32 %v3566, %v3950
  %v3952 = vpop.f32.mrb[0].mxu0
  %3953 = vmatprep.mubr.bf16.mxu0 %v1944
  %3954 = vmatmul.mubr.bf16.gmra.mrb[0].mxu0 %v1943
  %v3955 = vpop.f32.mrb[0].mxu0
  %v3956 = vadd.f32 %v3571, %v3955
  %v3957 = vpop.f32.mrb[0].mxu0
  %v3958 = vpop.f32.mrb[0].mxu0
  %v3959 = vadd.f32 %v3574, %v3958
  %v3960 = vpop.f32.mrb[0].mxu0
  %3961 = vmatprep.mubr.bf16.mxu0 %v1953
  %3962 = vmatmul.mubr.bf16.gmra.mrb[0].mxu0 %v1952
  %v3963 = vpop.f32.mrb[0].mxu0
  %v3964 = vadd.f32 %v3579, %v3963
  %v3965 = vpop.f32.mrb[0].mxu0
  %v3966 = vpop.f32.mrb[0].mxu0
  %v3967 = vadd.f32 %v3582, %v3966
  %v3968 = vpop.f32.mrb[0].mxu0
  %3969 = vmatprep.mubr.bf16.mxu0 %v1962
  %3970 = vmatmul.mubr.bf16.gmra.mrb[0].mxu0 %v1961
  %v3971 = vpop.f32.mrb[0].mxu0
  %v3972 = vadd.f32 %v3587, %v3971
  %v3973 = vpop.f32.mrb[0].mxu0
  %v3974 = vpop.f32.mrb[0].mxu0
  %v3975 = vadd.f32 %v3590, %v3974
  %v3976 = vpop.f32.mrb[0].mxu0
  %3977 = vmatprep.mubr.bf16.mxu0 %v1971
  %3978 = vmatmul.mubr.bf16.gmra.mrb[0].mxu0 %v1970
  %v3979 = vpop.f32.mrb[0].mxu0
  %v3980 = vadd.f32 %v3595, %v3979
  %v3981 = vpop.f32.mrb[0].mxu0
  %v3982 = vpop.f32.mrb[0].mxu0
  %v3983 = vadd.f32 %v3598, %v3982
  %v3984 = vpop.f32.mrb[0].mxu0
  %3985 = vmatprep.mubr.bf16.mxu0 %v1980
  %3986 = vmatmul.mubr.bf16.gmra.mrb[0].mxu0 %v1979
  %v3987 = vpop.f32.mrb[0].mxu0
  %v3988 = vadd.f32 %v3603, %v3987
  %v3989 = vpop.f32.mrb[0].mxu0
  %v3990 = vpop.f32.mrb[0].mxu0
  %v3991 = vadd.f32 %v3606, %v3990
  %v3992 = vpop.f32.mrb[0].mxu0
  %3993 = vmatprep.mubr.bf16.mxu0 %v1989
  %3994 = vmatmul.mubr.bf16.gmra.mrb[0].mxu0 %v1988
  %v3995 = vpop.f32.mrb[0].mxu0
  %v3996 = vadd.f32 %v3611, %v3995
  %v3997 = vpop.f32.mrb[0].mxu0
  %v3998 = vpop.f32.mrb[0].mxu0
  %v3999 = vadd.f32 %v3614, %v3998
  %v4000 = vpop.f32.mrb[0].mxu0
  %4001 = vmatprep.mubr.bf16.mxu0 %v1998
  %4002 = vmatmul.mubr.bf16.gmra.mrb[0].mxu0 %v1997
  %v4003 = vpop.f32.mrb[0].mxu0
  %v4004 = vadd.f32 %v3619, %v4003
  %v4005 = vpop.f32.mrb[0].mxu0
  %v4006 = vpop.f32.mrb[0].mxu0
  %v4007 = vadd.f32 %v3622, %v4006
  %v4008 = vpop.f32.mrb[0].mxu0
  %4009 = vmatprep.mubr.bf16.mxu0 %v2007
  %4010 = vmatmul.mubr.bf16.gmra.mrb[0].mxu0 %v2006
  %v4011 = vpop.f32.mrb[0].mxu0
  %v4012 = vadd.f32 %v3627, %v4011
  %v4013 = vpop.f32.mrb[0].mxu0
  %v4014 = vpop.f32.mrb[0].mxu0
  %v4015 = vadd.f32 %v3630, %v4014
  %v4016 = vpop.f32.mrb[0].mxu0
  %4017 = vmatprep.mubr.bf16.mxu0 %v2016
  %4018 = vmatmul.mubr.bf16.gmra.mrb[0].mxu0 %v2015
  %v4019 = vpop.f32.mrb[0].mxu0
  %v4020 = vadd.f32 %v3635, %v4019
  %v4021 = vpop.f32.mrb[0].mxu0
  %v4022 = vpop.f32.mrb[0].mxu0
  %v4023 = vadd.f32 %v3638, %v4022
  %v4024 = vpop.f32.mrb[0].mxu0
  %4025 = vmatprep.mubr.bf16.mxu0 %v2025
  %4026 = vmatmul.mubr.bf16.gmra.mrb[0].mxu0 %v2024
  %v4027 = vpop.f32.mrb[0].mxu0
  %v4028 = vadd.f32 %v3643, %v4027
  %v4029 = vpop.f32.mrb[0].mxu0
  %v4030 = vpop.f32.mrb[0].mxu0
  %v4031 = vadd.f32 %v3646, %v4030
  %v4032 = vpop.f32.mrb[0].mxu0
  %4033 = vmatprep.mubr.bf16.mxu0 %v2034
  %4034 = vmatmul.mubr.bf16.gmra.mrb[0].mxu0 %v2033
  %v4035 = vpop.f32.mrb[0].mxu0
  %v4036 = vadd.f32 %v3651, %v4035
  %v4037 = vpop.f32.mrb[0].mxu0
  %v4038 = vpop.f32.mrb[0].mxu0
  %v4039 = vadd.f32 %v3654, %v4038
  %v4040 = vpop.f32.mrb[0].mxu0
  %4041 = vmatprep.mubr.bf16.mxu0 %v2043
  %4042 = vmatmul.mubr.bf16.gmra.mrb[0].mxu0 %v2042
  %v4043 = vpop.f32.mrb[0].mxu0
  %v4044 = vadd.f32 %v3659, %v4043
  %v4045 = vpop.f32.mrb[0].mxu0
  %v4046 = vpop.f32.mrb[0].mxu0
  %v4047 = vadd.f32 %v3662, %v4046
  %v4048 = vpop.f32.mrb[0].mxu0
  %4049 = vmatprep.mubr.bf16.mxu0 %v2052
  %4050 = vmatmul.mubr.bf16.gmra.mrb[0].mxu0 %v2051
  %v4051 = vpop.f32.mrb[0].mxu0
  %v4052 = vadd.f32 %v3667, %v4051
  %v4053 = vpop.f32.mrb[0].mxu0
  %v4054 = vpop.f32.mrb[0].mxu0
  %v4055 = vadd.f32 %v3670, %v4054
  %v4056 = vpop.f32.mrb[0].mxu0
  %4057 = vmatprep.mubr.bf16.mxu0 %v2061
  %4058 = vmatmul.mubr.bf16.gmra.mrb[0].mxu0 %v2060
  %v4059 = vpop.f32.mrb[0].mxu0
  %v4060 = vadd.f32 %v3675, %v4059
  %v4061 = vpop.f32.mrb[0].mxu0
  %v4062 = vpop.f32.mrb[0].mxu0
  %v4063 = vadd.f32 %v3678, %v4062
  %v4064 = vpop.f32.mrb[0].mxu0
  %4065 = vmatprep.mubr.bf16.mxu0 %v2070
  %4066 = vmatmul.mubr.bf16.gmra.mrb[0].mxu0 %v2069
  %v4067 = vpop.f32.mrb[0].mxu0
  %v4068 = vadd.f32 %v3683, %v4067
  %v4069 = vpop.f32.mrb[0].mxu0
  %v4070 = vpop.f32.mrb[0].mxu0
  %v4071 = vadd.f32 %v3686, %v4070
  %v4072 = vpop.f32.mrb[0].mxu0
  %4073 = vmatprep.mubr.bf16.mxu0 %v2079
  %4074 = vmatmul.mubr.bf16.gmra.mrb[0].mxu0 %v2078
  %v4075 = vpop.f32.mrb[0].mxu0
  %v4076 = vadd.f32 %v3691, %v4075
  %v4077 = vpop.f32.mrb[0].mxu0
  %v4078 = vpop.f32.mrb[0].mxu0
  %v4079 = vadd.f32 %v3694, %v4078
  %v4080 = vpop.f32.mrb[0].mxu0
  %4081 = vmatprep.mubr.bf16.mxu0 %v2088
  %4082 = vmatmul.mubr.bf16.gmra.mrb[0].mxu0 %v2087
  %v4083 = vpop.f32.mrb[0].mxu0
  %v4084 = vadd.f32 %v3699, %v4083
  %v4085 = vpop.f32.mrb[0].mxu0
  %v4086 = vpop.f32.mrb[0].mxu0
  %v4087 = vadd.f32 %v3702, %v4086
  %v4088 = vpop.f32.mrb[0].mxu0
  %4089 = vmatprep.mubr.bf16.mxu0 %v2097
  %4090 = vmatmul.mubr.bf16.gmra.mrb[0].mxu0 %v2096
  %v4091 = vpop.f32.mrb[0].mxu0
  %v4092 = vadd.f32 %v3707, %v4091
  %v4093 = vpop.f32.mrb[0].mxu0
  %v4094 = vpop.f32.mrb[0].mxu0
  %v4095 = vadd.f32 %v3710, %v4094
  %v4096 = vpop.f32.mrb[0].mxu0
  %4097 = vmatprep.mubr.bf16.mxu0 %v2106
  %4098 = vmatmul.mubr.bf16.gmra.mrb[0].mxu0 %v2105
  %v4099 = vpop.f32.mrb[0].mxu0
  %v4100 = vadd.f32 %v3715, %v4099
  %v4101 = vpop.f32.mrb[0].mxu0
  %v4102 = vpop.f32.mrb[0].mxu0
  %v4103 = vadd.f32 %v3718, %v4102
  %v4104 = vpop.f32.mrb[0].mxu0
  %4105 = vmatprep.mubr.bf16.mxu0 %v2115
  %4106 = vmatmul.mubr.bf16.gmra.mrb[0].mxu0 %v2114
  %v4107 = vpop.f32.mrb[0].mxu0
  %v4108 = vadd.f32 %v3723, %v4107
  %v4109 = vpop.f32.mrb[0].mxu0
  %v4110 = vpop.f32.mrb[0].mxu0
  %v4111 = vadd.f32 %v3726, %v4110
  %v4112 = vpop.f32.mrb[0].mxu0
  %4113 = vmatprep.mubr.bf16.mxu0 %v2124
  %4114 = vmatmul.mubr.bf16.gmra.mrb[0].mxu0 %v2123
  %v4115 = vpop.f32.mrb[0].mxu0
  %v4116 = vadd.f32 %v3731, %v4115
  %v4117 = vpop.f32.mrb[0].mxu0
  %v4118 = vpop.f32.mrb[0].mxu0
  %v4119 = vadd.f32 %v3734, %v4118
  %v4120 = vpop.f32.mrb[0].mxu0
  %4121 = vmatprep.mubr.bf16.mxu0 %v2133
  %4122 = vmatmul.mubr.bf16.gmra.mrb[0].mxu0 %v2132
  %v4123 = vpop.f32.mrb[0].mxu0
  %v4124 = vadd.f32 %v3739, %v4123
  %v4125 = vpop.f32.mrb[0].mxu0
  %v4126 = vpop.f32.mrb[0].mxu0
  %v4127 = vadd.f32 %v3742, %v4126
  %v4128 = vpop.f32.mrb[0].mxu0
  %4129 = vmatprep.mubr.bf16.mxu0 %v2142
  %4130 = vmatmul.mubr.bf16.gmra.mrb[0].mxu0 %v2141
  %v4131 = vpop.f32.mrb[0].mxu0
  %v4132 = vadd.f32 %v3747, %v4131
  %v4133 = vpop.f32.mrb[0].mxu0
  %v4134 = vpop.f32.mrb[0].mxu0
  %v4135 = vadd.f32 %v3750, %v4134
  %v4136 = vpop.f32.mrb[0].mxu0
  %4137 = vmatprep.mubr.bf16.mxu0 %v2151
  %4138 = vmatmul.mubr.bf16.gmra.mrb[0].mxu0 %v2150
  %v4139 = vpop.f32.mrb[0].mxu0
  %v4140 = vadd.f32 %v3755, %v4139
  %v4141 = vpop.f32.mrb[0].mxu0
  %v4142 = vpop.f32.mrb[0].mxu0
  %v4143 = vadd.f32 %v3758, %v4142
  %v4144 = vpop.f32.mrb[0].mxu0
  %4145 = vmatprep.mubr.bf16.mxu0 %v2160
  %4146 = vmatmul.mubr.bf16.gmra.mrb[0].mxu0 %v2159
  %v4147 = vpop.f32.mrb[0].mxu0
  %v4148 = vadd.f32 %v3763, %v4147
  %v4149 = vpop.f32.mrb[0].mxu0
  %v4150 = vpop.f32.mrb[0].mxu0
  %v4151 = vadd.f32 %v3766, %v4150
  %v4152 = vpop.f32.mrb[0].mxu0
  %4153 = vmatprep.mubr.bf16.mxu0 %v2169
  %4154 = vmatmul.mubr.bf16.gmra.mrb[0].mxu0 %v2168
  %v4155 = vpop.f32.mrb[0].mxu0
  %v4156 = vadd.f32 %v3771, %v4155
  %v4157 = vpop.f32.mrb[0].mxu0
  %v4158 = vpop.f32.mrb[0].mxu0
  %v4159 = vadd.f32 %v3774, %v4158
  %v4160 = vpop.f32.mrb[0].mxu0
  %4161 = vmatprep.mubr.bf16.mxu0 %v2178
  %4162 = vmatmul.mubr.bf16.gmra.mrb[0].mxu0 %v2177
  %v4163 = vpop.f32.mrb[0].mxu0
  %v4164 = vadd.f32 %v3779, %v4163
  %v4165 = vpop.f32.mrb[0].mxu0
  %v4166 = vpop.f32.mrb[0].mxu0
  %v4167 = vadd.f32 %v3782, %v4166
  %v4168 = vpop.f32.mrb[0].mxu0
  %4169 = vmatprep.mubr.bf16.mxu0 %v2187
  %4170 = vmatmul.mubr.bf16.gmra.mrb[0].mxu0 %v2186
  %v4171 = vpop.f32.mrb[0].mxu0
  %v4172 = vadd.f32 %v3787, %v4171
  %v4173 = vpop.f32.mrb[0].mxu0
  %v4174 = vpop.f32.mrb[0].mxu0
  %v4175 = vadd.f32 %v3790, %v4174
  %v4176 = vpop.f32.mrb[0].mxu0
  %4177 = vmatprep.mubr.bf16.mxu0 %v2196
  %4178 = vmatmul.mubr.bf16.gmra.mrb[0].mxu0 %v2195
  %v4179 = vpop.f32.mrb[0].mxu0
  %v4180 = vadd.f32 %v3795, %v4179
  %v4181 = vpop.f32.mrb[0].mxu0
  %v4182 = vpop.f32.mrb[0].mxu0
  %v4183 = vadd.f32 %v3798, %v4182
  %v4184 = vpop.f32.mrb[0].mxu0
  %4185 = vmatprep.mubr.bf16.mxu0 %v2205
  %4186 = vmatmul.mubr.bf16.gmra.mrb[0].mxu0 %v2204
  %v4187 = vpop.f32.mrb[0].mxu0
  %v4188 = vadd.f32 %v3803, %v4187
  %v4189 = vpop.f32.mrb[0].mxu0
  %v4190 = vpop.f32.mrb[0].mxu0
  %v4191 = vadd.f32 %v3806, %v4190
  %v4192 = vpop.f32.mrb[0].mxu0
  %4193 = vmatprep.mubr.bf16.mxu0 %v2214
  %4194 = vmatmul.mubr.bf16.gmra.mrb[0].mxu0 %v2213
  %v4195 = vpop.f32.mrb[0].mxu0
  %v4196 = vadd.f32 %v3811, %v4195
  %v4197 = vpop.f32.mrb[0].mxu0
  %v4198 = vpop.f32.mrb[0].mxu0
  %v4199 = vadd.f32 %v3814, %v4198
  %v4200 = vpop.f32.mrb[0].mxu0
  %4201 = vmatprep.mubr.bf16.mxu0 %v2223
  %4202 = vmatmul.mubr.bf16.gmra.mrb[0].mxu0 %v2222
  %v4203 = vpop.f32.mrb[0].mxu0
  %v4204 = vadd.f32 %v3819, %v4203
  %v4205 = vpop.f32.mrb[0].mxu0
  %v4206 = vpop.f32.mrb[0].mxu0
  %v4207 = vadd.f32 %v3822, %v4206
  %v4208 = vpop.f32.mrb[0].mxu0
  %4209 = vdwg.mxu0
  %4210 = vmatprep.subr.bf16.mxu0 0
  %4211 = vmatpush1.bf16.msra.mxu0 %v2959
  %4212 = vmatprep.subr.bf16.mxu0 0
  %4213 = vmatpush1.bf16.msra.mxu0 %v2960
  %4214 = vmatprep.subr.bf16.mxu0 0
  %4215 = vmatpush1.bf16.msra.mxu0 %v2961
  %4216 = vmatprep.subr.bf16.mxu0 0
  %4217 = vmatpush1.bf16.msra.mxu0 %v2962
  %4218 = vmatprep.subr.bf16.mxu0 0
  %4219 = vmatpush1.bf16.msra.mxu0 %v2963
  %4220 = vmatprep.subr.bf16.mxu0 0
  %4221 = vmatpush1.bf16.msra.mxu0 %v2964
  %4222 = vmatprep.subr.bf16.mxu0 0
  %4223 = vmatpush1.bf16.msra.mxu0 %v2965
  %4224 = vmatprep.subr.bf16.mxu0 0
  %4225 = vmatpush1.bf16.msra.mxu0 %v2966
  %4226 = vmatprep.subr.bf16.mxu0 0
  %4227 = vmatpush1.bf16.msra.mxu0 %v2967
  %4228 = vmatprep.subr.bf16.mxu0 0
  %4229 = vmatpush1.bf16.msra.mxu0 %v2968
  %4230 = vmatprep.subr.bf16.mxu0 0
  %4231 = vmatpush1.bf16.msra.mxu0 %v2969
  %4232 = vmatprep.subr.bf16.mxu0 0
  %4233 = vmatpush1.bf16.msra.mxu0 %v2970
  %4234 = vmatprep.subr.bf16.mxu0 0
  %4235 = vmatpush1.bf16.msra.mxu0 %v2971
  %4236 = vmatprep.subr.bf16.mxu0 0
  %4237 = vmatpush1.bf16.msra.mxu0 %v2972
  %4238 = vmatprep.subr.bf16.mxu0 0
  %4239 = vmatpush1.bf16.msra.mxu0 %v2973
  %4240 = vmatprep.subr.bf16.mxu0 0
  %4241 = vmatpush1.bf16.msra.mxu0 %v2974
  %4242 = vmatprep.mubr.bf16.mxu0 %v1838
  %4243 = vmatmul.mubr.bf16.gmra.mrb[0].mxu0 %v1837
  %v4244 = vpop.f32.mrb[0].mxu0
  %v4245 = vadd.f32 %v3860, %v4244
  %v4246 = vpop.f32.mrb[0].mxu0
  %v4247 = vpop.f32.mrb[0].mxu0
  %v4248 = vadd.f32 %v3863, %v4247
  %v4249 = vpop.f32.mrb[0].mxu0
  %4250 = vmatprep.mubr.bf16.mxu0 %v1847
  %4251 = vmatmul.mubr.bf16.gmra.mrb[0].mxu0 %v1846
  %v4252 = vpop.f32.mrb[0].mxu0
  %v4253 = vadd.f32 %v3868, %v4252
  %v4254 = vpop.f32.mrb[0].mxu0
  %v4255 = vpop.f32.mrb[0].mxu0
  %v4256 = vadd.f32 %v3871, %v4255
  %v4257 = vpop.f32.mrb[0].mxu0
  %4258 = vmatprep.mubr.bf16.mxu0 %v1856
  %4259 = vmatmul.mubr.bf16.gmra.mrb[0].mxu0 %v1855
  %v4260 = vpop.f32.mrb[0].mxu0
  %v4261 = vadd.f32 %v3876, %v4260
  %v4262 = vpop.f32.mrb[0].mxu0
  %v4263 = vpop.f32.mrb[0].mxu0
  %v4264 = vadd.f32 %v3879, %v4263
  %v4265 = vpop.f32.mrb[0].mxu0
  %4266 = vmatprep.mubr.bf16.mxu0 %v1865
  %4267 = vmatmul.mubr.bf16.gmra.mrb[0].mxu0 %v1864
  %v4268 = vpop.f32.mrb[0].mxu0
  %v4269 = vadd.f32 %v3884, %v4268
  %v4270 = vpop.f32.mrb[0].mxu0
  %v4271 = vpop.f32.mrb[0].mxu0
  %v4272 = vadd.f32 %v3887, %v4271
  %v4273 = vpop.f32.mrb[0].mxu0
  %4274 = vmatprep.mubr.bf16.mxu0 %v1874
  %4275 = vmatmul.mubr.bf16.gmra.mrb[0].mxu0 %v1873
  %v4276 = vpop.f32.mrb[0].mxu0
  %v4277 = vadd.f32 %v3892, %v4276
  %v4278 = vpop.f32.mrb[0].mxu0
  %v4279 = vpop.f32.mrb[0].mxu0
  %v4280 = vadd.f32 %v3895, %v4279
  %v4281 = vpop.f32.mrb[0].mxu0
  %4282 = vmatprep.mubr.bf16.mxu0 %v1883
  %4283 = vmatmul.mubr.bf16.gmra.mrb[0].mxu0 %v1882
  %v4284 = vpop.f32.mrb[0].mxu0
  %v4285 = vadd.f32 %v3900, %v4284
  %v4286 = vpop.f32.mrb[0].mxu0
  %v4287 = vpop.f32.mrb[0].mxu0
  %v4288 = vadd.f32 %v3903, %v4287
  %v4289 = vpop.f32.mrb[0].mxu0
  %4290 = vmatprep.mubr.bf16.mxu0 %v1892
  %4291 = vmatmul.mubr.bf16.gmra.mrb[0].mxu0 %v1891
  %v4292 = vpop.f32.mrb[0].mxu0
  %v4293 = vadd.f32 %v3908, %v4292
  %v4294 = vpop.f32.mrb[0].mxu0
  %v4295 = vpop.f32.mrb[0].mxu0
  %v4296 = vadd.f32 %v3911, %v4295
  %v4297 = vpop.f32.mrb[0].mxu0
  %4298 = vmatprep.mubr.bf16.mxu0 %v1901
  %4299 = vmatmul.mubr.bf16.gmra.mrb[0].mxu0 %v1900
  %v4300 = vpop.f32.mrb[0].mxu0
  %v4301 = vadd.f32 %v3916, %v4300
  %v4302 = vpop.f32.mrb[0].mxu0
  %v4303 = vpop.f32.mrb[0].mxu0
  %v4304 = vadd.f32 %v3919, %v4303
  %v4305 = vpop.f32.mrb[0].mxu0
  %4306 = vmatprep.mubr.bf16.mxu0 %v1910
  %4307 = vmatmul.mubr.bf16.gmra.mrb[0].mxu0 %v1909
  %v4308 = vpop.f32.mrb[0].mxu0
  %v4309 = vadd.f32 %v3924, %v4308
  %v4310 = vpop.f32.mrb[0].mxu0
  %v4311 = vpop.f32.mrb[0].mxu0
  %v4312 = vadd.f32 %v3927, %v4311
  %v4313 = vpop.f32.mrb[0].mxu0
  %4314 = vmatprep.mubr.bf16.mxu0 %v1919
  %4315 = vmatmul.mubr.bf16.gmra.mrb[0].mxu0 %v1918
  %v4316 = vpop.f32.mrb[0].mxu0
  %v4317 = vadd.f32 %v3932, %v4316
  %v4318 = vpop.f32.mrb[0].mxu0
  %v4319 = vpop.f32.mrb[0].mxu0
  %v4320 = vadd.f32 %v3935, %v4319
  %v4321 = vpop.f32.mrb[0].mxu0
  %4322 = vmatprep.mubr.bf16.mxu0 %v1928
  %4323 = vmatmul.mubr.bf16.gmra.mrb[0].mxu0 %v1927
  %v4324 = vpop.f32.mrb[0].mxu0
  %v4325 = vadd.f32 %v3940, %v4324
  %v4326 = vpop.f32.mrb[0].mxu0
  %v4327 = vpop.f32.mrb[0].mxu0
  %v4328 = vadd.f32 %v3943, %v4327
  %v4329 = vpop.f32.mrb[0].mxu0
  %4330 = vmatprep.mubr.bf16.mxu0 %v1937
  %4331 = vmatmul.mubr.bf16.gmra.mrb[0].mxu0 %v1936
  %v4332 = vpop.f32.mrb[0].mxu0
  %v4333 = vadd.f32 %v3948, %v4332
  %v4334 = vpop.f32.mrb[0].mxu0
  %v4335 = vpop.f32.mrb[0].mxu0
  %v4336 = vadd.f32 %v3951, %v4335
  %v4337 = vpop.f32.mrb[0].mxu0
  %4338 = vmatprep.mubr.bf16.mxu0 %v1946
  %4339 = vmatmul.mubr.bf16.gmra.mrb[0].mxu0 %v1945
  %v4340 = vpop.f32.mrb[0].mxu0
  %v4341 = vadd.f32 %v3956, %v4340
  %v4342 = vpop.f32.mrb[0].mxu0
  %v4343 = vpop.f32.mrb[0].mxu0
  %v4344 = vadd.f32 %v3959, %v4343
  %v4345 = vpop.f32.mrb[0].mxu0
  %4346 = vmatprep.mubr.bf16.mxu0 %v1955
  %4347 = vmatmul.mubr.bf16.gmra.mrb[0].mxu0 %v1954
  %v4348 = vpop.f32.mrb[0].mxu0
  %v4349 = vadd.f32 %v3964, %v4348
  %v4350 = vpop.f32.mrb[0].mxu0
  %v4351 = vpop.f32.mrb[0].mxu0
  %v4352 = vadd.f32 %v3967, %v4351
  %v4353 = vpop.f32.mrb[0].mxu0
  %4354 = vmatprep.mubr.bf16.mxu0 %v1964
  %4355 = vmatmul.mubr.bf16.gmra.mrb[0].mxu0 %v1963
  %v4356 = vpop.f32.mrb[0].mxu0
  %v4357 = vadd.f32 %v3972, %v4356
  %v4358 = vpop.f32.mrb[0].mxu0
  %v4359 = vpop.f32.mrb[0].mxu0
  %v4360 = vadd.f32 %v3975, %v4359
  %v4361 = vpop.f32.mrb[0].mxu0
  %4362 = vmatprep.mubr.bf16.mxu0 %v1973
  %4363 = vmatmul.mubr.bf16.gmra.mrb[0].mxu0 %v1972
  %v4364 = vpop.f32.mrb[0].mxu0
  %v4365 = vadd.f32 %v3980, %v4364
  %v4366 = vpop.f32.mrb[0].mxu0
  %v4367 = vpop.f32.mrb[0].mxu0
  %v4368 = vadd.f32 %v3983, %v4367
  %v4369 = vpop.f32.mrb[0].mxu0
  %4370 = vmatprep.mubr.bf16.mxu0 %v1982
  %4371 = vmatmul.mubr.bf16.gmra.mrb[0].mxu0 %v1981
  %v4372 = vpop.f32.mrb[0].mxu0
  %v4373 = vadd.f32 %v3988, %v4372
  %v4374 = vpop.f32.mrb[0].mxu0
  %v4375 = vpop.f32.mrb[0].mxu0
  %v4376 = vadd.f32 %v3991, %v4375
  %v4377 = vpop.f32.mrb[0].mxu0
  %4378 = vmatprep.mubr.bf16.mxu0 %v1991
  %4379 = vmatmul.mubr.bf16.gmra.mrb[0].mxu0 %v1990
  %v4380 = vpop.f32.mrb[0].mxu0
  %v4381 = vadd.f32 %v3996, %v4380
  %v4382 = vpop.f32.mrb[0].mxu0
  %v4383 = vpop.f32.mrb[0].mxu0
  %v4384 = vadd.f32 %v3999, %v4383
  %v4385 = vpop.f32.mrb[0].mxu0
  %4386 = vmatprep.mubr.bf16.mxu0 %v2000
  %4387 = vmatmul.mubr.bf16.gmra.mrb[0].mxu0 %v1999
  %v4388 = vpop.f32.mrb[0].mxu0
  %v4389 = vadd.f32 %v4004, %v4388
  %v4390 = vpop.f32.mrb[0].mxu0
  %v4391 = vpop.f32.mrb[0].mxu0
  %v4392 = vadd.f32 %v4007, %v4391
  %v4393 = vpop.f32.mrb[0].mxu0
  %4394 = vmatprep.mubr.bf16.mxu0 %v2009
  %4395 = vmatmul.mubr.bf16.gmra.mrb[0].mxu0 %v2008
  %v4396 = vpop.f32.mrb[0].mxu0
  %v4397 = vadd.f32 %v4012, %v4396
  %v4398 = vpop.f32.mrb[0].mxu0
  %v4399 = vpop.f32.mrb[0].mxu0
  %v4400 = vadd.f32 %v4015, %v4399
  %v4401 = vpop.f32.mrb[0].mxu0
  %4402 = vmatprep.mubr.bf16.mxu0 %v2018
  %4403 = vmatmul.mubr.bf16.gmra.mrb[0].mxu0 %v2017
  %v4404 = vpop.f32.mrb[0].mxu0
  %v4405 = vadd.f32 %v4020, %v4404
  %v4406 = vpop.f32.mrb[0].mxu0
  %v4407 = vpop.f32.mrb[0].mxu0
  %v4408 = vadd.f32 %v4023, %v4407
  %v4409 = vpop.f32.mrb[0].mxu0
  %4410 = vmatprep.mubr.bf16.mxu0 %v2027
  %4411 = vmatmul.mubr.bf16.gmra.mrb[0].mxu0 %v2026
  %v4412 = vpop.f32.mrb[0].mxu0
  %v4413 = vadd.f32 %v4028, %v4412
  %v4414 = vpop.f32.mrb[0].mxu0
  %v4415 = vpop.f32.mrb[0].mxu0
  %v4416 = vadd.f32 %v4031, %v4415
  %v4417 = vpop.f32.mrb[0].mxu0
  %4418 = vmatprep.mubr.bf16.mxu0 %v2036
  %4419 = vmatmul.mubr.bf16.gmra.mrb[0].mxu0 %v2035
  %v4420 = vpop.f32.mrb[0].mxu0
  %v4421 = vadd.f32 %v4036, %v4420
  %v4422 = vpop.f32.mrb[0].mxu0
  %v4423 = vpop.f32.mrb[0].mxu0
  %v4424 = vadd.f32 %v4039, %v4423
  %v4425 = vpop.f32.mrb[0].mxu0
  %4426 = vmatprep.mubr.bf16.mxu0 %v2045
  %4427 = vmatmul.mubr.bf16.gmra.mrb[0].mxu0 %v2044
  %v4428 = vpop.f32.mrb[0].mxu0
  %v4429 = vadd.f32 %v4044, %v4428
  %v4430 = vpop.f32.mrb[0].mxu0
  %v4431 = vpop.f32.mrb[0].mxu0
  %v4432 = vadd.f32 %v4047, %v4431
  %v4433 = vpop.f32.mrb[0].mxu0
  %4434 = vmatprep.mubr.bf16.mxu0 %v2054
  %4435 = vmatmul.mubr.bf16.gmra.mrb[0].mxu0 %v2053
  %v4436 = vpop.f32.mrb[0].mxu0
  %v4437 = vadd.f32 %v4052, %v4436
  %v4438 = vpop.f32.mrb[0].mxu0
  %v4439 = vpop.f32.mrb[0].mxu0
  %v4440 = vadd.f32 %v4055, %v4439
  %v4441 = vpop.f32.mrb[0].mxu0
  %4442 = vmatprep.mubr.bf16.mxu0 %v2063
  %4443 = vmatmul.mubr.bf16.gmra.mrb[0].mxu0 %v2062
  %v4444 = vpop.f32.mrb[0].mxu0
  %v4445 = vadd.f32 %v4060, %v4444
  %v4446 = vpop.f32.mrb[0].mxu0
  %v4447 = vpop.f32.mrb[0].mxu0
  %v4448 = vadd.f32 %v4063, %v4447
  %v4449 = vpop.f32.mrb[0].mxu0
  %4450 = vmatprep.mubr.bf16.mxu0 %v2072
  %4451 = vmatmul.mubr.bf16.gmra.mrb[0].mxu0 %v2071
  %v4452 = vpop.f32.mrb[0].mxu0
  %v4453 = vadd.f32 %v4068, %v4452
  %v4454 = vpop.f32.mrb[0].mxu0
  %v4455 = vpop.f32.mrb[0].mxu0
  %v4456 = vadd.f32 %v4071, %v4455
  %v4457 = vpop.f32.mrb[0].mxu0
  %4458 = vmatprep.mubr.bf16.mxu0 %v2081
  %4459 = vmatmul.mubr.bf16.gmra.mrb[0].mxu0 %v2080
  %v4460 = vpop.f32.mrb[0].mxu0
  %v4461 = vadd.f32 %v4076, %v4460
  %v4462 = vpop.f32.mrb[0].mxu0
  %v4463 = vpop.f32.mrb[0].mxu0
  %v4464 = vadd.f32 %v4079, %v4463
  %v4465 = vpop.f32.mrb[0].mxu0
  %4466 = vmatprep.mubr.bf16.mxu0 %v2090
  %4467 = vmatmul.mubr.bf16.gmra.mrb[0].mxu0 %v2089
  %v4468 = vpop.f32.mrb[0].mxu0
  %v4469 = vadd.f32 %v4084, %v4468
  %v4470 = vpop.f32.mrb[0].mxu0
  %v4471 = vpop.f32.mrb[0].mxu0
  %v4472 = vadd.f32 %v4087, %v4471
  %v4473 = vpop.f32.mrb[0].mxu0
  %4474 = vmatprep.mubr.bf16.mxu0 %v2099
  %4475 = vmatmul.mubr.bf16.gmra.mrb[0].mxu0 %v2098
  %v4476 = vpop.f32.mrb[0].mxu0
  %v4477 = vadd.f32 %v4092, %v4476
  %v4478 = vpop.f32.mrb[0].mxu0
  %v4479 = vpop.f32.mrb[0].mxu0
  %v4480 = vadd.f32 %v4095, %v4479
  %v4481 = vpop.f32.mrb[0].mxu0
  %4482 = vmatprep.mubr.bf16.mxu0 %v2108
  %4483 = vmatmul.mubr.bf16.gmra.mrb[0].mxu0 %v2107
  %v4484 = vpop.f32.mrb[0].mxu0
  %v4485 = vadd.f32 %v4100, %v4484
  %v4486 = vpop.f32.mrb[0].mxu0
  %v4487 = vpop.f32.mrb[0].mxu0
  %v4488 = vadd.f32 %v4103, %v4487
  %v4489 = vpop.f32.mrb[0].mxu0
  %4490 = vmatprep.mubr.bf16.mxu0 %v2117
  %4491 = vmatmul.mubr.bf16.gmra.mrb[0].mxu0 %v2116
  %v4492 = vpop.f32.mrb[0].mxu0
  %v4493 = vadd.f32 %v4108, %v4492
  %v4494 = vpop.f32.mrb[0].mxu0
  %v4495 = vpop.f32.mrb[0].mxu0
  %v4496 = vadd.f32 %v4111, %v4495
  %v4497 = vpop.f32.mrb[0].mxu0
  %4498 = vmatprep.mubr.bf16.mxu0 %v2126
  %4499 = vmatmul.mubr.bf16.gmra.mrb[0].mxu0 %v2125
  %v4500 = vpop.f32.mrb[0].mxu0
  %v4501 = vadd.f32 %v4116, %v4500
  %v4502 = vpop.f32.mrb[0].mxu0
  %v4503 = vpop.f32.mrb[0].mxu0
  %v4504 = vadd.f32 %v4119, %v4503
  %v4505 = vpop.f32.mrb[0].mxu0
  %4506 = vmatprep.mubr.bf16.mxu0 %v2135
  %4507 = vmatmul.mubr.bf16.gmra.mrb[0].mxu0 %v2134
  %v4508 = vpop.f32.mrb[0].mxu0
  %v4509 = vadd.f32 %v4124, %v4508
  %v4510 = vpop.f32.mrb[0].mxu0
  %v4511 = vpop.f32.mrb[0].mxu0
  %v4512 = vadd.f32 %v4127, %v4511
  %v4513 = vpop.f32.mrb[0].mxu0
  %4514 = vmatprep.mubr.bf16.mxu0 %v2144
  %4515 = vmatmul.mubr.bf16.gmra.mrb[0].mxu0 %v2143
  %v4516 = vpop.f32.mrb[0].mxu0
  %v4517 = vadd.f32 %v4132, %v4516
  %v4518 = vpop.f32.mrb[0].mxu0
  %v4519 = vpop.f32.mrb[0].mxu0
  %v4520 = vadd.f32 %v4135, %v4519
  %v4521 = vpop.f32.mrb[0].mxu0
  %4522 = vmatprep.mubr.bf16.mxu0 %v2153
  %4523 = vmatmul.mubr.bf16.gmra.mrb[0].mxu0 %v2152
  %v4524 = vpop.f32.mrb[0].mxu0
  %v4525 = vadd.f32 %v4140, %v4524
  %v4526 = vpop.f32.mrb[0].mxu0
  %v4527 = vpop.f32.mrb[0].mxu0
  %v4528 = vadd.f32 %v4143, %v4527
  %v4529 = vpop.f32.mrb[0].mxu0
  %4530 = vmatprep.mubr.bf16.mxu0 %v2162
  %4531 = vmatmul.mubr.bf16.gmra.mrb[0].mxu0 %v2161
  %v4532 = vpop.f32.mrb[0].mxu0
  %v4533 = vadd.f32 %v4148, %v4532
  %v4534 = vpop.f32.mrb[0].mxu0
  %v4535 = vpop.f32.mrb[0].mxu0
  %v4536 = vadd.f32 %v4151, %v4535
  %v4537 = vpop.f32.mrb[0].mxu0
  %4538 = vmatprep.mubr.bf16.mxu0 %v2171
  %4539 = vmatmul.mubr.bf16.gmra.mrb[0].mxu0 %v2170
  %v4540 = vpop.f32.mrb[0].mxu0
  %v4541 = vadd.f32 %v4156, %v4540
  %v4542 = vpop.f32.mrb[0].mxu0
  %v4543 = vpop.f32.mrb[0].mxu0
  %v4544 = vadd.f32 %v4159, %v4543
  %v4545 = vpop.f32.mrb[0].mxu0
  %4546 = vmatprep.mubr.bf16.mxu0 %v2180
  %4547 = vmatmul.mubr.bf16.gmra.mrb[0].mxu0 %v2179
  %v4548 = vpop.f32.mrb[0].mxu0
  %v4549 = vadd.f32 %v4164, %v4548
  %v4550 = vpop.f32.mrb[0].mxu0
  %v4551 = vpop.f32.mrb[0].mxu0
  %v4552 = vadd.f32 %v4167, %v4551
  %v4553 = vpop.f32.mrb[0].mxu0
  %4554 = vmatprep.mubr.bf16.mxu0 %v2189
  %4555 = vmatmul.mubr.bf16.gmra.mrb[0].mxu0 %v2188
  %v4556 = vpop.f32.mrb[0].mxu0
  %v4557 = vadd.f32 %v4172, %v4556
  %v4558 = vpop.f32.mrb[0].mxu0
  %v4559 = vpop.f32.mrb[0].mxu0
  %v4560 = vadd.f32 %v4175, %v4559
  %v4561 = vpop.f32.mrb[0].mxu0
  %4562 = vmatprep.mubr.bf16.mxu0 %v2198
  %4563 = vmatmul.mubr.bf16.gmra.mrb[0].mxu0 %v2197
  %v4564 = vpop.f32.mrb[0].mxu0
  %v4565 = vadd.f32 %v4180, %v4564
  %v4566 = vpop.f32.mrb[0].mxu0
  %v4567 = vpop.f32.mrb[0].mxu0
  %v4568 = vadd.f32 %v4183, %v4567
  %v4569 = vpop.f32.mrb[0].mxu0
  %4570 = vmatprep.mubr.bf16.mxu0 %v2207
  %4571 = vmatmul.mubr.bf16.gmra.mrb[0].mxu0 %v2206
  %v4572 = vpop.f32.mrb[0].mxu0
  %v4573 = vadd.f32 %v4188, %v4572
  %v4574 = vpop.f32.mrb[0].mxu0
  %v4575 = vpop.f32.mrb[0].mxu0
  %v4576 = vadd.f32 %v4191, %v4575
  %v4577 = vpop.f32.mrb[0].mxu0
  %4578 = vmatprep.mubr.bf16.mxu0 %v2216
  %4579 = vmatmul.mubr.bf16.gmra.mrb[0].mxu0 %v2215
  %v4580 = vpop.f32.mrb[0].mxu0
  %v4581 = vadd.f32 %v4196, %v4580
  %v4582 = vpop.f32.mrb[0].mxu0
  %v4583 = vpop.f32.mrb[0].mxu0
  %v4584 = vadd.f32 %v4199, %v4583
  %v4585 = vpop.f32.mrb[0].mxu0
  %4586 = vmatprep.mubr.bf16.mxu0 %v2225
  %4587 = vmatmul.mubr.bf16.gmra.mrb[0].mxu0 %v2224
  %v4588 = vpop.f32.mrb[0].mxu0
  %v4589 = vadd.f32 %v4204, %v4588
  %v4590 = vpop.f32.mrb[0].mxu0
  %v4591 = vpop.f32.mrb[0].mxu0
  %v4592 = vadd.f32 %v4207, %v4591
  %v4593 = vpop.f32.mrb[0].mxu0
  %4594 = vdwg.mxu0
  %4595 = vmatprep.subr.bf16.mxu0 0
  %4596 = vmatpush1.bf16.msra.mxu0 %v2975
  %4597 = vmatprep.subr.bf16.mxu0 0
  %4598 = vmatpush1.bf16.msra.mxu0 %v2976
  %4599 = vmatprep.subr.bf16.mxu0 0
  %4600 = vmatpush1.bf16.msra.mxu0 %v2977
  %4601 = vmatprep.subr.bf16.mxu0 0
  %4602 = vmatpush1.bf16.msra.mxu0 %v2978
  %4603 = vmatprep.subr.bf16.mxu0 0
  %4604 = vmatpush1.bf16.msra.mxu0 %v2979
  %4605 = vmatprep.subr.bf16.mxu0 0
  %4606 = vmatpush1.bf16.msra.mxu0 %v2980
  %4607 = vmatprep.subr.bf16.mxu0 0
  %4608 = vmatpush1.bf16.msra.mxu0 %v2981
  %4609 = vmatprep.subr.bf16.mxu0 0
  %4610 = vmatpush1.bf16.msra.mxu0 %v2982
  %4611 = vmatprep.subr.bf16.mxu0 0
  %4612 = vmatpush1.bf16.msra.mxu0 0
  %4613 = vmatprep.subr.bf16.mxu0 0
  %4614 = vmatpush1.bf16.msra.mxu0 0
  %4615 = vmatprep.subr.bf16.mxu0 0
  %4616 = vmatpush1.bf16.msra.mxu0 0
  %4617 = vmatprep.subr.bf16.mxu0 0
  %4618 = vmatpush1.bf16.msra.mxu0 0
  %4619 = vmatprep.subr.bf16.mxu0 0
  %4620 = vmatpush1.bf16.msra.mxu0 0
  %4621 = vmatprep.subr.bf16.mxu0 0
  %4622 = vmatpush1.bf16.msra.mxu0 0
  %4623 = vmatprep.subr.bf16.mxu0 0
  %4624 = vmatpush1.bf16.msra.mxu0 0
  %4625 = vmatprep.subr.bf16.mxu0 0
  %4626 = vmatpush1.bf16.msra.mxu0 0
  %4627 = vmatprep.mubr.bf16.mxu0 0
  %4628 = vmatmul.mubr.bf16.gmra.mrb[0].mxu0 %v1839
  %v4629 = vpop.f32.mrb[0].mxu0
  %v4630 = vadd.f32 %v4245, %v4629
  %v4631 = vpop.f32.mrb[0].mxu0
  %v4632 = vpop.f32.mrb[0].mxu0
  %v4633 = vadd.f32 %v4248, %v4632
  %v4634 = vpop.f32.mrb[0].mxu0
  %4635 = vmatprep.mubr.bf16.mxu0 0
  %4636 = vmatmul.mubr.bf16.gmra.mrb[0].mxu0 %v1848
  %v4637 = vpop.f32.mrb[0].mxu0
  %v4638 = vadd.f32 %v4253, %v4637
  %v4639 = vpop.f32.mrb[0].mxu0
  %v4640 = vpop.f32.mrb[0].mxu0
  %v4641 = vadd.f32 %v4256, %v4640
  %v4642 = vpop.f32.mrb[0].mxu0
  %4643 = vmatprep.mubr.bf16.mxu0 0
  %4644 = vmatmul.mubr.bf16.gmra.mrb[0].mxu0 %v1857
  %v4645 = vpop.f32.mrb[0].mxu0
  %v4646 = vadd.f32 %v4261, %v4645
  %v4647 = vpop.f32.mrb[0].mxu0
  %v4648 = vpop.f32.mrb[0].mxu0
  %v4649 = vadd.f32 %v4264, %v4648
  %v4650 = vpop.f32.mrb[0].mxu0
  %4651 = vmatprep.mubr.bf16.mxu0 0
  %4652 = vmatmul.mubr.bf16.gmra.mrb[0].mxu0 %v1866
  %v4653 = vpop.f32.mrb[0].mxu0
  %v4654 = vadd.f32 %v4269, %v4653
  %v4655 = vpop.f32.mrb[0].mxu0
  %v4656 = vpop.f32.mrb[0].mxu0
  %v4657 = vadd.f32 %v4272, %v4656
  %v4658 = vpop.f32.mrb[0].mxu0
  %4659 = vmatprep.mubr.bf16.mxu0 0
  %4660 = vmatmul.mubr.bf16.gmra.mrb[0].mxu0 %v1875
  %v4661 = vpop.f32.mrb[0].mxu0
  %v4662 = vadd.f32 %v4277, %v4661
  %v4663 = vpop.f32.mrb[0].mxu0
  %v4664 = vpop.f32.mrb[0].mxu0
  %v4665 = vadd.f32 %v4280, %v4664
  %v4666 = vpop.f32.mrb[0].mxu0
  %4667 = vmatprep.mubr.bf16.mxu0 0
  %4668 = vmatmul.mubr.bf16.gmra.mrb[0].mxu0 %v1884
  %v4669 = vpop.f32.mrb[0].mxu0
  %v4670 = vadd.f32 %v4285, %v4669
  %v4671 = vpop.f32.mrb[0].mxu0
  %v4672 = vpop.f32.mrb[0].mxu0
  %v4673 = vadd.f32 %v4288, %v4672
  %v4674 = vpop.f32.mrb[0].mxu0
  %4675 = vmatprep.mubr.bf16.mxu0 0
  %4676 = vmatmul.mubr.bf16.gmra.mrb[0].mxu0 %v1893
  %v4677 = vpop.f32.mrb[0].mxu0
  %v4678 = vadd.f32 %v4293, %v4677
  %v4679 = vpop.f32.mrb[0].mxu0
  %v4680 = vpop.f32.mrb[0].mxu0
  %v4681 = vadd.f32 %v4296, %v4680
  %v4682 = vpop.f32.mrb[0].mxu0
  %4683 = vmatprep.mubr.bf16.mxu0 0
  %4684 = vmatmul.mubr.bf16.gmra.mrb[0].mxu0 %v1902
  %v4685 = vpop.f32.mrb[0].mxu0
  %v4686 = vadd.f32 %v4301, %v4685
  %v4687 = vpop.f32.mrb[0].mxu0
  %v4688 = vpop.f32.mrb[0].mxu0
  %v4689 = vadd.f32 %v4304, %v4688
  %v4690 = vpop.f32.mrb[0].mxu0
  %4691 = vmatprep.mubr.bf16.mxu0 0
  %4692 = vmatmul.mubr.bf16.gmra.mrb[0].mxu0 %v1911
  %v4693 = vpop.f32.mrb[0].mxu0
  %v4694 = vadd.f32 %v4309, %v4693
  %v4695 = vpop.f32.mrb[0].mxu0
  %v4696 = vpop.f32.mrb[0].mxu0
  %v4697 = vadd.f32 %v4312, %v4696
  %v4698 = vpop.f32.mrb[0].mxu0
  %4699 = vmatprep.mubr.bf16.mxu0 0
  %4700 = vmatmul.mubr.bf16.gmra.mrb[0].mxu0 %v1920
  %v4701 = vpop.f32.mrb[0].mxu0
  %v4702 = vadd.f32 %v4317, %v4701
  %v4703 = vpop.f32.mrb[0].mxu0
  %v4704 = vpop.f32.mrb[0].mxu0
  %v4705 = vadd.f32 %v4320, %v4704
  %v4706 = vpop.f32.mrb[0].mxu0
  %4707 = vmatprep.mubr.bf16.mxu0 0
  %4708 = vmatmul.mubr.bf16.gmra.mrb[0].mxu0 %v1929
  %v4709 = vpop.f32.mrb[0].mxu0
  %v4710 = vadd.f32 %v4325, %v4709
  %v4711 = vpop.f32.mrb[0].mxu0
  %v4712 = vpop.f32.mrb[0].mxu0
  %v4713 = vadd.f32 %v4328, %v4712
  %v4714 = vpop.f32.mrb[0].mxu0
  %4715 = vmatprep.mubr.bf16.mxu0 0
  %4716 = vmatmul.mubr.bf16.gmra.mrb[0].mxu0 %v1938
  %v4717 = vpop.f32.mrb[0].mxu0
  %v4718 = vadd.f32 %v4333, %v4717
  %v4719 = vpop.f32.mrb[0].mxu0
  %v4720 = vpop.f32.mrb[0].mxu0
  %v4721 = vadd.f32 %v4336, %v4720
  %v4722 = vpop.f32.mrb[0].mxu0
  %4723 = vmatprep.mubr.bf16.mxu0 0
  %4724 = vmatmul.mubr.bf16.gmra.mrb[0].mxu0 %v1947
  %v4725 = vpop.f32.mrb[0].mxu0
  %v4726 = vadd.f32 %v4341, %v4725
  %v4727 = vpop.f32.mrb[0].mxu0
  %v4728 = vpop.f32.mrb[0].mxu0
  %v4729 = vadd.f32 %v4344, %v4728
  %v4730 = vpop.f32.mrb[0].mxu0
  %4731 = vmatprep.mubr.bf16.mxu0 0
  %4732 = vmatmul.mubr.bf16.gmra.mrb[0].mxu0 %v1956
  %v4733 = vpop.f32.mrb[0].mxu0
  %v4734 = vadd.f32 %v4349, %v4733
  %v4735 = vpop.f32.mrb[0].mxu0
  %v4736 = vpop.f32.mrb[0].mxu0
  %v4737 = vadd.f32 %v4352, %v4736
  %v4738 = vpop.f32.mrb[0].mxu0
  %4739 = vmatprep.mubr.bf16.mxu0 0
  %4740 = vmatmul.mubr.bf16.gmra.mrb[0].mxu0 %v1965
  %v4741 = vpop.f32.mrb[0].mxu0
  %v4742 = vadd.f32 %v4357, %v4741
  %v4743 = vpop.f32.mrb[0].mxu0
  %v4744 = vpop.f32.mrb[0].mxu0
  %v4745 = vadd.f32 %v4360, %v4744
  %v4746 = vpop.f32.mrb[0].mxu0
  %4747 = vmatprep.mubr.bf16.mxu0 0
  %4748 = vmatmul.mubr.bf16.gmra.mrb[0].mxu0 %v1974
  %v4749 = vpop.f32.mrb[0].mxu0
  %v4750 = vadd.f32 %v4365, %v4749
  %v4751 = vpop.f32.mrb[0].mxu0
  %v4752 = vpop.f32.mrb[0].mxu0
  %v4753 = vadd.f32 %v4368, %v4752
  %v4754 = vpop.f32.mrb[0].mxu0
  %4755 = vmatprep.mubr.bf16.mxu0 0
  %4756 = vmatmul.mubr.bf16.gmra.mrb[0].mxu0 %v1983
  %v4757 = vpop.f32.mrb[0].mxu0
  %v4758 = vadd.f32 %v4373, %v4757
  %v4759 = vpop.f32.mrb[0].mxu0
  %v4760 = vpop.f32.mrb[0].mxu0
  %v4761 = vadd.f32 %v4376, %v4760
  %v4762 = vpop.f32.mrb[0].mxu0
  %4763 = vmatprep.mubr.bf16.mxu0 0
  %4764 = vmatmul.mubr.bf16.gmra.mrb[0].mxu0 %v1992
  %v4765 = vpop.f32.mrb[0].mxu0
  %v4766 = vadd.f32 %v4381, %v4765
  %v4767 = vpop.f32.mrb[0].mxu0
  %v4768 = vpop.f32.mrb[0].mxu0
  %v4769 = vadd.f32 %v4384, %v4768
  %v4770 = vpop.f32.mrb[0].mxu0
  %4771 = vmatprep.mubr.bf16.mxu0 0
  %4772 = vmatmul.mubr.bf16.gmra.mrb[0].mxu0 %v2001
  %v4773 = vpop.f32.mrb[0].mxu0
  %v4774 = vadd.f32 %v4389, %v4773
  %v4775 = vpop.f32.mrb[0].mxu0
  %v4776 = vpop.f32.mrb[0].mxu0
  %v4777 = vadd.f32 %v4392, %v4776
  %v4778 = vpop.f32.mrb[0].mxu0
  %4779 = vmatprep.mubr.bf16.mxu0 0
  %4780 = vmatmul.mubr.bf16.gmra.mrb[0].mxu0 %v2010
  %v4781 = vpop.f32.mrb[0].mxu0
  %v4782 = vadd.f32 %v4397, %v4781
  %v4783 = vpop.f32.mrb[0].mxu0
  %v4784 = vpop.f32.mrb[0].mxu0
  %v4785 = vadd.f32 %v4400, %v4784
  %v4786 = vpop.f32.mrb[0].mxu0
  %4787 = vmatprep.mubr.bf16.mxu0 0
  %4788 = vmatmul.mubr.bf16.gmra.mrb[0].mxu0 %v2019
  %v4789 = vpop.f32.mrb[0].mxu0
  %v4790 = vadd.f32 %v4405, %v4789
  %v4791 = vpop.f32.mrb[0].mxu0
  %v4792 = vpop.f32.mrb[0].mxu0
  %v4793 = vadd.f32 %v4408, %v4792
  %v4794 = vpop.f32.mrb[0].mxu0
  %4795 = vmatprep.mubr.bf16.mxu0 0
  %4796 = vmatmul.mubr.bf16.gmra.mrb[0].mxu0 %v2028
  %v4797 = vpop.f32.mrb[0].mxu0
  %v4798 = vadd.f32 %v4413, %v4797
  %v4799 = vpop.f32.mrb[0].mxu0
  %v4800 = vpop.f32.mrb[0].mxu0
  %v4801 = vadd.f32 %v4416, %v4800
  %v4802 = vpop.f32.mrb[0].mxu0
  %4803 = vmatprep.mubr.bf16.mxu0 0
  %4804 = vmatmul.mubr.bf16.gmra.mrb[0].mxu0 %v2037
  %v4805 = vpop.f32.mrb[0].mxu0
  %v4806 = vadd.f32 %v4421, %v4805
  %v4807 = vpop.f32.mrb[0].mxu0
  %v4808 = vpop.f32.mrb[0].mxu0
  %v4809 = vadd.f32 %v4424, %v4808
  %v4810 = vpop.f32.mrb[0].mxu0
  %4811 = vmatprep.mubr.bf16.mxu0 0
  %4812 = vmatmul.mubr.bf16.gmra.mrb[0].mxu0 %v2046
  %v4813 = vpop.f32.mrb[0].mxu0
  %v4814 = vadd.f32 %v4429, %v4813
  %v4815 = vpop.f32.mrb[0].mxu0
  %v4816 = vpop.f32.mrb[0].mxu0
  %v4817 = vadd.f32 %v4432, %v4816
  %v4818 = vpop.f32.mrb[0].mxu0
  %4819 = vmatprep.mubr.bf16.mxu0 0
  %4820 = vmatmul.mubr.bf16.gmra.mrb[0].mxu0 %v2055
  %v4821 = vpop.f32.mrb[0].mxu0
  %v4822 = vadd.f32 %v4437, %v4821
  %v4823 = vpop.f32.mrb[0].mxu0
  %v4824 = vpop.f32.mrb[0].mxu0
  %v4825 = vadd.f32 %v4440, %v4824
  %v4826 = vpop.f32.mrb[0].mxu0
  %4827 = vmatprep.mubr.bf16.mxu0 0
  %4828 = vmatmul.mubr.bf16.gmra.mrb[0].mxu0 %v2064
  %v4829 = vpop.f32.mrb[0].mxu0
  %v4830 = vadd.f32 %v4445, %v4829
  %v4831 = vpop.f32.mrb[0].mxu0
  %v4832 = vpop.f32.mrb[0].mxu0
  %v4833 = vadd.f32 %v4448, %v4832
  %v4834 = vpop.f32.mrb[0].mxu0
  %4835 = vmatprep.mubr.bf16.mxu0 0
  %4836 = vmatmul.mubr.bf16.gmra.mrb[0].mxu0 %v2073
  %v4837 = vpop.f32.mrb[0].mxu0
  %v4838 = vadd.f32 %v4453, %v4837
  %v4839 = vpop.f32.mrb[0].mxu0
  %v4840 = vpop.f32.mrb[0].mxu0
  %v4841 = vadd.f32 %v4456, %v4840
  %v4842 = vpop.f32.mrb[0].mxu0
  %4843 = vmatprep.mubr.bf16.mxu0 0
  %4844 = vmatmul.mubr.bf16.gmra.mrb[0].mxu0 %v2082
  %v4845 = vpop.f32.mrb[0].mxu0
  %v4846 = vadd.f32 %v4461, %v4845
  %v4847 = vpop.f32.mrb[0].mxu0
  %v4848 = vpop.f32.mrb[0].mxu0
  %v4849 = vadd.f32 %v4464, %v4848
  %v4850 = vpop.f32.mrb[0].mxu0
  %4851 = vmatprep.mubr.bf16.mxu0 0
  %4852 = vmatmul.mubr.bf16.gmra.mrb[0].mxu0 %v2091
  %v4853 = vpop.f32.mrb[0].mxu0
  %v4854 = vadd.f32 %v4469, %v4853
  %v4855 = vpop.f32.mrb[0].mxu0
  %v4856 = vpop.f32.mrb[0].mxu0
  %v4857 = vadd.f32 %v4472, %v4856
  %v4858 = vpop.f32.mrb[0].mxu0
  %4859 = vmatprep.mubr.bf16.mxu0 0
  %4860 = vmatmul.mubr.bf16.gmra.mrb[0].mxu0 %v2100
  %v4861 = vpop.f32.mrb[0].mxu0
  %v4862 = vadd.f32 %v4477, %v4861
  %v4863 = vpop.f32.mrb[0].mxu0
  %v4864 = vpop.f32.mrb[0].mxu0
  %v4865 = vadd.f32 %v4480, %v4864
  %v4866 = vpop.f32.mrb[0].mxu0
  %4867 = vmatprep.mubr.bf16.mxu0 0
  %4868 = vmatmul.mubr.bf16.gmra.mrb[0].mxu0 %v2109
  %v4869 = vpop.f32.mrb[0].mxu0
  %v4870 = vadd.f32 %v4485, %v4869
  %v4871 = vpop.f32.mrb[0].mxu0
  %v4872 = vpop.f32.mrb[0].mxu0
  %v4873 = vadd.f32 %v4488, %v4872
  %v4874 = vpop.f32.mrb[0].mxu0
  %4875 = vmatprep.mubr.bf16.mxu0 0
  %4876 = vmatmul.mubr.bf16.gmra.mrb[0].mxu0 %v2118
  %v4877 = vpop.f32.mrb[0].mxu0
  %v4878 = vadd.f32 %v4493, %v4877
  %v4879 = vpop.f32.mrb[0].mxu0
  %v4880 = vpop.f32.mrb[0].mxu0
  %v4881 = vadd.f32 %v4496, %v4880
  %v4882 = vpop.f32.mrb[0].mxu0
  %4883 = vmatprep.mubr.bf16.mxu0 0
  %4884 = vmatmul.mubr.bf16.gmra.mrb[0].mxu0 %v2127
  %v4885 = vpop.f32.mrb[0].mxu0
  %v4886 = vadd.f32 %v4501, %v4885
  %v4887 = vpop.f32.mrb[0].mxu0
  %v4888 = vpop.f32.mrb[0].mxu0
  %v4889 = vadd.f32 %v4504, %v4888
  %v4890 = vpop.f32.mrb[0].mxu0
  %4891 = vmatprep.mubr.bf16.mxu0 0
  %4892 = vmatmul.mubr.bf16.gmra.mrb[0].mxu0 %v2136
  %v4893 = vpop.f32.mrb[0].mxu0
  %v4894 = vadd.f32 %v4509, %v4893
  %v4895 = vpop.f32.mrb[0].mxu0
  %v4896 = vpop.f32.mrb[0].mxu0
  %v4897 = vadd.f32 %v4512, %v4896
  %v4898 = vpop.f32.mrb[0].mxu0
  %4899 = vmatprep.mubr.bf16.mxu0 0
  %4900 = vmatmul.mubr.bf16.gmra.mrb[0].mxu0 %v2145
  %v4901 = vpop.f32.mrb[0].mxu0
  %v4902 = vadd.f32 %v4517, %v4901
  %v4903 = vpop.f32.mrb[0].mxu0
  %v4904 = vpop.f32.mrb[0].mxu0
  %v4905 = vadd.f32 %v4520, %v4904
  %v4906 = vpop.f32.mrb[0].mxu0
  %4907 = vmatprep.mubr.bf16.mxu0 0
  %4908 = vmatmul.mubr.bf16.gmra.mrb[0].mxu0 %v2154
  %v4909 = vpop.f32.mrb[0].mxu0
  %v4910 = vadd.f32 %v4525, %v4909
  %v4911 = vpop.f32.mrb[0].mxu0
  %v4912 = vpop.f32.mrb[0].mxu0
  %v4913 = vadd.f32 %v4528, %v4912
  %v4914 = vpop.f32.mrb[0].mxu0
  %4915 = vmatprep.mubr.bf16.mxu0 0
  %4916 = vmatmul.mubr.bf16.gmra.mrb[0].mxu0 %v2163
  %v4917 = vpop.f32.mrb[0].mxu0
  %v4918 = vadd.f32 %v4533, %v4917
  %v4919 = vpop.f32.mrb[0].mxu0
  %v4920 = vpop.f32.mrb[0].mxu0
  %v4921 = vadd.f32 %v4536, %v4920
  %v4922 = vpop.f32.mrb[0].mxu0
  %4923 = vmatprep.mubr.bf16.mxu0 0
  %4924 = vmatmul.mubr.bf16.gmra.mrb[0].mxu0 %v2172
  %v4925 = vpop.f32.mrb[0].mxu0
  %v4926 = vadd.f32 %v4541, %v4925
  %v4927 = vpop.f32.mrb[0].mxu0
  %v4928 = vpop.f32.mrb[0].mxu0
  %v4929 = vadd.f32 %v4544, %v4928
  %v4930 = vpop.f32.mrb[0].mxu0
  %4931 = vmatprep.mubr.bf16.mxu0 0
  %4932 = vmatmul.mubr.bf16.gmra.mrb[0].mxu0 %v2181
  %v4933 = vpop.f32.mrb[0].mxu0
  %v4934 = vadd.f32 %v4549, %v4933
  %v4935 = vpop.f32.mrb[0].mxu0
  %v4936 = vpop.f32.mrb[0].mxu0
  %v4937 = vadd.f32 %v4552, %v4936
  %v4938 = vpop.f32.mrb[0].mxu0
  %4939 = vmatprep.mubr.bf16.mxu0 0
  %4940 = vmatmul.mubr.bf16.gmra.mrb[0].mxu0 %v2190
  %v4941 = vpop.f32.mrb[0].mxu0
  %v4942 = vadd.f32 %v4557, %v4941
  %v4943 = vpop.f32.mrb[0].mxu0
  %v4944 = vpop.f32.mrb[0].mxu0
  %v4945 = vadd.f32 %v4560, %v4944
  %v4946 = vpop.f32.mrb[0].mxu0
  %4947 = vmatprep.mubr.bf16.mxu0 0
  %4948 = vmatmul.mubr.bf16.gmra.mrb[0].mxu0 %v2199
  %v4949 = vpop.f32.mrb[0].mxu0
  %v4950 = vadd.f32 %v4565, %v4949
  %v4951 = vpop.f32.mrb[0].mxu0
  %v4952 = vpop.f32.mrb[0].mxu0
  %v4953 = vadd.f32 %v4568, %v4952
  %v4954 = vpop.f32.mrb[0].mxu0
  %4955 = vmatprep.mubr.bf16.mxu0 0
  %4956 = vmatmul.mubr.bf16.gmra.mrb[0].mxu0 %v2208
  %v4957 = vpop.f32.mrb[0].mxu0
  %v4958 = vadd.f32 %v4573, %v4957
  %v4959 = vpop.f32.mrb[0].mxu0
  %v4960 = vpop.f32.mrb[0].mxu0
  %v4961 = vadd.f32 %v4576, %v4960
  %v4962 = vpop.f32.mrb[0].mxu0
  %4963 = vmatprep.mubr.bf16.mxu0 0
  %4964 = vmatmul.mubr.bf16.gmra.mrb[0].mxu0 %v2217
  %v4965 = vpop.f32.mrb[0].mxu0
  %v4966 = vadd.f32 %v4581, %v4965
  %v4967 = vpop.f32.mrb[0].mxu0
  %v4968 = vpop.f32.mrb[0].mxu0
  %v4969 = vadd.f32 %v4584, %v4968
  %v4970 = vpop.f32.mrb[0].mxu0
  %4971 = vmatprep.mubr.bf16.mxu0 0
  %4972 = vmatmul.mubr.bf16.gmra.mrb[0].mxu0 %v2226
  %v4973 = vpop.f32.mrb[0].mxu0
  %v4974 = vadd.f32 %v4589, %v4973
  %v4975 = vpop.f32.mrb[0].mxu0
  %v4976 = vpop.f32.mrb[0].mxu0
  %v4977 = vadd.f32 %v4592, %v4976
  %v4978 = vpop.f32.mrb[0].mxu0
  %4979 = vdwg.mxu0
  %v4980 = vmax.f32 %v4630, %v4718
  %v4981 = vmax.f32 %v4633, %v4721
  %v4982 = vmax.f32 %v4638, %v4726
  %v4983 = vmax.f32 %v4641, %v4729
  %v4984 = vmax.f32 %v4646, %v4734
  %v4985 = vmax.f32 %v4649, %v4737
  %v4986 = vmax.f32 %v4654, %v4742
  %v4987 = vmax.f32 %v4657, %v4745
  %v4988 = vmax.f32 %v4662, %v4750
  %v4989 = vmax.f32 %v4665, %v4753
  %v4990 = vmax.f32 %v4670, %v4758
  %v4991 = vmax.f32 %v4673, %v4761
  %v4992 = vmax.f32 %v4678, %v4766
  %v4993 = vmax.f32 %v4681, %v4769
  %v4994 = vmax.f32 %v4686, %v4774
  %v4995 = vmax.f32 %v4689, %v4777
  %v4996 = vmax.f32 %v4694, %v4782
  %v4997 = vmax.f32 %v4697, %v4785
  %v4998 = vmax.f32 %v4702, %v4790
  %v4999 = vmax.f32 %v4705, %v4793
  %v5000 = vmax.f32 %v4710, %v4798
  %v5001 = vmax.f32 %v4713, %v4801
  %v5002 = vmax.f32 %v4806, %v4894
  %v5003 = vmax.f32 %v4809, %v4897
  %v5004 = vmax.f32 %v4814, %v4902
  %v5005 = vmax.f32 %v4817, %v4905
  %v5006 = vmax.f32 %v4822, %v4910
  %v5007 = vmax.f32 %v4825, %v4913
  %v5008 = vmax.f32 %v4830, %v4918
  %v5009 = vmax.f32 %v4833, %v4921
  %v5010 = vmax.f32 %v4838, %v4926
  %v5011 = vmax.f32 %v4841, %v4929
  %v5012 = vmax.f32 %v4846, %v4934
  %v5013 = vmax.f32 %v4849, %v4937
  %v5014 = vmax.f32 %v4854, %v4942
  %v5015 = vmax.f32 %v4857, %v4945
  %v5016 = vmax.f32 %v4862, %v4950
  %v5017 = vmax.f32 %v4865, %v4953
  %v5018 = vmax.f32 %v4870, %v4958
  %v5019 = vmax.f32 %v4873, %v4961
  %v5020 = vmax.f32 %v4878, %v4966
  %v5021 = vmax.f32 %v4881, %v4969
  %v5022 = vmax.f32 %v4886, %v4974
  %v5023 = vmax.f32 %v4889, %v4977
  %v5024 = vmax.f32 %v4980, %v5002
  %v5025 = vmax.f32 %v4981, %v5003
  %v5026 = vmax.f32 %v4982, %v5004
  %v5027 = vmax.f32 %v4983, %v5005
  %v5028 = vmax.f32 %v4984, %v5006
  %v5029 = vmax.f32 %v4985, %v5007
  %v5030 = vmax.f32 %v4986, %v5008
  %v5031 = vmax.f32 %v4987, %v5009
  %v5032 = vmax.f32 %v4988, %v5010
  %v5033 = vmax.f32 %v4989, %v5011
  %v5034 = vmax.f32 %v4990, %v5012
  %v5035 = vmax.f32 %v4991, %v5013
  %v5036 = vmax.f32 %v4992, %v5014
  %v5037 = vmax.f32 %v4993, %v5015
  %v5038 = vmax.f32 %v4994, %v5016
  %v5039 = vmax.f32 %v4995, %v5017
  %v5040 = vmax.f32 %v4996, %v5018
  %v5041 = vmax.f32 %v4997, %v5019
  %v5042 = vmax.f32 %v4998, %v5020
  %v5043 = vmax.f32 %v4999, %v5021
  %v5044 = vmax.f32 %v5000, %v5022
  %v5045 = vmax.f32 %v5001, %v5023
  %v5046 = vld [vmem:[%s2] sm:$0x1]
  %v5048 = vlaneseq
  %v5049 = vshrl.u32 %v5048, 7
  %v5050 = vsub.s32 0, %v5049
  %v5051 = vrot.slane %v5046, %v5050
  %v5053 = vadd.f32 %v5024, %v5051
  %v5054 = vadd.f32 %v5025, %v5051
  %v5055 = vadd.f32 %v5026, %v5051
  %v5056 = vadd.f32 %v5027, %v5051
  %v5057 = vadd.f32 %v5028, %v5051
  %v5058 = vadd.f32 %v5029, %v5051
  %v5059 = vadd.f32 %v5030, %v5051
  %v5060 = vadd.f32 %v5031, %v5051
  %v5061 = vadd.f32 %v5032, %v5051
  %v5062 = vadd.f32 %v5033, %v5051
  %v5063 = vadd.f32 %v5034, %v5051
  %v5064 = vadd.f32 %v5035, %v5051
  %v5065 = vadd.f32 %v5036, %v5051
  %v5066 = vadd.f32 %v5037, %v5051
  %v5067 = vadd.f32 %v5038, %v5051
  %v5068 = vadd.f32 %v5039, %v5051
  %v5069 = vadd.f32 %v5040, %v5051
  %v5070 = vadd.f32 %v5041, %v5051
  %v5071 = vadd.f32 %v5042, %v5051
  %v5072 = vadd.f32 %v5043, %v5051
  %v5073 = vadd.f32 %v5044, %v5051
  %v5074 = vadd.f32 %v5045, %v5051
  %v5075 = vmax.f32 %v5053, 0.0
  %v5076 = vmax.f32 %v5054, 0.0
  %v5077 = vmax.f32 %v5055, 0.0
  %v5078 = vmax.f32 %v5056, 0.0
  %v5079 = vmax.f32 %v5057, 0.0
  %v5080 = vmax.f32 %v5058, 0.0
  %v5081 = vmax.f32 %v5059, 0.0
  %v5082 = vmax.f32 %v5060, 0.0
  %v5083 = vmax.f32 %v5061, 0.0
  %v5084 = vmax.f32 %v5062, 0.0
  %v5085 = vmax.f32 %v5063, 0.0
  %v5086 = vmax.f32 %v5064, 0.0
  %v5087 = vmax.f32 %v5065, 0.0
  %v5088 = vmax.f32 %v5066, 0.0
  %v5089 = vmax.f32 %v5067, 0.0
  %v5090 = vmax.f32 %v5068, 0.0
  %v5091 = vmax.f32 %v5069, 0.0
  %v5092 = vmax.f32 %v5070, 0.0
  %v5093 = vmax.f32 %v5071, 0.0
  %v5094 = vmax.f32 %v5072, 0.0
  %v5095 = vmax.f32 %v5073, 0.0
  %v5096 = vmax.f32 %v5074, 0.0
  %v5097 = vpack.c.bf16 %v5076, %v5075
  %v5098 = vpack.c.bf16 %v5078, %v5077
  %v5099 = vpack.c.bf16 %v5080, %v5079
  %v5100 = vpack.c.bf16 %v5082, %v5081
  %v5101 = vpack.c.bf16 %v5084, %v5083
  %v5102 = vpack.c.bf16 %v5086, %v5085
  %v5103 = vpack.c.bf16 %v5088, %v5087
  %v5104 = vpack.c.bf16 %v5090, %v5089
  %v5105 = vpack.c.bf16 %v5092, %v5091
  %v5106 = vpack.c.bf16 %v5094, %v5093
  %v5107 = vpack.c.bf16 %v5096, %v5095
  %v5119 = vunpack.c.l.b16 %v5097
  %v5120 = vunpack.c.h.b16 %v5097
  %v5121 = vunpack.c.l.b16 %v5098
  %v5122 = vunpack.c.h.b16 %v5098
  %v5123 = vunpack.c.l.b16 %v5099
  %v5124 = vunpack.c.h.b16 %v5099
  %v5125 = vunpack.c.l.b16 %v5100
  %v5126 = vunpack.c.h.b16 %v5100
  %v5127 = vunpack.c.l.b16 %v5101
  %v5128 = vunpack.c.h.b16 %v5101
  %v5129 = vunpack.c.l.b16 %v5102
  %v5130 = vunpack.c.h.b16 %v5102
  %v5131 = vunpack.c.l.b16 %v5103
  %v5132 = vunpack.c.h.b16 %v5103
  %v5133 = vunpack.c.l.b16 %v5104
  %v5134 = vunpack.c.h.b16 %v5104
  %v5135 = vunpack.c.l.b16 %v5105
  %v5136 = vunpack.c.h.b16 %v5105
  %v5137 = vunpack.c.l.b16 %v5106
  %v5138 = vunpack.c.h.b16 %v5106
  %v5139 = vunpack.c.l.b16 %v5107
  %v5140 = vunpack.c.h.b16 %v5107
  %v5141 = vpack.c.b16 %v5119, %v5119
  %v5142 = vpack.c.b16 %v5120, %v5120
  %v5143 = vpack.c.b16 %v5121, %v5121
  %v5144 = vpack.c.b16 %v5122, %v5122
  %v5145 = vpack.c.b16 %v5123, %v5123
  %v5146 = vpack.c.b16 %v5124, %v5124
  %v5147 = vpack.c.b16 %v5125, %v5125
  %v5148 = vpack.c.b16 %v5126, %v5126
  %v5149 = vpack.c.b16 %v5127, %v5127
  %v5150 = vpack.c.b16 %v5128, %v5128
  %v5151 = vpack.c.b16 %v5129, %v5129
  %v5152 = vpack.c.b16 %v5130, %v5130
  %v5153 = vpack.c.b16 %v5131, %v5131
  %v5154 = vpack.c.b16 %v5132, %v5132
  %v5155 = vpack.c.b16 %v5133, %v5133
  %v5156 = vpack.c.b16 %v5134, %v5134
  %v5157 = vpack.c.b16 %v5135, %v5135
  %v5158 = vpack.c.b16 %v5136, %v5136
  %v5159 = vpack.c.b16 %v5137, %v5137
  %v5160 = vpack.c.b16 %v5138, %v5138
  %v5161 = vpack.c.b16 %v5139, %v5139
  %v5162 = vpack.c.b16 %v5140, %v5140
  %5185 = vst [vmem:[%s3] sm:$0xf] %v5141
  %5186 = vst [vmem:[%s3 + $0x4] sm:$0xf] %v5142
  %5187 = vst [vmem:[%s3 + $0x8] sm:$0xf] %v5143
  %5188 = vst [vmem:[%s3 + $0xc] sm:$0xf] %v5144
  %5189 = vst [vmem:[%s3 + $0x10] sm:$0xf] %v5145
  %5190 = vst [vmem:[%s3 + $0x14] sm:$0xf] %v5146
  %5191 = vst [vmem:[%s3 + $0x18] sm:$0xf] %v5147
  %5192 = vst [vmem:[%s3 + $0x1c] sm:$0xf] %v5148
  %5193 = vst [vmem:[%s3 + $0x20] sm:$0xf] %v5149
  %5194 = vst [vmem:[%s3 + $0x24] sm:$0xf] %v5150
  %5195 = vst [vmem:[%s3 + $0x28] sm:$0xf] %v5151
  %5196 = vst [vmem:[%s3 + $0x2c] sm:$0xf] %v5152
  %5197 = vst [vmem:[%s3 + $0x30] sm:$0xf] %v5153
  %5198 = vst [vmem:[%s3 + $0x34] sm:$0xf] %v5154
  %5199 = vst [vmem:[%s3 + $0x38] sm:$0xf] %v5155
  %5200 = vst [vmem:[%s3 + $0x3c] sm:$0xf] %v5156
  %5201 = vst [vmem:[%s3 + $0x40] sm:$0xf] %v5157
  %5202 = vst [vmem:[%s3 + $0x44] sm:$0xf] %v5158
  %5203 = vst [vmem:[%s3 + $0x48] sm:$0xf] %v5159
  %5204 = vst [vmem:[%s3 + $0x4c] sm:$0xf] %v5160
  %5205 = vst [vmem:[%s3 + $0x50] sm:$0xf] %v5161
  %5206 = vst [vmem:[%s3 + $0x54] sm:$0xf] %v5162
  // Predicated region
  $region14: #{net_forward.4} parent=0 // pred_check
    _
  $region15: #{net_forward.4} parent=0 // pred_check_branch
    %5208 = sbr.rel (0) target = $region17
  $region16: #{net_forward.4} parent=0 // pred_region
    _
  $region17: #{net_forward.4} parent=0 // pred_fallthru
    _
  // Predicated region
  $region18: #{net_forward.4} parent=0 // pred_check
    _
  $region19: #{net_forward.4} parent=0 // pred_check_branch
    %5210 = sbr.rel (0) target = $region21
  $region20: #{net_forward.4} parent=0 // pred_region
    _
  $region21: #{net_forward.4} parent=0 // pred_fallthru
    _

// kernel: net_forward.5
$region0: #{net_forward.5}
  #allocation0 [shape = 'u32[]', space=smem, size = 0x4, offset = 0x4, fixed_abs, tag = 'smem constant byte address 0x4 - core index']
  #allocation1 [shape = 'u32[144,128]{1,0:T(1,128)}', space=vmem, size = 0x12000, scoped, tag = 'internal scratch']
  %s0 = inlined_call_operand.vmem [shape: bf16[32,2176], index: 0, kind: input, shape index: {}]
  %s1 = inlined_call_operand.vmem [shape: bf16[2176,128], index: 1, kind: input, shape index: {}]
  %s2 = inlined_call_operand.vmem [shape: f32[1,128], index: 2, kind: input, shape index: {}]
  %s3 = inlined_call_operand.vmem [shape: bf16[512,512], index: 3, kind: input, shape index: {}]
  %s4 = inlined_call_operand.vmem [shape: f32[1,512], index: 4, kind: input, shape index: {}]
  %s5 = inlined_call_operand.vmem [shape: bf16[512,2], index: 5, kind: input, shape index: {}]
  %s6 = inlined_call_operand.vmem [shape: f32[1,2], index: 6, kind: input, shape index: {}]
  %s7 = inlined_call_operand.hbm [shape: f32[2,2], index: 7, kind: output, shape index: {}]
  %s8 = sld [smem:[#allocation0]]
  $region38: #{net_forward.5} parent=0
    _
  %s10 = ssub.s32 1, %s8
  %s11 = scalar_select 0, %s10, %s8
  $region1: #{net_forward.5} parent=0
    #allocation2 [shape = 'u8[1024]{0}', space=vmem, size = 0x400, scoped, tag = 'output window, operand 0, single buffered']
    #allocation3 [shape = 's32[1]{0}', space=sflag, size = 0x4, scoped, tag = 'scoped memory for net_forward.5']
    %12 = vsyncpa [#allocation3], 0
    // Predicated region
    $region2: #{net_forward.5} parent=1 // pred_check
      _
    $region3: #{net_forward.5} parent=1 // pred_check_branch
      %14 = sbr.rel (0) target = $region5
    $region4: #{net_forward.5} parent=1 // pred_region
      _
    $region5: #{net_forward.5} parent=1 // pred_fallthru
      _
    // Predicated region
    $region6: #{net_forward.5} parent=1 // pred_check
      _
    $region7: #{net_forward.5} parent=1 // pred_check_branch
      %16 = sbr.rel (0) target = $region9
    $region8: #{net_forward.5} parent=1 // pred_region
      _
    $region9: #{net_forward.5} parent=1 // pred_fallthru
      _
    // Predicated region
    $region10: #{net_forward.5} parent=1 // pred_check
      _
    $region11: #{net_forward.5} parent=1 // pred_check_branch
      %18 = sbr.rel (0) target = $region13
    $region12: #{net_forward.5} parent=1 // pred_region
      _
    $region13: #{net_forward.5} parent=1 // pred_fallthru
      _
    // Predicated region
    $region14: #{net_forward.5} parent=1 // pred_check
      _
    $region15: #{net_forward.5} parent=1 // pred_check_branch
      %20 = sbr.rel (0) target = $region17
    $region16: #{net_forward.5} parent=1 // pred_region
      _
    $region17: #{net_forward.5} parent=1 // pred_fallthru
      _
    // Predicated region
    $region18: #{net_forward.5} parent=1 // pred_check
      _
    $region19: #{net_forward.5} parent=1 // pred_check_branch
      %22 = sbr.rel (0) target = $region21
    $region20: #{net_forward.5} parent=1 // pred_region
      _
    $region21: #{net_forward.5} parent=1 // pred_fallthru
      _
    // Predicated region
    $region22: #{net_forward.5} parent=1 // pred_check
      _
    $region23: #{net_forward.5} parent=1 // pred_check_branch
      %24 = sbr.rel (0) target = $region25
    $region24: #{net_forward.5} parent=1 // pred_region
      _
    $region25: #{net_forward.5} parent=1 // pred_fallthru
      _
    // Predicated region
    $region26: #{net_forward.5} parent=1 // pred_check
      _
    $region27: #{net_forward.5} parent=1 // pred_check_branch
      %26 = sbr.rel (0) target = $region29
    $region28: #{net_forward.5} parent=1 // pred_region
      _
    $region29: #{net_forward.5} parent=1 // pred_fallthru
      _
    %v28 = vld [vmem:[%s0] sm:$0xff]
    %v29 = vld [vmem:[%s0 + $0x8] sm:$0xff]
    %v30 = vld [vmem:[%s0 + $0x10] sm:$0xff]
    %v31 = vld [vmem:[%s0 + $0x18] sm:$0xff]
    %v32 = vld [vmem:[%s0 + $0x20] sm:$0xff]
    %v33 = vld [vmem:[%s0 + $0x28] sm:$0xff]
    %v34 = vld [vmem:[%s0 + $0x30] sm:$0xff]
    %v35 = vld [vmem:[%s0 + $0x38] sm:$0xff]
    %v36 = vld [vmem:[%s0 + $0x40] sm:$0xf]
    %v37 = vld [vmem:[%s0 + $0x44] sm:$0xff]
    %v38 = vld [vmem:[%s0 + $0x4c] sm:$0xff]
    %v39 = vld [vmem:[%s0 + $0x54] sm:$0xff]
    %v40 = vld [vmem:[%s0 + $0x5c] sm:$0xff]
    %v41 = vld [vmem:[%s0 + $0x64] sm:$0xff]
    %v42 = vld [vmem:[%s0 + $0x6c] sm:$0xff]
    %v43 = vld [vmem:[%s0 + $0x74] sm:$0xff]
    %v44 = vld [vmem:[%s0 + $0x7c] sm:$0xff]
    %v45 = vld [vmem:[%s0 + $0x84] sm:$0xf]
    %v46 = vld [vmem:[%s0 + $0x88] sm:$0xff]
    %v47 = vld [vmem:[%s0 + $0x90] sm:$0xff]
    %v48 = vld [vmem:[%s0 + $0x98] sm:$0xff]
    %v49 = vld [vmem:[%s0 + $0xa0] sm:$0xff]
    %v50 = vld [vmem:[%s0 + $0xa8] sm:$0xff]
    %v51 = vld [vmem:[%s0 + $0xb0] sm:$0xff]
    %v52 = vld [vmem:[%s0 + $0xb8] sm:$0xff]
    %v53 = vld [vmem:[%s0 + $0xc0] sm:$0xff]
    %v54 = vld [vmem:[%s0 + $0xc8] sm:$0xf]
    %v55 = vld [vmem:[%s0 + $0xcc] sm:$0xff]
    %v56 = vld [vmem:[%s0 + $0xd4] sm:$0xff]
    %v57 = vld [vmem:[%s0 + $0xdc] sm:$0xff]
    %v58 = vld [vmem:[%s0 + $0xe4] sm:$0xff]
    %v59 = vld [vmem:[%s0 + $0xec] sm:$0xff]
    %v60 = vld [vmem:[%s0 + $0xf4] sm:$0xff]
    %v61 = vld [vmem:[%s0 + $0xfc] sm:$0xff]
    %v62 = vld [vmem:[%s0 + $0x104] sm:$0xff]
    %v63 = vld [vmem:[%s0 + $0x10c] sm:$0xf]
    %v64 = vld [vmem:[%s1] sm:$0xf]
    %v65 = vld [vmem:[%s1 + $0x4] sm:$0xf]
    %v66 = vld [vmem:[%s1 + $0x8] sm:$0xf]
    %v67 = vld [vmem:[%s1 + $0xc] sm:$0xf]
    %v68 = vld [vmem:[%s1 + $0x10] sm:$0xf]
    %v69 = vld [vmem:[%s1 + $0x14] sm:$0xf]
    %v70 = vld [vmem:[%s1 + $0x18] sm:$0xf]
    %v71 = vld [vmem:[%s1 + $0x1c] sm:$0xf]
    %v72 = vld [vmem:[%s1 + $0x20] sm:$0xf]
    %v73 = vld [vmem:[%s1 + $0x24] sm:$0xf]
    %v74 = vld [vmem:[%s1 + $0x28] sm:$0xf]
    %v75 = vld [vmem:[%s1 + $0x2c] sm:$0xf]
    %v76 = vld [vmem:[%s1 + $0x30] sm:$0xf]
    %v77 = vld [vmem:[%s1 + $0x34] sm:$0xf]
    %v78 = vld [vmem:[%s1 + $0x38] sm:$0xf]
    %v79 = vld [vmem:[%s1 + $0x3c] sm:$0xf]
    %v80 = vld [vmem:[%s1 + $0x40] sm:$0xf]
    %v81 = vld [vmem:[%s1 + $0x44] sm:$0xf]
    %v82 = vld [vmem:[%s1 + $0x48] sm:$0xf]
    %v83 = vld [vmem:[%s1 + $0x4c] sm:$0xf]
    %v84 = vld [vmem:[%s1 + $0x50] sm:$0xf]
    %v85 = vld [vmem:[%s1 + $0x54] sm:$0xf]
    %v86 = vld [vmem:[%s1 + $0x58] sm:$0xf]
    %v87 = vld [vmem:[%s1 + $0x5c] sm:$0xf]
    %v88 = vld [vmem:[%s1 + $0x60] sm:$0xf]
    %v89 = vld [vmem:[%s1 + $0x64] sm:$0xf]
    %v90 = vld [vmem:[%s1 + $0x68] sm:$0xf]
    %v91 = vld [vmem:[%s1 + $0x6c] sm:$0xf]
    %v92 = vld [vmem:[%s1 + $0x70] sm:$0xf]
    %v93 = vld [vmem:[%s1 + $0x74] sm:$0xf]
    %v94 = vld [vmem:[%s1 + $0x78] sm:$0xf]
    %v95 = vld [vmem:[%s1 + $0x7c] sm:$0xf]
    %v96 = vld [vmem:[%s1 + $0x80] sm:$0xf]
    %v97 = vld [vmem:[%s1 + $0x84] sm:$0xf]
    %v98 = vld [vmem:[%s1 + $0x88] sm:$0xf]
    %v99 = vld [vmem:[%s1 + $0x8c] sm:$0xf]
    %v100 = vld [vmem:[%s1 + $0x90] sm:$0xf]
    %v101 = vld [vmem:[%s1 + $0x94] sm:$0xf]
    %v102 = vld [vmem:[%s1 + $0x98] sm:$0xf]
    %v103 = vld [vmem:[%s1 + $0x9c] sm:$0xf]
    %v104 = vld [vmem:[%s1 + $0xa0] sm:$0xf]
    %v105 = vld [vmem:[%s1 + $0xa4] sm:$0xf]
    %v106 = vld [vmem:[%s1 + $0xa8] sm:$0xf]
    %v107 = vld [vmem:[%s1 + $0xac] sm:$0xf]
    %v108 = vld [vmem:[%s1 + $0xb0] sm:$0xf]
    %v109 = vld [vmem:[%s1 + $0xb4] sm:$0xf]
    %v110 = vld [vmem:[%s1 + $0xb8] sm:$0xf]
    %v111 = vld [vmem:[%s1 + $0xbc] sm:$0xf]
    %v112 = vld [vmem:[%s1 + $0xc0] sm:$0xf]
    %v113 = vld [vmem:[%s1 + $0xc4] sm:$0xf]
    %v114 = vld [vmem:[%s1 + $0xc8] sm:$0xf]
    %v115 = vld [vmem:[%s1 + $0xcc] sm:$0xf]
    %v116 = vld [vmem:[%s1 + $0xd0] sm:$0xf]
    %v117 = vld [vmem:[%s1 + $0xd4] sm:$0xf]
    %v118 = vld [vmem:[%s1 + $0xd8] sm:$0xf]
    %v119 = vld [vmem:[%s1 + $0xdc] sm:$0xf]
    %v120 = vld [vmem:[%s1 + $0xe0] sm:$0xf]
    %v121 = vld [vmem:[%s1 + $0xe4] sm:$0xf]
    %v122 = vld [vmem:[%s1 + $0xe8] sm:$0xf]
    %v123 = vld [vmem:[%s1 + $0xec] sm:$0xf]
    %v124 = vld [vmem:[%s1 + $0xf0] sm:$0xf]
    %v125 = vld [vmem:[%s1 + $0xf4] sm:$0xf]
    %v126 = vld [vmem:[%s1 + $0xf8] sm:$0xf]
    %v127 = vld [vmem:[%s1 + $0xfc] sm:$0xf]
    %v128 = vld [vmem:[%s1 + $0x100] sm:$0xf]
    %v129 = vld [vmem:[%s1 + $0x104] sm:$0xf]
    %v130 = vld [vmem:[%s1 + $0x108] sm:$0xf]
    %v131 = vld [vmem:[%s1 + $0x10c] sm:$0xf]
    %v132 = vld [vmem:[%s1 + $0x110] sm:$0xf]
    %v133 = vld [vmem:[%s1 + $0x114] sm:$0xf]
    %v134 = vld [vmem:[%s1 + $0x118] sm:$0xf]
    %v135 = vld [vmem:[%s1 + $0x11c] sm:$0xf]
    %v136 = vld [vmem:[%s1 + $0x120] sm:$0xf]
    %v137 = vld [vmem:[%s1 + $0x124] sm:$0xf]
    %v138 = vld [vmem:[%s1 + $0x128] sm:$0xf]
    %v139 = vld [vmem:[%s1 + $0x12c] sm:$0xf]
    %v140 = vld [vmem:[%s1 + $0x130] sm:$0xf]
    %v141 = vld [vmem:[%s1 + $0x134] sm:$0xf]
    %v142 = vld [vmem:[%s1 + $0x138] sm:$0xf]
    %v143 = vld [vmem:[%s1 + $0x13c] sm:$0xf]
    %v144 = vld [vmem:[%s1 + $0x140] sm:$0xf]
    %v145 = vld [vmem:[%s1 + $0x144] sm:$0xf]
    %v146 = vld [vmem:[%s1 + $0x148] sm:$0xf]
    %v147 = vld [vmem:[%s1 + $0x14c] sm:$0xf]
    %v148 = vld [vmem:[%s1 + $0x150] sm:$0xf]
    %v149 = vld [vmem:[%s1 + $0x154] sm:$0xf]
    %v150 = vld [vmem:[%s1 + $0x158] sm:$0xf]
    %v151 = vld [vmem:[%s1 + $0x15c] sm:$0xf]
    %v152 = vld [vmem:[%s1 + $0x160] sm:$0xf]
    %v153 = vld [vmem:[%s1 + $0x164] sm:$0xf]
    %v154 = vld [vmem:[%s1 + $0x168] sm:$0xf]
    %v155 = vld [vmem:[%s1 + $0x16c] sm:$0xf]
    %v156 = vld [vmem:[%s1 + $0x170] sm:$0xf]
    %v157 = vld [vmem:[%s1 + $0x174] sm:$0xf]
    %v158 = vld [vmem:[%s1 + $0x178] sm:$0xf]
    %v159 = vld [vmem:[%s1 + $0x17c] sm:$0xf]
    %v160 = vld [vmem:[%s1 + $0x180] sm:$0xf]
    %v161 = vld [vmem:[%s1 + $0x184] sm:$0xf]
    %v162 = vld [vmem:[%s1 + $0x188] sm:$0xf]
    %v163 = vld [vmem:[%s1 + $0x18c] sm:$0xf]
    %v164 = vld [vmem:[%s1 + $0x190] sm:$0xf]
    %v165 = vld [vmem:[%s1 + $0x194] sm:$0xf]
    %v166 = vld [vmem:[%s1 + $0x198] sm:$0xf]
    %v167 = vld [vmem:[%s1 + $0x19c] sm:$0xf]
    %v168 = vld [vmem:[%s1 + $0x1a0] sm:$0xf]
    %v169 = vld [vmem:[%s1 + $0x1a4] sm:$0xf]
    %v170 = vld [vmem:[%s1 + $0x1a8] sm:$0xf]
    %v171 = vld [vmem:[%s1 + $0x1ac] sm:$0xf]
    %v172 = vld [vmem:[%s1 + $0x1b0] sm:$0xf]
    %v173 = vld [vmem:[%s1 + $0x1b4] sm:$0xf]
    %v174 = vld [vmem:[%s1 + $0x1b8] sm:$0xf]
    %v175 = vld [vmem:[%s1 + $0x1bc] sm:$0xf]
    %v176 = vld [vmem:[%s1 + $0x1c0] sm:$0xf]
    %v177 = vld [vmem:[%s1 + $0x1c4] sm:$0xf]
    %v178 = vld [vmem:[%s1 + $0x1c8] sm:$0xf]
    %v179 = vld [vmem:[%s1 + $0x1cc] sm:$0xf]
    %v180 = vld [vmem:[%s1 + $0x1d0] sm:$0xf]
    %v181 = vld [vmem:[%s1 + $0x1d4] sm:$0xf]
    %v182 = vld [vmem:[%s1 + $0x1d8] sm:$0xf]
    %v183 = vld [vmem:[%s1 + $0x1dc] sm:$0xf]
    %v184 = vld [vmem:[%s1 + $0x1e0] sm:$0xf]
    %v185 = vld [vmem:[%s1 + $0x1e4] sm:$0xf]
    %v186 = vld [vmem:[%s1 + $0x1e8] sm:$0xf]
    %v187 = vld [vmem:[%s1 + $0x1ec] sm:$0xf]
    %v188 = vld [vmem:[%s1 + $0x1f0] sm:$0xf]
    %v189 = vld [vmem:[%s1 + $0x1f4] sm:$0xf]
    %v190 = vld [vmem:[%s1 + $0x1f8] sm:$0xf]
    %v191 = vld [vmem:[%s1 + $0x1fc] sm:$0xf]
    %v192 = vld [vmem:[%s1 + $0x200] sm:$0xf]
    %v193 = vld [vmem:[%s1 + $0x204] sm:$0xf]
    %v194 = vld [vmem:[%s1 + $0x208] sm:$0xf]
    %v195 = vld [vmem:[%s1 + $0x20c] sm:$0xf]
    %v196 = vld [vmem:[%s1 + $0x210] sm:$0xf]
    %v197 = vld [vmem:[%s1 + $0x214] sm:$0xf]
    %v198 = vld [vmem:[%s1 + $0x218] sm:$0xf]
    %v199 = vld [vmem:[%s1 + $0x21c] sm:$0xf]
    %v200 = vld [vmem:[%s1 + $0x220] sm:$0xf]
    %v201 = vld [vmem:[%s1 + $0x224] sm:$0xf]
    %v202 = vld [vmem:[%s1 + $0x228] sm:$0xf]
    %v203 = vld [vmem:[%s1 + $0x22c] sm:$0xf]
    %v204 = vld [vmem:[%s1 + $0x230] sm:$0xf]
    %v205 = vld [vmem:[%s1 + $0x234] sm:$0xf]
    %v206 = vld [vmem:[%s1 + $0x238] sm:$0xf]
    %v207 = vld [vmem:[%s1 + $0x23c] sm:$0xf]
    %v208 = vld [vmem:[%s1 + $0x240] sm:$0xf]
    %v209 = vld [vmem:[%s1 + $0x244] sm:$0xf]
    %v210 = vld [vmem:[%s1 + $0x248] sm:$0xf]
    %v211 = vld [vmem:[%s1 + $0x24c] sm:$0xf]
    %v212 = vld [vmem:[%s1 + $0x250] sm:$0xf]
    %v213 = vld [vmem:[%s1 + $0x254] sm:$0xf]
    %v214 = vld [vmem:[%s1 + $0x258] sm:$0xf]
    %v215 = vld [vmem:[%s1 + $0x25c] sm:$0xf]
    %v216 = vld [vmem:[%s1 + $0x260] sm:$0xf]
    %v217 = vld [vmem:[%s1 + $0x264] sm:$0xf]
    %v218 = vld [vmem:[%s1 + $0x268] sm:$0xf]
    %v219 = vld [vmem:[%s1 + $0x26c] sm:$0xf]
    %v220 = vld [vmem:[%s1 + $0x270] sm:$0xf]
    %v221 = vld [vmem:[%s1 + $0x274] sm:$0xf]
    %v222 = vld [vmem:[%s1 + $0x278] sm:$0xf]
    %v223 = vld [vmem:[%s1 + $0x27c] sm:$0xf]
    %v224 = vld [vmem:[%s1 + $0x280] sm:$0xf]
    %v225 = vld [vmem:[%s1 + $0x284] sm:$0xf]
    %v226 = vld [vmem:[%s1 + $0x288] sm:$0xf]
    %v227 = vld [vmem:[%s1 + $0x28c] sm:$0xf]
    %v228 = vld [vmem:[%s1 + $0x290] sm:$0xf]
    %v229 = vld [vmem:[%s1 + $0x294] sm:$0xf]
    %v230 = vld [vmem:[%s1 + $0x298] sm:$0xf]
    %v231 = vld [vmem:[%s1 + $0x29c] sm:$0xf]
    %v232 = vld [vmem:[%s1 + $0x2a0] sm:$0xf]
    %v233 = vld [vmem:[%s1 + $0x2a4] sm:$0xf]
    %v234 = vld [vmem:[%s1 + $0x2a8] sm:$0xf]
    %v235 = vld [vmem:[%s1 + $0x2ac] sm:$0xf]
    %v236 = vld [vmem:[%s1 + $0x2b0] sm:$0xf]
    %v237 = vld [vmem:[%s1 + $0x2b4] sm:$0xf]
    %v238 = vld [vmem:[%s1 + $0x2b8] sm:$0xf]
    %v239 = vld [vmem:[%s1 + $0x2bc] sm:$0xf]
    %v240 = vld [vmem:[%s1 + $0x2c0] sm:$0xf]
    %v241 = vld [vmem:[%s1 + $0x2c4] sm:$0xf]
    %v242 = vld [vmem:[%s1 + $0x2c8] sm:$0xf]
    %v243 = vld [vmem:[%s1 + $0x2cc] sm:$0xf]
    %v244 = vld [vmem:[%s1 + $0x2d0] sm:$0xf]
    %v245 = vld [vmem:[%s1 + $0x2d4] sm:$0xf]
    %v246 = vld [vmem:[%s1 + $0x2d8] sm:$0xf]
    %v247 = vld [vmem:[%s1 + $0x2dc] sm:$0xf]
    %v248 = vld [vmem:[%s1 + $0x2e0] sm:$0xf]
    %v249 = vld [vmem:[%s1 + $0x2e4] sm:$0xf]
    %v250 = vld [vmem:[%s1 + $0x2e8] sm:$0xf]
    %v251 = vld [vmem:[%s1 + $0x2ec] sm:$0xf]
    %v252 = vld [vmem:[%s1 + $0x2f0] sm:$0xf]
    %v253 = vld [vmem:[%s1 + $0x2f4] sm:$0xf]
    %v254 = vld [vmem:[%s1 + $0x2f8] sm:$0xf]
    %v255 = vld [vmem:[%s1 + $0x2fc] sm:$0xf]
    %v256 = vld [vmem:[%s1 + $0x300] sm:$0xf]
    %v257 = vld [vmem:[%s1 + $0x304] sm:$0xf]
    %v258 = vld [vmem:[%s1 + $0x308] sm:$0xf]
    %v259 = vld [vmem:[%s1 + $0x30c] sm:$0xf]
    %v260 = vld [vmem:[%s1 + $0x310] sm:$0xf]
    %v261 = vld [vmem:[%s1 + $0x314] sm:$0xf]
    %v262 = vld [vmem:[%s1 + $0x318] sm:$0xf]
    %v263 = vld [vmem:[%s1 + $0x31c] sm:$0xf]
    %v264 = vld [vmem:[%s1 + $0x320] sm:$0xf]
    %v265 = vld [vmem:[%s1 + $0x324] sm:$0xf]
    %v266 = vld [vmem:[%s1 + $0x328] sm:$0xf]
    %v267 = vld [vmem:[%s1 + $0x32c] sm:$0xf]
    %v268 = vld [vmem:[%s1 + $0x330] sm:$0xf]
    %v269 = vld [vmem:[%s1 + $0x334] sm:$0xf]
    %v270 = vld [vmem:[%s1 + $0x338] sm:$0xf]
    %v271 = vld [vmem:[%s1 + $0x33c] sm:$0xf]
    %v272 = vld [vmem:[%s1 + $0x340] sm:$0xf]
    %v273 = vld [vmem:[%s1 + $0x344] sm:$0xf]
    %v274 = vld [vmem:[%s1 + $0x348] sm:$0xf]
    %v275 = vld [vmem:[%s1 + $0x34c] sm:$0xf]
    %v276 = vld [vmem:[%s1 + $0x350] sm:$0xf]
    %v277 = vld [vmem:[%s1 + $0x354] sm:$0xf]
    %v278 = vld [vmem:[%s1 + $0x358] sm:$0xf]
    %v279 = vld [vmem:[%s1 + $0x35c] sm:$0xf]
    %v280 = vld [vmem:[%s1 + $0x360] sm:$0xf]
    %v281 = vld [vmem:[%s1 + $0x364] sm:$0xf]
    %v282 = vld [vmem:[%s1 + $0x368] sm:$0xf]
    %v283 = vld [vmem:[%s1 + $0x36c] sm:$0xf]
    %v284 = vld [vmem:[%s1 + $0x370] sm:$0xf]
    %v285 = vld [vmem:[%s1 + $0x374] sm:$0xf]
    %v286 = vld [vmem:[%s1 + $0x378] sm:$0xf]
    %v287 = vld [vmem:[%s1 + $0x37c] sm:$0xf]
    %v288 = vld [vmem:[%s1 + $0x380] sm:$0xf]
    %v289 = vld [vmem:[%s1 + $0x384] sm:$0xf]
    %v290 = vld [vmem:[%s1 + $0x388] sm:$0xf]
    %v291 = vld [vmem:[%s1 + $0x38c] sm:$0xf]
    %v292 = vld [vmem:[%s1 + $0x390] sm:$0xf]
    %v293 = vld [vmem:[%s1 + $0x394] sm:$0xf]
    %v294 = vld [vmem:[%s1 + $0x398] sm:$0xf]
    %v295 = vld [vmem:[%s1 + $0x39c] sm:$0xf]
    %v296 = vld [vmem:[%s1 + $0x3a0] sm:$0xf]
    %v297 = vld [vmem:[%s1 + $0x3a4] sm:$0xf]
    %v298 = vld [vmem:[%s1 + $0x3a8] sm:$0xf]
    %v299 = vld [vmem:[%s1 + $0x3ac] sm:$0xf]
    %v300 = vld [vmem:[%s1 + $0x3b0] sm:$0xf]
    %v301 = vld [vmem:[%s1 + $0x3b4] sm:$0xf]
    %v302 = vld [vmem:[%s1 + $0x3b8] sm:$0xf]
    %v303 = vld [vmem:[%s1 + $0x3bc] sm:$0xf]
    %v304 = vld [vmem:[%s1 + $0x3c0] sm:$0xf]
    %v305 = vld [vmem:[%s1 + $0x3c4] sm:$0xf]
    %v306 = vld [vmem:[%s1 + $0x3c8] sm:$0xf]
    %v307 = vld [vmem:[%s1 + $0x3cc] sm:$0xf]
    %v308 = vld [vmem:[%s1 + $0x3d0] sm:$0xf]
    %v309 = vld [vmem:[%s1 + $0x3d4] sm:$0xf]
    %v310 = vld [vmem:[%s1 + $0x3d8] sm:$0xf]
    %v311 = vld [vmem:[%s1 + $0x3dc] sm:$0xf]
    %v312 = vld [vmem:[%s1 + $0x3e0] sm:$0xf]
    %v313 = vld [vmem:[%s1 + $0x3e4] sm:$0xf]
    %v314 = vld [vmem:[%s1 + $0x3e8] sm:$0xf]
    %v315 = vld [vmem:[%s1 + $0x3ec] sm:$0xf]
    %v316 = vld [vmem:[%s1 + $0x3f0] sm:$0xf]
    %v317 = vld [vmem:[%s1 + $0x3f4] sm:$0xf]
    %v318 = vld [vmem:[%s1 + $0x3f8] sm:$0xf]
    %v319 = vld [vmem:[%s1 + $0x3fc] sm:$0xf]
    %v320 = vld [vmem:[%s1 + $0x400] sm:$0xf]
    %v321 = vld [vmem:[%s1 + $0x404] sm:$0xf]
    %v322 = vld [vmem:[%s1 + $0x408] sm:$0xf]
    %v323 = vld [vmem:[%s1 + $0x40c] sm:$0xf]
    %v324 = vld [vmem:[%s1 + $0x410] sm:$0xf]
    %v325 = vld [vmem:[%s1 + $0x414] sm:$0xf]
    %v326 = vld [vmem:[%s1 + $0x418] sm:$0xf]
    %v327 = vld [vmem:[%s1 + $0x41c] sm:$0xf]
    %v328 = vld [vmem:[%s1 + $0x420] sm:$0xf]
    %v329 = vld [vmem:[%s1 + $0x424] sm:$0xf]
    %v330 = vld [vmem:[%s1 + $0x428] sm:$0xf]
    %v331 = vld [vmem:[%s1 + $0x42c] sm:$0xf]
    %v332 = vld [vmem:[%s1 + $0x430] sm:$0xf]
    %v333 = vld [vmem:[%s1 + $0x434] sm:$0xf]
    %v334 = vld [vmem:[%s1 + $0x438] sm:$0xf]
    %v335 = vld [vmem:[%s1 + $0x43c] sm:$0xf]
    %v372 = vunpack.c.l.b16 %v28
    %v373 = vunpack.c.h.b16 %v28
    %v374 = vunpack.c.l.b16 %v29
    %v375 = vunpack.c.h.b16 %v29
    %v376 = vunpack.c.l.b16 %v30
    %v377 = vunpack.c.h.b16 %v30
    %v378 = vunpack.c.l.b16 %v31
    %v379 = vunpack.c.h.b16 %v31
    %v380 = vunpack.c.l.b16 %v32
    %v381 = vunpack.c.h.b16 %v32
    %v382 = vunpack.c.l.b16 %v33
    %v383 = vunpack.c.h.b16 %v33
    %v384 = vunpack.c.l.b16 %v34
    %v385 = vunpack.c.h.b16 %v34
    %v386 = vunpack.c.l.b16 %v35
    %v387 = vunpack.c.h.b16 %v35
    %v388 = vunpack.c.l.b16 %v36
    %v389 = vunpack.c.l.b16 %v37
    %v390 = vunpack.c.h.b16 %v37
    %v391 = vunpack.c.l.b16 %v38
    %v392 = vunpack.c.h.b16 %v38
    %v393 = vunpack.c.l.b16 %v39
    %v394 = vunpack.c.h.b16 %v39
    %v395 = vunpack.c.l.b16 %v40
    %v396 = vunpack.c.h.b16 %v40
    %v397 = vunpack.c.l.b16 %v41
    %v398 = vunpack.c.h.b16 %v41
    %v399 = vunpack.c.l.b16 %v42
    %v400 = vunpack.c.h.b16 %v42
    %v401 = vunpack.c.l.b16 %v43
    %v402 = vunpack.c.h.b16 %v43
    %v403 = vunpack.c.l.b16 %v44
    %v404 = vunpack.c.h.b16 %v44
    %v405 = vunpack.c.l.b16 %v45
    %v406 = vunpack.c.l.b16 %v46
    %v407 = vunpack.c.h.b16 %v46
    %v408 = vunpack.c.l.b16 %v47
    %v409 = vunpack.c.h.b16 %v47
    %v410 = vunpack.c.l.b16 %v48
    %v411 = vunpack.c.h.b16 %v48
    %v412 = vunpack.c.l.b16 %v49
    %v413 = vunpack.c.h.b16 %v49
    %v414 = vunpack.c.l.b16 %v50
    %v415 = vunpack.c.h.b16 %v50
    %v416 = vunpack.c.l.b16 %v51
    %v417 = vunpack.c.h.b16 %v51
    %v418 = vunpack.c.l.b16 %v52
    %v419 = vunpack.c.h.b16 %v52
    %v420 = vunpack.c.l.b16 %v53
    %v421 = vunpack.c.h.b16 %v53
    %v422 = vunpack.c.l.b16 %v54
    %v423 = vunpack.c.l.b16 %v55
    %v424 = vunpack.c.h.b16 %v55
    %v425 = vunpack.c.l.b16 %v56
    %v426 = vunpack.c.h.b16 %v56
    %v427 = vunpack.c.l.b16 %v57
    %v428 = vunpack.c.h.b16 %v57
    %v429 = vunpack.c.l.b16 %v58
    %v430 = vunpack.c.h.b16 %v58
    %v431 = vunpack.c.l.b16 %v59
    %v432 = vunpack.c.h.b16 %v59
    %v433 = vunpack.c.l.b16 %v60
    %v434 = vunpack.c.h.b16 %v60
    %v435 = vunpack.c.l.b16 %v61
    %v436 = vunpack.c.h.b16 %v61
    %v437 = vunpack.c.l.b16 %v62
    %v438 = vunpack.c.h.b16 %v62
    %v439 = vunpack.c.l.b16 %v63
    %v440 = vpack.c.b16 %v389, %v372
    %v441 = vpack.c.b16 %v390, %v373
    %v442 = vpack.c.b16 %v391, %v374
    %v443 = vpack.c.b16 %v392, %v375
    %v444 = vpack.c.b16 %v393, %v376
    %v445 = vpack.c.b16 %v394, %v377
    %v446 = vpack.c.b16 %v395, %v378
    %v447 = vpack.c.b16 %v396, %v379
    %v448 = vpack.c.b16 %v397, %v380
    %v449 = vpack.c.b16 %v398, %v381
    %v450 = vpack.c.b16 %v399, %v382
    %v451 = vpack.c.b16 %v400, %v383
    %v452 = vpack.c.b16 %v401, %v384
    %v453 = vpack.c.b16 %v402, %v385
    %v454 = vpack.c.b16 %v403, %v386
    %v455 = vpack.c.b16 %v404, %v387
    %v456 = vpack.c.b16 %v405, %v388
    %v457 = vpack.c.b16 %v423, %v406
    %v458 = vpack.c.b16 %v424, %v407
    %v459 = vpack.c.b16 %v425, %v408
    %v460 = vpack.c.b16 %v426, %v409
    %v461 = vpack.c.b16 %v427, %v410
    %v462 = vpack.c.b16 %v428, %v411
    %v463 = vpack.c.b16 %v429, %v412
    %v464 = vpack.c.b16 %v430, %v413
    %v465 = vpack.c.b16 %v431, %v414
    %v466 = vpack.c.b16 %v432, %v415
    %v467 = vpack.c.b16 %v433, %v416
    %v468 = vpack.c.b16 %v434, %v417
    %v469 = vpack.c.b16 %v435, %v418
    %v470 = vpack.c.b16 %v436, %v419
    %v471 = vpack.c.b16 %v437, %v420
    %v472 = vpack.c.b16 %v438, %v421
    %v473 = vpack.c.b16 %v439, %v422
    %v780 = vunpack.c.l.b16 %v64
    %v781 = vunpack.c.l.b16 %v65
    %v782 = vunpack.c.l.b16 %v66
    %v783 = vunpack.c.l.b16 %v67
    %v784 = vunpack.c.l.b16 %v68
    %v785 = vunpack.c.l.b16 %v69
    %v786 = vunpack.c.l.b16 %v70
    %v787 = vunpack.c.l.b16 %v71
    %v788 = vunpack.c.l.b16 %v72
    %v789 = vunpack.c.l.b16 %v73
    %v790 = vunpack.c.l.b16 %v74
    %v791 = vunpack.c.l.b16 %v75
    %v792 = vunpack.c.l.b16 %v76
    %v793 = vunpack.c.l.b16 %v77
    %v794 = vunpack.c.l.b16 %v78
    %v795 = vunpack.c.l.b16 %v79
    %v796 = vunpack.c.l.b16 %v80
    %v797 = vunpack.c.l.b16 %v81
    %v798 = vunpack.c.l.b16 %v82
    %v799 = vunpack.c.l.b16 %v83
    %v800 = vunpack.c.l.b16 %v84
    %v801 = vunpack.c.l.b16 %v85
    %v802 = vunpack.c.l.b16 %v86
    %v803 = vunpack.c.l.b16 %v87
    %v804 = vunpack.c.l.b16 %v88
    %v805 = vunpack.c.l.b16 %v89
    %v806 = vunpack.c.l.b16 %v90
    %v807 = vunpack.c.l.b16 %v91
    %v808 = vunpack.c.l.b16 %v92
    %v809 = vunpack.c.l.b16 %v93
    %v810 = vunpack.c.l.b16 %v94
    %v811 = vunpack.c.l.b16 %v95
    %v812 = vunpack.c.l.b16 %v96
    %v813 = vunpack.c.l.b16 %v97
    %v814 = vunpack.c.l.b16 %v98
    %v815 = vunpack.c.l.b16 %v99
    %v816 = vunpack.c.l.b16 %v100
    %v817 = vunpack.c.l.b16 %v101
    %v818 = vunpack.c.l.b16 %v102
    %v819 = vunpack.c.l.b16 %v103
    %v820 = vunpack.c.l.b16 %v104
    %v821 = vunpack.c.l.b16 %v105
    %v822 = vunpack.c.l.b16 %v106
    %v823 = vunpack.c.l.b16 %v107
    %v824 = vunpack.c.l.b16 %v108
    %v825 = vunpack.c.l.b16 %v109
    %v826 = vunpack.c.l.b16 %v110
    %v827 = vunpack.c.l.b16 %v111
    %v828 = vunpack.c.l.b16 %v112
    %v829 = vunpack.c.l.b16 %v113
    %v830 = vunpack.c.l.b16 %v114
    %v831 = vunpack.c.l.b16 %v115
    %v832 = vunpack.c.l.b16 %v116
    %v833 = vunpack.c.l.b16 %v117
    %v834 = vunpack.c.l.b16 %v118
    %v835 = vunpack.c.l.b16 %v119
    %v836 = vunpack.c.l.b16 %v120
    %v837 = vunpack.c.l.b16 %v121
    %v838 = vunpack.c.l.b16 %v122
    %v839 = vunpack.c.l.b16 %v123
    %v840 = vunpack.c.l.b16 %v124
    %v841 = vunpack.c.l.b16 %v125
    %v842 = vunpack.c.l.b16 %v126
    %v843 = vunpack.c.l.b16 %v127
    %v844 = vunpack.c.l.b16 %v128
    %v845 = vunpack.c.l.b16 %v129
    %v846 = vunpack.c.l.b16 %v130
    %v847 = vunpack.c.l.b16 %v131
    %v848 = vunpack.c.l.b16 %v132
    %v849 = vunpack.c.l.b16 %v133
    %v850 = vunpack.c.l.b16 %v134
    %v851 = vunpack.c.l.b16 %v135
    %v852 = vunpack.c.l.b16 %v136
    %v853 = vunpack.c.l.b16 %v137
    %v854 = vunpack.c.l.b16 %v138
    %v855 = vunpack.c.l.b16 %v139
    %v856 = vunpack.c.l.b16 %v140
    %v857 = vunpack.c.l.b16 %v141
    %v858 = vunpack.c.l.b16 %v142
    %v859 = vunpack.c.l.b16 %v143
    %v860 = vunpack.c.l.b16 %v144
    %v861 = vunpack.c.l.b16 %v145
    %v862 = vunpack.c.l.b16 %v146
    %v863 = vunpack.c.l.b16 %v147
    %v864 = vunpack.c.l.b16 %v148
    %v865 = vunpack.c.l.b16 %v149
    %v866 = vunpack.c.l.b16 %v150
    %v867 = vunpack.c.l.b16 %v151
    %v868 = vunpack.c.l.b16 %v152
    %v869 = vunpack.c.l.b16 %v153
    %v870 = vunpack.c.l.b16 %v154
    %v871 = vunpack.c.l.b16 %v155
    %v872 = vunpack.c.l.b16 %v156
    %v873 = vunpack.c.l.b16 %v157
    %v874 = vunpack.c.l.b16 %v158
    %v875 = vunpack.c.l.b16 %v159
    %v876 = vunpack.c.l.b16 %v160
    %v877 = vunpack.c.l.b16 %v161
    %v878 = vunpack.c.l.b16 %v162
    %v879 = vunpack.c.l.b16 %v163
    %v880 = vunpack.c.l.b16 %v164
    %v881 = vunpack.c.l.b16 %v165
    %v882 = vunpack.c.l.b16 %v166
    %v883 = vunpack.c.l.b16 %v167
    %v884 = vunpack.c.l.b16 %v168
    %v885 = vunpack.c.l.b16 %v169
    %v886 = vunpack.c.l.b16 %v170
    %v887 = vunpack.c.l.b16 %v171
    %v888 = vunpack.c.l.b16 %v172
    %v889 = vunpack.c.l.b16 %v173
    %v890 = vunpack.c.l.b16 %v174
    %v891 = vunpack.c.l.b16 %v175
    %v892 = vunpack.c.l.b16 %v176
    %v893 = vunpack.c.l.b16 %v177
    %v894 = vunpack.c.l.b16 %v178
    %v895 = vunpack.c.l.b16 %v179
    %v896 = vunpack.c.l.b16 %v180
    %v897 = vunpack.c.l.b16 %v181
    %v898 = vunpack.c.l.b16 %v182
    %v899 = vunpack.c.l.b16 %v183
    %v900 = vunpack.c.l.b16 %v184
    %v901 = vunpack.c.l.b16 %v185
    %v902 = vunpack.c.l.b16 %v186
    %v903 = vunpack.c.l.b16 %v187
    %v904 = vunpack.c.l.b16 %v188
    %v905 = vunpack.c.l.b16 %v189
    %v906 = vunpack.c.l.b16 %v190
    %v907 = vunpack.c.l.b16 %v191
    %v908 = vunpack.c.l.b16 %v192
    %v909 = vunpack.c.l.b16 %v193
    %v910 = vunpack.c.l.b16 %v194
    %v911 = vunpack.c.l.b16 %v195
    %v912 = vunpack.c.l.b16 %v196
    %v913 = vunpack.c.l.b16 %v197
    %v914 = vunpack.c.l.b16 %v198
    %v915 = vunpack.c.l.b16 %v199
    %v916 = vunpack.c.l.b16 %v200
    %v917 = vunpack.c.l.b16 %v201
    %v918 = vunpack.c.l.b16 %v202
    %v919 = vunpack.c.l.b16 %v203
    %v920 = vunpack.c.l.b16 %v204
    %v921 = vunpack.c.l.b16 %v205
    %v922 = vunpack.c.l.b16 %v206
    %v923 = vunpack.c.l.b16 %v207
    %v924 = vunpack.c.l.b16 %v208
    %v925 = vunpack.c.l.b16 %v209
    %v926 = vunpack.c.l.b16 %v210
    %v927 = vunpack.c.l.b16 %v211
    %v928 = vunpack.c.l.b16 %v212
    %v929 = vunpack.c.l.b16 %v213
    %v930 = vunpack.c.l.b16 %v214
    %v931 = vunpack.c.l.b16 %v215
    %v932 = vunpack.c.l.b16 %v216
    %v933 = vunpack.c.l.b16 %v217
    %v934 = vunpack.c.l.b16 %v218
    %v935 = vunpack.c.l.b16 %v219
    %v936 = vunpack.c.l.b16 %v220
    %v937 = vunpack.c.l.b16 %v221
    %v938 = vunpack.c.l.b16 %v222
    %v939 = vunpack.c.l.b16 %v223
    %v940 = vunpack.c.l.b16 %v224
    %v941 = vunpack.c.l.b16 %v225
    %v942 = vunpack.c.l.b16 %v226
    %v943 = vunpack.c.l.b16 %v227
    %v944 = vunpack.c.l.b16 %v228
    %v945 = vunpack.c.l.b16 %v229
    %v946 = vunpack.c.l.b16 %v230
    %v947 = vunpack.c.l.b16 %v231
    %v948 = vunpack.c.l.b16 %v232
    %v949 = vunpack.c.l.b16 %v233
    %v950 = vunpack.c.l.b16 %v234
    %v951 = vunpack.c.l.b16 %v235
    %v952 = vunpack.c.l.b16 %v236
    %v953 = vunpack.c.l.b16 %v237
    %v954 = vunpack.c.l.b16 %v238
    %v955 = vunpack.c.l.b16 %v239
    %v956 = vunpack.c.l.b16 %v240
    %v957 = vunpack.c.l.b16 %v241
    %v958 = vunpack.c.l.b16 %v242
    %v959 = vunpack.c.l.b16 %v243
    %v960 = vunpack.c.l.b16 %v244
    %v961 = vunpack.c.l.b16 %v245
    %v962 = vunpack.c.l.b16 %v246
    %v963 = vunpack.c.l.b16 %v247
    %v964 = vunpack.c.l.b16 %v248
    %v965 = vunpack.c.l.b16 %v249
    %v966 = vunpack.c.l.b16 %v250
    %v967 = vunpack.c.l.b16 %v251
    %v968 = vunpack.c.l.b16 %v252
    %v969 = vunpack.c.l.b16 %v253
    %v970 = vunpack.c.l.b16 %v254
    %v971 = vunpack.c.l.b16 %v255
    %v972 = vunpack.c.l.b16 %v256
    %v973 = vunpack.c.l.b16 %v257
    %v974 = vunpack.c.l.b16 %v258
    %v975 = vunpack.c.l.b16 %v259
    %v976 = vunpack.c.l.b16 %v260
    %v977 = vunpack.c.l.b16 %v261
    %v978 = vunpack.c.l.b16 %v262
    %v979 = vunpack.c.l.b16 %v263
    %v980 = vunpack.c.l.b16 %v264
    %v981 = vunpack.c.l.b16 %v265
    %v982 = vunpack.c.l.b16 %v266
    %v983 = vunpack.c.l.b16 %v267
    %v984 = vunpack.c.l.b16 %v268
    %v985 = vunpack.c.l.b16 %v269
    %v986 = vunpack.c.l.b16 %v270
    %v987 = vunpack.c.l.b16 %v271
    %v988 = vunpack.c.l.b16 %v272
    %v989 = vunpack.c.l.b16 %v273
    %v990 = vunpack.c.l.b16 %v274
    %v991 = vunpack.c.l.b16 %v275
    %v992 = vunpack.c.l.b16 %v276
    %v993 = vunpack.c.l.b16 %v277
    %v994 = vunpack.c.l.b16 %v278
    %v995 = vunpack.c.l.b16 %v279
    %v996 = vunpack.c.l.b16 %v280
    %v997 = vunpack.c.l.b16 %v281
    %v998 = vunpack.c.l.b16 %v282
    %v999 = vunpack.c.l.b16 %v283
    %v1000 = vunpack.c.l.b16 %v284
    %v1001 = vunpack.c.l.b16 %v285
    %v1002 = vunpack.c.l.b16 %v286
    %v1003 = vunpack.c.l.b16 %v287
    %v1004 = vunpack.c.l.b16 %v288
    %v1005 = vunpack.c.l.b16 %v289
    %v1006 = vunpack.c.l.b16 %v290
    %v1007 = vunpack.c.l.b16 %v291
    %v1008 = vunpack.c.l.b16 %v292
    %v1009 = vunpack.c.l.b16 %v293
    %v1010 = vunpack.c.l.b16 %v294
    %v1011 = vunpack.c.l.b16 %v295
    %v1012 = vunpack.c.l.b16 %v296
    %v1013 = vunpack.c.l.b16 %v297
    %v1014 = vunpack.c.l.b16 %v298
    %v1015 = vunpack.c.l.b16 %v299
    %v1016 = vunpack.c.l.b16 %v300
    %v1017 = vunpack.c.l.b16 %v301
    %v1018 = vunpack.c.l.b16 %v302
    %v1019 = vunpack.c.l.b16 %v303
    %v1020 = vunpack.c.l.b16 %v304
    %v1021 = vunpack.c.l.b16 %v305
    %v1022 = vunpack.c.l.b16 %v306
    %v1023 = vunpack.c.l.b16 %v307
    %v1024 = vunpack.c.l.b16 %v308
    %v1025 = vunpack.c.l.b16 %v309
    %v1026 = vunpack.c.l.b16 %v310
    %v1027 = vunpack.c.l.b16 %v311
    %v1028 = vunpack.c.l.b16 %v312
    %v1029 = vunpack.c.l.b16 %v313
    %v1030 = vunpack.c.l.b16 %v314
    %v1031 = vunpack.c.l.b16 %v315
    %v1032 = vunpack.c.l.b16 %v316
    %v1033 = vunpack.c.l.b16 %v317
    %v1034 = vunpack.c.l.b16 %v318
    %v1035 = vunpack.c.l.b16 %v319
    %v1036 = vunpack.c.l.b16 %v320
    %v1037 = vunpack.c.l.b16 %v321
    %v1038 = vunpack.c.l.b16 %v322
    %v1039 = vunpack.c.l.b16 %v323
    %v1040 = vunpack.c.l.b16 %v324
    %v1041 = vunpack.c.l.b16 %v325
    %v1042 = vunpack.c.l.b16 %v326
    %v1043 = vunpack.c.l.b16 %v327
    %v1044 = vunpack.c.l.b16 %v328
    %v1045 = vunpack.c.l.b16 %v329
    %v1046 = vunpack.c.l.b16 %v330
    %v1047 = vunpack.c.l.b16 %v331
    %v1048 = vunpack.c.l.b16 %v332
    %v1049 = vunpack.c.l.b16 %v333
    %v1050 = vunpack.c.l.b16 %v334
    %v1051 = vunpack.c.l.b16 %v335
    %v1052 = vpack.c.b16 %v781, %v780
    %v1053 = vpack.c.b16 %v783, %v782
    %v1054 = vpack.c.b16 %v785, %v784
    %v1055 = vpack.c.b16 %v787, %v786
    %v1056 = vpack.c.b16 %v789, %v788
    %v1057 = vpack.c.b16 %v791, %v790
    %v1058 = vpack.c.b16 %v793, %v792
    %v1059 = vpack.c.b16 %v795, %v794
    %v1060 = vpack.c.b16 %v797, %v796
    %v1061 = vpack.c.b16 %v799, %v798
    %v1062 = vpack.c.b16 %v801, %v800
    %v1063 = vpack.c.b16 %v803, %v802
    %v1064 = vpack.c.b16 %v805, %v804
    %v1065 = vpack.c.b16 %v807, %v806
    %v1066 = vpack.c.b16 %v809, %v808
    %v1067 = vpack.c.b16 %v811, %v810
    %v1068 = vpack.c.b16 %v813, %v812
    %v1069 = vpack.c.b16 %v815, %v814
    %v1070 = vpack.c.b16 %v817, %v816
    %v1071 = vpack.c.b16 %v819, %v818
    %v1072 = vpack.c.b16 %v821, %v820
    %v1073 = vpack.c.b16 %v823, %v822
    %v1074 = vpack.c.b16 %v825, %v824
    %v1075 = vpack.c.b16 %v827, %v826
    %v1076 = vpack.c.b16 %v829, %v828
    %v1077 = vpack.c.b16 %v831, %v830
    %v1078 = vpack.c.b16 %v833, %v832
    %v1079 = vpack.c.b16 %v835, %v834
    %v1080 = vpack.c.b16 %v837, %v836
    %v1081 = vpack.c.b16 %v839, %v838
    %v1082 = vpack.c.b16 %v841, %v840
    %v1083 = vpack.c.b16 %v843, %v842
    %v1084 = vpack.c.b16 %v845, %v844
    %v1085 = vpack.c.b16 %v847, %v846
    %v1086 = vpack.c.b16 %v849, %v848
    %v1087 = vpack.c.b16 %v851, %v850
    %v1088 = vpack.c.b16 %v853, %v852
    %v1089 = vpack.c.b16 %v855, %v854
    %v1090 = vpack.c.b16 %v857, %v856
    %v1091 = vpack.c.b16 %v859, %v858
    %v1092 = vpack.c.b16 %v861, %v860
    %v1093 = vpack.c.b16 %v863, %v862
    %v1094 = vpack.c.b16 %v865, %v864
    %v1095 = vpack.c.b16 %v867, %v866
    %v1096 = vpack.c.b16 %v869, %v868
    %v1097 = vpack.c.b16 %v871, %v870
    %v1098 = vpack.c.b16 %v873, %v872
    %v1099 = vpack.c.b16 %v875, %v874
    %v1100 = vpack.c.b16 %v877, %v876
    %v1101 = vpack.c.b16 %v879, %v878
    %v1102 = vpack.c.b16 %v881, %v880
    %v1103 = vpack.c.b16 %v883, %v882
    %v1104 = vpack.c.b16 %v885, %v884
    %v1105 = vpack.c.b16 %v887, %v886
    %v1106 = vpack.c.b16 %v889, %v888
    %v1107 = vpack.c.b16 %v891, %v890
    %v1108 = vpack.c.b16 %v893, %v892
    %v1109 = vpack.c.b16 %v895, %v894
    %v1110 = vpack.c.b16 %v897, %v896
    %v1111 = vpack.c.b16 %v899, %v898
    %v1112 = vpack.c.b16 %v901, %v900
    %v1113 = vpack.c.b16 %v903, %v902
    %v1114 = vpack.c.b16 %v905, %v904
    %v1115 = vpack.c.b16 %v907, %v906
    %v1116 = vpack.c.b16 %v909, %v908
    %v1117 = vpack.c.b16 %v911, %v910
    %v1118 = vpack.c.b16 %v913, %v912
    %v1119 = vpack.c.b16 %v915, %v914
    %v1120 = vpack.c.b16 %v917, %v916
    %v1121 = vpack.c.b16 %v919, %v918
    %v1122 = vpack.c.b16 %v921, %v920
    %v1123 = vpack.c.b16 %v923, %v922
    %v1124 = vpack.c.b16 %v925, %v924
    %v1125 = vpack.c.b16 %v927, %v926
    %v1126 = vpack.c.b16 %v929, %v928
    %v1127 = vpack.c.b16 %v931, %v930
    %v1128 = vpack.c.b16 %v933, %v932
    %v1129 = vpack.c.b16 %v935, %v934
    %v1130 = vpack.c.b16 %v937, %v936
    %v1131 = vpack.c.b16 %v939, %v938
    %v1132 = vpack.c.b16 %v941, %v940
    %v1133 = vpack.c.b16 %v943, %v942
    %v1134 = vpack.c.b16 %v945, %v944
    %v1135 = vpack.c.b16 %v947, %v946
    %v1136 = vpack.c.b16 %v949, %v948
    %v1137 = vpack.c.b16 %v951, %v950
    %v1138 = vpack.c.b16 %v953, %v952
    %v1139 = vpack.c.b16 %v955, %v954
    %v1140 = vpack.c.b16 %v957, %v956
    %v1141 = vpack.c.b16 %v959, %v958
    %v1142 = vpack.c.b16 %v961, %v960
    %v1143 = vpack.c.b16 %v963, %v962
    %v1144 = vpack.c.b16 %v965, %v964
    %v1145 = vpack.c.b16 %v967, %v966
    %v1146 = vpack.c.b16 %v969, %v968
    %v1147 = vpack.c.b16 %v971, %v970
    %v1148 = vpack.c.b16 %v973, %v972
    %v1149 = vpack.c.b16 %v975, %v974
    %v1150 = vpack.c.b16 %v977, %v976
    %v1151 = vpack.c.b16 %v979, %v978
    %v1152 = vpack.c.b16 %v981, %v980
    %v1153 = vpack.c.b16 %v983, %v982
    %v1154 = vpack.c.b16 %v985, %v984
    %v1155 = vpack.c.b16 %v987, %v986
    %v1156 = vpack.c.b16 %v989, %v988
    %v1157 = vpack.c.b16 %v991, %v990
    %v1158 = vpack.c.b16 %v993, %v992
    %v1159 = vpack.c.b16 %v995, %v994
    %v1160 = vpack.c.b16 %v997, %v996
    %v1161 = vpack.c.b16 %v999, %v998
    %v1162 = vpack.c.b16 %v1001, %v1000
    %v1163 = vpack.c.b16 %v1003, %v1002
    %v1164 = vpack.c.b16 %v1005, %v1004
    %v1165 = vpack.c.b16 %v1007, %v1006
    %v1166 = vpack.c.b16 %v1009, %v1008
    %v1167 = vpack.c.b16 %v1011, %v1010
    %v1168 = vpack.c.b16 %v1013, %v1012
    %v1169 = vpack.c.b16 %v1015, %v1014
    %v1170 = vpack.c.b16 %v1017, %v1016
    %v1171 = vpack.c.b16 %v1019, %v1018
    %v1172 = vpack.c.b16 %v1021, %v1020
    %v1173 = vpack.c.b16 %v1023, %v1022
    %v1174 = vpack.c.b16 %v1025, %v1024
    %v1175 = vpack.c.b16 %v1027, %v1026
    %v1176 = vpack.c.b16 %v1029, %v1028
    %v1177 = vpack.c.b16 %v1031, %v1030
    %v1178 = vpack.c.b16 %v1033, %v1032
    %v1179 = vpack.c.b16 %v1035, %v1034
    %v1180 = vpack.c.b16 %v1037, %v1036
    %v1181 = vpack.c.b16 %v1039, %v1038
    %v1182 = vpack.c.b16 %v1041, %v1040
    %v1183 = vpack.c.b16 %v1043, %v1042
    %v1184 = vpack.c.b16 %v1045, %v1044
    %v1185 = vpack.c.b16 %v1047, %v1046
    %v1186 = vpack.c.b16 %v1049, %v1048
    %v1187 = vpack.c.b16 %v1051, %v1050
    %1324 = vmatprep.subr.bf16.mxu0 0
    %1325 = vmatpush1.bf16.msra.mxu0 %v1052
    %1326 = vmatprep.subr.bf16.mxu0 0
    %1327 = vmatpush1.bf16.msra.mxu0 %v1053
    %1328 = vmatprep.subr.bf16.mxu0 0
    %1329 = vmatpush1.bf16.msra.mxu0 %v1054
    %1330 = vmatprep.subr.bf16.mxu0 0
    %1331 = vmatpush1.bf16.msra.mxu0 %v1055
    %1332 = vmatprep.subr.bf16.mxu0 0
    %1333 = vmatpush1.bf16.msra.mxu0 %v1056
    %1334 = vmatprep.subr.bf16.mxu0 0
    %1335 = vmatpush1.bf16.msra.mxu0 %v1057
    %1336 = vmatprep.subr.bf16.mxu0 0
    %1337 = vmatpush1.bf16.msra.mxu0 %v1058
    %1338 = vmatprep.subr.bf16.mxu0 0
    %1339 = vmatpush1.bf16.msra.mxu0 %v1059
    %1340 = vmatprep.subr.bf16.mxu0 0
    %1341 = vmatpush1.bf16.msra.mxu0 %v1060
    %1342 = vmatprep.subr.bf16.mxu0 0
    %1343 = vmatpush1.bf16.msra.mxu0 %v1061
    %1344 = vmatprep.subr.bf16.mxu0 0
    %1345 = vmatpush1.bf16.msra.mxu0 %v1062
    %1346 = vmatprep.subr.bf16.mxu0 0
    %1347 = vmatpush1.bf16.msra.mxu0 %v1063
    %1348 = vmatprep.subr.bf16.mxu0 0
    %1349 = vmatpush1.bf16.msra.mxu0 %v1064
    %1350 = vmatprep.subr.bf16.mxu0 0
    %1351 = vmatpush1.bf16.msra.mxu0 %v1065
    %1352 = vmatprep.subr.bf16.mxu0 0
    %1353 = vmatpush1.bf16.msra.mxu0 %v1066
    %1354 = vmatprep.subr.bf16.mxu0 0
    %1355 = vmatpush1.bf16.msra.mxu0 %v1067
    %1356 = vmatprep.mubr.bf16.mxu0 %v441
    %1357 = vmatmul.mubr.bf16.gmra.mrb[0].mxu0 %v440
    %v1358 = vpop.f32.mrb[0].mxu0
    %v1359 = vadd.f32 0.0, %v1358
    %v1360 = vpop.f32.mrb[0].mxu0
    %v1361 = vpop.f32.mrb[0].mxu0
    %v1362 = vadd.f32 0.0, %v1361
    %v1363 = vpop.f32.mrb[0].mxu0
    %1364 = vmatprep.mubr.bf16.mxu0 %v458
    %1365 = vmatmul.mubr.bf16.gmra.mrb[0].mxu0 %v457
    %v1366 = vpop.f32.mrb[0].mxu0
    %v1367 = vadd.f32 0.0, %v1366
    %v1368 = vpop.f32.mrb[0].mxu0
    %v1369 = vpop.f32.mrb[0].mxu0
    %v1370 = vadd.f32 0.0, %v1369
    %v1371 = vpop.f32.mrb[0].mxu0
    %1372 = vdwg.mxu0
    %1373 = vmatprep.subr.bf16.mxu0 0
    %1374 = vmatpush1.bf16.msra.mxu0 %v1068
    %1375 = vmatprep.subr.bf16.mxu0 0
    %1376 = vmatpush1.bf16.msra.mxu0 %v1069
    %1377 = vmatprep.subr.bf16.mxu0 0
    %1378 = vmatpush1.bf16.msra.mxu0 %v1070
    %1379 = vmatprep.subr.bf16.mxu0 0
    %1380 = vmatpush1.bf16.msra.mxu0 %v1071
    %1381 = vmatprep.subr.bf16.mxu0 0
    %1382 = vmatpush1.bf16.msra.mxu0 %v1072
    %1383 = vmatprep.subr.bf16.mxu0 0
    %1384 = vmatpush1.bf16.msra.mxu0 %v1073
    %1385 = vmatprep.subr.bf16.mxu0 0
    %1386 = vmatpush1.bf16.msra.mxu0 %v1074
    %1387 = vmatprep.subr.bf16.mxu0 0
    %1388 = vmatpush1.bf16.msra.mxu0 %v1075
    %1389 = vmatprep.subr.bf16.mxu0 0
    %1390 = vmatpush1.bf16.msra.mxu0 %v1076
    %1391 = vmatprep.subr.bf16.mxu0 0
    %1392 = vmatpush1.bf16.msra.mxu0 %v1077
    %1393 = vmatprep.subr.bf16.mxu0 0
    %1394 = vmatpush1.bf16.msra.mxu0 %v1078
    %1395 = vmatprep.subr.bf16.mxu0 0
    %1396 = vmatpush1.bf16.msra.mxu0 %v1079
    %1397 = vmatprep.subr.bf16.mxu0 0
    %1398 = vmatpush1.bf16.msra.mxu0 %v1080
    %1399 = vmatprep.subr.bf16.mxu0 0
    %1400 = vmatpush1.bf16.msra.mxu0 %v1081
    %1401 = vmatprep.subr.bf16.mxu0 0
    %1402 = vmatpush1.bf16.msra.mxu0 %v1082
    %1403 = vmatprep.subr.bf16.mxu0 0
    %1404 = vmatpush1.bf16.msra.mxu0 %v1083
    %1405 = vmatprep.mubr.bf16.mxu0 %v443
    %1406 = vmatmul.mubr.bf16.gmra.mrb[0].mxu0 %v442
    %v1407 = vpop.f32.mrb[0].mxu0
    %v1408 = vadd.f32 %v1359, %v1407
    %v1409 = vpop.f32.mrb[0].mxu0
    %v1410 = vpop.f32.mrb[0].mxu0
    %v1411 = vadd.f32 %v1362, %v1410
    %v1412 = vpop.f32.mrb[0].mxu0
    %1413 = vmatprep.mubr.bf16.mxu0 %v460
    %1414 = vmatmul.mubr.bf16.gmra.mrb[0].mxu0 %v459
    %v1415 = vpop.f32.mrb[0].mxu0
    %v1416 = vadd.f32 %v1367, %v1415
    %v1417 = vpop.f32.mrb[0].mxu0
    %v1418 = vpop.f32.mrb[0].mxu0
    %v1419 = vadd.f32 %v1370, %v1418
    %v1420 = vpop.f32.mrb[0].mxu0
    %1421 = vdwg.mxu0
    %1422 = vmatprep.subr.bf16.mxu0 0
    %1423 = vmatpush1.bf16.msra.mxu0 %v1084
    %1424 = vmatprep.subr.bf16.mxu0 0
    %1425 = vmatpush1.bf16.msra.mxu0 %v1085
    %1426 = vmatprep.subr.bf16.mxu0 0
    %1427 = vmatpush1.bf16.msra.mxu0 %v1086
    %1428 = vmatprep.subr.bf16.mxu0 0
    %1429 = vmatpush1.bf16.msra.mxu0 %v1087
    %1430 = vmatprep.subr.bf16.mxu0 0
    %1431 = vmatpush1.bf16.msra.mxu0 %v1088
    %1432 = vmatprep.subr.bf16.mxu0 0
    %1433 = vmatpush1.bf16.msra.mxu0 %v1089
    %1434 = vmatprep.subr.bf16.mxu0 0
    %1435 = vmatpush1.bf16.msra.mxu0 %v1090
    %1436 = vmatprep.subr.bf16.mxu0 0
    %1437 = vmatpush1.bf16.msra.mxu0 %v1091
    %1438 = vmatprep.subr.bf16.mxu0 0
    %1439 = vmatpush1.bf16.msra.mxu0 %v1092
    %1440 = vmatprep.subr.bf16.mxu0 0
    %1441 = vmatpush1.bf16.msra.mxu0 %v1093
    %1442 = vmatprep.subr.bf16.mxu0 0
    %1443 = vmatpush1.bf16.msra.mxu0 %v1094
    %1444 = vmatprep.subr.bf16.mxu0 0
    %1445 = vmatpush1.bf16.msra.mxu0 %v1095
    %1446 = vmatprep.subr.bf16.mxu0 0
    %1447 = vmatpush1.bf16.msra.mxu0 %v1096
    %1448 = vmatprep.subr.bf16.mxu0 0
    %1449 = vmatpush1.bf16.msra.mxu0 %v1097
    %1450 = vmatprep.subr.bf16.mxu0 0
    %1451 = vmatpush1.bf16.msra.mxu0 %v1098
    %1452 = vmatprep.subr.bf16.mxu0 0
    %1453 = vmatpush1.bf16.msra.mxu0 %v1099
    %1454 = vmatprep.mubr.bf16.mxu0 %v445
    %1455 = vmatmul.mubr.bf16.gmra.mrb[0].mxu0 %v444
    %v1456 = vpop.f32.mrb[0].mxu0
    %v1457 = vadd.f32 %v1408, %v1456
    %v1458 = vpop.f32.mrb[0].mxu0
    %v1459 = vpop.f32.mrb[0].mxu0
    %v1460 = vadd.f32 %v1411, %v1459
    %v1461 = vpop.f32.mrb[0].mxu0
    %1462 = vmatprep.mubr.bf16.mxu0 %v462
    %1463 = vmatmul.mubr.bf16.gmra.mrb[0].mxu0 %v461
    %v1464 = vpop.f32.mrb[0].mxu0
    %v1465 = vadd.f32 %v1416, %v1464
    %v1466 = vpop.f32.mrb[0].mxu0
    %v1467 = vpop.f32.mrb[0].mxu0
    %v1468 = vadd.f32 %v1419, %v1467
    %v1469 = vpop.f32.mrb[0].mxu0
    %1470 = vdwg.mxu0
    %1471 = vmatprep.subr.bf16.mxu0 0
    %1472 = vmatpush1.bf16.msra.mxu0 %v1100
    %1473 = vmatprep.subr.bf16.mxu0 0
    %1474 = vmatpush1.bf16.msra.mxu0 %v1101
    %1475 = vmatprep.subr.bf16.mxu0 0
    %1476 = vmatpush1.bf16.msra.mxu0 %v1102
    %1477 = vmatprep.subr.bf16.mxu0 0
    %1478 = vmatpush1.bf16.msra.mxu0 %v1103
    %1479 = vmatprep.subr.bf16.mxu0 0
    %1480 = vmatpush1.bf16.msra.mxu0 %v1104
    %1481 = vmatprep.subr.bf16.mxu0 0
    %1482 = vmatpush1.bf16.msra.mxu0 %v1105
    %1483 = vmatprep.subr.bf16.mxu0 0
    %1484 = vmatpush1.bf16.msra.mxu0 %v1106
    %1485 = vmatprep.subr.bf16.mxu0 0
    %1486 = vmatpush1.bf16.msra.mxu0 %v1107
    %1487 = vmatprep.subr.bf16.mxu0 0
    %1488 = vmatpush1.bf16.msra.mxu0 %v1108
    %1489 = vmatprep.subr.bf16.mxu0 0
    %1490 = vmatpush1.bf16.msra.mxu0 %v1109
    %1491 = vmatprep.subr.bf16.mxu0 0
    %1492 = vmatpush1.bf16.msra.mxu0 %v1110
    %1493 = vmatprep.subr.bf16.mxu0 0
    %1494 = vmatpush1.bf16.msra.mxu0 %v1111
    %1495 = vmatprep.subr.bf16.mxu0 0
    %1496 = vmatpush1.bf16.msra.mxu0 %v1112
    %1497 = vmatprep.subr.bf16.mxu0 0
    %1498 = vmatpush1.bf16.msra.mxu0 %v1113
    %1499 = vmatprep.subr.bf16.mxu0 0
    %1500 = vmatpush1.bf16.msra.mxu0 %v1114
    %1501 = vmatprep.subr.bf16.mxu0 0
    %1502 = vmatpush1.bf16.msra.mxu0 %v1115
    %1503 = vmatprep.mubr.bf16.mxu0 %v447
    %1504 = vmatmul.mubr.bf16.gmra.mrb[0].mxu0 %v446
    %v1505 = vpop.f32.mrb[0].mxu0
    %v1506 = vadd.f32 %v1457, %v1505
    %v1507 = vpop.f32.mrb[0].mxu0
    %v1508 = vpop.f32.mrb[0].mxu0
    %v1509 = vadd.f32 %v1460, %v1508
    %v1510 = vpop.f32.mrb[0].mxu0
    %1511 = vmatprep.mubr.bf16.mxu0 %v464
    %1512 = vmatmul.mubr.bf16.gmra.mrb[0].mxu0 %v463
    %v1513 = vpop.f32.mrb[0].mxu0
    %v1514 = vadd.f32 %v1465, %v1513
    %v1515 = vpop.f32.mrb[0].mxu0
    %v1516 = vpop.f32.mrb[0].mxu0
    %v1517 = vadd.f32 %v1468, %v1516
    %v1518 = vpop.f32.mrb[0].mxu0
    %1519 = vdwg.mxu0
    %1520 = vmatprep.subr.bf16.mxu0 0
    %1521 = vmatpush1.bf16.msra.mxu0 %v1116
    %1522 = vmatprep.subr.bf16.mxu0 0
    %1523 = vmatpush1.bf16.msra.mxu0 %v1117
    %1524 = vmatprep.subr.bf16.mxu0 0
    %1525 = vmatpush1.bf16.msra.mxu0 %v1118
    %1526 = vmatprep.subr.bf16.mxu0 0
    %1527 = vmatpush1.bf16.msra.mxu0 %v1119
    %1528 = vmatprep.subr.bf16.mxu0 0
    %1529 = vmatpush1.bf16.msra.mxu0 %v1120
    %1530 = vmatprep.subr.bf16.mxu0 0
    %1531 = vmatpush1.bf16.msra.mxu0 %v1121
    %1532 = vmatprep.subr.bf16.mxu0 0
    %1533 = vmatpush1.bf16.msra.mxu0 %v1122
    %1534 = vmatprep.subr.bf16.mxu0 0
    %1535 = vmatpush1.bf16.msra.mxu0 %v1123
    %1536 = vmatprep.subr.bf16.mxu0 0
    %1537 = vmatpush1.bf16.msra.mxu0 %v1124
    %1538 = vmatprep.subr.bf16.mxu0 0
    %1539 = vmatpush1.bf16.msra.mxu0 %v1125
    %1540 = vmatprep.subr.bf16.mxu0 0
    %1541 = vmatpush1.bf16.msra.mxu0 %v1126
    %1542 = vmatprep.subr.bf16.mxu0 0
    %1543 = vmatpush1.bf16.msra.mxu0 %v1127
    %1544 = vmatprep.subr.bf16.mxu0 0
    %1545 = vmatpush1.bf16.msra.mxu0 %v1128
    %1546 = vmatprep.subr.bf16.mxu0 0
    %1547 = vmatpush1.bf16.msra.mxu0 %v1129
    %1548 = vmatprep.subr.bf16.mxu0 0
    %1549 = vmatpush1.bf16.msra.mxu0 %v1130
    %1550 = vmatprep.subr.bf16.mxu0 0
    %1551 = vmatpush1.bf16.msra.mxu0 %v1131
    %1552 = vmatprep.mubr.bf16.mxu0 %v449
    %1553 = vmatmul.mubr.bf16.gmra.mrb[0].mxu0 %v448
    %v1554 = vpop.f32.mrb[0].mxu0
    %v1555 = vadd.f32 %v1506, %v1554
    %v1556 = vpop.f32.mrb[0].mxu0
    %v1557 = vpop.f32.mrb[0].mxu0
    %v1558 = vadd.f32 %v1509, %v1557
    %v1559 = vpop.f32.mrb[0].mxu0
    %1560 = vmatprep.mubr.bf16.mxu0 %v466
    %1561 = vmatmul.mubr.bf16.gmra.mrb[0].mxu0 %v465
    %v1562 = vpop.f32.mrb[0].mxu0
    %v1563 = vadd.f32 %v1514, %v1562
    %v1564 = vpop.f32.mrb[0].mxu0
    %v1565 = vpop.f32.mrb[0].mxu0
    %v1566 = vadd.f32 %v1517, %v1565
    %v1567 = vpop.f32.mrb[0].mxu0
    %1568 = vdwg.mxu0
    %1569 = vmatprep.subr.bf16.mxu0 0
    %1570 = vmatpush1.bf16.msra.mxu0 %v1132
    %1571 = vmatprep.subr.bf16.mxu0 0
    %1572 = vmatpush1.bf16.msra.mxu0 %v1133
    %1573 = vmatprep.subr.bf16.mxu0 0
    %1574 = vmatpush1.bf16.msra.mxu0 %v1134
    %1575 = vmatprep.subr.bf16.mxu0 0
    %1576 = vmatpush1.bf16.msra.mxu0 %v1135
    %1577 = vmatprep.subr.bf16.mxu0 0
    %1578 = vmatpush1.bf16.msra.mxu0 %v1136
    %1579 = vmatprep.subr.bf16.mxu0 0
    %1580 = vmatpush1.bf16.msra.mxu0 %v1137
    %1581 = vmatprep.subr.bf16.mxu0 0
    %1582 = vmatpush1.bf16.msra.mxu0 %v1138
    %1583 = vmatprep.subr.bf16.mxu0 0
    %1584 = vmatpush1.bf16.msra.mxu0 %v1139
    %1585 = vmatprep.subr.bf16.mxu0 0
    %1586 = vmatpush1.bf16.msra.mxu0 %v1140
    %1587 = vmatprep.subr.bf16.mxu0 0
    %1588 = vmatpush1.bf16.msra.mxu0 %v1141
    %1589 = vmatprep.subr.bf16.mxu0 0
    %1590 = vmatpush1.bf16.msra.mxu0 %v1142
    %1591 = vmatprep.subr.bf16.mxu0 0
    %1592 = vmatpush1.bf16.msra.mxu0 %v1143
    %1593 = vmatprep.subr.bf16.mxu0 0
    %1594 = vmatpush1.bf16.msra.mxu0 %v1144
    %1595 = vmatprep.subr.bf16.mxu0 0
    %1596 = vmatpush1.bf16.msra.mxu0 %v1145
    %1597 = vmatprep.subr.bf16.mxu0 0
    %1598 = vmatpush1.bf16.msra.mxu0 %v1146
    %1599 = vmatprep.subr.bf16.mxu0 0
    %1600 = vmatpush1.bf16.msra.mxu0 %v1147
    %1601 = vmatprep.mubr.bf16.mxu0 %v451
    %1602 = vmatmul.mubr.bf16.gmra.mrb[0].mxu0 %v450
    %v1603 = vpop.f32.mrb[0].mxu0
    %v1604 = vadd.f32 %v1555, %v1603
    %v1605 = vpop.f32.mrb[0].mxu0
    %v1606 = vpop.f32.mrb[0].mxu0
    %v1607 = vadd.f32 %v1558, %v1606
    %v1608 = vpop.f32.mrb[0].mxu0
    %1609 = vmatprep.mubr.bf16.mxu0 %v468
    %1610 = vmatmul.mubr.bf16.gmra.mrb[0].mxu0 %v467
    %v1611 = vpop.f32.mrb[0].mxu0
    %v1612 = vadd.f32 %v1563, %v1611
    %v1613 = vpop.f32.mrb[0].mxu0
    %v1614 = vpop.f32.mrb[0].mxu0
    %v1615 = vadd.f32 %v1566, %v1614
    %v1616 = vpop.f32.mrb[0].mxu0
    %1617 = vdwg.mxu0
    %1618 = vmatprep.subr.bf16.mxu0 0
    %1619 = vmatpush1.bf16.msra.mxu0 %v1148
    %1620 = vmatprep.subr.bf16.mxu0 0
    %1621 = vmatpush1.bf16.msra.mxu0 %v1149
    %1622 = vmatprep.subr.bf16.mxu0 0
    %1623 = vmatpush1.bf16.msra.mxu0 %v1150
    %1624 = vmatprep.subr.bf16.mxu0 0
    %1625 = vmatpush1.bf16.msra.mxu0 %v1151
    %1626 = vmatprep.subr.bf16.mxu0 0
    %1627 = vmatpush1.bf16.msra.mxu0 %v1152
    %1628 = vmatprep.subr.bf16.mxu0 0
    %1629 = vmatpush1.bf16.msra.mxu0 %v1153
    %1630 = vmatprep.subr.bf16.mxu0 0
    %1631 = vmatpush1.bf16.msra.mxu0 %v1154
    %1632 = vmatprep.subr.bf16.mxu0 0
    %1633 = vmatpush1.bf16.msra.mxu0 %v1155
    %1634 = vmatprep.subr.bf16.mxu0 0
    %1635 = vmatpush1.bf16.msra.mxu0 %v1156
    %1636 = vmatprep.subr.bf16.mxu0 0
    %1637 = vmatpush1.bf16.msra.mxu0 %v1157
    %1638 = vmatprep.subr.bf16.mxu0 0
    %1639 = vmatpush1.bf16.msra.mxu0 %v1158
    %1640 = vmatprep.subr.bf16.mxu0 0
    %1641 = vmatpush1.bf16.msra.mxu0 %v1159
    %1642 = vmatprep.subr.bf16.mxu0 0
    %1643 = vmatpush1.bf16.msra.mxu0 %v1160
    %1644 = vmatprep.subr.bf16.mxu0 0
    %1645 = vmatpush1.bf16.msra.mxu0 %v1161
    %1646 = vmatprep.subr.bf16.mxu0 0
    %1647 = vmatpush1.bf16.msra.mxu0 %v1162
    %1648 = vmatprep.subr.bf16.mxu0 0
    %1649 = vmatpush1.bf16.msra.mxu0 %v1163
    %1650 = vmatprep.mubr.bf16.mxu0 %v453
    %1651 = vmatmul.mubr.bf16.gmra.mrb[0].mxu0 %v452
    %v1652 = vpop.f32.mrb[0].mxu0
    %v1653 = vadd.f32 %v1604, %v1652
    %v1654 = vpop.f32.mrb[0].mxu0
    %v1655 = vpop.f32.mrb[0].mxu0
    %v1656 = vadd.f32 %v1607, %v1655
    %v1657 = vpop.f32.mrb[0].mxu0
    %1658 = vmatprep.mubr.bf16.mxu0 %v470
    %1659 = vmatmul.mubr.bf16.gmra.mrb[0].mxu0 %v469
    %v1660 = vpop.f32.mrb[0].mxu0
    %v1661 = vadd.f32 %v1612, %v1660
    %v1662 = vpop.f32.mrb[0].mxu0
    %v1663 = vpop.f32.mrb[0].mxu0
    %v1664 = vadd.f32 %v1615, %v1663
    %v1665 = vpop.f32.mrb[0].mxu0
    %1666 = vdwg.mxu0
    %1667 = vmatprep.subr.bf16.mxu0 0
    %1668 = vmatpush1.bf16.msra.mxu0 %v1164
    %1669 = vmatprep.subr.bf16.mxu0 0
    %1670 = vmatpush1.bf16.msra.mxu0 %v1165
    %1671 = vmatprep.subr.bf16.mxu0 0
    %1672 = vmatpush1.bf16.msra.mxu0 %v1166
    %1673 = vmatprep.subr.bf16.mxu0 0
    %1674 = vmatpush1.bf16.msra.mxu0 %v1167
    %1675 = vmatprep.subr.bf16.mxu0 0
    %1676 = vmatpush1.bf16.msra.mxu0 %v1168
    %1677 = vmatprep.subr.bf16.mxu0 0
    %1678 = vmatpush1.bf16.msra.mxu0 %v1169
    %1679 = vmatprep.subr.bf16.mxu0 0
    %1680 = vmatpush1.bf16.msra.mxu0 %v1170
    %1681 = vmatprep.subr.bf16.mxu0 0
    %1682 = vmatpush1.bf16.msra.mxu0 %v1171
    %1683 = vmatprep.subr.bf16.mxu0 0
    %1684 = vmatpush1.bf16.msra.mxu0 %v1172
    %1685 = vmatprep.subr.bf16.mxu0 0
    %1686 = vmatpush1.bf16.msra.mxu0 %v1173
    %1687 = vmatprep.subr.bf16.mxu0 0
    %1688 = vmatpush1.bf16.msra.mxu0 %v1174
    %1689 = vmatprep.subr.bf16.mxu0 0
    %1690 = vmatpush1.bf16.msra.mxu0 %v1175
    %1691 = vmatprep.subr.bf16.mxu0 0
    %1692 = vmatpush1.bf16.msra.mxu0 %v1176
    %1693 = vmatprep.subr.bf16.mxu0 0
    %1694 = vmatpush1.bf16.msra.mxu0 %v1177
    %1695 = vmatprep.subr.bf16.mxu0 0
    %1696 = vmatpush1.bf16.msra.mxu0 %v1178
    %1697 = vmatprep.subr.bf16.mxu0 0
    %1698 = vmatpush1.bf16.msra.mxu0 %v1179
    %1699 = vmatprep.mubr.bf16.mxu0 %v455
    %1700 = vmatmul.mubr.bf16.gmra.mrb[0].mxu0 %v454
    %v1701 = vpop.f32.mrb[0].mxu0
    %v1702 = vadd.f32 %v1653, %v1701
    %v1703 = vpop.f32.mrb[0].mxu0
    %v1704 = vpop.f32.mrb[0].mxu0
    %v1705 = vadd.f32 %v1656, %v1704
    %v1706 = vpop.f32.mrb[0].mxu0
    %1707 = vmatprep.mubr.bf16.mxu0 %v472
    %1708 = vmatmul.mubr.bf16.gmra.mrb[0].mxu0 %v471
    %v1709 = vpop.f32.mrb[0].mxu0
    %v1710 = vadd.f32 %v1661, %v1709
    %v1711 = vpop.f32.mrb[0].mxu0
    %v1712 = vpop.f32.mrb[0].mxu0
    %v1713 = vadd.f32 %v1664, %v1712
    %v1714 = vpop.f32.mrb[0].mxu0
    %1715 = vdwg.mxu0
    %1716 = vmatprep.subr.bf16.mxu0 0
    %1717 = vmatpush1.bf16.msra.mxu0 %v1180
    %1718 = vmatprep.subr.bf16.mxu0 0
    %1719 = vmatpush1.bf16.msra.mxu0 %v1181
    %1720 = vmatprep.subr.bf16.mxu0 0
    %1721 = vmatpush1.bf16.msra.mxu0 %v1182
    %1722 = vmatprep.subr.bf16.mxu0 0
    %1723 = vmatpush1.bf16.msra.mxu0 %v1183
    %1724 = vmatprep.subr.bf16.mxu0 0
    %1725 = vmatpush1.bf16.msra.mxu0 %v1184
    %1726 = vmatprep.subr.bf16.mxu0 0
    %1727 = vmatpush1.bf16.msra.mxu0 %v1185
    %1728 = vmatprep.subr.bf16.mxu0 0
    %1729 = vmatpush1.bf16.msra.mxu0 %v1186
    %1730 = vmatprep.subr.bf16.mxu0 0
    %1731 = vmatpush1.bf16.msra.mxu0 %v1187
    %1732 = vmatprep.subr.bf16.mxu0 0
    %1733 = vmatpush1.bf16.msra.mxu0 0
    %1734 = vmatprep.subr.bf16.mxu0 0
    %1735 = vmatpush1.bf16.msra.mxu0 0
    %1736 = vmatprep.subr.bf16.mxu0 0
    %1737 = vmatpush1.bf16.msra.mxu0 0
    %1738 = vmatprep.subr.bf16.mxu0 0
    %1739 = vmatpush1.bf16.msra.mxu0 0
    %1740 = vmatprep.subr.bf16.mxu0 0
    %1741 = vmatpush1.bf16.msra.mxu0 0
    %1742 = vmatprep.subr.bf16.mxu0 0
    %1743 = vmatpush1.bf16.msra.mxu0 0
    %1744 = vmatprep.subr.bf16.mxu0 0
    %1745 = vmatpush1.bf16.msra.mxu0 0
    %1746 = vmatprep.subr.bf16.mxu0 0
    %1747 = vmatpush1.bf16.msra.mxu0 0
    %1748 = vmatprep.mubr.bf16.mxu0 0
    %1749 = vmatmul.mubr.bf16.gmra.mrb[0].mxu0 %v456
    %v1750 = vpop.f32.mrb[0].mxu0
    %v1751 = vadd.f32 %v1702, %v1750
    %v1752 = vpop.f32.mrb[0].mxu0
    %v1753 = vpop.f32.mrb[0].mxu0
    %v1754 = vadd.f32 %v1705, %v1753
    %v1755 = vpop.f32.mrb[0].mxu0
    %1756 = vmatprep.mubr.bf16.mxu0 0
    %1757 = vmatmul.mubr.bf16.gmra.mrb[0].mxu0 %v473
    %v1758 = vpop.f32.mrb[0].mxu0
    %v1759 = vadd.f32 %v1710, %v1758
    %v1760 = vpop.f32.mrb[0].mxu0
    %v1761 = vpop.f32.mrb[0].mxu0
    %v1762 = vadd.f32 %v1713, %v1761
    %v1763 = vpop.f32.mrb[0].mxu0
    %1764 = vdwg.mxu0
    %v1765 = vmax.f32 %v1751, %v1754
    %v1766 = vmax.f32 %v1759, %v1762
    %v1767 = vmax.f32 %v1765, %v1766
    %v1768 = vld [vmem:[%s2] sm:$0x1]
    %v1770 = vlaneseq
    %v1771 = vshrl.u32 %v1770, 7
    %v1772 = vsub.s32 0, %v1771
    %v1773 = vrot.slane %v1768, %v1772
    %v1775 = vadd.f32 %v1767, %v1773
    %v1776 = vmax.f32 %v1775, 0.0
    %v1777 = vpack.c.bf16 %v1776, %v1776
    %v1779 = vrot.slane %v1777, 1
    %v1781 = vrot.slane %v1777, 2
    %v1783 = vrot.slane %v1777, 3
    %v1785 = vld [vmem:[%s3] sm:$0xff]
    %v1786 = vld [vmem:[%s3 + $0x8] sm:$0xff]
    %v1787 = vld [vmem:[%s3 + $0x10] sm:$0xff]
    %v1788 = vld [vmem:[%s3 + $0x18] sm:$0xff]
    %v1789 = vld [vmem:[%s3 + $0x20] sm:$0xff]
    %v1790 = vld [vmem:[%s3 + $0x28] sm:$0xff]
    %v1791 = vld [vmem:[%s3 + $0x30] sm:$0xff]
    %v1792 = vld [vmem:[%s3 + $0x38] sm:$0xff]
    %v1793 = vld [vmem:[%s3 + $0x40] sm:$0xff]
    %v1794 = vld [vmem:[%s3 + $0x48] sm:$0xff]
    %v1795 = vld [vmem:[%s3 + $0x50] sm:$0xff]
    %v1796 = vld [vmem:[%s3 + $0x58] sm:$0xff]
    %v1797 = vld [vmem:[%s3 + $0x60] sm:$0xff]
    %v1798 = vld [vmem:[%s3 + $0x68] sm:$0xff]
    %v1799 = vld [vmem:[%s3 + $0x70] sm:$0xff]
    %v1800 = vld [vmem:[%s3 + $0x78] sm:$0xff]
    %v1801 = vld [vmem:[%s3 + $0x80] sm:$0xff]
    %v1802 = vld [vmem:[%s3 + $0x88] sm:$0xff]
    %v1803 = vld [vmem:[%s3 + $0x90] sm:$0xff]
    %v1804 = vld [vmem:[%s3 + $0x98] sm:$0xff]
    %v1805 = vld [vmem:[%s3 + $0xa0] sm:$0xff]
    %v1806 = vld [vmem:[%s3 + $0xa8] sm:$0xff]
    %v1807 = vld [vmem:[%s3 + $0xb0] sm:$0xff]
    %v1808 = vld [vmem:[%s3 + $0xb8] sm:$0xff]
    %v1809 = vld [vmem:[%s3 + $0xc0] sm:$0xff]
    %v1810 = vld [vmem:[%s3 + $0xc8] sm:$0xff]
    %v1811 = vld [vmem:[%s3 + $0xd0] sm:$0xff]
    %v1812 = vld [vmem:[%s3 + $0xd8] sm:$0xff]
    %v1813 = vld [vmem:[%s3 + $0xe0] sm:$0xff]
    %v1814 = vld [vmem:[%s3 + $0xe8] sm:$0xff]
    %v1815 = vld [vmem:[%s3 + $0xf0] sm:$0xff]
    %v1816 = vld [vmem:[%s3 + $0xf8] sm:$0xff]
    %v1817 = vld [vmem:[%s3 + $0x100] sm:$0xff]
    %v1818 = vld [vmem:[%s3 + $0x108] sm:$0xff]
    %v1819 = vld [vmem:[%s3 + $0x110] sm:$0xff]
    %v1820 = vld [vmem:[%s3 + $0x118] sm:$0xff]
    %v1821 = vld [vmem:[%s3 + $0x120] sm:$0xff]
    %v1822 = vld [vmem:[%s3 + $0x128] sm:$0xff]
    %v1823 = vld [vmem:[%s3 + $0x130] sm:$0xff]
    %v1824 = vld [vmem:[%s3 + $0x138] sm:$0xff]
    %v1825 = vld [vmem:[%s3 + $0x140] sm:$0xff]
    %v1826 = vld [vmem:[%s3 + $0x148] sm:$0xff]
    %v1827 = vld [vmem:[%s3 + $0x150] sm:$0xff]
    %v1828 = vld [vmem:[%s3 + $0x158] sm:$0xff]
    %v1829 = vld [vmem:[%s3 + $0x160] sm:$0xff]
    %v1830 = vld [vmem:[%s3 + $0x168] sm:$0xff]
    %v1831 = vld [vmem:[%s3 + $0x170] sm:$0xff]
    %v1832 = vld [vmem:[%s3 + $0x178] sm:$0xff]
    %v1833 = vld [vmem:[%s3 + $0x180] sm:$0xff]
    %v1834 = vld [vmem:[%s3 + $0x188] sm:$0xff]
    %v1835 = vld [vmem:[%s3 + $0x190] sm:$0xff]
    %v1836 = vld [vmem:[%s3 + $0x198] sm:$0xff]
    %v1837 = vld [vmem:[%s3 + $0x1a0] sm:$0xff]
    %v1838 = vld [vmem:[%s3 + $0x1a8] sm:$0xff]
    %v1839 = vld [vmem:[%s3 + $0x1b0] sm:$0xff]
    %v1840 = vld [vmem:[%s3 + $0x1b8] sm:$0xff]
    %v1841 = vld [vmem:[%s3 + $0x1c0] sm:$0xff]
    %v1842 = vld [vmem:[%s3 + $0x1c8] sm:$0xff]
    %v1843 = vld [vmem:[%s3 + $0x1d0] sm:$0xff]
    %v1844 = vld [vmem:[%s3 + $0x1d8] sm:$0xff]
    %v1845 = vld [vmem:[%s3 + $0x1e0] sm:$0xff]
    %v1846 = vld [vmem:[%s3 + $0x1e8] sm:$0xff]
    %v1847 = vld [vmem:[%s3 + $0x1f0] sm:$0xff]
    %v1848 = vld [vmem:[%s3 + $0x1f8] sm:$0xff]
    %v1849 = vld [vmem:[%s3 + $0x200] sm:$0xff]
    %v1850 = vld [vmem:[%s3 + $0x208] sm:$0xff]
    %v1851 = vld [vmem:[%s3 + $0x210] sm:$0xff]
    %v1852 = vld [vmem:[%s3 + $0x218] sm:$0xff]
    %v1853 = vld [vmem:[%s3 + $0x220] sm:$0xff]
    %v1854 = vld [vmem:[%s3 + $0x228] sm:$0xff]
    %v1855 = vld [vmem:[%s3 + $0x230] sm:$0xff]
    %v1856 = vld [vmem:[%s3 + $0x238] sm:$0xff]
    %v1857 = vld [vmem:[%s3 + $0x240] sm:$0xff]
    %v1858 = vld [vmem:[%s3 + $0x248] sm:$0xff]
    %v1859 = vld [vmem:[%s3 + $0x250] sm:$0xff]
    %v1860 = vld [vmem:[%s3 + $0x258] sm:$0xff]
    %v1861 = vld [vmem:[%s3 + $0x260] sm:$0xff]
    %v1862 = vld [vmem:[%s3 + $0x268] sm:$0xff]
    %v1863 = vld [vmem:[%s3 + $0x270] sm:$0xff]
    %v1864 = vld [vmem:[%s3 + $0x278] sm:$0xff]
    %v1865 = vld [vmem:[%s3 + $0x280] sm:$0xff]
    %v1866 = vld [vmem:[%s3 + $0x288] sm:$0xff]
    %v1867 = vld [vmem:[%s3 + $0x290] sm:$0xff]
    %v1868 = vld [vmem:[%s3 + $0x298] sm:$0xff]
    %v1869 = vld [vmem:[%s3 + $0x2a0] sm:$0xff]
    %v1870 = vld [vmem:[%s3 + $0x2a8] sm:$0xff]
    %v1871 = vld [vmem:[%s3 + $0x2b0] sm:$0xff]
    %v1872 = vld [vmem:[%s3 + $0x2b8] sm:$0xff]
    %v1873 = vld [vmem:[%s3 + $0x2c0] sm:$0xff]
    %v1874 = vld [vmem:[%s3 + $0x2c8] sm:$0xff]
    %v1875 = vld [vmem:[%s3 + $0x2d0] sm:$0xff]
    %v1876 = vld [vmem:[%s3 + $0x2d8] sm:$0xff]
    %v1877 = vld [vmem:[%s3 + $0x2e0] sm:$0xff]
    %v1878 = vld [vmem:[%s3 + $0x2e8] sm:$0xff]
    %v1879 = vld [vmem:[%s3 + $0x2f0] sm:$0xff]
    %v1880 = vld [vmem:[%s3 + $0x2f8] sm:$0xff]
    %v1881 = vld [vmem:[%s3 + $0x300] sm:$0xff]
    %v1882 = vld [vmem:[%s3 + $0x308] sm:$0xff]
    %v1883 = vld [vmem:[%s3 + $0x310] sm:$0xff]
    %v1884 = vld [vmem:[%s3 + $0x318] sm:$0xff]
    %v1885 = vld [vmem:[%s3 + $0x320] sm:$0xff]
    %v1886 = vld [vmem:[%s3 + $0x328] sm:$0xff]
    %v1887 = vld [vmem:[%s3 + $0x330] sm:$0xff]
    %v1888 = vld [vmem:[%s3 + $0x338] sm:$0xff]
    %v1889 = vld [vmem:[%s3 + $0x340] sm:$0xff]
    %v1890 = vld [vmem:[%s3 + $0x348] sm:$0xff]
    %v1891 = vld [vmem:[%s3 + $0x350] sm:$0xff]
    %v1892 = vld [vmem:[%s3 + $0x358] sm:$0xff]
    %v1893 = vld [vmem:[%s3 + $0x360] sm:$0xff]
    %v1894 = vld [vmem:[%s3 + $0x368] sm:$0xff]
    %v1895 = vld [vmem:[%s3 + $0x370] sm:$0xff]
    %v1896 = vld [vmem:[%s3 + $0x378] sm:$0xff]
    %v1897 = vld [vmem:[%s3 + $0x380] sm:$0xff]
    %v1898 = vld [vmem:[%s3 + $0x388] sm:$0xff]
    %v1899 = vld [vmem:[%s3 + $0x390] sm:$0xff]
    %v1900 = vld [vmem:[%s3 + $0x398] sm:$0xff]
    %v1901 = vld [vmem:[%s3 + $0x3a0] sm:$0xff]
    %v1902 = vld [vmem:[%s3 + $0x3a8] sm:$0xff]
    %v1903 = vld [vmem:[%s3 + $0x3b0] sm:$0xff]
    %v1904 = vld [vmem:[%s3 + $0x3b8] sm:$0xff]
    %v1905 = vld [vmem:[%s3 + $0x3c0] sm:$0xff]
    %v1906 = vld [vmem:[%s3 + $0x3c8] sm:$0xff]
    %v1907 = vld [vmem:[%s3 + $0x3d0] sm:$0xff]
    %v1908 = vld [vmem:[%s3 + $0x3d8] sm:$0xff]
    %v1909 = vld [vmem:[%s3 + $0x3e0] sm:$0xff]
    %v1910 = vld [vmem:[%s3 + $0x3e8] sm:$0xff]
    %v1911 = vld [vmem:[%s3 + $0x3f0] sm:$0xff]
    %v1912 = vld [vmem:[%s3 + $0x3f8] sm:$0xff]
    %v1913 = vld [vmem:[%s4] sm:$0xf]
    %v1915 = vlaneseq
    %v1916 = vshrl.u32 %v1915, 7
    %v1917 = vsub.s32 0, %v1916
    %v1918 = vrot.slane %v1913, %v1917
    %v1919 = vlaneseq
    %v1920 = vshrl.u32 %v1919, 7
    %v1921 = vsub.s32 1, %v1920
    %v1922 = vrot.slane %v1913, %v1921
    %v1923 = vlaneseq
    %v1924 = vshrl.u32 %v1923, 7
    %v1925 = vsub.s32 2, %v1924
    %v1926 = vrot.slane %v1913, %v1925
    %v1927 = vlaneseq
    %v1928 = vshrl.u32 %v1927, 7
    %v1929 = vsub.s32 3, %v1928
    %v1930 = vrot.slane %v1913, %v1929
    %v2063 = vunpack.c.l.b16 %v1785
    %v2064 = vunpack.c.h.b16 %v1785
    %v2065 = vunpack.c.l.b16 %v1786
    %v2066 = vunpack.c.h.b16 %v1786
    %v2067 = vunpack.c.l.b16 %v1787
    %v2068 = vunpack.c.h.b16 %v1787
    %v2069 = vunpack.c.l.b16 %v1788
    %v2070 = vunpack.c.h.b16 %v1788
    %v2071 = vunpack.c.l.b16 %v1789
    %v2072 = vunpack.c.h.b16 %v1789
    %v2073 = vunpack.c.l.b16 %v1790
    %v2074 = vunpack.c.h.b16 %v1790
    %v2075 = vunpack.c.l.b16 %v1791
    %v2076 = vunpack.c.h.b16 %v1791
    %v2077 = vunpack.c.l.b16 %v1792
    %v2078 = vunpack.c.h.b16 %v1792
    %v2079 = vunpack.c.l.b16 %v1793
    %v2080 = vunpack.c.h.b16 %v1793
    %v2081 = vunpack.c.l.b16 %v1794
    %v2082 = vunpack.c.h.b16 %v1794
    %v2083 = vunpack.c.l.b16 %v1795
    %v2084 = vunpack.c.h.b16 %v1795
    %v2085 = vunpack.c.l.b16 %v1796
    %v2086 = vunpack.c.h.b16 %v1796
    %v2087 = vunpack.c.l.b16 %v1797
    %v2088 = vunpack.c.h.b16 %v1797
    %v2089 = vunpack.c.l.b16 %v1798
    %v2090 = vunpack.c.h.b16 %v1798
    %v2091 = vunpack.c.l.b16 %v1799
    %v2092 = vunpack.c.h.b16 %v1799
    %v2093 = vunpack.c.l.b16 %v1800
    %v2094 = vunpack.c.h.b16 %v1800
    %v2095 = vunpack.c.l.b16 %v1801
    %v2096 = vunpack.c.h.b16 %v1801
    %v2097 = vunpack.c.l.b16 %v1802
    %v2098 = vunpack.c.h.b16 %v1802
    %v2099 = vunpack.c.l.b16 %v1803
    %v2100 = vunpack.c.h.b16 %v1803
    %v2101 = vunpack.c.l.b16 %v1804
    %v2102 = vunpack.c.h.b16 %v1804
    %v2103 = vunpack.c.l.b16 %v1805
    %v2104 = vunpack.c.h.b16 %v1805
    %v2105 = vunpack.c.l.b16 %v1806
    %v2106 = vunpack.c.h.b16 %v1806
    %v2107 = vunpack.c.l.b16 %v1807
    %v2108 = vunpack.c.h.b16 %v1807
    %v2109 = vunpack.c.l.b16 %v1808
    %v2110 = vunpack.c.h.b16 %v1808
    %v2111 = vunpack.c.l.b16 %v1809
    %v2112 = vunpack.c.h.b16 %v1809
    %v2113 = vunpack.c.l.b16 %v1810
    %v2114 = vunpack.c.h.b16 %v1810
    %v2115 = vunpack.c.l.b16 %v1811
    %v2116 = vunpack.c.h.b16 %v1811
    %v2117 = vunpack.c.l.b16 %v1812
    %v2118 = vunpack.c.h.b16 %v1812
    %v2119 = vunpack.c.l.b16 %v1813
    %v2120 = vunpack.c.h.b16 %v1813
    %v2121 = vunpack.c.l.b16 %v1814
    %v2122 = vunpack.c.h.b16 %v1814
    %v2123 = vunpack.c.l.b16 %v1815
    %v2124 = vunpack.c.h.b16 %v1815
    %v2125 = vunpack.c.l.b16 %v1816
    %v2126 = vunpack.c.h.b16 %v1816
    %v2127 = vunpack.c.l.b16 %v1817
    %v2128 = vunpack.c.h.b16 %v1817
    %v2129 = vunpack.c.l.b16 %v1818
    %v2130 = vunpack.c.h.b16 %v1818
    %v2131 = vunpack.c.l.b16 %v1819
    %v2132 = vunpack.c.h.b16 %v1819
    %v2133 = vunpack.c.l.b16 %v1820
    %v2134 = vunpack.c.h.b16 %v1820
    %v2135 = vunpack.c.l.b16 %v1821
    %v2136 = vunpack.c.h.b16 %v1821
    %v2137 = vunpack.c.l.b16 %v1822
    %v2138 = vunpack.c.h.b16 %v1822
    %v2139 = vunpack.c.l.b16 %v1823
    %v2140 = vunpack.c.h.b16 %v1823
    %v2141 = vunpack.c.l.b16 %v1824
    %v2142 = vunpack.c.h.b16 %v1824
    %v2143 = vunpack.c.l.b16 %v1825
    %v2144 = vunpack.c.h.b16 %v1825
    %v2145 = vunpack.c.l.b16 %v1826
    %v2146 = vunpack.c.h.b16 %v1826
    %v2147 = vunpack.c.l.b16 %v1827
    %v2148 = vunpack.c.h.b16 %v1827
    %v2149 = vunpack.c.l.b16 %v1828
    %v2150 = vunpack.c.h.b16 %v1828
    %v2151 = vunpack.c.l.b16 %v1829
    %v2152 = vunpack.c.h.b16 %v1829
    %v2153 = vunpack.c.l.b16 %v1830
    %v2154 = vunpack.c.h.b16 %v1830
    %v2155 = vunpack.c.l.b16 %v1831
    %v2156 = vunpack.c.h.b16 %v1831
    %v2157 = vunpack.c.l.b16 %v1832
    %v2158 = vunpack.c.h.b16 %v1832
    %v2159 = vunpack.c.l.b16 %v1833
    %v2160 = vunpack.c.h.b16 %v1833
    %v2161 = vunpack.c.l.b16 %v1834
    %v2162 = vunpack.c.h.b16 %v1834
    %v2163 = vunpack.c.l.b16 %v1835
    %v2164 = vunpack.c.h.b16 %v1835
    %v2165 = vunpack.c.l.b16 %v1836
    %v2166 = vunpack.c.h.b16 %v1836
    %v2167 = vunpack.c.l.b16 %v1837
    %v2168 = vunpack.c.h.b16 %v1837
    %v2169 = vunpack.c.l.b16 %v1838
    %v2170 = vunpack.c.h.b16 %v1838
    %v2171 = vunpack.c.l.b16 %v1839
    %v2172 = vunpack.c.h.b16 %v1839
    %v2173 = vunpack.c.l.b16 %v1840
    %v2174 = vunpack.c.h.b16 %v1840
    %v2175 = vunpack.c.l.b16 %v1841
    %v2176 = vunpack.c.h.b16 %v1841
    %v2177 = vunpack.c.l.b16 %v1842
    %v2178 = vunpack.c.h.b16 %v1842
    %v2179 = vunpack.c.l.b16 %v1843
    %v2180 = vunpack.c.h.b16 %v1843
    %v2181 = vunpack.c.l.b16 %v1844
    %v2182 = vunpack.c.h.b16 %v1844
    %v2183 = vunpack.c.l.b16 %v1845
    %v2184 = vunpack.c.h.b16 %v1845
    %v2185 = vunpack.c.l.b16 %v1846
    %v2186 = vunpack.c.h.b16 %v1846
    %v2187 = vunpack.c.l.b16 %v1847
    %v2188 = vunpack.c.h.b16 %v1847
    %v2189 = vunpack.c.l.b16 %v1848
    %v2190 = vunpack.c.h.b16 %v1848
    %v2191 = vunpack.c.l.b16 %v1849
    %v2192 = vunpack.c.h.b16 %v1849
    %v2193 = vunpack.c.l.b16 %v1850
    %v2194 = vunpack.c.h.b16 %v1850
    %v2195 = vunpack.c.l.b16 %v1851
    %v2196 = vunpack.c.h.b16 %v1851
    %v2197 = vunpack.c.l.b16 %v1852
    %v2198 = vunpack.c.h.b16 %v1852
    %v2199 = vunpack.c.l.b16 %v1853
    %v2200 = vunpack.c.h.b16 %v1853
    %v2201 = vunpack.c.l.b16 %v1854
    %v2202 = vunpack.c.h.b16 %v1854
    %v2203 = vunpack.c.l.b16 %v1855
    %v2204 = vunpack.c.h.b16 %v1855
    %v2205 = vunpack.c.l.b16 %v1856
    %v2206 = vunpack.c.h.b16 %v1856
    %v2207 = vunpack.c.l.b16 %v1857
    %v2208 = vunpack.c.h.b16 %v1857
    %v2209 = vunpack.c.l.b16 %v1858
    %v2210 = vunpack.c.h.b16 %v1858
    %v2211 = vunpack.c.l.b16 %v1859
    %v2212 = vunpack.c.h.b16 %v1859
    %v2213 = vunpack.c.l.b16 %v1860
    %v2214 = vunpack.c.h.b16 %v1860
    %v2215 = vunpack.c.l.b16 %v1861
    %v2216 = vunpack.c.h.b16 %v1861
    %v2217 = vunpack.c.l.b16 %v1862
    %v2218 = vunpack.c.h.b16 %v1862
    %v2219 = vunpack.c.l.b16 %v1863
    %v2220 = vunpack.c.h.b16 %v1863
    %v2221 = vunpack.c.l.b16 %v1864
    %v2222 = vunpack.c.h.b16 %v1864
    %v2223 = vunpack.c.l.b16 %v1865
    %v2224 = vunpack.c.h.b16 %v1865
    %v2225 = vunpack.c.l.b16 %v1866
    %v2226 = vunpack.c.h.b16 %v1866
    %v2227 = vunpack.c.l.b16 %v1867
    %v2228 = vunpack.c.h.b16 %v1867
    %v2229 = vunpack.c.l.b16 %v1868
    %v2230 = vunpack.c.h.b16 %v1868
    %v2231 = vunpack.c.l.b16 %v1869
    %v2232 = vunpack.c.h.b16 %v1869
    %v2233 = vunpack.c.l.b16 %v1870
    %v2234 = vunpack.c.h.b16 %v1870
    %v2235 = vunpack.c.l.b16 %v1871
    %v2236 = vunpack.c.h.b16 %v1871
    %v2237 = vunpack.c.l.b16 %v1872
    %v2238 = vunpack.c.h.b16 %v1872
    %v2239 = vunpack.c.l.b16 %v1873
    %v2240 = vunpack.c.h.b16 %v1873
    %v2241 = vunpack.c.l.b16 %v1874
    %v2242 = vunpack.c.h.b16 %v1874
    %v2243 = vunpack.c.l.b16 %v1875
    %v2244 = vunpack.c.h.b16 %v1875
    %v2245 = vunpack.c.l.b16 %v1876
    %v2246 = vunpack.c.h.b16 %v1876
    %v2247 = vunpack.c.l.b16 %v1877
    %v2248 = vunpack.c.h.b16 %v1877
    %v2249 = vunpack.c.l.b16 %v1878
    %v2250 = vunpack.c.h.b16 %v1878
    %v2251 = vunpack.c.l.b16 %v1879
    %v2252 = vunpack.c.h.b16 %v1879
    %v2253 = vunpack.c.l.b16 %v1880
    %v2254 = vunpack.c.h.b16 %v1880
    %v2255 = vunpack.c.l.b16 %v1881
    %v2256 = vunpack.c.h.b16 %v1881
    %v2257 = vunpack.c.l.b16 %v1882
    %v2258 = vunpack.c.h.b16 %v1882
    %v2259 = vunpack.c.l.b16 %v1883
    %v2260 = vunpack.c.h.b16 %v1883
    %v2261 = vunpack.c.l.b16 %v1884
    %v2262 = vunpack.c.h.b16 %v1884
    %v2263 = vunpack.c.l.b16 %v1885
    %v2264 = vunpack.c.h.b16 %v1885
    %v2265 = vunpack.c.l.b16 %v1886
    %v2266 = vunpack.c.h.b16 %v1886
    %v2267 = vunpack.c.l.b16 %v1887
    %v2268 = vunpack.c.h.b16 %v1887
    %v2269 = vunpack.c.l.b16 %v1888
    %v2270 = vunpack.c.h.b16 %v1888
    %v2271 = vunpack.c.l.b16 %v1889
    %v2272 = vunpack.c.h.b16 %v1889
    %v2273 = vunpack.c.l.b16 %v1890
    %v2274 = vunpack.c.h.b16 %v1890
    %v2275 = vunpack.c.l.b16 %v1891
    %v2276 = vunpack.c.h.b16 %v1891
    %v2277 = vunpack.c.l.b16 %v1892
    %v2278 = vunpack.c.h.b16 %v1892
    %v2279 = vunpack.c.l.b16 %v1893
    %v2280 = vunpack.c.h.b16 %v1893
    %v2281 = vunpack.c.l.b16 %v1894
    %v2282 = vunpack.c.h.b16 %v1894
    %v2283 = vunpack.c.l.b16 %v1895
    %v2284 = vunpack.c.h.b16 %v1895
    %v2285 = vunpack.c.l.b16 %v1896
    %v2286 = vunpack.c.h.b16 %v1896
    %v2287 = vunpack.c.l.b16 %v1897
    %v2288 = vunpack.c.h.b16 %v1897
    %v2289 = vunpack.c.l.b16 %v1898
    %v2290 = vunpack.c.h.b16 %v1898
    %v2291 = vunpack.c.l.b16 %v1899
    %v2292 = vunpack.c.h.b16 %v1899
    %v2293 = vunpack.c.l.b16 %v1900
    %v2294 = vunpack.c.h.b16 %v1900
    %v2295 = vunpack.c.l.b16 %v1901
    %v2296 = vunpack.c.h.b16 %v1901
    %v2297 = vunpack.c.l.b16 %v1902
    %v2298 = vunpack.c.h.b16 %v1902
    %v2299 = vunpack.c.l.b16 %v1903
    %v2300 = vunpack.c.h.b16 %v1903
    %v2301 = vunpack.c.l.b16 %v1904
    %v2302 = vunpack.c.h.b16 %v1904
    %v2303 = vunpack.c.l.b16 %v1905
    %v2304 = vunpack.c.h.b16 %v1905
    %v2305 = vunpack.c.l.b16 %v1906
    %v2306 = vunpack.c.h.b16 %v1906
    %v2307 = vunpack.c.l.b16 %v1907
    %v2308 = vunpack.c.h.b16 %v1907
    %v2309 = vunpack.c.l.b16 %v1908
    %v2310 = vunpack.c.h.b16 %v1908
    %v2311 = vunpack.c.l.b16 %v1909
    %v2312 = vunpack.c.h.b16 %v1909
    %v2313 = vunpack.c.l.b16 %v1910
    %v2314 = vunpack.c.h.b16 %v1910
    %v2315 = vunpack.c.l.b16 %v1911
    %v2316 = vunpack.c.h.b16 %v1911
    %v2317 = vunpack.c.l.b16 %v1912
    %v2318 = vunpack.c.h.b16 %v1912
    %v2319 = vpack.c.b16 %v2067, %v2063
    %v2320 = vpack.c.b16 %v2068, %v2064
    %v2321 = vpack.c.b16 %v2069, %v2065
    %v2322 = vpack.c.b16 %v2070, %v2066
    %v2323 = vpack.c.b16 %v2075, %v2071
    %v2324 = vpack.c.b16 %v2076, %v2072
    %v2325 = vpack.c.b16 %v2077, %v2073
    %v2326 = vpack.c.b16 %v2078, %v2074
    %v2327 = vpack.c.b16 %v2083, %v2079
    %v2328 = vpack.c.b16 %v2084, %v2080
    %v2329 = vpack.c.b16 %v2085, %v2081
    %v2330 = vpack.c.b16 %v2086, %v2082
    %v2331 = vpack.c.b16 %v2091, %v2087
    %v2332 = vpack.c.b16 %v2092, %v2088
    %v2333 = vpack.c.b16 %v2093, %v2089
    %v2334 = vpack.c.b16 %v2094, %v2090
    %v2335 = vpack.c.b16 %v2099, %v2095
    %v2336 = vpack.c.b16 %v2100, %v2096
    %v2337 = vpack.c.b16 %v2101, %v2097
    %v2338 = vpack.c.b16 %v2102, %v2098
    %v2339 = vpack.c.b16 %v2107, %v2103
    %v2340 = vpack.c.b16 %v2108, %v2104
    %v2341 = vpack.c.b16 %v2109, %v2105
    %v2342 = vpack.c.b16 %v2110, %v2106
    %v2343 = vpack.c.b16 %v2115, %v2111
    %v2344 = vpack.c.b16 %v2116, %v2112
    %v2345 = vpack.c.b16 %v2117, %v2113
    %v2346 = vpack.c.b16 %v2118, %v2114
    %v2347 = vpack.c.b16 %v2123, %v2119
    %v2348 = vpack.c.b16 %v2124, %v2120
    %v2349 = vpack.c.b16 %v2125, %v2121
    %v2350 = vpack.c.b16 %v2126, %v2122
    %v2351 = vpack.c.b16 %v2131, %v2127
    %v2352 = vpack.c.b16 %v2132, %v2128
    %v2353 = vpack.c.b16 %v2133, %v2129
    %v2354 = vpack.c.b16 %v2134, %v2130
    %v2355 = vpack.c.b16 %v2139, %v2135
    %v2356 = vpack.c.b16 %v2140, %v2136
    %v2357 = vpack.c.b16 %v2141, %v2137
    %v2358 = vpack.c.b16 %v2142, %v2138
    %v2359 = vpack.c.b16 %v2147, %v2143
    %v2360 = vpack.c.b16 %v2148, %v2144
    %v2361 = vpack.c.b16 %v2149, %v2145
    %v2362 = vpack.c.b16 %v2150, %v2146
    %v2363 = vpack.c.b16 %v2155, %v2151
    %v2364 = vpack.c.b16 %v2156, %v2152
    %v2365 = vpack.c.b16 %v2157, %v2153
    %v2366 = vpack.c.b16 %v2158, %v2154
    %v2367 = vpack.c.b16 %v2163, %v2159
    %v2368 = vpack.c.b16 %v2164, %v2160
    %v2369 = vpack.c.b16 %v2165, %v2161
    %v2370 = vpack.c.b16 %v2166, %v2162
    %v2371 = vpack.c.b16 %v2171, %v2167
    %v2372 = vpack.c.b16 %v2172, %v2168
    %v2373 = vpack.c.b16 %v2173, %v2169
    %v2374 = vpack.c.b16 %v2174, %v2170
    %v2375 = vpack.c.b16 %v2179, %v2175
    %v2376 = vpack.c.b16 %v2180, %v2176
    %v2377 = vpack.c.b16 %v2181, %v2177
    %v2378 = vpack.c.b16 %v2182, %v2178
    %v2379 = vpack.c.b16 %v2187, %v2183
    %v2380 = vpack.c.b16 %v2188, %v2184
    %v2381 = vpack.c.b16 %v2189, %v2185
    %v2382 = vpack.c.b16 %v2190, %v2186
    %v2383 = vpack.c.b16 %v2195, %v2191
    %v2384 = vpack.c.b16 %v2196, %v2192
    %v2385 = vpack.c.b16 %v2197, %v2193
    %v2386 = vpack.c.b16 %v2198, %v2194
    %v2387 = vpack.c.b16 %v2203, %v2199
    %v2388 = vpack.c.b16 %v2204, %v2200
    %v2389 = vpack.c.b16 %v2205, %v2201
    %v2390 = vpack.c.b16 %v2206, %v2202
    %v2391 = vpack.c.b16 %v2211, %v2207
    %v2392 = vpack.c.b16 %v2212, %v2208
    %v2393 = vpack.c.b16 %v2213, %v2209
    %v2394 = vpack.c.b16 %v2214, %v2210
    %v2395 = vpack.c.b16 %v2219, %v2215
    %v2396 = vpack.c.b16 %v2220, %v2216
    %v2397 = vpack.c.b16 %v2221, %v2217
    %v2398 = vpack.c.b16 %v2222, %v2218
    %v2399 = vpack.c.b16 %v2227, %v2223
    %v2400 = vpack.c.b16 %v2228, %v2224
    %v2401 = vpack.c.b16 %v2229, %v2225
    %v2402 = vpack.c.b16 %v2230, %v2226
    %v2403 = vpack.c.b16 %v2235, %v2231
    %v2404 = vpack.c.b16 %v2236, %v2232
    %v2405 = vpack.c.b16 %v2237, %v2233
    %v2406 = vpack.c.b16 %v2238, %v2234
    %v2407 = vpack.c.b16 %v2243, %v2239
    %v2408 = vpack.c.b16 %v2244, %v2240
    %v2409 = vpack.c.b16 %v2245, %v2241
    %v2410 = vpack.c.b16 %v2246, %v2242
    %v2411 = vpack.c.b16 %v2251, %v2247
    %v2412 = vpack.c.b16 %v2252, %v2248
    %v2413 = vpack.c.b16 %v2253, %v2249
    %v2414 = vpack.c.b16 %v2254, %v2250
    %v2415 = vpack.c.b16 %v2259, %v2255
    %v2416 = vpack.c.b16 %v2260, %v2256
    %v2417 = vpack.c.b16 %v2261, %v2257
    %v2418 = vpack.c.b16 %v2262, %v2258
    %v2419 = vpack.c.b16 %v2267, %v2263
    %v2420 = vpack.c.b16 %v2268, %v2264
    %v2421 = vpack.c.b16 %v2269, %v2265
    %v2422 = vpack.c.b16 %v2270, %v2266
    %v2423 = vpack.c.b16 %v2275, %v2271
    %v2424 = vpack.c.b16 %v2276, %v2272
    %v2425 = vpack.c.b16 %v2277, %v2273
    %v2426 = vpack.c.b16 %v2278, %v2274
    %v2427 = vpack.c.b16 %v2283, %v2279
    %v2428 = vpack.c.b16 %v2284, %v2280
    %v2429 = vpack.c.b16 %v2285, %v2281
    %v2430 = vpack.c.b16 %v2286, %v2282
    %v2431 = vpack.c.b16 %v2291, %v2287
    %v2432 = vpack.c.b16 %v2292, %v2288
    %v2433 = vpack.c.b16 %v2293, %v2289
    %v2434 = vpack.c.b16 %v2294, %v2290
    %v2435 = vpack.c.b16 %v2299, %v2295
    %v2436 = vpack.c.b16 %v2300, %v2296
    %v2437 = vpack.c.b16 %v2301, %v2297
    %v2438 = vpack.c.b16 %v2302, %v2298
    %v2439 = vpack.c.b16 %v2307, %v2303
    %v2440 = vpack.c.b16 %v2308, %v2304
    %v2441 = vpack.c.b16 %v2309, %v2305
    %v2442 = vpack.c.b16 %v2310, %v2306
    %v2443 = vpack.c.b16 %v2315, %v2311
    %v2444 = vpack.c.b16 %v2316, %v2312
    %v2445 = vpack.c.b16 %v2317, %v2313
    %v2446 = vpack.c.b16 %v2318, %v2314
    %2575 = vmatprep.subr.bf16.mxu0 %v2320
    %2576 = vmatpush1.bf16.msra.mxu0 %v2319
    %2577 = vmatprep.subr.bf16.mxu0 %v2324
    %2578 = vmatpush1.bf16.msra.mxu0 %v2323
    %2579 = vmatprep.subr.bf16.mxu0 %v2328
    %2580 = vmatpush1.bf16.msra.mxu0 %v2327
    %2581 = vmatprep.subr.bf16.mxu0 %v2332
    %2582 = vmatpush1.bf16.msra.mxu0 %v2331
    %2583 = vmatprep.subr.bf16.mxu0 %v2336
    %2584 = vmatpush1.bf16.msra.mxu0 %v2335
    %2585 = vmatprep.subr.bf16.mxu0 %v2340
    %2586 = vmatpush1.bf16.msra.mxu0 %v2339
    %2587 = vmatprep.subr.bf16.mxu0 %v2344
    %2588 = vmatpush1.bf16.msra.mxu0 %v2343
    %2589 = vmatprep.subr.bf16.mxu0 %v2348
    %2590 = vmatpush1.bf16.msra.mxu0 %v2347
    %2591 = vmatprep.subr.bf16.mxu0 %v2352
    %2592 = vmatpush1.bf16.msra.mxu0 %v2351
    %2593 = vmatprep.subr.bf16.mxu0 %v2356
    %2594 = vmatpush1.bf16.msra.mxu0 %v2355
    %2595 = vmatprep.subr.bf16.mxu0 %v2360
    %2596 = vmatpush1.bf16.msra.mxu0 %v2359
    %2597 = vmatprep.subr.bf16.mxu0 %v2364
    %2598 = vmatpush1.bf16.msra.mxu0 %v2363
    %2599 = vmatprep.subr.bf16.mxu0 %v2368
    %2600 = vmatpush1.bf16.msra.mxu0 %v2367
    %2601 = vmatprep.subr.bf16.mxu0 %v2372
    %2602 = vmatpush1.bf16.msra.mxu0 %v2371
    %2603 = vmatprep.subr.bf16.mxu0 %v2376
    %2604 = vmatpush1.bf16.msra.mxu0 %v2375
    %2605 = vmatprep.subr.bf16.mxu0 %v2380
    %2606 = vmatpush1.bf16.msra.mxu0 %v2379
    %2607 = vmatprep.mubr.bf16.mxu0 %v1779
    %2608 = vmatmul.mubr.bf16.gmra.mrb[0].mxu0 %v1777
    %v2609 = vpop.f32.mrb[0].mxu0
    %v2610 = vadd.f32 %v1918, %v2609
    %v2611 = vpop.f32.mrb[0].mxu0
    %v2612 = vadd.f32 %v1922, %v2611
    %v2613 = vpop.f32.mrb[0].mxu0
    %v2614 = vpop.f32.mrb[0].mxu0
    %2615 = vdwg.mxu0
    %2616 = vmatprep.subr.bf16.mxu0 %v2384
    %2617 = vmatpush1.bf16.msra.mxu0 %v2383
    %2618 = vmatprep.subr.bf16.mxu0 %v2388
    %2619 = vmatpush1.bf16.msra.mxu0 %v2387
    %2620 = vmatprep.subr.bf16.mxu0 %v2392
    %2621 = vmatpush1.bf16.msra.mxu0 %v2391
    %2622 = vmatprep.subr.bf16.mxu0 %v2396
    %2623 = vmatpush1.bf16.msra.mxu0 %v2395
    %2624 = vmatprep.subr.bf16.mxu0 %v2400
    %2625 = vmatpush1.bf16.msra.mxu0 %v2399
    %2626 = vmatprep.subr.bf16.mxu0 %v2404
    %2627 = vmatpush1.bf16.msra.mxu0 %v2403
    %2628 = vmatprep.subr.bf16.mxu0 %v2408
    %2629 = vmatpush1.bf16.msra.mxu0 %v2407
    %2630 = vmatprep.subr.bf16.mxu0 %v2412
    %2631 = vmatpush1.bf16.msra.mxu0 %v2411
    %2632 = vmatprep.subr.bf16.mxu0 %v2416
    %2633 = vmatpush1.bf16.msra.mxu0 %v2415
    %2634 = vmatprep.subr.bf16.mxu0 %v2420
    %2635 = vmatpush1.bf16.msra.mxu0 %v2419
    %2636 = vmatprep.subr.bf16.mxu0 %v2424
    %2637 = vmatpush1.bf16.msra.mxu0 %v2423
    %2638 = vmatprep.subr.bf16.mxu0 %v2428
    %2639 = vmatpush1.bf16.msra.mxu0 %v2427
    %2640 = vmatprep.subr.bf16.mxu0 %v2432
    %2641 = vmatpush1.bf16.msra.mxu0 %v2431
    %2642 = vmatprep.subr.bf16.mxu0 %v2436
    %2643 = vmatpush1.bf16.msra.mxu0 %v2435
    %2644 = vmatprep.subr.bf16.mxu0 %v2440
    %2645 = vmatpush1.bf16.msra.mxu0 %v2439
    %2646 = vmatprep.subr.bf16.mxu0 %v2444
    %2647 = vmatpush1.bf16.msra.mxu0 %v2443
    %2648 = vmatprep.mubr.bf16.mxu0 %v1783
    %2649 = vmatmul.mubr.bf16.gmra.mrb[0].mxu0 %v1781
    %v2650 = vpop.f32.mrb[0].mxu0
    %v2651 = vadd.f32 %v2610, %v2650
    %v2652 = vpop.f32.mrb[0].mxu0
    %v2653 = vadd.f32 %v2612, %v2652
    %v2654 = vpop.f32.mrb[0].mxu0
    %v2655 = vpop.f32.mrb[0].mxu0
    %2656 = vdwg.mxu0
    %2657 = vmatprep.subr.bf16.mxu0 %v2322
    %2658 = vmatpush1.bf16.msra.mxu0 %v2321
    %2659 = vmatprep.subr.bf16.mxu0 %v2326
    %2660 = vmatpush1.bf16.msra.mxu0 %v2325
    %2661 = vmatprep.subr.bf16.mxu0 %v2330
    %2662 = vmatpush1.bf16.msra.mxu0 %v2329
    %2663 = vmatprep.subr.bf16.mxu0 %v2334
    %2664 = vmatpush1.bf16.msra.mxu0 %v2333
    %2665 = vmatprep.subr.bf16.mxu0 %v2338
    %2666 = vmatpush1.bf16.msra.mxu0 %v2337
    %2667 = vmatprep.subr.bf16.mxu0 %v2342
    %2668 = vmatpush1.bf16.msra.mxu0 %v2341
    %2669 = vmatprep.subr.bf16.mxu0 %v2346
    %2670 = vmatpush1.bf16.msra.mxu0 %v2345
    %2671 = vmatprep.subr.bf16.mxu0 %v2350
    %2672 = vmatpush1.bf16.msra.mxu0 %v2349
    %2673 = vmatprep.subr.bf16.mxu0 %v2354
    %2674 = vmatpush1.bf16.msra.mxu0 %v2353
    %2675 = vmatprep.subr.bf16.mxu0 %v2358
    %2676 = vmatpush1.bf16.msra.mxu0 %v2357
    %2677 = vmatprep.subr.bf16.mxu0 %v2362
    %2678 = vmatpush1.bf16.msra.mxu0 %v2361
    %2679 = vmatprep.subr.bf16.mxu0 %v2366
    %2680 = vmatpush1.bf16.msra.mxu0 %v2365
    %2681 = vmatprep.subr.bf16.mxu0 %v2370
    %2682 = vmatpush1.bf16.msra.mxu0 %v2369
    %2683 = vmatprep.subr.bf16.mxu0 %v2374
    %2684 = vmatpush1.bf16.msra.mxu0 %v2373
    %2685 = vmatprep.subr.bf16.mxu0 %v2378
    %2686 = vmatpush1.bf16.msra.mxu0 %v2377
    %2687 = vmatprep.subr.bf16.mxu0 %v2382
    %2688 = vmatpush1.bf16.msra.mxu0 %v2381
    %2689 = vmatprep.mubr.bf16.mxu0 %v1779
    %2690 = vmatmul.mubr.bf16.gmra.mrb[0].mxu0 %v1777
    %v2691 = vpop.f32.mrb[0].mxu0
    %v2692 = vadd.f32 %v1926, %v2691
    %v2693 = vpop.f32.mrb[0].mxu0
    %v2694 = vadd.f32 %v1930, %v2693
    %v2695 = vpop.f32.mrb[0].mxu0
    %v2696 = vpop.f32.mrb[0].mxu0
    %2697 = vdwg.mxu0
    %2698 = vmatprep.subr.bf16.mxu0 %v2386
    %2699 = vmatpush1.bf16.msra.mxu0 %v2385
    %2700 = vmatprep.subr.bf16.mxu0 %v2390
    %2701 = vmatpush1.bf16.msra.mxu0 %v2389
    %2702 = vmatprep.subr.bf16.mxu0 %v2394
    %2703 = vmatpush1.bf16.msra.mxu0 %v2393
    %2704 = vmatprep.subr.bf16.mxu0 %v2398
    %2705 = vmatpush1.bf16.msra.mxu0 %v2397
    %2706 = vmatprep.subr.bf16.mxu0 %v2402
    %2707 = vmatpush1.bf16.msra.mxu0 %v2401
    %2708 = vmatprep.subr.bf16.mxu0 %v2406
    %2709 = vmatpush1.bf16.msra.mxu0 %v2405
    %2710 = vmatprep.subr.bf16.mxu0 %v2410
    %2711 = vmatpush1.bf16.msra.mxu0 %v2409
    %2712 = vmatprep.subr.bf16.mxu0 %v2414
    %2713 = vmatpush1.bf16.msra.mxu0 %v2413
    %2714 = vmatprep.subr.bf16.mxu0 %v2418
    %2715 = vmatpush1.bf16.msra.mxu0 %v2417
    %2716 = vmatprep.subr.bf16.mxu0 %v2422
    %2717 = vmatpush1.bf16.msra.mxu0 %v2421
    %2718 = vmatprep.subr.bf16.mxu0 %v2426
    %2719 = vmatpush1.bf16.msra.mxu0 %v2425
    %2720 = vmatprep.subr.bf16.mxu0 %v2430
    %2721 = vmatpush1.bf16.msra.mxu0 %v2429
    %2722 = vmatprep.subr.bf16.mxu0 %v2434
    %2723 = vmatpush1.bf16.msra.mxu0 %v2433
    %2724 = vmatprep.subr.bf16.mxu0 %v2438
    %2725 = vmatpush1.bf16.msra.mxu0 %v2437
    %2726 = vmatprep.subr.bf16.mxu0 %v2442
    %2727 = vmatpush1.bf16.msra.mxu0 %v2441
    %2728 = vmatprep.subr.bf16.mxu0 %v2446
    %2729 = vmatpush1.bf16.msra.mxu0 %v2445
    %2730 = vmatprep.mubr.bf16.mxu0 %v1783
    %2731 = vmatmul.mubr.bf16.gmra.mrb[0].mxu0 %v1781
    %v2732 = vpop.f32.mrb[0].mxu0
    %v2733 = vadd.f32 %v2692, %v2732
    %v2734 = vpop.f32.mrb[0].mxu0
    %v2735 = vadd.f32 %v2694, %v2734
    %v2736 = vpop.f32.mrb[0].mxu0
    %v2737 = vpop.f32.mrb[0].mxu0
    %2738 = vdwg.mxu0
    %v2739 = vmax.f32 %v2651, 0.0
    %v2740 = vmax.f32 %v2653, 0.0
    %v2741 = vmax.f32 %v2733, 0.0
    %v2742 = vmax.f32 %v2735, 0.0
    %v2743 = vpack.c.bf16 %v2739, %v2739
    %v2744 = vpack.c.bf16 %v2740, %v2740
    %v2745 = vpack.c.bf16 %v2741, %v2741
    %v2746 = vpack.c.bf16 %v2742, %v2742
    %v2747 = vld [vmem:[%s5] sm:$0xf]
    %v2748 = vld [vmem:[%s5 + $0x4] sm:$0xf]
    %v2749 = vld [vmem:[%s5 + $0x8] sm:$0xf]
    %v2750 = vld [vmem:[%s5 + $0xc] sm:$0xf]
    %v2751 = vld [vmem:[%s5 + $0x10] sm:$0xf]
    %v2752 = vld [vmem:[%s5 + $0x14] sm:$0xf]
    %v2753 = vld [vmem:[%s5 + $0x18] sm:$0xf]
    %v2754 = vld [vmem:[%s5 + $0x1c] sm:$0xf]
    %v2755 = vld [vmem:[%s5 + $0x20] sm:$0xf]
    %v2756 = vld [vmem:[%s5 + $0x24] sm:$0xf]
    %v2757 = vld [vmem:[%s5 + $0x28] sm:$0xf]
    %v2758 = vld [vmem:[%s5 + $0x2c] sm:$0xf]
    %v2759 = vld [vmem:[%s5 + $0x30] sm:$0xf]
    %v2760 = vld [vmem:[%s5 + $0x34] sm:$0xf]
    %v2761 = vld [vmem:[%s5 + $0x38] sm:$0xf]
    %v2762 = vld [vmem:[%s5 + $0x3c] sm:$0xf]
    %v2763 = vld [vmem:[%s5 + $0x40] sm:$0xf]
    %v2764 = vld [vmem:[%s5 + $0x44] sm:$0xf]
    %v2765 = vld [vmem:[%s5 + $0x48] sm:$0xf]
    %v2766 = vld [vmem:[%s5 + $0x4c] sm:$0xf]
    %v2767 = vld [vmem:[%s5 + $0x50] sm:$0xf]
    %v2768 = vld [vmem:[%s5 + $0x54] sm:$0xf]
    %v2769 = vld [vmem:[%s5 + $0x58] sm:$0xf]
    %v2770 = vld [vmem:[%s5 + $0x5c] sm:$0xf]
    %v2771 = vld [vmem:[%s5 + $0x60] sm:$0xf]
    %v2772 = vld [vmem:[%s5 + $0x64] sm:$0xf]
    %v2773 = vld [vmem:[%s5 + $0x68] sm:$0xf]
    %v2774 = vld [vmem:[%s5 + $0x6c] sm:$0xf]
    %v2775 = vld [vmem:[%s5 + $0x70] sm:$0xf]
    %v2776 = vld [vmem:[%s5 + $0x74] sm:$0xf]
    %v2777 = vld [vmem:[%s5 + $0x78] sm:$0xf]
    %v2778 = vld [vmem:[%s5 + $0x7c] sm:$0xf]
    %v2779 = vld [vmem:[%s5 + $0x80] sm:$0xf]
    %v2780 = vld [vmem:[%s5 + $0x84] sm:$0xf]
    %v2781 = vld [vmem:[%s5 + $0x88] sm:$0xf]
    %v2782 = vld [vmem:[%s5 + $0x8c] sm:$0xf]
    %v2783 = vld [vmem:[%s5 + $0x90] sm:$0xf]
    %v2784 = vld [vmem:[%s5 + $0x94] sm:$0xf]
    %v2785 = vld [vmem:[%s5 + $0x98] sm:$0xf]
    %v2786 = vld [vmem:[%s5 + $0x9c] sm:$0xf]
    %v2787 = vld [vmem:[%s5 + $0xa0] sm:$0xf]
    %v2788 = vld [vmem:[%s5 + $0xa4] sm:$0xf]
    %v2789 = vld [vmem:[%s5 + $0xa8] sm:$0xf]
    %v2790 = vld [vmem:[%s5 + $0xac] sm:$0xf]
    %v2791 = vld [vmem:[%s5 + $0xb0] sm:$0xf]
    %v2792 = vld [vmem:[%s5 + $0xb4] sm:$0xf]
    %v2793 = vld [vmem:[%s5 + $0xb8] sm:$0xf]
    %v2794 = vld [vmem:[%s5 + $0xbc] sm:$0xf]
    %v2795 = vld [vmem:[%s5 + $0xc0] sm:$0xf]
    %v2796 = vld [vmem:[%s5 + $0xc4] sm:$0xf]
    %v2797 = vld [vmem:[%s5 + $0xc8] sm:$0xf]
    %v2798 = vld [vmem:[%s5 + $0xcc] sm:$0xf]
    %v2799 = vld [vmem:[%s5 + $0xd0] sm:$0xf]
    %v2800 = vld [vmem:[%s5 + $0xd4] sm:$0xf]
    %v2801 = vld [vmem:[%s5 + $0xd8] sm:$0xf]
    %v2802 = vld [vmem:[%s5 + $0xdc] sm:$0xf]
    %v2803 = vld [vmem:[%s5 + $0xe0] sm:$0xf]
    %v2804 = vld [vmem:[%s5 + $0xe4] sm:$0xf]
    %v2805 = vld [vmem:[%s5 + $0xe8] sm:$0xf]
    %v2806 = vld [vmem:[%s5 + $0xec] sm:$0xf]
    %v2807 = vld [vmem:[%s5 + $0xf0] sm:$0xf]
    %v2808 = vld [vmem:[%s5 + $0xf4] sm:$0xf]
    %v2809 = vld [vmem:[%s5 + $0xf8] sm:$0xf]
    %v2810 = vld [vmem:[%s5 + $0xfc] sm:$0xf]
    %v2811 = vld [vmem:[%s6] sm:$0x1]
    %v2813 = vlaneseq
    %v2814 = vshrl.u32 %v2813, 7
    %v2815 = vsub.s32 0, %v2814
    %v2816 = vrot.slane %v2811, %v2815
    %v2882 = vunpack.c.l.b16 %v2747
    %v2883 = vunpack.c.l.b16 %v2748
    %v2884 = vunpack.c.l.b16 %v2749
    %v2885 = vunpack.c.l.b16 %v2750
    %v2886 = vunpack.c.l.b16 %v2751
    %v2887 = vunpack.c.l.b16 %v2752
    %v2888 = vunpack.c.l.b16 %v2753
    %v2889 = vunpack.c.l.b16 %v2754
    %v2890 = vunpack.c.l.b16 %v2755
    %v2891 = vunpack.c.l.b16 %v2756
    %v2892 = vunpack.c.l.b16 %v2757
    %v2893 = vunpack.c.l.b16 %v2758
    %v2894 = vunpack.c.l.b16 %v2759
    %v2895 = vunpack.c.l.b16 %v2760
    %v2896 = vunpack.c.l.b16 %v2761
    %v2897 = vunpack.c.l.b16 %v2762
    %v2898 = vunpack.c.l.b16 %v2763
    %v2899 = vunpack.c.l.b16 %v2764
    %v2900 = vunpack.c.l.b16 %v2765
    %v2901 = vunpack.c.l.b16 %v2766
    %v2902 = vunpack.c.l.b16 %v2767
    %v2903 = vunpack.c.l.b16 %v2768
    %v2904 = vunpack.c.l.b16 %v2769
    %v2905 = vunpack.c.l.b16 %v2770
    %v2906 = vunpack.c.l.b16 %v2771
    %v2907 = vunpack.c.l.b16 %v2772
    %v2908 = vunpack.c.l.b16 %v2773
    %v2909 = vunpack.c.l.b16 %v2774
    %v2910 = vunpack.c.l.b16 %v2775
    %v2911 = vunpack.c.l.b16 %v2776
    %v2912 = vunpack.c.l.b16 %v2777
    %v2913 = vunpack.c.l.b16 %v2778
    %v2914 = vunpack.c.l.b16 %v2779
    %v2915 = vunpack.c.l.b16 %v2780
    %v2916 = vunpack.c.l.b16 %v2781
    %v2917 = vunpack.c.l.b16 %v2782
    %v2918 = vunpack.c.l.b16 %v2783
    %v2919 = vunpack.c.l.b16 %v2784
    %v2920 = vunpack.c.l.b16 %v2785
    %v2921 = vunpack.c.l.b16 %v2786
    %v2922 = vunpack.c.l.b16 %v2787
    %v2923 = vunpack.c.l.b16 %v2788
    %v2924 = vunpack.c.l.b16 %v2789
    %v2925 = vunpack.c.l.b16 %v2790
    %v2926 = vunpack.c.l.b16 %v2791
    %v2927 = vunpack.c.l.b16 %v2792
    %v2928 = vunpack.c.l.b16 %v2793
    %v2929 = vunpack.c.l.b16 %v2794
    %v2930 = vunpack.c.l.b16 %v2795
    %v2931 = vunpack.c.l.b16 %v2796
    %v2932 = vunpack.c.l.b16 %v2797
    %v2933 = vunpack.c.l.b16 %v2798
    %v2934 = vunpack.c.l.b16 %v2799
    %v2935 = vunpack.c.l.b16 %v2800
    %v2936 = vunpack.c.l.b16 %v2801
    %v2937 = vunpack.c.l.b16 %v2802
    %v2938 = vunpack.c.l.b16 %v2803
    %v2939 = vunpack.c.l.b16 %v2804
    %v2940 = vunpack.c.l.b16 %v2805
    %v2941 = vunpack.c.l.b16 %v2806
    %v2942 = vunpack.c.l.b16 %v2807
    %v2943 = vunpack.c.l.b16 %v2808
    %v2944 = vunpack.c.l.b16 %v2809
    %v2945 = vunpack.c.l.b16 %v2810
    %v2946 = vpack.c.b16 %v2883, %v2882
    %v2947 = vpack.c.b16 %v2885, %v2884
    %v2948 = vpack.c.b16 %v2887, %v2886
    %v2949 = vpack.c.b16 %v2889, %v2888
    %v2950 = vpack.c.b16 %v2891, %v2890
    %v2951 = vpack.c.b16 %v2893, %v2892
    %v2952 = vpack.c.b16 %v2895, %v2894
    %v2953 = vpack.c.b16 %v2897, %v2896
    %v2954 = vpack.c.b16 %v2899, %v2898
    %v2955 = vpack.c.b16 %v2901, %v2900
    %v2956 = vpack.c.b16 %v2903, %v2902
    %v2957 = vpack.c.b16 %v2905, %v2904
    %v2958 = vpack.c.b16 %v2907, %v2906
    %v2959 = vpack.c.b16 %v2909, %v2908
    %v2960 = vpack.c.b16 %v2911, %v2910
    %v2961 = vpack.c.b16 %v2913, %v2912
    %v2962 = vpack.c.b16 %v2915, %v2914
    %v2963 = vpack.c.b16 %v2917, %v2916
    %v2964 = vpack.c.b16 %v2919, %v2918
    %v2965 = vpack.c.b16 %v2921, %v2920
    %v2966 = vpack.c.b16 %v2923, %v2922
    %v2967 = vpack.c.b16 %v2925, %v2924
    %v2968 = vpack.c.b16 %v2927, %v2926
    %v2969 = vpack.c.b16 %v2929, %v2928
    %v2970 = vpack.c.b16 %v2931, %v2930
    %v2971 = vpack.c.b16 %v2933, %v2932
    %v2972 = vpack.c.b16 %v2935, %v2934
    %v2973 = vpack.c.b16 %v2937, %v2936
    %v2974 = vpack.c.b16 %v2939, %v2938
    %v2975 = vpack.c.b16 %v2941, %v2940
    %v2976 = vpack.c.b16 %v2943, %v2942
    %v2977 = vpack.c.b16 %v2945, %v2944
    %3010 = vmatprep.subr.bf16.mxu0 0
    %3011 = vmatpush1.bf16.msra.mxu0 %v2946
    %3012 = vmatprep.subr.bf16.mxu0 0
    %3013 = vmatpush1.bf16.msra.mxu0 %v2947
    %3014 = vmatprep.subr.bf16.mxu0 0
    %3015 = vmatpush1.bf16.msra.mxu0 %v2948
    %3016 = vmatprep.subr.bf16.mxu0 0
    %3017 = vmatpush1.bf16.msra.mxu0 %v2949
    %3018 = vmatprep.subr.bf16.mxu0 0
    %3019 = vmatpush1.bf16.msra.mxu0 %v2950
    %3020 = vmatprep.subr.bf16.mxu0 0
    %3021 = vmatpush1.bf16.msra.mxu0 %v2951
    %3022 = vmatprep.subr.bf16.mxu0 0
    %3023 = vmatpush1.bf16.msra.mxu0 %v2952
    %3024 = vmatprep.subr.bf16.mxu0 0
    %3025 = vmatpush1.bf16.msra.mxu0 %v2953
    %3026 = vmatprep.subr.bf16.mxu0 0
    %3027 = vmatpush1.bf16.msra.mxu0 %v2954
    %3028 = vmatprep.subr.bf16.mxu0 0
    %3029 = vmatpush1.bf16.msra.mxu0 %v2955
    %3030 = vmatprep.subr.bf16.mxu0 0
    %3031 = vmatpush1.bf16.msra.mxu0 %v2956
    %3032 = vmatprep.subr.bf16.mxu0 0
    %3033 = vmatpush1.bf16.msra.mxu0 %v2957
    %3034 = vmatprep.subr.bf16.mxu0 0
    %3035 = vmatpush1.bf16.msra.mxu0 %v2958
    %3036 = vmatprep.subr.bf16.mxu0 0
    %3037 = vmatpush1.bf16.msra.mxu0 %v2959
    %3038 = vmatprep.subr.bf16.mxu0 0
    %3039 = vmatpush1.bf16.msra.mxu0 %v2960
    %3040 = vmatprep.subr.bf16.mxu0 0
    %3041 = vmatpush1.bf16.msra.mxu0 %v2961
    %3042 = vmatprep.mubr.bf16.mxu0 %v2744
    %3043 = vmatmul.mubr.bf16.gmra.mrb[0].mxu0 %v2743
    %v3044 = vpop.f32.mrb[0].mxu0
    %v3045 = vadd.f32 %v2816, %v3044
    %v3046 = vpop.f32.mrb[0].mxu0
    %v3047 = vpop.f32.mrb[0].mxu0
    %v3048 = vpop.f32.mrb[0].mxu0
    %3049 = vdwg.mxu0
    %3050 = vmatprep.subr.bf16.mxu0 0
    %3051 = vmatpush1.bf16.msra.mxu0 %v2962
    %3052 = vmatprep.subr.bf16.mxu0 0
    %3053 = vmatpush1.bf16.msra.mxu0 %v2963
    %3054 = vmatprep.subr.bf16.mxu0 0
    %3055 = vmatpush1.bf16.msra.mxu0 %v2964
    %3056 = vmatprep.subr.bf16.mxu0 0
    %3057 = vmatpush1.bf16.msra.mxu0 %v2965
    %3058 = vmatprep.subr.bf16.mxu0 0
    %3059 = vmatpush1.bf16.msra.mxu0 %v2966
    %3060 = vmatprep.subr.bf16.mxu0 0
    %3061 = vmatpush1.bf16.msra.mxu0 %v2967
    %3062 = vmatprep.subr.bf16.mxu0 0
    %3063 = vmatpush1.bf16.msra.mxu0 %v2968
    %3064 = vmatprep.subr.bf16.mxu0 0
    %3065 = vmatpush1.bf16.msra.mxu0 %v2969
    %3066 = vmatprep.subr.bf16.mxu0 0
    %3067 = vmatpush1.bf16.msra.mxu0 %v2970
    %3068 = vmatprep.subr.bf16.mxu0 0
    %3069 = vmatpush1.bf16.msra.mxu0 %v2971
    %3070 = vmatprep.subr.bf16.mxu0 0
    %3071 = vmatpush1.bf16.msra.mxu0 %v2972
    %3072 = vmatprep.subr.bf16.mxu0 0
    %3073 = vmatpush1.bf16.msra.mxu0 %v2973
    %3074 = vmatprep.subr.bf16.mxu0 0
    %3075 = vmatpush1.bf16.msra.mxu0 %v2974
    %3076 = vmatprep.subr.bf16.mxu0 0
    %3077 = vmatpush1.bf16.msra.mxu0 %v2975
    %3078 = vmatprep.subr.bf16.mxu0 0
    %3079 = vmatpush1.bf16.msra.mxu0 %v2976
    %3080 = vmatprep.subr.bf16.mxu0 0
    %3081 = vmatpush1.bf16.msra.mxu0 %v2977
    %3082 = vmatprep.mubr.bf16.mxu0 %v2746
    %3083 = vmatmul.mubr.bf16.gmra.mrb[0].mxu0 %v2745
    %v3084 = vpop.f32.mrb[0].mxu0
    %v3085 = vadd.f32 %v3045, %v3084
    %v3086 = vpop.f32.mrb[0].mxu0
    %v3087 = vpop.f32.mrb[0].mxu0
    %v3088 = vpop.f32.mrb[0].mxu0
    %3089 = vdwg.mxu0
    %vm3090 = vcmask 9216
    %v3091 = vsel %vm3090, %v3085, -inf
    %3092 = vmax.xlane.f32.xlu0 %v3091
    %v3093 = vpop.xlane.xlu0 %3092
    %v3094 = vsub.f32 %v3085, %v3093
    %v3095 = vmul.f32 %v3094, 1.442695
    %v3096 = vpow.pop %v3095
    %v3097 = vsel %vm3090, %v3096, 0.0
    %3098 = vadd.xlane.f32.xlu0 %v3097
    %v3099 = vpop.xlane.xlu0 %3098
    %v3100 = vrcp.pop %v3099
    %v3101 = vmul.f32 %v3096, %v3100
    %3102 = vst.msk [vmem:[#allocation2] sm:$0x3] %vm3090, %v3101
    // Predicated region
    $region30: #{net_forward.5} parent=1 // pred_check
      _
    $region31: #{net_forward.5} parent=1 // pred_check_branch
      %3104 = sbr.rel (0) target = $region33
    $region32: #{net_forward.5} parent=1 // pred_region
      %s3106 = ssub.s32 32, 32
      %3107 = vsyncadd [#allocation3], %s3106
      %s3109 = sshll.u32 [#allocation2], 4
      %s3110 = int_to_ptr.vmem [resolvable:$true] %s3109
      %3112 = dma.vmem_to_hbm [thread:$0]  %s3110, 32, %s7, [#allocation3]
    $region33: #{net_forward.5} parent=1 // pred_fallthru
      _
    // Predicated region
    $region34: #{net_forward.5} parent=1 // pred_check
      _
    $region35: #{net_forward.5} parent=1 // pred_check_branch
      %3114 = sbr.rel (0) target = $region37
    $region36: #{net_forward.5} parent=1 // pred_region
      %3115 = dma.done [#allocation3], 32
    $region37: #{net_forward.5} parent=1 // pred_fallthru
      _
    %3116 = vsyncpa [#allocation3], 1

</llo_original>
